<compile_context>
chip_gen: v6e
topology: v6e:2x2x1
jax: 0.10.0
libtpu: 0.0.40
codegen_flags: <defaults>
</compile_context>

<pallas_src>
import math
import functools

import jax
import jax.numpy as jnp
from jax import lax
from jax.experimental import pallas as pl
from jax.experimental.pallas import tpu as pltpu


# ----------------------------------------------------------------------------
# Fused subsampling kernel: conv1 + ReLU + conv2 + ReLU + output linear
# (grid over batch; conv2's stride-2 time access is handled with an even/odd
#  time-phase split of the conv1 im2col patches, so the kernel only uses
#  unit-stride slices, 2-D matmuls and concats).
# ----------------------------------------------------------------------------

def _subsample_kernel(pe_ref, po_ref, w1_ref, b1_ref, w2_ref, b2_ref,
                      wo_ref, bo_ref, o_ref, *, k2, s2):
    pe = pe_ref[0]                      # (F1, T2, P1) even-time conv1 patches
    po = po_ref[0]                      # (F1, T2, P1) odd-time conv1 patches
    F1, T2, _ = pe.shape
    C = w1_ref.shape[1]
    F2 = wo_ref.shape[0]
    d_out = wo_ref.shape[-1]

    w1 = w1_ref[...].astype(jnp.bfloat16)
    b1 = b1_ref[...]
    b2 = b2_ref[...]
    bo = bo_ref[...]
    zero_row = jnp.zeros((1, C), jnp.float32)

    # conv1 + ReLU, per input frequency, even/odd time phases; prepend one
    # zero row = causal (left) zero padding of the conv2 input.
    y_even, y_odd = [], []
    for f in range(F1):
        ye = jnp.maximum(
            jnp.dot(pe[f].astype(jnp.bfloat16), w1,
                    preferred_element_type=jnp.float32) + b1, 0.0)
        yo = jnp.maximum(
            jnp.dot(po[f].astype(jnp.bfloat16), w1,
                    preferred_element_type=jnp.float32) + b1, 0.0)
        y_even.append(jnp.concatenate([zero_row, ye], axis=0))   # (T2+1, C)
        y_odd.append(jnp.concatenate([zero_row, yo], axis=0))    # (T2+1, C)

    # conv2 + ReLU + output linear (accumulated per output frequency).
    out = jnp.zeros((T2, d_out), jnp.float32) + bo
    for f2 in range(F2):
        acc = jnp.zeros((T2, C), jnp.float32)
        for it in range(k2):                     # time taps (k2 == 3, s2 == 2)
            for jf in range(k2):                 # freq taps
                fin = f2 * s2 + jf
                if it == 0:
                    src = y_even[fin][0:T2]
                elif it == 1:
                    src = y_odd[fin][0:T2]
                else:
                    src = y_even[fin][1:T2 + 1]
                acc = acc + jnp.dot(
                    src.astype(jnp.bfloat16),
                    w2_ref[it * k2 + jf].astype(jnp.bfloat16),
                    preferred_element_type=jnp.float32)
        y2 = jnp.maximum(acc + b2, 0.0)
        out = out + jnp.dot(y2.astype(jnp.bfloat16),
                            wo_ref[f2].astype(jnp.bfloat16),
                            preferred_element_type=jnp.float32)

    o_ref[...] = out[None].astype(o_ref.dtype)


def pallas_subsample(pe, po, params, cfg):
    B, F1, T2, P1 = pe.shape
    d = cfg["subsampled_input_size"]
    k2, s2 = cfg["subsampling_kernel_size2"], cfg["subsampling_stride2"]
    # TODO(synk): even/odd time-phase split is specialized to stride2=2, k2=3.
    assert s2 == 2 and k2 == 3, "fused subsampling requires stride2=2, k2=3"

    kernel = functools.partial(_subsample_kernel, k2=k2, s2=s2)

    def wspec(a):
        return pl.BlockSpec(a.shape, lambda b, _n=a.ndim: (0,) * _n)

    weights = [params["sub_w1"], params["sub_b1"], params["sub_w2"],
               params["sub_b2"], params["sub_wo"], params["sub_bo"]]
    return pl.pallas_call(
        kernel,
        out_shape=jax.ShapeDtypeStruct((B, T2, d), jnp.float32),
        grid=(B,),
        in_specs=[pl.BlockSpec((1, F1, T2, P1), lambda b: (b, 0, 0, 0)),
                  pl.BlockSpec((1, F1, T2, P1), lambda b: (b, 0, 0, 0))]
                 + [wspec(w) for w in weights],
        out_specs=pl.BlockSpec((1, T2, d), lambda b: (b, 0, 0)),
        compiler_params=pltpu.CompilerParams(
            dimension_semantics=("parallel",)),
    )(pe, po, *weights)


# ----------------------------------------------------------------------------
# Fully fused conformer stack: ONE pallas_call, grid=(batch, block).
# Per-block weights are stacked along a leading L axis (index_map picks the
# block); the activation stays resident in a VMEM scratch across the block
# axis (no HBM round trips between blocks).
# ----------------------------------------------------------------------------

def _conformer_blocks_kernel(
        x_ref,
        ln_g_ref, ln_b_ref,
        ff1_w1_ref, ff1_b1_ref, ff1_w2_ref, ff1_b2_ref,
        wq_ref, bq_ref, wk_ref, bk_ref, wv_ref, bv_ref,
        ao_w_ref, ao_b_ref,
        pw1_wa_ref, pw1_ba_ref, pw1_wg_ref, pw1_bg_ref,
        dw_w_ref, dw_b_ref,
        pw2_w_ref, pw2_b_ref,
        ff2_w1_ref, ff2_b1_ref, ff2_w2_ref, ff2_b2_ref,
        o_ref, act_ref, *, num_heads, ksize, window, eps):
    lblk = pl.program_id(1)

    # First block of this batch element: load the input activation into the
    # persistent VMEM carrier.
    @pl.when(lblk == 0)
    def _():
        act_ref[...] = x_ref[...].astype(jnp.float32)

    x = act_ref[0]                                # (T, d), f32
    T, d = x.shape
    Dh = d // num_heads

    def layernorm(h, idx):
        g = ln_g_ref[0, idx:idx + 1, :]
        b = ln_b_ref[0, idx:idx + 1, :]
        mu = jnp.mean(h, axis=-1, keepdims=True)
        var = jnp.mean((h - mu) ** 2, axis=-1, keepdims=True)
        return (h - mu) * lax.rsqrt(var + eps) * g + b

    def mm(a, w_ref_):
        return jnp.dot(a.astype(jnp.bfloat16),
                       w_ref_[0].astype(jnp.bfloat16),
                       preferred_element_type=jnp.float32)

    # ---- macaron feed-forward 1 (half-step residual) ----
    h = layernorm(x, 0)
    h = mm(h, ff1_w1_ref) + ff1_b1_ref[0]
    h = h * jax.nn.sigmoid(h)                     # SiLU
    h = mm(h, ff1_w2_ref) + ff1_b2_ref[0]
    x = x + 0.5 * h

    # ---- windowed-causal multi-head self-attention ----
    # TODO(synk): per-sample key-padding mask from bx_len is not applied (only
    # the causal/window mask); padded tail frames do not affect valid outputs.
    h = layernorm(x, 1)
    q = mm(h, wq_ref) + bq_ref[0]
    k = mm(h, wk_ref) + bk_ref[0]
    v = mm(h, wv_ref) + bv_ref[0]
    ti = lax.broadcasted_iota(jnp.int32, (T, T), 0)
    tj = lax.broadcasted_iota(jnp.int32, (T, T), 1)
    causal = (tj <= ti) & (tj >= ti - window)
    lane = lax.broadcasted_iota(jnp.int32, (1, d), 1)
    scale = 1.0 / math.sqrt(Dh)
    k_b = k.astype(jnp.bfloat16)
    attn = jnp.zeros((T, d), jnp.float32)
    for head in range(num_heads):
        # per-head lane mask: full-width matmuls, no lane slicing / reshapes
        hm = ((lane >= head * Dh) & (lane < (head + 1) * Dh)).astype(jnp.float32)
        qh = (q * hm).astype(jnp.bfloat16)
        s = lax.dot_general(qh, k_b, (((1,), (1,)), ((), ())),
                            preferred_element_type=jnp.float32) * scale
        s = jnp.where(causal, s, -1e30)           # keep mask fill in f32
        m = jnp.max(s, axis=-1, keepdims=True)
        p = jnp.exp(s - m)
        p = p * pl.reciprocal(jnp.sum(p, axis=-1, keepdims=True), approx=True)
        vh = (v * hm).astype(jnp.bfloat16)
        attn = attn + jnp.dot(p.astype(jnp.bfloat16), vh,
                              preferred_element_type=jnp.float32)
    h = mm(attn, ao_w_ref) + ao_b_ref[0]
    x = x + h

    # ---- causal convolution module ----
    h = layernorm(x, 2)
    a = mm(h, pw1_wa_ref) + pw1_ba_ref[0]         # GLU: split weights,
    g = mm(h, pw1_wg_ref) + pw1_bg_ref[0]         # no lane slicing
    hc = a * jax.nn.sigmoid(g)
    ch = hc.shape[-1]
    hp = jnp.concatenate(
        [jnp.zeros((ksize - 1, ch), jnp.float32), hc], axis=0)   # causal pad
    acc = jnp.zeros((T, ch), jnp.float32)
    for kk in range(ksize):
        acc = acc + hp[kk:kk + T, :] * dw_w_ref[0, kk:kk + 1, :]
    y = acc + dw_b_ref[0]
    # TODO(synk): BatchNorm elided (eval mode w/ default running stats => identity).
    y = y * jax.nn.sigmoid(y)                     # SiLU
    h = mm(y, pw2_w_ref) + pw2_b_ref[0]
    x = x + h

    # ---- feed-forward 2 (half-step residual) ----
    h = layernorm(x, 3)
    h = mm(h, ff2_w1_ref) + ff2_b1_ref[0]
    h = h * jax.nn.sigmoid(h)
    h = mm(h, ff2_w2_ref) + ff2_b2_ref[0]
    x = x + 0.5 * h

    # ---- final layer norm ----
    # TODO(synk): is_timewise_ln=True (normalize over time) not implemented;
    # feature-wise LayerNorm used (is_timewise_ln=False).
    x = layernorm(x, 4)

    act_ref[...] = x[None]                        # carry to the next block
    o_ref[...] = x[None].astype(o_ref.dtype)      # resident; flushed once per b


def conformer_blocks_pallas(x, bp, cfg):
    B, T, d = x.shape
    L = cfg["num_conformer_blocks"]
    window = cfg["num_previous_frames"]
    if window == "all":
        window = T
    kernel = functools.partial(
        _conformer_blocks_kernel, num_heads=cfg["mha_num_heads"],
        ksize=cfg["conv_kernel_size"], window=int(window), eps=1e-5)

    def stacked_spec(a):
        nd = a.ndim
        return pl.BlockSpec((1,) + a.shape[1:],
                            lambda b, l, _nd=nd: (l,) + (0,) * (_nd - 1))

    names = ["ln_g", "ln_b",
             "ff1_w1", "ff1_b1", "ff1_w2", "ff1_b2",
             "wq", "bq", "wk", "bk", "wv", "bv",
             "ao_w", "ao_b",
             "pw1_wa", "pw1_ba", "pw1_wg", "pw1_bg",
             "dw_w", "dw_b",
             "pw2_w", "pw2_b",
             "ff2_w1", "ff2_b1", "ff2_w2", "ff2_b2"]
    weights = [bp[n] for n in names]

    return pl.pallas_call(
        kernel,
        out_shape=jax.ShapeDtypeStruct((B, T, d), jnp.float32),
        grid=(B, L),
        in_specs=[pl.BlockSpec((1, T, d), lambda b, l: (b, 0, 0))]
                 + [stacked_spec(w) for w in weights],
        out_specs=pl.BlockSpec((1, T, d), lambda b, l: (b, 0, 0)),
        scratch_shapes=[pltpu.VMEM((1, T, d), jnp.float32)],
        compiler_params=pltpu.CompilerParams(
            dimension_semantics=("parallel", "arbitrary")),
    )(x, *weights)


# ----------------------------------------------------------------------------
# Fused CTC head: linear + log-softmax, vocab padded to 128 lanes (lane-dense)
# ----------------------------------------------------------------------------

def _ctc_head_kernel(x_ref, w_ref, b_ref, o_ref):
    logits = jnp.dot(x_ref[...].astype(jnp.bfloat16),
                     w_ref[...].astype(jnp.bfloat16),
                     preferred_element_type=jnp.float32) + b_ref[...]
    m = jnp.max(logits, axis=-1, keepdims=True)
    z = logits - m
    lse = jnp.log(jnp.sum(jnp.exp(z), axis=-1, keepdims=True))
    o_ref[...] = (z - lse).astype(o_ref.dtype)


def pallas_ctc_head(x2d, w_pad, b_pad):
    # TODO(synk): grid over row tiles (256-512) once B*T2 grows beyond VMEM.
    M, d = x2d.shape
    VP = w_pad.shape[1]
    return pl.pallas_call(
        _ctc_head_kernel,
        out_shape=jax.ShapeDtypeStruct((M, VP), jnp.float32),
        in_specs=[pl.BlockSpec((M, d), lambda: (0, 0)),
                  pl.BlockSpec((d, VP), lambda: (0, 0)),
                  pl.BlockSpec((1, VP), lambda: (0, 0))],
        out_specs=pl.BlockSpec((M, VP), lambda: (0, 0)),
    )(x2d, w_pad, b_pad)


# ----------------------------------------------------------------------------
# Parameter init (deterministic, torch-Linear-style uniform)
# ----------------------------------------------------------------------------

def _init_linear(key, fan_in, fan_out):
    kw, kb = jax.random.split(key)
    bound = 1.0 / math.sqrt(fan_in)
    w = jax.random.uniform(kw, (fan_in, fan_out), jnp.float32, -bound, bound)
    b = jax.random.uniform(kb, (1, fan_out), jnp.float32, -bound, bound)
    return w, b


def init_params(key, cfg):
    d = cfg["subsampled_input_size"]
    ffh = cfg["ff_hidden_size"]
    ch = cfg["conv_hidden_size"]
    K = cfg["conv_kernel_size"]
    k1, s1 = cfg["subsampling_kernel_size1"], cfg["subsampling_stride1"]
    k2, s2 = cfg["subsampling_kernel_size2"], cfg["subsampling_stride2"]
    F = cfg["input_size"]
    F1 = (F - k1) // s1 + 1
    F2 = (F1 - k2) // s2 + 1
    V = cfg["vocab_size"]
    C = d

    keys = iter(jax.random.split(key, 16 + 16 * cfg["num_conformer_blocks"]))
    p = {}
    p["sub_w1"], p["sub_b1"] = _init_linear(next(keys), k1 * k1, C)
    w2, p["sub_b2"] = _init_linear(next(keys), k2 * k2 * C, C)
    p["sub_w2"] = w2.reshape(k2 * k2, C, C)           # per-tap (C, C) slabs
    wo, p["sub_bo"] = _init_linear(next(keys), F2 * C, d)
    p["sub_wo"] = wo.reshape(F2, C, d)                # per-frequency slabs

    # CTC head padded to 128 lanes (zero weight cols, -1e30 bias => padded
    # logits are ignored by softmax and sliced away on the host).
    wc, bc = _init_linear(next(keys), d, V)
    VP = max(128, ((V + 127) // 128) * 128)
    p["ctc_w"] = jnp.zeros((d, VP), jnp.float32).at[:, :V].set(wc)
    p["ctc_b"] = jnp.full((1, VP), -1e30, jnp.float32).at[:, :V].set(bc)

    blocks = []
    for _ in range(cfg["num_conformer_blocks"]):
        blk = {}
        blk["ln_g"] = jnp.ones((5, d), jnp.float32)   # ff1, mha, conv, ff2, out
        blk["ln_b"] = jnp.zeros((5, d), jnp.float32)
        blk["ff1_w1"], blk["ff1_b1"] = _init_linear(next(keys), d, ffh)
        blk["ff1_w2"], blk["ff1_b2"] = _init_linear(next(keys), ffh, d)
        wqkv, bqkv = _init_linear(next(keys), d, 3 * d)
        blk["wq"], blk["wk"], blk["wv"] = (wqkv[:, :d], wqkv[:, d:2 * d],
                                           wqkv[:, 2 * d:])
        blk["bq"], blk["bk"], blk["bv"] = (bqkv[:, :d], bqkv[:, d:2 * d],
                                           bqkv[:, 2 * d:])
        blk["ao_w"], blk["ao_b"] = _init_linear(next(keys), d, d)
        wpw1, bpw1 = _init_linear(next(keys), d, 2 * ch)
        blk["pw1_wa"], blk["pw1_wg"] = wpw1[:, :ch], wpw1[:, ch:]
        blk["pw1_ba"], blk["pw1_bg"] = bpw1[:, :ch], bpw1[:, ch:]
        blk["dw_w"], blk["dw_b"] = _init_linear(next(keys), K, ch)
        blk["pw2_w"], blk["pw2_b"] = _init_linear(next(keys), ch, d)
        blk["ff2_w1"], blk["ff2_b1"] = _init_linear(next(keys), d, ffh)
        blk["ff2_w2"], blk["ff2_b2"] = _init_linear(next(keys), ffh, d)
        blocks.append(blk)
    # Stack per-block weights along a leading L axis (kernel index_map picks
    # the current block; activations stay in VMEM across the block axis).
    p["blk"] = {k: jnp.stack([b[k] for b in blocks]) for k in blocks[0]}
    return p


# ----------------------------------------------------------------------------
# Model forward
# ----------------------------------------------------------------------------

def causal_conformer_ctc_forward(params, bx, bx_len, cfg):
    B, T, F = bx.shape
    k1, s1 = cfg["subsampling_kernel_size1"], cfg["subsampling_stride1"]
    k2, s2 = cfg["subsampling_kernel_size2"], cfg["subsampling_stride2"]
    d = cfg["subsampled_input_size"]

    # ---- host glue: causal time pad + im2col for conv1, split into even/odd
    #      time phases so the fused kernel never needs strided access ----
    xp = jnp.pad(bx, ((0, 0), (k1 - 1, 0), (0, 0)))
    Tp = T + k1 - 1
    T1 = (Tp - k1) // s1 + 1
    F1 = (F - k1) // s1 + 1
    T2 = (T1 - 1) // s2 + 1
    cols = []
    for it in range(k1):
        for jf in range(k1):
            cols.append(xp[:, it:it + (T1 - 1) * s1 + 1:s1,
                           jf:jf + (F1 - 1) * s1 + 1:s1])
    p1 = jnp.stack(cols, axis=-1)                  # (B, T1, F1, k1*k1)
    p1 = jnp.transpose(p1, (0, 2, 1, 3))           # (B, F1, T1, P1)
    pe = p1[:, :, 0::s2, :]                        # even time phase
    po = p1[:, :, 1::s2, :]                        # odd time phase
    if po.shape[2] < T2:
        po = jnp.pad(po, ((0, 0), (0, 0), (0, T2 - po.shape[2]), (0, 0)))

    x = pallas_subsample(pe, po, params, cfg)      # (B, T2, d)

    # subsampled lengths (causal left padding => out = floor((L-1)/s)+1)
    l1 = (bx_len - 1) // s1 + 1
    bsubsampled_x_len = (l1 - 1) // s2 + 1

    # ---- conformer blocks (single fused pallas_call, grid over (B, L)) ----
    x = conformer_blocks_pallas(x, params["blk"], cfg)

    # ---- fused CTC head + log-softmax (lane-dense, vocab padded to 128) ----
    logp = pallas_ctc_head(x.reshape(B * T2, d), params["ctc_w"],
                           params["ctc_b"])
    V = cfg["vocab_size"]
    blog_probs = logp.reshape(B, T2, -1)[..., :V]
    return blog_probs, bsubsampled_x_len


# ----------------------------------------------------------------------------
# main
# ----------------------------------------------------------------------------

if __name__ == "__main__":
    cfg = dict(
        input_size=16,
        subsampled_input_size=32,
        num_conformer_blocks=2,
        ff_hidden_size=64,
        conv_hidden_size=32,
        conv_kernel_size=3,
        mha_num_heads=4,
        dropout=0.0,                # eval mode: identity
        subsampling_kernel_size1=3,
        subsampling_stride1=2,
        subsampling_kernel_size2=3,
        subsampling_stride2=2,
        num_previous_frames=4,
        is_timewise_ln=False,
        vocab_size=11,
        blank_idx=0,
    )

    key = jax.random.PRNGKey(0)
    k_param, k_x = jax.random.split(key)
    params = init_params(k_param, cfg)

    B, T, F = 2, 32, cfg["input_size"]
    bx = jax.random.normal(k_x, (B, T, F), dtype=jnp.float32)
    bx_len = jnp.array([32, 28], dtype=jnp.int32)

    fwd = jax.jit(lambda p, x, xl: causal_conformer_ctc_forward(p, x, xl, cfg))
    blog_probs, bsub_len = fwd(params, bx, bx_len)
    jax.block_until_ready(blog_probs)
    jax.block_until_ready(bsub_len)

    assert blog_probs.shape == (B, 8, cfg["vocab_size"])
    assert bsub_len.shape == (B,)
    # log_softmax rows sum to 1 in prob space
    assert jnp.allclose(jnp.sum(jnp.exp(blog_probs), axis=-1), 1.0, atol=1e-4)

    print("KERNEL_OK")
</pallas_src>

<mosaic_0001>
module attributes {stable_mosaic.version = 11 : i64} {
  func.func @_subsample_kernel(%arg0: i32, %arg1: memref<1x7x8x9xf32, #tpu.memory_space<vmem>>, %arg2: memref<1x7x8x9xf32, #tpu.memory_space<vmem>>, %arg3: memref<9x32xf32, #tpu.memory_space<vmem>>, %arg4: memref<1x32xf32, #tpu.memory_space<vmem>>, %arg5: memref<9x32x32xf32, #tpu.memory_space<vmem>>, %arg6: memref<1x32xf32, #tpu.memory_space<vmem>>, %arg7: memref<3x32x32xf32, #tpu.memory_space<vmem>>, %arg8: memref<1x32xf32, #tpu.memory_space<vmem>>, %arg9: memref<1x8x32xf32, #tpu.memory_space<vmem>>) attributes {dimension_semantics = [#tpu.dimension_semantics<parallel>], iteration_bounds = array<i64: 2>, scalar_prefetch = 0 : i64, scratch_operands = 0 : i64, tpu.core_type = #tpu.core_type<tc>, window_params = [{transform_indices = @transform_0, window_bounds = array<i64: 1, 7, 8, 9>}, {transform_indices = @transform_1, window_bounds = array<i64: 1, 7, 8, 9>}, {pipeline_mode = #tpu.pipeline_mode<synchronous>, transform_indices = @transform_2, window_bounds = array<i64: 9, 32>}, {pipeline_mode = #tpu.pipeline_mode<synchronous>, transform_indices = @transform_3, window_bounds = array<i64: 1, 32>}, {pipeline_mode = #tpu.pipeline_mode<synchronous>, transform_indices = @transform_4, window_bounds = array<i64: 9, 32, 32>}, {pipeline_mode = #tpu.pipeline_mode<synchronous>, transform_indices = @transform_5, window_bounds = array<i64: 1, 32>}, {pipeline_mode = #tpu.pipeline_mode<synchronous>, transform_indices = @transform_6, window_bounds = array<i64: 3, 32, 32>}, {pipeline_mode = #tpu.pipeline_mode<synchronous>, transform_indices = @transform_7, window_bounds = array<i64: 1, 32>}, {transform_indices = @transform_8, window_bounds = array<i64: 1, 8, 32>}]} {
    %c0 = arith.constant 0 : index
    %c0_0 = arith.constant 0 : index
    %c0_1 = arith.constant 0 : index
    %c0_2 = arith.constant 0 : index
    %0 = vector.load %arg1[%c0, %c0_0, %c0_1, %c0_2] : memref<1x7x8x9xf32, #tpu.memory_space<vmem>>, vector<1x7x8x9xf32>
    %1 = vector.shape_cast %0 : vector<1x7x8x9xf32> to vector<7x8x9xf32>
    %c0_3 = arith.constant 0 : index
    %c0_4 = arith.constant 0 : index
    %c0_5 = arith.constant 0 : index
    %c0_6 = arith.constant 0 : index
    %2 = vector.load %arg2[%c0_3, %c0_4, %c0_5, %c0_6] : memref<1x7x8x9xf32, #tpu.memory_space<vmem>>, vector<1x7x8x9xf32>
    %3 = vector.shape_cast %2 : vector<1x7x8x9xf32> to vector<7x8x9xf32>
    %c0_7 = arith.constant 0 : index
    %c0_8 = arith.constant 0 : index
    %4 = vector.load %arg3[%c0_7, %c0_8] : memref<9x32xf32, #tpu.memory_space<vmem>>, vector<9x32xf32>
    %5 = arith.truncf %4 : vector<9x32xf32> to vector<9x32xbf16>
    %c0_9 = arith.constant 0 : index
    %c0_10 = arith.constant 0 : index
    %6 = vector.load %arg4[%c0_9, %c0_10] : memref<1x32xf32, #tpu.memory_space<vmem>>, vector<1x32xf32>
    %c0_11 = arith.constant 0 : index
    %c0_12 = arith.constant 0 : index
    %7 = vector.load %arg6[%c0_11, %c0_12] : memref<1x32xf32, #tpu.memory_space<vmem>>, vector<1x32xf32>
    %c0_13 = arith.constant 0 : index
    %c0_14 = arith.constant 0 : index
    %8 = vector.load %arg8[%c0_13, %c0_14] : memref<1x32xf32, #tpu.memory_space<vmem>>, vector<1x32xf32>
    %cst = arith.constant 0.000000e+00 : f32
    %9 = vector.broadcast %cst : f32 to vector<1x32xf32>
    %10 = vector.extract_strided_slice %1 {offsets = [0, 0, 0], sizes = [1, 8, 9], strides = [1, 1, 1]} : vector<7x8x9xf32> to vector<1x8x9xf32>
    %11 = vector.shape_cast %10 : vector<1x8x9xf32> to vector<8x9xf32>
    %12 = arith.truncf %11 : vector<8x9xf32> to vector<8x9xbf16>
    %cst_15 = arith.constant dense<0.000000e+00> : vector<8x32xf32>
    %13 = tpu.matmul %12, %5, %cst_15 {dimension_numbers = #tpu.dot_dimension_numbers<[1], [0], [0], [1], [0, 0, 1, 1], [], []>} : vector<8x9xbf16>, vector<9x32xbf16>, vector<8x32xf32> -> vector<8x32xf32>
    %14 = vector.broadcast %6 : vector<1x32xf32> to vector<8x32xf32>
    %15 = arith.addf %13, %14 : vector<8x32xf32>
    %cst_16 = arith.constant 0.000000e+00 : f32
    %16 = vector.broadcast %cst_16 : f32 to vector<8x32xf32>
    %17 = arith.maximumf %15, %16 : vector<8x32xf32>
    %18 = vector.extract_strided_slice %3 {offsets = [0, 0, 0], sizes = [1, 8, 9], strides = [1, 1, 1]} : vector<7x8x9xf32> to vector<1x8x9xf32>
    %19 = vector.shape_cast %18 : vector<1x8x9xf32> to vector<8x9xf32>
    %20 = arith.truncf %19 : vector<8x9xf32> to vector<8x9xbf16>
    %cst_17 = arith.constant dense<0.000000e+00> : vector<8x32xf32>
    %21 = tpu.matmul %20, %5, %cst_17 {dimension_numbers = #tpu.dot_dimension_numbers<[1], [0], [0], [1], [0, 0, 1, 1], [], []>} : vector<8x9xbf16>, vector<9x32xbf16>, vector<8x32xf32> -> vector<8x32xf32>
    %22 = vector.broadcast %6 : vector<1x32xf32> to vector<8x32xf32>
    %23 = arith.addf %21, %22 : vector<8x32xf32>
    %cst_18 = arith.constant 0.000000e+00 : f32
    %24 = vector.broadcast %cst_18 : f32 to vector<8x32xf32>
    %25 = arith.maximumf %23, %24 : vector<8x32xf32>
    %26 = tpu.concatenate %9, %17 in 0 : vector<1x32xf32>, vector<8x32xf32> -> vector<9x32xf32>
    %27 = tpu.concatenate %9, %25 in 0 : vector<1x32xf32>, vector<8x32xf32> -> vector<9x32xf32>
    %28 = vector.extract_strided_slice %1 {offsets = [1, 0, 0], sizes = [1, 8, 9], strides = [1, 1, 1]} : vector<7x8x9xf32> to vector<1x8x9xf32>
    %29 = vector.shape_cast %28 : vector<1x8x9xf32> to vector<8x9xf32>
    %30 = arith.truncf %29 : vector<8x9xf32> to vector<8x9xbf16>
    %cst_19 = arith.constant dense<0.000000e+00> : vector<8x32xf32>
    %31 = tpu.matmul %30, %5, %cst_19 {dimension_numbers = #tpu.dot_dimension_numbers<[1], [0], [0], [1], [0, 0, 1, 1], [], []>} : vector<8x9xbf16>, vector<9x32xbf16>, vector<8x32xf32> -> vector<8x32xf32>
    %32 = vector.broadcast %6 : vector<1x32xf32> to vector<8x32xf32>
    %33 = arith.addf %31, %32 : vector<8x32xf32>
    %cst_20 = arith.constant 0.000000e+00 : f32
    %34 = vector.broadcast %cst_20 : f32 to vector<8x32xf32>
    %35 = arith.maximumf %33, %34 : vector<8x32xf32>
    %36 = vector.extract_strided_slice %3 {offsets = [1, 0, 0], sizes = [1, 8, 9], strides = [1, 1, 1]} : vector<7x8x9xf32> to vector<1x8x9xf32>
    %37 = vector.shape_cast %36 : vector<1x8x9xf32> to vector<8x9xf32>
    %38 = arith.truncf %37 : vector<8x9xf32> to vector<8x9xbf16>
    %cst_21 = arith.constant dense<0.000000e+00> : vector<8x32xf32>
    %39 = tpu.matmul %38, %5, %cst_21 {dimension_numbers = #tpu.dot_dimension_numbers<[1], [0], [0], [1], [0, 0, 1, 1], [], []>} : vector<8x9xbf16>, vector<9x32xbf16>, vector<8x32xf32> -> vector<8x32xf32>
    %40 = vector.broadcast %6 : vector<1x32xf32> to vector<8x32xf32>
    %41 = arith.addf %39, %40 : vector<8x32xf32>
    %cst_22 = arith.constant 0.000000e+00 : f32
    %42 = vector.broadcast %cst_22 : f32 to vector<8x32xf32>
    %43 = arith.maximumf %41, %42 : vector<8x32xf32>
    %44 = tpu.concatenate %9, %35 in 0 : vector<1x32xf32>, vector<8x32xf32> -> vector<9x32xf32>
    %45 = tpu.concatenate %9, %43 in 0 : vector<1x32xf32>, vector<8x32xf32> -> vector<9x32xf32>
    %46 = vector.extract_strided_slice %1 {offsets = [2, 0, 0], sizes = [1, 8, 9], strides = [1, 1, 1]} : vector<7x8x9xf32> to vector<1x8x9xf32>
    %47 = vector.shape_cast %46 : vector<1x8x9xf32> to vector<8x9xf32>
    %48 = arith.truncf %47 : vector<8x9xf32> to vector<8x9xbf16>
    %cst_23 = arith.constant dense<0.000000e+00> : vector<8x32xf32>
    %49 = tpu.matmul %48, %5, %cst_23 {dimension_numbers = #tpu.dot_dimension_numbers<[1], [0], [0], [1], [0, 0, 1, 1], [], []>} : vector<8x9xbf16>, vector<9x32xbf16>, vector<8x32xf32> -> vector<8x32xf32>
    %50 = vector.broadcast %6 : vector<1x32xf32> to vector<8x32xf32>
    %51 = arith.addf %49, %50 : vector<8x32xf32>
    %cst_24 = arith.constant 0.000000e+00 : f32
    %52 = vector.broadcast %cst_24 : f32 to vector<8x32xf32>
    %53 = arith.maximumf %51, %52 : vector<8x32xf32>
    %54 = vector.extract_strided_slice %3 {offsets = [2, 0, 0], sizes = [1, 8, 9], strides = [1, 1, 1]} : vector<7x8x9xf32> to vector<1x8x9xf32>
    %55 = vector.shape_cast %54 : vector<1x8x9xf32> to vector<8x9xf32>
    %56 = arith.truncf %55 : vector<8x9xf32> to vector<8x9xbf16>
    %cst_25 = arith.constant dense<0.000000e+00> : vector<8x32xf32>
    %57 = tpu.matmul %56, %5, %cst_25 {dimension_numbers = #tpu.dot_dimension_numbers<[1], [0], [0], [1], [0, 0, 1, 1], [], []>} : vector<8x9xbf16>, vector<9x32xbf16>, vector<8x32xf32> -> vector<8x32xf32>
    %58 = vector.broadcast %6 : vector<1x32xf32> to vector<8x32xf32>
    %59 = arith.addf %57, %58 : vector<8x32xf32>
    %cst_26 = arith.constant 0.000000e+00 : f32
    %60 = vector.broadcast %cst_26 : f32 to vector<8x32xf32>
    %61 = arith.maximumf %59, %60 : vector<8x32xf32>
    %62 = tpu.concatenate %9, %53 in 0 : vector<1x32xf32>, vector<8x32xf32> -> vector<9x32xf32>
    %63 = tpu.concatenate %9, %61 in 0 : vector<1x32xf32>, vector<8x32xf32> -> vector<9x32xf32>
    %64 = vector.extract_strided_slice %1 {offsets = [3, 0, 0], sizes = [1, 8, 9], strides = [1, 1, 1]} : vector<7x8x9xf32> to vector<1x8x9xf32>
    %65 = vector.shape_cast %64 : vector<1x8x9xf32> to vector<8x9xf32>
    %66 = arith.truncf %65 : vector<8x9xf32> to vector<8x9xbf16>
    %cst_27 = arith.constant dense<0.000000e+00> : vector<8x32xf32>
    %67 = tpu.matmul %66, %5, %cst_27 {dimension_numbers = #tpu.dot_dimension_numbers<[1], [0], [0], [1], [0, 0, 1, 1], [], []>} : vector<8x9xbf16>, vector<9x32xbf16>, vector<8x32xf32> -> vector<8x32xf32>
    %68 = vector.broadcast %6 : vector<1x32xf32> to vector<8x32xf32>
    %69 = arith.addf %67, %68 : vector<8x32xf32>
    %cst_28 = arith.constant 0.000000e+00 : f32
    %70 = vector.broadcast %cst_28 : f32 to vector<8x32xf32>
    %71 = arith.maximumf %69, %70 : vector<8x32xf32>
    %72 = vector.extract_strided_slice %3 {offsets = [3, 0, 0], sizes = [1, 8, 9], strides = [1, 1, 1]} : vector<7x8x9xf32> to vector<1x8x9xf32>
    %73 = vector.shape_cast %72 : vector<1x8x9xf32> to vector<8x9xf32>
    %74 = arith.truncf %73 : vector<8x9xf32> to vector<8x9xbf16>
    %cst_29 = arith.constant dense<0.000000e+00> : vector<8x32xf32>
    %75 = tpu.matmul %74, %5, %cst_29 {dimension_numbers = #tpu.dot_dimension_numbers<[1], [0], [0], [1], [0, 0, 1, 1], [], []>} : vector<8x9xbf16>, vector<9x32xbf16>, vector<8x32xf32> -> vector<8x32xf32>
    %76 = vector.broadcast %6 : vector<1x32xf32> to vector<8x32xf32>
    %77 = arith.addf %75, %76 : vector<8x32xf32>
    %cst_30 = arith.constant 0.000000e+00 : f32
    %78 = vector.broadcast %cst_30 : f32 to vector<8x32xf32>
    %79 = arith.maximumf %77, %78 : vector<8x32xf32>
    %80 = tpu.concatenate %9, %71 in 0 : vector<1x32xf32>, vector<8x32xf32> -> vector<9x32xf32>
    %81 = tpu.concatenate %9, %79 in 0 : vector<1x32xf32>, vector<8x32xf32> -> vector<9x32xf32>
    %82 = vector.extract_strided_slice %1 {offsets = [4, 0, 0], sizes = [1, 8, 9], strides = [1, 1, 1]} : vector<7x8x9xf32> to vector<1x8x9xf32>
    %83 = vector.shape_cast %82 : vector<1x8x9xf32> to vector<8x9xf32>
    %84 = arith.truncf %83 : vector<8x9xf32> to vector<8x9xbf16>
    %cst_31 = arith.constant dense<0.000000e+00> : vector<8x32xf32>
    %85 = tpu.matmul %84, %5, %cst_31 {dimension_numbers = #tpu.dot_dimension_numbers<[1], [0], [0], [1], [0, 0, 1, 1], [], []>} : vector<8x9xbf16>, vector<9x32xbf16>, vector<8x32xf32> -> vector<8x32xf32>
    %86 = vector.broadcast %6 : vector<1x32xf32> to vector<8x32xf32>
    %87 = arith.addf %85, %86 : vector<8x32xf32>
    %cst_32 = arith.constant 0.000000e+00 : f32
    %88 = vector.broadcast %cst_32 : f32 to vector<8x32xf32>
    %89 = arith.maximumf %87, %88 : vector<8x32xf32>
    %90 = vector.extract_strided_slice %3 {offsets = [4, 0, 0], sizes = [1, 8, 9], strides = [1, 1, 1]} : vector<7x8x9xf32> to vector<1x8x9xf32>
    %91 = vector.shape_cast %90 : vector<1x8x9xf32> to vector<8x9xf32>
    %92 = arith.truncf %91 : vector<8x9xf32> to vector<8x9xbf16>
    %cst_33 = arith.constant dense<0.000000e+00> : vector<8x32xf32>
    %93 = tpu.matmul %92, %5, %cst_33 {dimension_numbers = #tpu.dot_dimension_numbers<[1], [0], [0], [1], [0, 0, 1, 1], [], []>} : vector<8x9xbf16>, vector<9x32xbf16>, vector<8x32xf32> -> vector<8x32xf32>
    %94 = vector.broadcast %6 : vector<1x32xf32> to vector<8x32xf32>
    %95 = arith.addf %93, %94 : vector<8x32xf32>
    %cst_34 = arith.constant 0.000000e+00 : f32
    %96 = vector.broadcast %cst_34 : f32 to vector<8x32xf32>
    %97 = arith.maximumf %95, %96 : vector<8x32xf32>
    %98 = tpu.concatenate %9, %89 in 0 : vector<1x32xf32>, vector<8x32xf32> -> vector<9x32xf32>
    %99 = tpu.concatenate %9, %97 in 0 : vector<1x32xf32>, vector<8x32xf32> -> vector<9x32xf32>
    %100 = vector.extract_strided_slice %1 {offsets = [5, 0, 0], sizes = [1, 8, 9], strides = [1, 1, 1]} : vector<7x8x9xf32> to vector<1x8x9xf32>
    %101 = vector.shape_cast %100 : vector<1x8x9xf32> to vector<8x9xf32>
    %102 = arith.truncf %101 : vector<8x9xf32> to vector<8x9xbf16>
    %cst_35 = arith.constant dense<0.000000e+00> : vector<8x32xf32>
    %103 = tpu.matmul %102, %5, %cst_35 {dimension_numbers = #tpu.dot_dimension_numbers<[1], [0], [0], [1], [0, 0, 1, 1], [], []>} : vector<8x9xbf16>, vector<9x32xbf16>, vector<8x32xf32> -> vector<8x32xf32>
    %104 = vector.broadcast %6 : vector<1x32xf32> to vector<8x32xf32>
    %105 = arith.addf %103, %104 : vector<8x32xf32>
    %cst_36 = arith.constant 0.000000e+00 : f32
    %106 = vector.broadcast %cst_36 : f32 to vector<8x32xf32>
    %107 = arith.maximumf %105, %106 : vector<8x32xf32>
    %108 = vector.extract_strided_slice %3 {offsets = [5, 0, 0], sizes = [1, 8, 9], strides = [1, 1, 1]} : vector<7x8x9xf32> to vector<1x8x9xf32>
    %109 = vector.shape_cast %108 : vector<1x8x9xf32> to vector<8x9xf32>
    %110 = arith.truncf %109 : vector<8x9xf32> to vector<8x9xbf16>
    %cst_37 = arith.constant dense<0.000000e+00> : vector<8x32xf32>
    %111 = tpu.matmul %110, %5, %cst_37 {dimension_numbers = #tpu.dot_dimension_numbers<[1], [0], [0], [1], [0, 0, 1, 1], [], []>} : vector<8x9xbf16>, vector<9x32xbf16>, vector<8x32xf32> -> vector<8x32xf32>
    %112 = vector.broadcast %6 : vector<1x32xf32> to vector<8x32xf32>
    %113 = arith.addf %111, %112 : vector<8x32xf32>
    %cst_38 = arith.constant 0.000000e+00 : f32
    %114 = vector.broadcast %cst_38 : f32 to vector<8x32xf32>
    %115 = arith.maximumf %113, %114 : vector<8x32xf32>
    %116 = tpu.concatenate %9, %107 in 0 : vector<1x32xf32>, vector<8x32xf32> -> vector<9x32xf32>
    %117 = tpu.concatenate %9, %115 in 0 : vector<1x32xf32>, vector<8x32xf32> -> vector<9x32xf32>
    %118 = vector.extract_strided_slice %1 {offsets = [6, 0, 0], sizes = [1, 8, 9], strides = [1, 1, 1]} : vector<7x8x9xf32> to vector<1x8x9xf32>
    %119 = vector.shape_cast %118 : vector<1x8x9xf32> to vector<8x9xf32>
    %120 = arith.truncf %119 : vector<8x9xf32> to vector<8x9xbf16>
    %cst_39 = arith.constant dense<0.000000e+00> : vector<8x32xf32>
    %121 = tpu.matmul %120, %5, %cst_39 {dimension_numbers = #tpu.dot_dimension_numbers<[1], [0], [0], [1], [0, 0, 1, 1], [], []>} : vector<8x9xbf16>, vector<9x32xbf16>, vector<8x32xf32> -> vector<8x32xf32>
    %122 = vector.broadcast %6 : vector<1x32xf32> to vector<8x32xf32>
    %123 = arith.addf %121, %122 : vector<8x32xf32>
    %cst_40 = arith.constant 0.000000e+00 : f32
    %124 = vector.broadcast %cst_40 : f32 to vector<8x32xf32>
    %125 = arith.maximumf %123, %124 : vector<8x32xf32>
    %126 = vector.extract_strided_slice %3 {offsets = [6, 0, 0], sizes = [1, 8, 9], strides = [1, 1, 1]} : vector<7x8x9xf32> to vector<1x8x9xf32>
    %127 = vector.shape_cast %126 : vector<1x8x9xf32> to vector<8x9xf32>
    %128 = arith.truncf %127 : vector<8x9xf32> to vector<8x9xbf16>
    %cst_41 = arith.constant dense<0.000000e+00> : vector<8x32xf32>
    %129 = tpu.matmul %128, %5, %cst_41 {dimension_numbers = #tpu.dot_dimension_numbers<[1], [0], [0], [1], [0, 0, 1, 1], [], []>} : vector<8x9xbf16>, vector<9x32xbf16>, vector<8x32xf32> -> vector<8x32xf32>
    %130 = vector.broadcast %6 : vector<1x32xf32> to vector<8x32xf32>
    %131 = arith.addf %129, %130 : vector<8x32xf32>
    %cst_42 = arith.constant 0.000000e+00 : f32
    %132 = vector.broadcast %cst_42 : f32 to vector<8x32xf32>
    %133 = arith.maximumf %131, %132 : vector<8x32xf32>
    %134 = tpu.concatenate %9, %125 in 0 : vector<1x32xf32>, vector<8x32xf32> -> vector<9x32xf32>
    %135 = tpu.concatenate %9, %133 in 0 : vector<1x32xf32>, vector<8x32xf32> -> vector<9x32xf32>
    %cst_43 = arith.constant 0.000000e+00 : f32
    %136 = vector.broadcast %cst_43 : f32 to vector<8x32xf32>
    %137 = vector.broadcast %8 : vector<1x32xf32> to vector<8x32xf32>
    %138 = arith.addf %136, %137 : vector<8x32xf32>
    %cst_44 = arith.constant 0.000000e+00 : f32
    %139 = vector.broadcast %cst_44 : f32 to vector<8x32xf32>
    %140 = vector.extract_strided_slice %26 {offsets = [0, 0], sizes = [8, 32], strides = [1, 1]} : vector<9x32xf32> to vector<8x32xf32>
    %141 = arith.truncf %140 : vector<8x32xf32> to vector<8x32xbf16>
    %c0_45 = arith.constant 0 : index
    %c0_46 = arith.constant 0 : index
    %c0_47 = arith.constant 0 : index
    %142 = vector.load %arg5[%c0_45, %c0_46, %c0_47] : memref<9x32x32xf32, #tpu.memory_space<vmem>>, vector<1x32x32xf32>
    %143 = vector.shape_cast %142 : vector<1x32x32xf32> to vector<32x32xf32>
    %144 = arith.truncf %143 : vector<32x32xf32> to vector<32x32xbf16>
    %cst_48 = arith.constant dense<0.000000e+00> : vector<8x32xf32>
    %145 = tpu.matmul %141, %144, %cst_48 {dimension_numbers = #tpu.dot_dimension_numbers<[1], [0], [0], [1], [0, 0, 1, 1], [], []>} : vector<8x32xbf16>, vector<32x32xbf16>, vector<8x32xf32> -> vector<8x32xf32>
    %146 = arith.addf %139, %145 : vector<8x32xf32>
    %147 = vector.extract_strided_slice %44 {offsets = [0, 0], sizes = [8, 32], strides = [1, 1]} : vector<9x32xf32> to vector<8x32xf32>
    %148 = arith.truncf %147 : vector<8x32xf32> to vector<8x32xbf16>
    %c1 = arith.constant 1 : index
    %c0_49 = arith.constant 0 : index
    %c0_50 = arith.constant 0 : index
    %149 = vector.load %arg5[%c1, %c0_49, %c0_50] : memref<9x32x32xf32, #tpu.memory_space<vmem>>, vector<1x32x32xf32>
    %150 = vector.shape_cast %149 : vector<1x32x32xf32> to vector<32x32xf32>
    %151 = arith.truncf %150 : vector<32x32xf32> to vector<32x32xbf16>
    %cst_51 = arith.constant dense<0.000000e+00> : vector<8x32xf32>
    %152 = tpu.matmul %148, %151, %cst_51 {dimension_numbers = #tpu.dot_dimension_numbers<[1], [0], [0], [1], [0, 0, 1, 1], [], []>} : vector<8x32xbf16>, vector<32x32xbf16>, vector<8x32xf32> -> vector<8x32xf32>
    %153 = arith.addf %146, %152 : vector<8x32xf32>
    %154 = vector.extract_strided_slice %62 {offsets = [0, 0], sizes = [8, 32], strides = [1, 1]} : vector<9x32xf32> to vector<8x32xf32>
    %155 = arith.truncf %154 : vector<8x32xf32> to vector<8x32xbf16>
    %c2 = arith.constant 2 : index
    %c0_52 = arith.constant 0 : index
    %c0_53 = arith.constant 0 : index
    %156 = vector.load %arg5[%c2, %c0_52, %c0_53] : memref<9x32x32xf32, #tpu.memory_space<vmem>>, vector<1x32x32xf32>
    %157 = vector.shape_cast %156 : vector<1x32x32xf32> to vector<32x32xf32>
    %158 = arith.truncf %157 : vector<32x32xf32> to vector<32x32xbf16>
    %cst_54 = arith.constant dense<0.000000e+00> : vector<8x32xf32>
    %159 = tpu.matmul %155, %158, %cst_54 {dimension_numbers = #tpu.dot_dimension_numbers<[1], [0], [0], [1], [0, 0, 1, 1], [], []>} : vector<8x32xbf16>, vector<32x32xbf16>, vector<8x32xf32> -> vector<8x32xf32>
    %160 = arith.addf %153, %159 : vector<8x32xf32>
    %161 = vector.extract_strided_slice %27 {offsets = [0, 0], sizes = [8, 32], strides = [1, 1]} : vector<9x32xf32> to vector<8x32xf32>
    %162 = arith.truncf %161 : vector<8x32xf32> to vector<8x32xbf16>
    %c3 = arith.constant 3 : index
    %c0_55 = arith.constant 0 : index
    %c0_56 = arith.constant 0 : index
    %163 = vector.load %arg5[%c3, %c0_55, %c0_56] : memref<9x32x32xf32, #tpu.memory_space<vmem>>, vector<1x32x32xf32>
    %164 = vector.shape_cast %163 : vector<1x32x32xf32> to vector<32x32xf32>
    %165 = arith.truncf %164 : vector<32x32xf32> to vector<32x32xbf16>
    %cst_57 = arith.constant dense<0.000000e+00> : vector<8x32xf32>
    %166 = tpu.matmul %162, %165, %cst_57 {dimension_numbers = #tpu.dot_dimension_numbers<[1], [0], [0], [1], [0, 0, 1, 1], [], []>} : vector<8x32xbf16>, vector<32x32xbf16>, vector<8x32xf32> -> vector<8x32xf32>
    %167 = arith.addf %160, %166 : vector<8x32xf32>
    %168 = vector.extract_strided_slice %45 {offsets = [0, 0], sizes = [8, 32], strides = [1, 1]} : vector<9x32xf32> to vector<8x32xf32>
    %169 = arith.truncf %168 : vector<8x32xf32> to vector<8x32xbf16>
    %c4 = arith.constant 4 : index
    %c0_58 = arith.constant 0 : index
    %c0_59 = arith.constant 0 : index
    %170 = vector.load %arg5[%c4, %c0_58, %c0_59] : memref<9x32x32xf32, #tpu.memory_space<vmem>>, vector<1x32x32xf32>
    %171 = vector.shape_cast %170 : vector<1x32x32xf32> to vector<32x32xf32>
    %172 = arith.truncf %171 : vector<32x32xf32> to vector<32x32xbf16>
    %cst_60 = arith.constant dense<0.000000e+00> : vector<8x32xf32>
    %173 = tpu.matmul %169, %172, %cst_60 {dimension_numbers = #tpu.dot_dimension_numbers<[1], [0], [0], [1], [0, 0, 1, 1], [], []>} : vector<8x32xbf16>, vector<32x32xbf16>, vector<8x32xf32> -> vector<8x32xf32>
    %174 = arith.addf %167, %173 : vector<8x32xf32>
    %175 = vector.extract_strided_slice %63 {offsets = [0, 0], sizes = [8, 32], strides = [1, 1]} : vector<9x32xf32> to vector<8x32xf32>
    %176 = arith.truncf %175 : vector<8x32xf32> to vector<8x32xbf16>
    %c5 = arith.constant 5 : index
    %c0_61 = arith.constant 0 : index
    %c0_62 = arith.constant 0 : index
    %177 = vector.load %arg5[%c5, %c0_61, %c0_62] : memref<9x32x32xf32, #tpu.memory_space<vmem>>, vector<1x32x32xf32>
    %178 = vector.shape_cast %177 : vector<1x32x32xf32> to vector<32x32xf32>
    %179 = arith.truncf %178 : vector<32x32xf32> to vector<32x32xbf16>
    %cst_63 = arith.constant dense<0.000000e+00> : vector<8x32xf32>
    %180 = tpu.matmul %176, %179, %cst_63 {dimension_numbers = #tpu.dot_dimension_numbers<[1], [0], [0], [1], [0, 0, 1, 1], [], []>} : vector<8x32xbf16>, vector<32x32xbf16>, vector<8x32xf32> -> vector<8x32xf32>
    %181 = arith.addf %174, %180 : vector<8x32xf32>
    %182 = vector.extract_strided_slice %26 {offsets = [1, 0], sizes = [8, 32], strides = [1, 1]} : vector<9x32xf32> to vector<8x32xf32>
    %183 = arith.truncf %182 : vector<8x32xf32> to vector<8x32xbf16>
    %c6 = arith.constant 6 : index
    %c0_64 = arith.constant 0 : index
    %c0_65 = arith.constant 0 : index
    %184 = vector.load %arg5[%c6, %c0_64, %c0_65] : memref<9x32x32xf32, #tpu.memory_space<vmem>>, vector<1x32x32xf32>
    %185 = vector.shape_cast %184 : vector<1x32x32xf32> to vector<32x32xf32>
    %186 = arith.truncf %185 : vector<32x32xf32> to vector<32x32xbf16>
    %cst_66 = arith.constant dense<0.000000e+00> : vector<8x32xf32>
    %187 = tpu.matmul %183, %186, %cst_66 {dimension_numbers = #tpu.dot_dimension_numbers<[1], [0], [0], [1], [0, 0, 1, 1], [], []>} : vector<8x32xbf16>, vector<32x32xbf16>, vector<8x32xf32> -> vector<8x32xf32>
    %188 = arith.addf %181, %187 : vector<8x32xf32>
    %189 = vector.extract_strided_slice %44 {offsets = [1, 0], sizes = [8, 32], strides = [1, 1]} : vector<9x32xf32> to vector<8x32xf32>
    %190 = arith.truncf %189 : vector<8x32xf32> to vector<8x32xbf16>
    %c7 = arith.constant 7 : index
    %c0_67 = arith.constant 0 : index
    %c0_68 = arith.constant 0 : index
    %191 = vector.load %arg5[%c7, %c0_67, %c0_68] : memref<9x32x32xf32, #tpu.memory_space<vmem>>, vector<1x32x32xf32>
    %192 = vector.shape_cast %191 : vector<1x32x32xf32> to vector<32x32xf32>
    %193 = arith.truncf %192 : vector<32x32xf32> to vector<32x32xbf16>
    %cst_69 = arith.constant dense<0.000000e+00> : vector<8x32xf32>
    %194 = tpu.matmul %190, %193, %cst_69 {dimension_numbers = #tpu.dot_dimension_numbers<[1], [0], [0], [1], [0, 0, 1, 1], [], []>} : vector<8x32xbf16>, vector<32x32xbf16>, vector<8x32xf32> -> vector<8x32xf32>
    %195 = arith.addf %188, %194 : vector<8x32xf32>
    %196 = vector.extract_strided_slice %62 {offsets = [1, 0], sizes = [8, 32], strides = [1, 1]} : vector<9x32xf32> to vector<8x32xf32>
    %197 = arith.truncf %196 : vector<8x32xf32> to vector<8x32xbf16>
    %c8 = arith.constant 8 : index
    %c0_70 = arith.constant 0 : index
    %c0_71 = arith.constant 0 : index
    %198 = vector.load %arg5[%c8, %c0_70, %c0_71] : memref<9x32x32xf32, #tpu.memory_space<vmem>>, vector<1x32x32xf32>
    %199 = vector.shape_cast %198 : vector<1x32x32xf32> to vector<32x32xf32>
    %200 = arith.truncf %199 : vector<32x32xf32> to vector<32x32xbf16>
    %cst_72 = arith.constant dense<0.000000e+00> : vector<8x32xf32>
    %201 = tpu.matmul %197, %200, %cst_72 {dimension_numbers = #tpu.dot_dimension_numbers<[1], [0], [0], [1], [0, 0, 1, 1], [], []>} : vector<8x32xbf16>, vector<32x32xbf16>, vector<8x32xf32> -> vector<8x32xf32>
    %202 = arith.addf %195, %201 : vector<8x32xf32>
    %203 = vector.broadcast %7 : vector<1x32xf32> to vector<8x32xf32>
    %204 = arith.addf %202, %203 : vector<8x32xf32>
    %cst_73 = arith.constant 0.000000e+00 : f32
    %205 = vector.broadcast %cst_73 : f32 to vector<8x32xf32>
    %206 = arith.maximumf %204, %205 : vector<8x32xf32>
    %207 = arith.truncf %206 : vector<8x32xf32> to vector<8x32xbf16>
    %c0_74 = arith.constant 0 : index
    %c0_75 = arith.constant 0 : index
    %c0_76 = arith.constant 0 : index
    %208 = vector.load %arg7[%c0_74, %c0_75, %c0_76] : memref<3x32x32xf32, #tpu.memory_space<vmem>>, vector<1x32x32xf32>
    %209 = vector.shape_cast %208 : vector<1x32x32xf32> to vector<32x32xf32>
    %210 = arith.truncf %209 : vector<32x32xf32> to vector<32x32xbf16>
    %cst_77 = arith.constant dense<0.000000e+00> : vector<8x32xf32>
    %211 = tpu.matmul %207, %210, %cst_77 {dimension_numbers = #tpu.dot_dimension_numbers<[1], [0], [0], [1], [0, 0, 1, 1], [], []>} : vector<8x32xbf16>, vector<32x32xbf16>, vector<8x32xf32> -> vector<8x32xf32>
    %212 = arith.addf %138, %211 : vector<8x32xf32>
    %cst_78 = arith.constant 0.000000e+00 : f32
    %213 = vector.broadcast %cst_78 : f32 to vector<8x32xf32>
    %214 = vector.extract_strided_slice %62 {offsets = [0, 0], sizes = [8, 32], strides = [1, 1]} : vector<9x32xf32> to vector<8x32xf32>
    %215 = arith.truncf %214 : vector<8x32xf32> to vector<8x32xbf16>
    %c0_79 = arith.constant 0 : index
    %c0_80 = arith.constant 0 : index
    %c0_81 = arith.constant 0 : index
    %216 = vector.load %arg5[%c0_79, %c0_80, %c0_81] : memref<9x32x32xf32, #tpu.memory_space<vmem>>, vector<1x32x32xf32>
    %217 = vector.shape_cast %216 : vector<1x32x32xf32> to vector<32x32xf32>
    %218 = arith.truncf %217 : vector<32x32xf32> to vector<32x32xbf16>
    %cst_82 = arith.constant dense<0.000000e+00> : vector<8x32xf32>
    %219 = tpu.matmul %215, %218, %cst_82 {dimension_numbers = #tpu.dot_dimension_numbers<[1], [0], [0], [1], [0, 0, 1, 1], [], []>} : vector<8x32xbf16>, vector<32x32xbf16>, vector<8x32xf32> -> vector<8x32xf32>
    %220 = arith.addf %213, %219 : vector<8x32xf32>
    %221 = vector.extract_strided_slice %80 {offsets = [0, 0], sizes = [8, 32], strides = [1, 1]} : vector<9x32xf32> to vector<8x32xf32>
    %222 = arith.truncf %221 : vector<8x32xf32> to vector<8x32xbf16>
    %c1_83 = arith.constant 1 : index
    %c0_84 = arith.constant 0 : index
    %c0_85 = arith.constant 0 : index
    %223 = vector.load %arg5[%c1_83, %c0_84, %c0_85] : memref<9x32x32xf32, #tpu.memory_space<vmem>>, vector<1x32x32xf32>
    %224 = vector.shape_cast %223 : vector<1x32x32xf32> to vector<32x32xf32>
    %225 = arith.truncf %224 : vector<32x32xf32> to vector<32x32xbf16>
    %cst_86 = arith.constant dense<0.000000e+00> : vector<8x32xf32>
    %226 = tpu.matmul %222, %225, %cst_86 {dimension_numbers = #tpu.dot_dimension_numbers<[1], [0], [0], [1], [0, 0, 1, 1], [], []>} : vector<8x32xbf16>, vector<32x32xbf16>, vector<8x32xf32> -> vector<8x32xf32>
    %227 = arith.addf %220, %226 : vector<8x32xf32>
    %228 = vector.extract_strided_slice %98 {offsets = [0, 0], sizes = [8, 32], strides = [1, 1]} : vector<9x32xf32> to vector<8x32xf32>
    %229 = arith.truncf %228 : vector<8x32xf32> to vector<8x32xbf16>
    %c2_87 = arith.constant 2 : index
    %c0_88 = arith.constant 0 : index
    %c0_89 = arith.constant 0 : index
    %230 = vector.load %arg5[%c2_87, %c0_88, %c0_89] : memref<9x32x32xf32, #tpu.memory_space<vmem>>, vector<1x32x32xf32>
    %231 = vector.shape_cast %230 : vector<1x32x32xf32> to vector<32x32xf32>
    %232 = arith.truncf %231 : vector<32x32xf32> to vector<32x32xbf16>
    %cst_90 = arith.constant dense<0.000000e+00> : vector<8x32xf32>
    %233 = tpu.matmul %229, %232, %cst_90 {dimension_numbers = #tpu.dot_dimension_numbers<[1], [0], [0], [1], [0, 0, 1, 1], [], []>} : vector<8x32xbf16>, vector<32x32xbf16>, vector<8x32xf32> -> vector<8x32xf32>
    %234 = arith.addf %227, %233 : vector<8x32xf32>
    %235 = vector.extract_strided_slice %63 {offsets = [0, 0], sizes = [8, 32], strides = [1, 1]} : vector<9x32xf32> to vector<8x32xf32>
    %236 = arith.truncf %235 : vector<8x32xf32> to vector<8x32xbf16>
    %c3_91 = arith.constant 3 : index
    %c0_92 = arith.constant 0 : index
    %c0_93 = arith.constant 0 : index
    %237 = vector.load %arg5[%c3_91, %c0_92, %c0_93] : memref<9x32x32xf32, #tpu.memory_space<vmem>>, vector<1x32x32xf32>
    %238 = vector.shape_cast %237 : vector<1x32x32xf32> to vector<32x32xf32>
    %239 = arith.truncf %238 : vector<32x32xf32> to vector<32x32xbf16>
    %cst_94 = arith.constant dense<0.000000e+00> : vector<8x32xf32>
    %240 = tpu.matmul %236, %239, %cst_94 {dimension_numbers = #tpu.dot_dimension_numbers<[1], [0], [0], [1], [0, 0, 1, 1], [], []>} : vector<8x32xbf16>, vector<32x32xbf16>, vector<8x32xf32> -> vector<8x32xf32>
    %241 = arith.addf %234, %240 : vector<8x32xf32>
    %242 = vector.extract_strided_slice %81 {offsets = [0, 0], sizes = [8, 32], strides = [1, 1]} : vector<9x32xf32> to vector<8x32xf32>
    %243 = arith.truncf %242 : vector<8x32xf32> to vector<8x32xbf16>
    %c4_95 = arith.constant 4 : index
    %c0_96 = arith.constant 0 : index
    %c0_97 = arith.constant 0 : index
    %244 = vector.load %arg5[%c4_95, %c0_96, %c0_97] : memref<9x32x32xf32, #tpu.memory_space<vmem>>, vector<1x32x32xf32>
    %245 = vector.shape_cast %244 : vector<1x32x32xf32> to vector<32x32xf32>
    %246 = arith.truncf %245 : vector<32x32xf32> to vector<32x32xbf16>
    %cst_98 = arith.constant dense<0.000000e+00> : vector<8x32xf32>
    %247 = tpu.matmul %243, %246, %cst_98 {dimension_numbers = #tpu.dot_dimension_numbers<[1], [0], [0], [1], [0, 0, 1, 1], [], []>} : vector<8x32xbf16>, vector<32x32xbf16>, vector<8x32xf32> -> vector<8x32xf32>
    %248 = arith.addf %241, %247 : vector<8x32xf32>
    %249 = vector.extract_strided_slice %99 {offsets = [0, 0], sizes = [8, 32], strides = [1, 1]} : vector<9x32xf32> to vector<8x32xf32>
    %250 = arith.truncf %249 : vector<8x32xf32> to vector<8x32xbf16>
    %c5_99 = arith.constant 5 : index
    %c0_100 = arith.constant 0 : index
    %c0_101 = arith.constant 0 : index
    %251 = vector.load %arg5[%c5_99, %c0_100, %c0_101] : memref<9x32x32xf32, #tpu.memory_space<vmem>>, vector<1x32x32xf32>
    %252 = vector.shape_cast %251 : vector<1x32x32xf32> to vector<32x32xf32>
    %253 = arith.truncf %252 : vector<32x32xf32> to vector<32x32xbf16>
    %cst_102 = arith.constant dense<0.000000e+00> : vector<8x32xf32>
    %254 = tpu.matmul %250, %253, %cst_102 {dimension_numbers = #tpu.dot_dimension_numbers<[1], [0], [0], [1], [0, 0, 1, 1], [], []>} : vector<8x32xbf16>, vector<32x32xbf16>, vector<8x32xf32> -> vector<8x32xf32>
    %255 = arith.addf %248, %254 : vector<8x32xf32>
    %256 = vector.extract_strided_slice %62 {offsets = [1, 0], sizes = [8, 32], strides = [1, 1]} : vector<9x32xf32> to vector<8x32xf32>
    %257 = arith.truncf %256 : vector<8x32xf32> to vector<8x32xbf16>
    %c6_103 = arith.constant 6 : index
    %c0_104 = arith.constant 0 : index
    %c0_105 = arith.constant 0 : index
    %258 = vector.load %arg5[%c6_103, %c0_104, %c0_105] : memref<9x32x32xf32, #tpu.memory_space<vmem>>, vector<1x32x32xf32>
    %259 = vector.shape_cast %258 : vector<1x32x32xf32> to vector<32x32xf32>
    %260 = arith.truncf %259 : vector<32x32xf32> to vector<32x32xbf16>
    %cst_106 = arith.constant dense<0.000000e+00> : vector<8x32xf32>
    %261 = tpu.matmul %257, %260, %cst_106 {dimension_numbers = #tpu.dot_dimension_numbers<[1], [0], [0], [1], [0, 0, 1, 1], [], []>} : vector<8x32xbf16>, vector<32x32xbf16>, vector<8x32xf32> -> vector<8x32xf32>
    %262 = arith.addf %255, %261 : vector<8x32xf32>
    %263 = vector.extract_strided_slice %80 {offsets = [1, 0], sizes = [8, 32], strides = [1, 1]} : vector<9x32xf32> to vector<8x32xf32>
    %264 = arith.truncf %263 : vector<8x32xf32> to vector<8x32xbf16>
    %c7_107 = arith.constant 7 : index
    %c0_108 = arith.constant 0 : index
    %c0_109 = arith.constant 0 : index
    %265 = vector.load %arg5[%c7_107, %c0_108, %c0_109] : memref<9x32x32xf32, #tpu.memory_space<vmem>>, vector<1x32x32xf32>
    %266 = vector.shape_cast %265 : vector<1x32x32xf32> to vector<32x32xf32>
    %267 = arith.truncf %266 : vector<32x32xf32> to vector<32x32xbf16>
    %cst_110 = arith.constant dense<0.000000e+00> : vector<8x32xf32>
    %268 = tpu.matmul %264, %267, %cst_110 {dimension_numbers = #tpu.dot_dimension_numbers<[1], [0], [0], [1], [0, 0, 1, 1], [], []>} : vector<8x32xbf16>, vector<32x32xbf16>, vector<8x32xf32> -> vector<8x32xf32>
    %269 = arith.addf %262, %268 : vector<8x32xf32>
    %270 = vector.extract_strided_slice %98 {offsets = [1, 0], sizes = [8, 32], strides = [1, 1]} : vector<9x32xf32> to vector<8x32xf32>
    %271 = arith.truncf %270 : vector<8x32xf32> to vector<8x32xbf16>
    %c8_111 = arith.constant 8 : index
    %c0_112 = arith.constant 0 : index
    %c0_113 = arith.constant 0 : index
    %272 = vector.load %arg5[%c8_111, %c0_112, %c0_113] : memref<9x32x32xf32, #tpu.memory_space<vmem>>, vector<1x32x32xf32>
    %273 = vector.shape_cast %272 : vector<1x32x32xf32> to vector<32x32xf32>
    %274 = arith.truncf %273 : vector<32x32xf32> to vector<32x32xbf16>
    %cst_114 = arith.constant dense<0.000000e+00> : vector<8x32xf32>
    %275 = tpu.matmul %271, %274, %cst_114 {dimension_numbers = #tpu.dot_dimension_numbers<[1], [0], [0], [1], [0, 0, 1, 1], [], []>} : vector<8x32xbf16>, vector<32x32xbf16>, vector<8x32xf32> -> vector<8x32xf32>
    %276 = arith.addf %269, %275 : vector<8x32xf32>
    %277 = vector.broadcast %7 : vector<1x32xf32> to vector<8x32xf32>
    %278 = arith.addf %276, %277 : vector<8x32xf32>
    %cst_115 = arith.constant 0.000000e+00 : f32
    %279 = vector.broadcast %cst_115 : f32 to vector<8x32xf32>
    %280 = arith.maximumf %278, %279 : vector<8x32xf32>
    %281 = arith.truncf %280 : vector<8x32xf32> to vector<8x32xbf16>
    %c1_116 = arith.constant 1 : index
    %c0_117 = arith.constant 0 : index
    %c0_118 = arith.constant 0 : index
    %282 = vector.load %arg7[%c1_116, %c0_117, %c0_118] : memref<3x32x32xf32, #tpu.memory_space<vmem>>, vector<1x32x32xf32>
    %283 = vector.shape_cast %282 : vector<1x32x32xf32> to vector<32x32xf32>
    %284 = arith.truncf %283 : vector<32x32xf32> to vector<32x32xbf16>
    %cst_119 = arith.constant dense<0.000000e+00> : vector<8x32xf32>
    %285 = tpu.matmul %281, %284, %cst_119 {dimension_numbers = #tpu.dot_dimension_numbers<[1], [0], [0], [1], [0, 0, 1, 1], [], []>} : vector<8x32xbf16>, vector<32x32xbf16>, vector<8x32xf32> -> vector<8x32xf32>
    %286 = arith.addf %212, %285 : vector<8x32xf32>
    %cst_120 = arith.constant 0.000000e+00 : f32
    %287 = vector.broadcast %cst_120 : f32 to vector<8x32xf32>
    %288 = vector.extract_strided_slice %98 {offsets = [0, 0], sizes = [8, 32], strides = [1, 1]} : vector<9x32xf32> to vector<8x32xf32>
    %289 = arith.truncf %288 : vector<8x32xf32> to vector<8x32xbf16>
    %c0_121 = arith.constant 0 : index
    %c0_122 = arith.constant 0 : index
    %c0_123 = arith.constant 0 : index
    %290 = vector.load %arg5[%c0_121, %c0_122, %c0_123] : memref<9x32x32xf32, #tpu.memory_space<vmem>>, vector<1x32x32xf32>
    %291 = vector.shape_cast %290 : vector<1x32x32xf32> to vector<32x32xf32>
    %292 = arith.truncf %291 : vector<32x32xf32> to vector<32x32xbf16>
    %cst_124 = arith.constant dense<0.000000e+00> : vector<8x32xf32>
    %293 = tpu.matmul %289, %292, %cst_124 {dimension_numbers = #tpu.dot_dimension_numbers<[1], [0], [0], [1], [0, 0, 1, 1], [], []>} : vector<8x32xbf16>, vector<32x32xbf16>, vector<8x32xf32> -> vector<8x32xf32>
    %294 = arith.addf %287, %293 : vector<8x32xf32>
    %295 = vector.extract_strided_slice %116 {offsets = [0, 0], sizes = [8, 32], strides = [1, 1]} : vector<9x32xf32> to vector<8x32xf32>
    %296 = arith.truncf %295 : vector<8x32xf32> to vector<8x32xbf16>
    %c1_125 = arith.constant 1 : index
    %c0_126 = arith.constant 0 : index
    %c0_127 = arith.constant 0 : index
    %297 = vector.load %arg5[%c1_125, %c0_126, %c0_127] : memref<9x32x32xf32, #tpu.memory_space<vmem>>, vector<1x32x32xf32>
    %298 = vector.shape_cast %297 : vector<1x32x32xf32> to vector<32x32xf32>
    %299 = arith.truncf %298 : vector<32x32xf32> to vector<32x32xbf16>
    %cst_128 = arith.constant dense<0.000000e+00> : vector<8x32xf32>
    %300 = tpu.matmul %296, %299, %cst_128 {dimension_numbers = #tpu.dot_dimension_numbers<[1], [0], [0], [1], [0, 0, 1, 1], [], []>} : vector<8x32xbf16>, vector<32x32xbf16>, vector<8x32xf32> -> vector<8x32xf32>
    %301 = arith.addf %294, %300 : vector<8x32xf32>
    %302 = vector.extract_strided_slice %134 {offsets = [0, 0], sizes = [8, 32], strides = [1, 1]} : vector<9x32xf32> to vector<8x32xf32>
    %303 = arith.truncf %302 : vector<8x32xf32> to vector<8x32xbf16>
    %c2_129 = arith.constant 2 : index
    %c0_130 = arith.constant 0 : index
    %c0_131 = arith.constant 0 : index
    %304 = vector.load %arg5[%c2_129, %c0_130, %c0_131] : memref<9x32x32xf32, #tpu.memory_space<vmem>>, vector<1x32x32xf32>
    %305 = vector.shape_cast %304 : vector<1x32x32xf32> to vector<32x32xf32>
    %306 = arith.truncf %305 : vector<32x32xf32> to vector<32x32xbf16>
    %cst_132 = arith.constant dense<0.000000e+00> : vector<8x32xf32>
    %307 = tpu.matmul %303, %306, %cst_132 {dimension_numbers = #tpu.dot_dimension_numbers<[1], [0], [0], [1], [0, 0, 1, 1], [], []>} : vector<8x32xbf16>, vector<32x32xbf16>, vector<8x32xf32> -> vector<8x32xf32>
    %308 = arith.addf %301, %307 : vector<8x32xf32>
    %309 = vector.extract_strided_slice %99 {offsets = [0, 0], sizes = [8, 32], strides = [1, 1]} : vector<9x32xf32> to vector<8x32xf32>
    %310 = arith.truncf %309 : vector<8x32xf32> to vector<8x32xbf16>
    %c3_133 = arith.constant 3 : index
    %c0_134 = arith.constant 0 : index
    %c0_135 = arith.constant 0 : index
    %311 = vector.load %arg5[%c3_133, %c0_134, %c0_135] : memref<9x32x32xf32, #tpu.memory_space<vmem>>, vector<1x32x32xf32>
    %312 = vector.shape_cast %311 : vector<1x32x32xf32> to vector<32x32xf32>
    %313 = arith.truncf %312 : vector<32x32xf32> to vector<32x32xbf16>
    %cst_136 = arith.constant dense<0.000000e+00> : vector<8x32xf32>
    %314 = tpu.matmul %310, %313, %cst_136 {dimension_numbers = #tpu.dot_dimension_numbers<[1], [0], [0], [1], [0, 0, 1, 1], [], []>} : vector<8x32xbf16>, vector<32x32xbf16>, vector<8x32xf32> -> vector<8x32xf32>
    %315 = arith.addf %308, %314 : vector<8x32xf32>
    %316 = vector.extract_strided_slice %117 {offsets = [0, 0], sizes = [8, 32], strides = [1, 1]} : vector<9x32xf32> to vector<8x32xf32>
    %317 = arith.truncf %316 : vector<8x32xf32> to vector<8x32xbf16>
    %c4_137 = arith.constant 4 : index
    %c0_138 = arith.constant 0 : index
    %c0_139 = arith.constant 0 : index
    %318 = vector.load %arg5[%c4_137, %c0_138, %c0_139] : memref<9x32x32xf32, #tpu.memory_space<vmem>>, vector<1x32x32xf32>
    %319 = vector.shape_cast %318 : vector<1x32x32xf32> to vector<32x32xf32>
    %320 = arith.truncf %319 : vector<32x32xf32> to vector<32x32xbf16>
    %cst_140 = arith.constant dense<0.000000e+00> : vector<8x32xf32>
    %321 = tpu.matmul %317, %320, %cst_140 {dimension_numbers = #tpu.dot_dimension_numbers<[1], [0], [0], [1], [0, 0, 1, 1], [], []>} : vector<8x32xbf16>, vector<32x32xbf16>, vector<8x32xf32> -> vector<8x32xf32>
    %322 = arith.addf %315, %321 : vector<8x32xf32>
    %323 = vector.extract_strided_slice %135 {offsets = [0, 0], sizes = [8, 32], strides = [1, 1]} : vector<9x32xf32> to vector<8x32xf32>
    %324 = arith.truncf %323 : vector<8x32xf32> to vector<8x32xbf16>
    %c5_141 = arith.constant 5 : index
    %c0_142 = arith.constant 0 : index
    %c0_143 = arith.constant 0 : index
    %325 = vector.load %arg5[%c5_141, %c0_142, %c0_143] : memref<9x32x32xf32, #tpu.memory_space<vmem>>, vector<1x32x32xf32>
    %326 = vector.shape_cast %325 : vector<1x32x32xf32> to vector<32x32xf32>
    %327 = arith.truncf %326 : vector<32x32xf32> to vector<32x32xbf16>
    %cst_144 = arith.constant dense<0.000000e+00> : vector<8x32xf32>
    %328 = tpu.matmul %324, %327, %cst_144 {dimension_numbers = #tpu.dot_dimension_numbers<[1], [0], [0], [1], [0, 0, 1, 1], [], []>} : vector<8x32xbf16>, vector<32x32xbf16>, vector<8x32xf32> -> vector<8x32xf32>
    %329 = arith.addf %322, %328 : vector<8x32xf32>
    %330 = vector.extract_strided_slice %98 {offsets = [1, 0], sizes = [8, 32], strides = [1, 1]} : vector<9x32xf32> to vector<8x32xf32>
    %331 = arith.truncf %330 : vector<8x32xf32> to vector<8x32xbf16>
    %c6_145 = arith.constant 6 : index
    %c0_146 = arith.constant 0 : index
    %c0_147 = arith.constant 0 : index
    %332 = vector.load %arg5[%c6_145, %c0_146, %c0_147] : memref<9x32x32xf32, #tpu.memory_space<vmem>>, vector<1x32x32xf32>
    %333 = vector.shape_cast %332 : vector<1x32x32xf32> to vector<32x32xf32>
    %334 = arith.truncf %333 : vector<32x32xf32> to vector<32x32xbf16>
    %cst_148 = arith.constant dense<0.000000e+00> : vector<8x32xf32>
    %335 = tpu.matmul %331, %334, %cst_148 {dimension_numbers = #tpu.dot_dimension_numbers<[1], [0], [0], [1], [0, 0, 1, 1], [], []>} : vector<8x32xbf16>, vector<32x32xbf16>, vector<8x32xf32> -> vector<8x32xf32>
    %336 = arith.addf %329, %335 : vector<8x32xf32>
    %337 = vector.extract_strided_slice %116 {offsets = [1, 0], sizes = [8, 32], strides = [1, 1]} : vector<9x32xf32> to vector<8x32xf32>
    %338 = arith.truncf %337 : vector<8x32xf32> to vector<8x32xbf16>
    %c7_149 = arith.constant 7 : index
    %c0_150 = arith.constant 0 : index
    %c0_151 = arith.constant 0 : index
    %339 = vector.load %arg5[%c7_149, %c0_150, %c0_151] : memref<9x32x32xf32, #tpu.memory_space<vmem>>, vector<1x32x32xf32>
    %340 = vector.shape_cast %339 : vector<1x32x32xf32> to vector<32x32xf32>
    %341 = arith.truncf %340 : vector<32x32xf32> to vector<32x32xbf16>
    %cst_152 = arith.constant dense<0.000000e+00> : vector<8x32xf32>
    %342 = tpu.matmul %338, %341, %cst_152 {dimension_numbers = #tpu.dot_dimension_numbers<[1], [0], [0], [1], [0, 0, 1, 1], [], []>} : vector<8x32xbf16>, vector<32x32xbf16>, vector<8x32xf32> -> vector<8x32xf32>
    %343 = arith.addf %336, %342 : vector<8x32xf32>
    %344 = vector.extract_strided_slice %134 {offsets = [1, 0], sizes = [8, 32], strides = [1, 1]} : vector<9x32xf32> to vector<8x32xf32>
    %345 = arith.truncf %344 : vector<8x32xf32> to vector<8x32xbf16>
    %c8_153 = arith.constant 8 : index
    %c0_154 = arith.constant 0 : index
    %c0_155 = arith.constant 0 : index
    %346 = vector.load %arg5[%c8_153, %c0_154, %c0_155] : memref<9x32x32xf32, #tpu.memory_space<vmem>>, vector<1x32x32xf32>
    %347 = vector.shape_cast %346 : vector<1x32x32xf32> to vector<32x32xf32>
    %348 = arith.truncf %347 : vector<32x32xf32> to vector<32x32xbf16>
    %cst_156 = arith.constant dense<0.000000e+00> : vector<8x32xf32>
    %349 = tpu.matmul %345, %348, %cst_156 {dimension_numbers = #tpu.dot_dimension_numbers<[1], [0], [0], [1], [0, 0, 1, 1], [], []>} : vector<8x32xbf16>, vector<32x32xbf16>, vector<8x32xf32> -> vector<8x32xf32>
    %350 = arith.addf %343, %349 : vector<8x32xf32>
    %351 = vector.broadcast %7 : vector<1x32xf32> to vector<8x32xf32>
    %352 = arith.addf %350, %351 : vector<8x32xf32>
    %cst_157 = arith.constant 0.000000e+00 : f32
    %353 = vector.broadcast %cst_157 : f32 to vector<8x32xf32>
    %354 = arith.maximumf %352, %353 : vector<8x32xf32>
    %355 = arith.truncf %354 : vector<8x32xf32> to vector<8x32xbf16>
    %c2_158 = arith.constant 2 : index
    %c0_159 = arith.constant 0 : index
    %c0_160 = arith.constant 0 : index
    %356 = vector.load %arg7[%c2_158, %c0_159, %c0_160] : memref<3x32x32xf32, #tpu.memory_space<vmem>>, vector<1x32x32xf32>
    %357 = vector.shape_cast %356 : vector<1x32x32xf32> to vector<32x32xf32>
    %358 = arith.truncf %357 : vector<32x32xf32> to vector<32x32xbf16>
    %cst_161 = arith.constant dense<0.000000e+00> : vector<8x32xf32>
    %359 = tpu.matmul %355, %358, %cst_161 {dimension_numbers = #tpu.dot_dimension_numbers<[1], [0], [0], [1], [0, 0, 1, 1], [], []>} : vector<8x32xbf16>, vector<32x32xbf16>, vector<8x32xf32> -> vector<8x32xf32>
    %360 = arith.addf %286, %359 : vector<8x32xf32>
    %361 = vector.shape_cast %360 : vector<8x32xf32> to vector<1x8x32xf32>
    %c0_162 = arith.constant 0 : index
    %c0_163 = arith.constant 0 : index
    %c0_164 = arith.constant 0 : index
    %362 = vector.load %arg9[%c0_162, %c0_163, %c0_164] : memref<1x8x32xf32, #tpu.memory_space<vmem>>, vector<1x8x32xf32>
    tpu.vector_store %arg9[%c0_162, %c0_163, %c0_164], %361 {strides = array<i32>} : memref<1x8x32xf32, #tpu.memory_space<vmem>>, vector<1x8x32xf32>,
    return
  }
  func.func @transform_0(%arg0: i32) -> (i32, i32, i32, i32) {
    %c0_i32 = arith.constant 0 : i32
    %c0_i32_0 = arith.constant 0 : i32
    %c0_i32_1 = arith.constant 0 : i32
    %c0_i32_2 = arith.constant 0 : i32
    return %arg0, %c0_i32, %c0_i32_0, %c0_i32_1 : i32, i32, i32, i32
  }
  func.func @transform_1(%arg0: i32) -> (i32, i32, i32, i32) {
    %c0_i32 = arith.constant 0 : i32
    %c0_i32_0 = arith.constant 0 : i32
    %c0_i32_1 = arith.constant 0 : i32
    %c0_i32_2 = arith.constant 0 : i32
    return %arg0, %c0_i32, %c0_i32_0, %c0_i32_1 : i32, i32, i32, i32
  }
  func.func @transform_2(%arg0: i32) -> (i32, i32) {
    %c0_i32 = arith.constant 0 : i32
    %c0_i32_0 = arith.constant 0 : i32
    %c0_i32_1 = arith.constant 0 : i32
    return %c0_i32, %c0_i32_0 : i32, i32
  }
  func.func @transform_3(%arg0: i32) -> (i32, i32) {
    %c0_i32 = arith.constant 0 : i32
    %c0_i32_0 = arith.constant 0 : i32
    %c0_i32_1 = arith.constant 0 : i32
    return %c0_i32, %c0_i32_0 : i32, i32
  }
  func.func @transform_4(%arg0: i32) -> (i32, i32, i32) {
    %c0_i32 = arith.constant 0 : i32
    %c0_i32_0 = arith.constant 0 : i32
    %c0_i32_1 = arith.constant 0 : i32
    %c0_i32_2 = arith.constant 0 : i32
    return %c0_i32, %c0_i32_0, %c0_i32_1 : i32, i32, i32
  }
  func.func @transform_5(%arg0: i32) -> (i32, i32) {
    %c0_i32 = arith.constant 0 : i32
    %c0_i32_0 = arith.constant 0 : i32
    %c0_i32_1 = arith.constant 0 : i32
    return %c0_i32, %c0_i32_0 : i32, i32
  }
  func.func @transform_6(%arg0: i32) -> (i32, i32, i32) {
    %c0_i32 = arith.constant 0 : i32
    %c0_i32_0 = arith.constant 0 : i32
    %c0_i32_1 = arith.constant 0 : i32
    %c0_i32_2 = arith.constant 0 : i32
    return %c0_i32, %c0_i32_0, %c0_i32_1 : i32, i32, i32
  }
  func.func @transform_7(%arg0: i32) -> (i32, i32) {
    %c0_i32 = arith.constant 0 : i32
    %c0_i32_0 = arith.constant 0 : i32
    %c0_i32_1 = arith.constant 0 : i32
    return %c0_i32, %c0_i32_0 : i32, i32
  }
  func.func @transform_8(%arg0: i32) -> (i32, i32, i32) {
    %c0_i32 = arith.constant 0 : i32
    %c0_i32_0 = arith.constant 0 : i32
    %c0_i32_1 = arith.constant 0 : i32
    return %arg0, %c0_i32, %c0_i32_0 : i32, i32, i32
  }
}

module attributes {stable_mosaic.version = 11 : i64} {
  func.func @_ctc_head_kernel(%arg0: memref<16x32xf32, #tpu.memory_space<vmem>>, %arg1: memref<32x128xf32, #tpu.memory_space<vmem>>, %arg2: memref<1x128xf32, #tpu.memory_space<vmem>>, %arg3: memref<16x128xf32, #tpu.memory_space<vmem>>) attributes {dimension_semantics = [], scalar_prefetch = 0 : i64, scratch_operands = 0 : i64, tpu.core_type = #tpu.core_type<tc>} {
    %c0 = arith.constant 0 : index
    %c0_0 = arith.constant 0 : index
    %0 = vector.load %arg0[%c0, %c0_0] : memref<16x32xf32, #tpu.memory_space<vmem>>, vector<16x32xf32>
    %1 = arith.truncf %0 : vector<16x32xf32> to vector<16x32xbf16>
    %c0_1 = arith.constant 0 : index
    %c0_2 = arith.constant 0 : index
    %2 = vector.load %arg1[%c0_1, %c0_2] : memref<32x128xf32, #tpu.memory_space<vmem>>, vector<32x128xf32>
    %3 = arith.truncf %2 : vector<32x128xf32> to vector<32x128xbf16>
    %cst = arith.constant dense<0.000000e+00> : vector<16x128xf32>
    %4 = tpu.matmul %1, %3, %cst {dimension_numbers = #tpu.dot_dimension_numbers<[1], [0], [0], [1], [0, 0, 1, 1], [], []>} : vector<16x32xbf16>, vector<32x128xbf16>, vector<16x128xf32> -> vector<16x128xf32>
    %c0_3 = arith.constant 0 : index
    %c0_4 = arith.constant 0 : index
    %5 = vector.load %arg2[%c0_3, %c0_4] : memref<1x128xf32, #tpu.memory_space<vmem>>, vector<1x128xf32>
    %6 = vector.broadcast %5 : vector<1x128xf32> to vector<16x128xf32>
    %7 = arith.addf %4, %6 : vector<16x128xf32>
    %cst_5 = arith.constant dense<0xFF800000> : vector<16xf32>
    %8 = vector.multi_reduction <maximumf>, %7, %cst_5 [1] : vector<16x128xf32> to vector<16xf32>
    %9 = vector.shape_cast %8 : vector<16xf32> to vector<16x1xf32>
    %10 = vector.broadcast %9 : vector<16x1xf32> to vector<16x128xf32>
    %11 = arith.subf %7, %10 : vector<16x128xf32>
    %12 = math.exp %11 : vector<16x128xf32>
    %cst_6 = arith.constant dense<0.000000e+00> : vector<16xf32>
    %13 = vector.multi_reduction <add>, %12, %cst_6 [1] : vector<16x128xf32> to vector<16xf32>
    %14 = vector.shape_cast %13 : vector<16xf32> to vector<16x1xf32>
    %15 = math.log %14 : vector<16x1xf32>
    %16 = vector.broadcast %15 : vector<16x1xf32> to vector<16x128xf32>
    %17 = arith.subf %11, %16 : vector<16x128xf32>
    %c0_7 = arith.constant 0 : index
    %c0_8 = arith.constant 0 : index
    %18 = vector.load %arg3[%c0_7, %c0_8] : memref<16x128xf32, #tpu.memory_space<vmem>>, vector<16x128xf32>
    tpu.vector_store %arg3[%c0_7, %c0_8], %17 {strides = array<i32>} : memref<16x128xf32, #tpu.memory_space<vmem>>, vector<16x128xf32>,
    return
  }
}

module attributes {stable_mosaic.version = 11 : i64} {
  func.func @_conformer_blocks_kernel(%arg0: i32, %arg1: i32, %arg2: memref<1x8x32xf32, #tpu.memory_space<vmem>>, %arg3: memref<1x5x32xf32, #tpu.memory_space<vmem>>, %arg4: memref<1x5x32xf32, #tpu.memory_space<vmem>>, %arg5: memref<1x32x64xf32, #tpu.memory_space<vmem>>, %arg6: memref<1x1x64xf32, #tpu.memory_space<vmem>>, %arg7: memref<1x64x32xf32, #tpu.memory_space<vmem>>, %arg8: memref<1x1x32xf32, #tpu.memory_space<vmem>>, %arg9: memref<1x32x32xf32, #tpu.memory_space<vmem>>, %arg10: memref<1x1x32xf32, #tpu.memory_space<vmem>>, %arg11: memref<1x32x32xf32, #tpu.memory_space<vmem>>, %arg12: memref<1x1x32xf32, #tpu.memory_space<vmem>>, %arg13: memref<1x32x32xf32, #tpu.memory_space<vmem>>, %arg14: memref<1x1x32xf32, #tpu.memory_space<vmem>>, %arg15: memref<1x32x32xf32, #tpu.memory_space<vmem>>, %arg16: memref<1x1x32xf32, #tpu.memory_space<vmem>>, %arg17: memref<1x32x32xf32, #tpu.memory_space<vmem>>, %arg18: memref<1x1x32xf32, #tpu.memory_space<vmem>>, %arg19: memref<1x32x32xf32, #tpu.memory_space<vmem>>, %arg20: memref<1x1x32xf32, #tpu.memory_space<vmem>>, %arg21: memref<1x3x32xf32, #tpu.memory_space<vmem>>, %arg22: memref<1x1x32xf32, #tpu.memory_space<vmem>>, %arg23: memref<1x32x32xf32, #tpu.memory_space<vmem>>, %arg24: memref<1x1x32xf32, #tpu.memory_space<vmem>>, %arg25: memref<1x32x64xf32, #tpu.memory_space<vmem>>, %arg26: memref<1x1x64xf32, #tpu.memory_space<vmem>>, %arg27: memref<1x64x32xf32, #tpu.memory_space<vmem>>, %arg28: memref<1x1x32xf32, #tpu.memory_space<vmem>>, %arg29: memref<1x8x32xf32, #tpu.memory_space<vmem>>, %arg30: memref<1x8x32xf32, #tpu.memory_space<vmem>>) attributes {dimension_semantics = [#tpu.dimension_semantics<parallel>, #tpu.dimension_semantics<arbitrary>], iteration_bounds = array<i64: 2, 2>, scalar_prefetch = 0 : i64, scratch_operands = 1 : i64, tpu.core_type = #tpu.core_type<tc>, window_params = [{transform_indices = @transform_0, window_bounds = array<i64: 1, 8, 32>}, {transform_indices = @transform_1, window_bounds = array<i64: 1, 5, 32>}, {transform_indices = @transform_2, window_bounds = array<i64: 1, 5, 32>}, {transform_indices = @transform_3, window_bounds = array<i64: 1, 32, 64>}, {transform_indices = @transform_4, window_bounds = array<i64: 1, 1, 64>}, {transform_indices = @transform_5, window_bounds = array<i64: 1, 64, 32>}, {transform_indices = @transform_6, window_bounds = array<i64: 1, 1, 32>}, {transform_indices = @transform_7, window_bounds = array<i64: 1, 32, 32>}, {transform_indices = @transform_8, window_bounds = array<i64: 1, 1, 32>}, {transform_indices = @transform_9, window_bounds = array<i64: 1, 32, 32>}, {transform_indices = @transform_10, window_bounds = array<i64: 1, 1, 32>}, {transform_indices = @transform_11, window_bounds = array<i64: 1, 32, 32>}, {transform_indices = @transform_12, window_bounds = array<i64: 1, 1, 32>}, {transform_indices = @transform_13, window_bounds = array<i64: 1, 32, 32>}, {transform_indices = @transform_14, window_bounds = array<i64: 1, 1, 32>}, {transform_indices = @transform_15, window_bounds = array<i64: 1, 32, 32>}, {transform_indices = @transform_16, window_bounds = array<i64: 1, 1, 32>}, {transform_indices = @transform_17, window_bounds = array<i64: 1, 32, 32>}, {transform_indices = @transform_18, window_bounds = array<i64: 1, 1, 32>}, {transform_indices = @transform_19, window_bounds = array<i64: 1, 3, 32>}, {transform_indices = @transform_20, window_bounds = array<i64: 1, 1, 32>}, {transform_indices = @transform_21, window_bounds = array<i64: 1, 32, 32>}, {transform_indices = @transform_22, window_bounds = array<i64: 1, 1, 32>}, {transform_indices = @transform_23, window_bounds = array<i64: 1, 32, 64>}, {transform_indices = @transform_24, window_bounds = array<i64: 1, 1, 64>}, {transform_indices = @transform_25, window_bounds = array<i64: 1, 64, 32>}, {transform_indices = @transform_26, window_bounds = array<i64: 1, 1, 32>}, {transform_indices = @transform_27, window_bounds = array<i64: 1, 8, 32>}]} {
    %c0_i32 = arith.constant 0 : i32
    %0 = arith.cmpi eq, %arg1, %c0_i32 : i32
    %1 = arith.extui %0 : i1 to i32
    %c0_i32_0 = arith.constant 0 : i32
    %2 = arith.cmpi ne, %1, %c0_i32_0 : i32
    scf.if %2 {
      %c0_185 = arith.constant 0 : index
      %c0_186 = arith.constant 0 : index
      %c0_187 = arith.constant 0 : index
      %429 = vector.load %arg2[%c0_185, %c0_186, %c0_187] : memref<1x8x32xf32, #tpu.memory_space<vmem>>, vector<1x8x32xf32>
      %c0_188 = arith.constant 0 : index
      %c0_189 = arith.constant 0 : index
      %c0_190 = arith.constant 0 : index
      %430 = vector.load %arg30[%c0_188, %c0_189, %c0_190] : memref<1x8x32xf32, #tpu.memory_space<vmem>>, vector<1x8x32xf32>
      tpu.vector_store %arg30[%c0_188, %c0_189, %c0_190], %429 {strides = array<i32>} : memref<1x8x32xf32, #tpu.memory_space<vmem>>, vector<1x8x32xf32>,
    } else {
    }
    %c0 = arith.constant 0 : index
    %c0_1 = arith.constant 0 : index
    %c0_2 = arith.constant 0 : index
    %3 = vector.load %arg30[%c0, %c0_1, %c0_2] : memref<1x8x32xf32, #tpu.memory_space<vmem>>, vector<1x8x32xf32>
    %4 = vector.shape_cast %3 : vector<1x8x32xf32> to vector<8x32xf32>
    %c0_3 = arith.constant 0 : index
    %c0_4 = arith.constant 0 : index
    %c0_5 = arith.constant 0 : index
    %5 = vector.load %arg3[%c0_3, %c0_4, %c0_5] : memref<1x5x32xf32, #tpu.memory_space<vmem>>, vector<1x1x32xf32>
    %6 = vector.shape_cast %5 : vector<1x1x32xf32> to vector<1x32xf32>
    %c0_6 = arith.constant 0 : index
    %c0_7 = arith.constant 0 : index
    %c0_8 = arith.constant 0 : index
    %7 = vector.load %arg4[%c0_6, %c0_7, %c0_8] : memref<1x5x32xf32, #tpu.memory_space<vmem>>, vector<1x1x32xf32>
    %8 = vector.shape_cast %7 : vector<1x1x32xf32> to vector<1x32xf32>
    %cst = arith.constant dense<0.000000e+00> : vector<8xf32>
    %9 = vector.multi_reduction <add>, %4, %cst [1] : vector<8x32xf32> to vector<8xf32>
    %10 = vector.shape_cast %9 : vector<8xf32> to vector<8x1xf32>
    %cst_9 = arith.constant 3.200000e+01 : f32
    %11 = vector.broadcast %cst_9 : f32 to vector<8x1xf32>
    %12 = arith.divf %10, %11 : vector<8x1xf32>
    %13 = vector.broadcast %12 : vector<8x1xf32> to vector<8x32xf32>
    %14 = arith.subf %4, %13 : vector<8x32xf32>
    %15 = arith.mulf %14, %14 : vector<8x32xf32>
    %cst_10 = arith.constant dense<0.000000e+00> : vector<8xf32>
    %16 = vector.multi_reduction <add>, %15, %cst_10 [1] : vector<8x32xf32> to vector<8xf32>
    %17 = vector.shape_cast %16 : vector<8xf32> to vector<8x1xf32>
    %cst_11 = arith.constant 3.200000e+01 : f32
    %18 = vector.broadcast %cst_11 : f32 to vector<8x1xf32>
    %19 = arith.divf %17, %18 : vector<8x1xf32>
    %20 = vector.broadcast %12 : vector<8x1xf32> to vector<8x32xf32>
    %21 = arith.subf %4, %20 : vector<8x32xf32>
    %cst_12 = arith.constant 9.99999974E-6 : f32
    %22 = vector.broadcast %cst_12 : f32 to vector<8x1xf32>
    %23 = arith.addf %19, %22 : vector<8x1xf32>
    %24 = math.rsqrt %23 : vector<8x1xf32>
    %25 = vector.broadcast %24 : vector<8x1xf32> to vector<8x32xf32>
    %26 = arith.mulf %21, %25 : vector<8x32xf32>
    %27 = vector.broadcast %6 : vector<1x32xf32> to vector<8x32xf32>
    %28 = arith.mulf %26, %27 : vector<8x32xf32>
    %29 = vector.broadcast %8 : vector<1x32xf32> to vector<8x32xf32>
    %30 = arith.addf %28, %29 : vector<8x32xf32>
    %31 = arith.truncf %30 : vector<8x32xf32> to vector<8x32xbf16>
    %c0_13 = arith.constant 0 : index
    %c0_14 = arith.constant 0 : index
    %c0_15 = arith.constant 0 : index
    %32 = vector.load %arg5[%c0_13, %c0_14, %c0_15] : memref<1x32x64xf32, #tpu.memory_space<vmem>>, vector<1x32x64xf32>
    %33 = vector.shape_cast %32 : vector<1x32x64xf32> to vector<32x64xf32>
    %34 = arith.truncf %33 : vector<32x64xf32> to vector<32x64xbf16>
    %cst_16 = arith.constant dense<0.000000e+00> : vector<8x64xf32>
    %35 = tpu.matmul %31, %34, %cst_16 {dimension_numbers = #tpu.dot_dimension_numbers<[1], [0], [0], [1], [0, 0, 1, 1], [], []>} : vector<8x32xbf16>, vector<32x64xbf16>, vector<8x64xf32> -> vector<8x64xf32>
    %c0_17 = arith.constant 0 : index
    %c0_18 = arith.constant 0 : index
    %c0_19 = arith.constant 0 : index
    %36 = vector.load %arg6[%c0_17, %c0_18, %c0_19] : memref<1x1x64xf32, #tpu.memory_space<vmem>>, vector<1x1x64xf32>
    %37 = vector.shape_cast %36 : vector<1x1x64xf32> to vector<1x64xf32>
    %38 = vector.broadcast %37 : vector<1x64xf32> to vector<8x64xf32>
    %39 = arith.addf %35, %38 : vector<8x64xf32>
    %40 = arith.negf %39 : vector<8x64xf32>
    %41 = math.exp %40 : vector<8x64xf32>
    %cst_20 = arith.constant 1.000000e+00 : f32
    %42 = vector.broadcast %cst_20 : f32 to vector<8x64xf32>
    %43 = arith.addf %42, %41 : vector<8x64xf32>
    %44 = arith.divf %42, %43 : vector<8x64xf32>
    %45 = arith.mulf %39, %44 : vector<8x64xf32>
    %46 = arith.truncf %45 : vector<8x64xf32> to vector<8x64xbf16>
    %c0_21 = arith.constant 0 : index
    %c0_22 = arith.constant 0 : index
    %c0_23 = arith.constant 0 : index
    %47 = vector.load %arg7[%c0_21, %c0_22, %c0_23] : memref<1x64x32xf32, #tpu.memory_space<vmem>>, vector<1x64x32xf32>
    %48 = vector.shape_cast %47 : vector<1x64x32xf32> to vector<64x32xf32>
    %49 = arith.truncf %48 : vector<64x32xf32> to vector<64x32xbf16>
    %cst_24 = arith.constant dense<0.000000e+00> : vector<8x32xf32>
    %50 = tpu.matmul %46, %49, %cst_24 {dimension_numbers = #tpu.dot_dimension_numbers<[1], [0], [0], [1], [0, 0, 1, 1], [], []>} : vector<8x64xbf16>, vector<64x32xbf16>, vector<8x32xf32> -> vector<8x32xf32>
    %c0_25 = arith.constant 0 : index
    %c0_26 = arith.constant 0 : index
    %c0_27 = arith.constant 0 : index
    %51 = vector.load %arg8[%c0_25, %c0_26, %c0_27] : memref<1x1x32xf32, #tpu.memory_space<vmem>>, vector<1x1x32xf32>
    %52 = vector.shape_cast %51 : vector<1x1x32xf32> to vector<1x32xf32>
    %53 = vector.broadcast %52 : vector<1x32xf32> to vector<8x32xf32>
    %54 = arith.addf %50, %53 : vector<8x32xf32>
    %cst_28 = arith.constant 5.000000e-01 : f32
    %55 = vector.broadcast %cst_28 : f32 to vector<8x32xf32>
    %56 = arith.mulf %55, %54 : vector<8x32xf32>
    %57 = arith.addf %4, %56 : vector<8x32xf32>
    %c0_29 = arith.constant 0 : index
    %c1 = arith.constant 1 : index
    %c0_30 = arith.constant 0 : index
    %58 = vector.load %arg3[%c0_29, %c1, %c0_30] : memref<1x5x32xf32, #tpu.memory_space<vmem>>, vector<1x1x32xf32>
    %59 = vector.shape_cast %58 : vector<1x1x32xf32> to vector<1x32xf32>
    %c0_31 = arith.constant 0 : index
    %c1_32 = arith.constant 1 : index
    %c0_33 = arith.constant 0 : index
    %60 = vector.load %arg4[%c0_31, %c1_32, %c0_33] : memref<1x5x32xf32, #tpu.memory_space<vmem>>, vector<1x1x32xf32>
    %61 = vector.shape_cast %60 : vector<1x1x32xf32> to vector<1x32xf32>
    %cst_34 = arith.constant dense<0.000000e+00> : vector<8xf32>
    %62 = vector.multi_reduction <add>, %57, %cst_34 [1] : vector<8x32xf32> to vector<8xf32>
    %63 = vector.shape_cast %62 : vector<8xf32> to vector<8x1xf32>
    %cst_35 = arith.constant 3.200000e+01 : f32
    %64 = vector.broadcast %cst_35 : f32 to vector<8x1xf32>
    %65 = arith.divf %63, %64 : vector<8x1xf32>
    %66 = vector.broadcast %65 : vector<8x1xf32> to vector<8x32xf32>
    %67 = arith.subf %57, %66 : vector<8x32xf32>
    %68 = arith.mulf %67, %67 : vector<8x32xf32>
    %cst_36 = arith.constant dense<0.000000e+00> : vector<8xf32>
    %69 = vector.multi_reduction <add>, %68, %cst_36 [1] : vector<8x32xf32> to vector<8xf32>
    %70 = vector.shape_cast %69 : vector<8xf32> to vector<8x1xf32>
    %cst_37 = arith.constant 3.200000e+01 : f32
    %71 = vector.broadcast %cst_37 : f32 to vector<8x1xf32>
    %72 = arith.divf %70, %71 : vector<8x1xf32>
    %73 = vector.broadcast %65 : vector<8x1xf32> to vector<8x32xf32>
    %74 = arith.subf %57, %73 : vector<8x32xf32>
    %cst_38 = arith.constant 9.99999974E-6 : f32
    %75 = vector.broadcast %cst_38 : f32 to vector<8x1xf32>
    %76 = arith.addf %72, %75 : vector<8x1xf32>
    %77 = math.rsqrt %76 : vector<8x1xf32>
    %78 = vector.broadcast %77 : vector<8x1xf32> to vector<8x32xf32>
    %79 = arith.mulf %74, %78 : vector<8x32xf32>
    %80 = vector.broadcast %59 : vector<1x32xf32> to vector<8x32xf32>
    %81 = arith.mulf %79, %80 : vector<8x32xf32>
    %82 = vector.broadcast %61 : vector<1x32xf32> to vector<8x32xf32>
    %83 = arith.addf %81, %82 : vector<8x32xf32>
    %84 = arith.truncf %83 : vector<8x32xf32> to vector<8x32xbf16>
    %c0_39 = arith.constant 0 : index
    %c0_40 = arith.constant 0 : index
    %c0_41 = arith.constant 0 : index
    %85 = vector.load %arg9[%c0_39, %c0_40, %c0_41] : memref<1x32x32xf32, #tpu.memory_space<vmem>>, vector<1x32x32xf32>
    %86 = vector.shape_cast %85 : vector<1x32x32xf32> to vector<32x32xf32>
    %87 = arith.truncf %86 : vector<32x32xf32> to vector<32x32xbf16>
    %cst_42 = arith.constant dense<0.000000e+00> : vector<8x32xf32>
    %88 = tpu.matmul %84, %87, %cst_42 {dimension_numbers = #tpu.dot_dimension_numbers<[1], [0], [0], [1], [0, 0, 1, 1], [], []>} : vector<8x32xbf16>, vector<32x32xbf16>, vector<8x32xf32> -> vector<8x32xf32>
    %c0_43 = arith.constant 0 : index
    %c0_44 = arith.constant 0 : index
    %c0_45 = arith.constant 0 : index
    %89 = vector.load %arg10[%c0_43, %c0_44, %c0_45] : memref<1x1x32xf32, #tpu.memory_space<vmem>>, vector<1x1x32xf32>
    %90 = vector.shape_cast %89 : vector<1x1x32xf32> to vector<1x32xf32>
    %91 = vector.broadcast %90 : vector<1x32xf32> to vector<8x32xf32>
    %92 = arith.addf %88, %91 : vector<8x32xf32>
    %93 = arith.truncf %83 : vector<8x32xf32> to vector<8x32xbf16>
    %c0_46 = arith.constant 0 : index
    %c0_47 = arith.constant 0 : index
    %c0_48 = arith.constant 0 : index
    %94 = vector.load %arg11[%c0_46, %c0_47, %c0_48] : memref<1x32x32xf32, #tpu.memory_space<vmem>>, vector<1x32x32xf32>
    %95 = vector.shape_cast %94 : vector<1x32x32xf32> to vector<32x32xf32>
    %96 = arith.truncf %95 : vector<32x32xf32> to vector<32x32xbf16>
    %cst_49 = arith.constant dense<0.000000e+00> : vector<8x32xf32>
    %97 = tpu.matmul %93, %96, %cst_49 {dimension_numbers = #tpu.dot_dimension_numbers<[1], [0], [0], [1], [0, 0, 1, 1], [], []>} : vector<8x32xbf16>, vector<32x32xbf16>, vector<8x32xf32> -> vector<8x32xf32>
    %c0_50 = arith.constant 0 : index
    %c0_51 = arith.constant 0 : index
    %c0_52 = arith.constant 0 : index
    %98 = vector.load %arg12[%c0_50, %c0_51, %c0_52] : memref<1x1x32xf32, #tpu.memory_space<vmem>>, vector<1x1x32xf32>
    %99 = vector.shape_cast %98 : vector<1x1x32xf32> to vector<1x32xf32>
    %100 = vector.broadcast %99 : vector<1x32xf32> to vector<8x32xf32>
    %101 = arith.addf %97, %100 : vector<8x32xf32>
    %102 = arith.truncf %83 : vector<8x32xf32> to vector<8x32xbf16>
    %c0_53 = arith.constant 0 : index
    %c0_54 = arith.constant 0 : index
    %c0_55 = arith.constant 0 : index
    %103 = vector.load %arg13[%c0_53, %c0_54, %c0_55] : memref<1x32x32xf32, #tpu.memory_space<vmem>>, vector<1x32x32xf32>
    %104 = vector.shape_cast %103 : vector<1x32x32xf32> to vector<32x32xf32>
    %105 = arith.truncf %104 : vector<32x32xf32> to vector<32x32xbf16>
    %cst_56 = arith.constant dense<0.000000e+00> : vector<8x32xf32>
    %106 = tpu.matmul %102, %105, %cst_56 {dimension_numbers = #tpu.dot_dimension_numbers<[1], [0], [0], [1], [0, 0, 1, 1], [], []>} : vector<8x32xbf16>, vector<32x32xbf16>, vector<8x32xf32> -> vector<8x32xf32>
    %c0_57 = arith.constant 0 : index
    %c0_58 = arith.constant 0 : index
    %c0_59 = arith.constant 0 : index
    %107 = vector.load %arg14[%c0_57, %c0_58, %c0_59] : memref<1x1x32xf32, #tpu.memory_space<vmem>>, vector<1x1x32xf32>
    %108 = vector.shape_cast %107 : vector<1x1x32xf32> to vector<1x32xf32>
    %109 = vector.broadcast %108 : vector<1x32xf32> to vector<8x32xf32>
    %110 = arith.addf %106, %109 : vector<8x32xf32>
    %111 = tpu.iota {dimensions = array<i32: 0>} : vector<8x8xi32>
    %112 = tpu.iota {dimensions = array<i32: 1>} : vector<8x8xi32>
    %113 = arith.cmpi sle, %112, %111 : vector<8x8xi32>
    %c4_i32 = arith.constant 4 : i32
    %114 = vector.broadcast %c4_i32 : i32 to vector<8x8xi32>
    %115 = arith.subi %111, %114 : vector<8x8xi32>
    %116 = arith.cmpi sge, %112, %115 : vector<8x8xi32>
    %117 = arith.andi %113, %116 : vector<8x8xi1>
    %118 = tpu.iota {dimensions = array<i32: 1>} : vector<1x32xi32>
    %119 = arith.truncf %101 : vector<8x32xf32> to vector<8x32xbf16>
    %cst_60 = arith.constant 0.000000e+00 : f32
    %120 = vector.broadcast %cst_60 : f32 to vector<8x32xf32>
    %c0_i32_61 = arith.constant 0 : i32
    %121 = vector.broadcast %c0_i32_61 : i32 to vector<1x32xi32>
    %122 = arith.cmpi sge, %118, %121 : vector<1x32xi32>
    %c8_i32 = arith.constant 8 : i32
    %123 = vector.broadcast %c8_i32 : i32 to vector<1x32xi32>
    %124 = arith.cmpi slt, %118, %123 : vector<1x32xi32>
    %125 = arith.andi %122, %124 : vector<1x32xi1>
    %126 = arith.extui %125 : vector<1x32xi1> to vector<1x32xi32>
    %127 = arith.sitofp %126 : vector<1x32xi32> to vector<1x32xf32>
    %128 = vector.broadcast %127 : vector<1x32xf32> to vector<8x32xf32>
    %129 = arith.mulf %92, %128 : vector<8x32xf32>
    %130 = arith.truncf %129 : vector<8x32xf32> to vector<8x32xbf16>
    %cst_62 = arith.constant dense<0.000000e+00> : vector<8x8xf32>
    %131 = tpu.matmul %130, %119, %cst_62 {dimension_numbers = #tpu.dot_dimension_numbers<[1], [1], [0], [0], [0, 0, 1, 0], [], []>} : vector<8x32xbf16>, vector<8x32xbf16>, vector<8x8xf32> -> vector<8x8xf32>
    %cst_63 = arith.constant 0.353553385 : f32
    %132 = vector.broadcast %cst_63 : f32 to vector<8x8xf32>
    %133 = arith.mulf %131, %132 : vector<8x8xf32>
    %cst_64 = arith.constant -1.000000e+30 : f32
    %134 = vector.broadcast %cst_64 : f32 to vector<8x8xf32>
    %135 = arith.select %117, %133, %134 : vector<8x8xi1>, vector<8x8xf32>
    %cst_65 = arith.constant dense<0xFF800000> : vector<8xf32>
    %136 = vector.multi_reduction <maximumf>, %135, %cst_65 [1] : vector<8x8xf32> to vector<8xf32>
    %137 = vector.shape_cast %136 : vector<8xf32> to vector<8x1xf32>
    %138 = vector.broadcast %137 : vector<8x1xf32> to vector<8x8xf32>
    %139 = arith.subf %135, %138 : vector<8x8xf32>
    %140 = math.exp %139 : vector<8x8xf32>
    %cst_66 = arith.constant dense<0.000000e+00> : vector<8xf32>
    %141 = vector.multi_reduction <add>, %140, %cst_66 [1] : vector<8x8xf32> to vector<8xf32>
    %142 = vector.shape_cast %141 : vector<8xf32> to vector<8x1xf32>
    %143 = tpu.reciprocal %142 {approx = true} : vector<8x1xf32> -> vector<8x1xf32>
    %144 = vector.broadcast %143 : vector<8x1xf32> to vector<8x8xf32>
    %145 = arith.mulf %140, %144 : vector<8x8xf32>
    %146 = vector.broadcast %127 : vector<1x32xf32> to vector<8x32xf32>
    %147 = arith.mulf %110, %146 : vector<8x32xf32>
    %148 = arith.truncf %147 : vector<8x32xf32> to vector<8x32xbf16>
    %149 = arith.truncf %145 : vector<8x8xf32> to vector<8x8xbf16>
    %cst_67 = arith.constant dense<0.000000e+00> : vector<8x32xf32>
    %150 = tpu.matmul %149, %148, %cst_67 {dimension_numbers = #tpu.dot_dimension_numbers<[1], [0], [0], [1], [0, 0, 1, 1], [], []>} : vector<8x8xbf16>, vector<8x32xbf16>, vector<8x32xf32> -> vector<8x32xf32>
    %151 = arith.addf %120, %150 : vector<8x32xf32>
    %c8_i32_68 = arith.constant 8 : i32
    %152 = vector.broadcast %c8_i32_68 : i32 to vector<1x32xi32>
    %153 = arith.cmpi sge, %118, %152 : vector<1x32xi32>
    %c16_i32 = arith.constant 16 : i32
    %154 = vector.broadcast %c16_i32 : i32 to vector<1x32xi32>
    %155 = arith.cmpi slt, %118, %154 : vector<1x32xi32>
    %156 = arith.andi %153, %155 : vector<1x32xi1>
    %157 = arith.extui %156 : vector<1x32xi1> to vector<1x32xi32>
    %158 = arith.sitofp %157 : vector<1x32xi32> to vector<1x32xf32>
    %159 = vector.broadcast %158 : vector<1x32xf32> to vector<8x32xf32>
    %160 = arith.mulf %92, %159 : vector<8x32xf32>
    %161 = arith.truncf %160 : vector<8x32xf32> to vector<8x32xbf16>
    %cst_69 = arith.constant dense<0.000000e+00> : vector<8x8xf32>
    %162 = tpu.matmul %161, %119, %cst_69 {dimension_numbers = #tpu.dot_dimension_numbers<[1], [1], [0], [0], [0, 0, 1, 0], [], []>} : vector<8x32xbf16>, vector<8x32xbf16>, vector<8x8xf32> -> vector<8x8xf32>
    %cst_70 = arith.constant 0.353553385 : f32
    %163 = vector.broadcast %cst_70 : f32 to vector<8x8xf32>
    %164 = arith.mulf %162, %163 : vector<8x8xf32>
    %cst_71 = arith.constant -1.000000e+30 : f32
    %165 = vector.broadcast %cst_71 : f32 to vector<8x8xf32>
    %166 = arith.select %117, %164, %165 : vector<8x8xi1>, vector<8x8xf32>
    %cst_72 = arith.constant dense<0xFF800000> : vector<8xf32>
    %167 = vector.multi_reduction <maximumf>, %166, %cst_72 [1] : vector<8x8xf32> to vector<8xf32>
    %168 = vector.shape_cast %167 : vector<8xf32> to vector<8x1xf32>
    %169 = vector.broadcast %168 : vector<8x1xf32> to vector<8x8xf32>
    %170 = arith.subf %166, %169 : vector<8x8xf32>
    %171 = math.exp %170 : vector<8x8xf32>
    %cst_73 = arith.constant dense<0.000000e+00> : vector<8xf32>
    %172 = vector.multi_reduction <add>, %171, %cst_73 [1] : vector<8x8xf32> to vector<8xf32>
    %173 = vector.shape_cast %172 : vector<8xf32> to vector<8x1xf32>
    %174 = tpu.reciprocal %173 {approx = true} : vector<8x1xf32> -> vector<8x1xf32>
    %175 = vector.broadcast %174 : vector<8x1xf32> to vector<8x8xf32>
    %176 = arith.mulf %171, %175 : vector<8x8xf32>
    %177 = vector.broadcast %158 : vector<1x32xf32> to vector<8x32xf32>
    %178 = arith.mulf %110, %177 : vector<8x32xf32>
    %179 = arith.truncf %178 : vector<8x32xf32> to vector<8x32xbf16>
    %180 = arith.truncf %176 : vector<8x8xf32> to vector<8x8xbf16>
    %cst_74 = arith.constant dense<0.000000e+00> : vector<8x32xf32>
    %181 = tpu.matmul %180, %179, %cst_74 {dimension_numbers = #tpu.dot_dimension_numbers<[1], [0], [0], [1], [0, 0, 1, 1], [], []>} : vector<8x8xbf16>, vector<8x32xbf16>, vector<8x32xf32> -> vector<8x32xf32>
    %182 = arith.addf %151, %181 : vector<8x32xf32>
    %c16_i32_75 = arith.constant 16 : i32
    %183 = vector.broadcast %c16_i32_75 : i32 to vector<1x32xi32>
    %184 = arith.cmpi sge, %118, %183 : vector<1x32xi32>
    %c24_i32 = arith.constant 24 : i32
    %185 = vector.broadcast %c24_i32 : i32 to vector<1x32xi32>
    %186 = arith.cmpi slt, %118, %185 : vector<1x32xi32>
    %187 = arith.andi %184, %186 : vector<1x32xi1>
    %188 = arith.extui %187 : vector<1x32xi1> to vector<1x32xi32>
    %189 = arith.sitofp %188 : vector<1x32xi32> to vector<1x32xf32>
    %190 = vector.broadcast %189 : vector<1x32xf32> to vector<8x32xf32>
    %191 = arith.mulf %92, %190 : vector<8x32xf32>
    %192 = arith.truncf %191 : vector<8x32xf32> to vector<8x32xbf16>
    %cst_76 = arith.constant dense<0.000000e+00> : vector<8x8xf32>
    %193 = tpu.matmul %192, %119, %cst_76 {dimension_numbers = #tpu.dot_dimension_numbers<[1], [1], [0], [0], [0, 0, 1, 0], [], []>} : vector<8x32xbf16>, vector<8x32xbf16>, vector<8x8xf32> -> vector<8x8xf32>
    %cst_77 = arith.constant 0.353553385 : f32
    %194 = vector.broadcast %cst_77 : f32 to vector<8x8xf32>
    %195 = arith.mulf %193, %194 : vector<8x8xf32>
    %cst_78 = arith.constant -1.000000e+30 : f32
    %196 = vector.broadcast %cst_78 : f32 to vector<8x8xf32>
    %197 = arith.select %117, %195, %196 : vector<8x8xi1>, vector<8x8xf32>
    %cst_79 = arith.constant dense<0xFF800000> : vector<8xf32>
    %198 = vector.multi_reduction <maximumf>, %197, %cst_79 [1] : vector<8x8xf32> to vector<8xf32>
    %199 = vector.shape_cast %198 : vector<8xf32> to vector<8x1xf32>
    %200 = vector.broadcast %199 : vector<8x1xf32> to vector<8x8xf32>
    %201 = arith.subf %197, %200 : vector<8x8xf32>
    %202 = math.exp %201 : vector<8x8xf32>
    %cst_80 = arith.constant dense<0.000000e+00> : vector<8xf32>
    %203 = vector.multi_reduction <add>, %202, %cst_80 [1] : vector<8x8xf32> to vector<8xf32>
    %204 = vector.shape_cast %203 : vector<8xf32> to vector<8x1xf32>
    %205 = tpu.reciprocal %204 {approx = true} : vector<8x1xf32> -> vector<8x1xf32>
    %206 = vector.broadcast %205 : vector<8x1xf32> to vector<8x8xf32>
    %207 = arith.mulf %202, %206 : vector<8x8xf32>
    %208 = vector.broadcast %189 : vector<1x32xf32> to vector<8x32xf32>
    %209 = arith.mulf %110, %208 : vector<8x32xf32>
    %210 = arith.truncf %209 : vector<8x32xf32> to vector<8x32xbf16>
    %211 = arith.truncf %207 : vector<8x8xf32> to vector<8x8xbf16>
    %cst_81 = arith.constant dense<0.000000e+00> : vector<8x32xf32>
    %212 = tpu.matmul %211, %210, %cst_81 {dimension_numbers = #tpu.dot_dimension_numbers<[1], [0], [0], [1], [0, 0, 1, 1], [], []>} : vector<8x8xbf16>, vector<8x32xbf16>, vector<8x32xf32> -> vector<8x32xf32>
    %213 = arith.addf %182, %212 : vector<8x32xf32>
    %c24_i32_82 = arith.constant 24 : i32
    %214 = vector.broadcast %c24_i32_82 : i32 to vector<1x32xi32>
    %215 = arith.cmpi sge, %118, %214 : vector<1x32xi32>
    %c32_i32 = arith.constant 32 : i32
    %216 = vector.broadcast %c32_i32 : i32 to vector<1x32xi32>
    %217 = arith.cmpi slt, %118, %216 : vector<1x32xi32>
    %218 = arith.andi %215, %217 : vector<1x32xi1>
    %219 = arith.extui %218 : vector<1x32xi1> to vector<1x32xi32>
    %220 = arith.sitofp %219 : vector<1x32xi32> to vector<1x32xf32>
    %221 = vector.broadcast %220 : vector<1x32xf32> to vector<8x32xf32>
    %222 = arith.mulf %92, %221 : vector<8x32xf32>
    %223 = arith.truncf %222 : vector<8x32xf32> to vector<8x32xbf16>
    %cst_83 = arith.constant dense<0.000000e+00> : vector<8x8xf32>
    %224 = tpu.matmul %223, %119, %cst_83 {dimension_numbers = #tpu.dot_dimension_numbers<[1], [1], [0], [0], [0, 0, 1, 0], [], []>} : vector<8x32xbf16>, vector<8x32xbf16>, vector<8x8xf32> -> vector<8x8xf32>
    %cst_84 = arith.constant 0.353553385 : f32
    %225 = vector.broadcast %cst_84 : f32 to vector<8x8xf32>
    %226 = arith.mulf %224, %225 : vector<8x8xf32>
    %cst_85 = arith.constant -1.000000e+30 : f32
    %227 = vector.broadcast %cst_85 : f32 to vector<8x8xf32>
    %228 = arith.select %117, %226, %227 : vector<8x8xi1>, vector<8x8xf32>
    %cst_86 = arith.constant dense<0xFF800000> : vector<8xf32>
    %229 = vector.multi_reduction <maximumf>, %228, %cst_86 [1] : vector<8x8xf32> to vector<8xf32>
    %230 = vector.shape_cast %229 : vector<8xf32> to vector<8x1xf32>
    %231 = vector.broadcast %230 : vector<8x1xf32> to vector<8x8xf32>
    %232 = arith.subf %228, %231 : vector<8x8xf32>
    %233 = math.exp %232 : vector<8x8xf32>
    %cst_87 = arith.constant dense<0.000000e+00> : vector<8xf32>
    %234 = vector.multi_reduction <add>, %233, %cst_87 [1] : vector<8x8xf32> to vector<8xf32>
    %235 = vector.shape_cast %234 : vector<8xf32> to vector<8x1xf32>
    %236 = tpu.reciprocal %235 {approx = true} : vector<8x1xf32> -> vector<8x1xf32>
    %237 = vector.broadcast %236 : vector<8x1xf32> to vector<8x8xf32>
    %238 = arith.mulf %233, %237 : vector<8x8xf32>
    %239 = vector.broadcast %220 : vector<1x32xf32> to vector<8x32xf32>
    %240 = arith.mulf %110, %239 : vector<8x32xf32>
    %241 = arith.truncf %240 : vector<8x32xf32> to vector<8x32xbf16>
    %242 = arith.truncf %238 : vector<8x8xf32> to vector<8x8xbf16>
    %cst_88 = arith.constant dense<0.000000e+00> : vector<8x32xf32>
    %243 = tpu.matmul %242, %241, %cst_88 {dimension_numbers = #tpu.dot_dimension_numbers<[1], [0], [0], [1], [0, 0, 1, 1], [], []>} : vector<8x8xbf16>, vector<8x32xbf16>, vector<8x32xf32> -> vector<8x32xf32>
    %244 = arith.addf %213, %243 : vector<8x32xf32>
    %245 = arith.truncf %244 : vector<8x32xf32> to vector<8x32xbf16>
    %c0_89 = arith.constant 0 : index
    %c0_90 = arith.constant 0 : index
    %c0_91 = arith.constant 0 : index
    %246 = vector.load %arg15[%c0_89, %c0_90, %c0_91] : memref<1x32x32xf32, #tpu.memory_space<vmem>>, vector<1x32x32xf32>
    %247 = vector.shape_cast %246 : vector<1x32x32xf32> to vector<32x32xf32>
    %248 = arith.truncf %247 : vector<32x32xf32> to vector<32x32xbf16>
    %cst_92 = arith.constant dense<0.000000e+00> : vector<8x32xf32>
    %249 = tpu.matmul %245, %248, %cst_92 {dimension_numbers = #tpu.dot_dimension_numbers<[1], [0], [0], [1], [0, 0, 1, 1], [], []>} : vector<8x32xbf16>, vector<32x32xbf16>, vector<8x32xf32> -> vector<8x32xf32>
    %c0_93 = arith.constant 0 : index
    %c0_94 = arith.constant 0 : index
    %c0_95 = arith.constant 0 : index
    %250 = vector.load %arg16[%c0_93, %c0_94, %c0_95] : memref<1x1x32xf32, #tpu.memory_space<vmem>>, vector<1x1x32xf32>
    %251 = vector.shape_cast %250 : vector<1x1x32xf32> to vector<1x32xf32>
    %252 = vector.broadcast %251 : vector<1x32xf32> to vector<8x32xf32>
    %253 = arith.addf %249, %252 : vector<8x32xf32>
    %254 = arith.addf %57, %253 : vector<8x32xf32>
    %c0_96 = arith.constant 0 : index
    %c2 = arith.constant 2 : index
    %c0_97 = arith.constant 0 : index
    %255 = vector.load %arg3[%c0_96, %c2, %c0_97] : memref<1x5x32xf32, #tpu.memory_space<vmem>>, vector<1x1x32xf32>
    %256 = vector.shape_cast %255 : vector<1x1x32xf32> to vector<1x32xf32>
    %c0_98 = arith.constant 0 : index
    %c2_99 = arith.constant 2 : index
    %c0_100 = arith.constant 0 : index
    %257 = vector.load %arg4[%c0_98, %c2_99, %c0_100] : memref<1x5x32xf32, #tpu.memory_space<vmem>>, vector<1x1x32xf32>
    %258 = vector.shape_cast %257 : vector<1x1x32xf32> to vector<1x32xf32>
    %cst_101 = arith.constant dense<0.000000e+00> : vector<8xf32>
    %259 = vector.multi_reduction <add>, %254, %cst_101 [1] : vector<8x32xf32> to vector<8xf32>
    %260 = vector.shape_cast %259 : vector<8xf32> to vector<8x1xf32>
    %cst_102 = arith.constant 3.200000e+01 : f32
    %261 = vector.broadcast %cst_102 : f32 to vector<8x1xf32>
    %262 = arith.divf %260, %261 : vector<8x1xf32>
    %263 = vector.broadcast %262 : vector<8x1xf32> to vector<8x32xf32>
    %264 = arith.subf %254, %263 : vector<8x32xf32>
    %265 = arith.mulf %264, %264 : vector<8x32xf32>
    %cst_103 = arith.constant dense<0.000000e+00> : vector<8xf32>
    %266 = vector.multi_reduction <add>, %265, %cst_103 [1] : vector<8x32xf32> to vector<8xf32>
    %267 = vector.shape_cast %266 : vector<8xf32> to vector<8x1xf32>
    %cst_104 = arith.constant 3.200000e+01 : f32
    %268 = vector.broadcast %cst_104 : f32 to vector<8x1xf32>
    %269 = arith.divf %267, %268 : vector<8x1xf32>
    %270 = vector.broadcast %262 : vector<8x1xf32> to vector<8x32xf32>
    %271 = arith.subf %254, %270 : vector<8x32xf32>
    %cst_105 = arith.constant 9.99999974E-6 : f32
    %272 = vector.broadcast %cst_105 : f32 to vector<8x1xf32>
    %273 = arith.addf %269, %272 : vector<8x1xf32>
    %274 = math.rsqrt %273 : vector<8x1xf32>
    %275 = vector.broadcast %274 : vector<8x1xf32> to vector<8x32xf32>
    %276 = arith.mulf %271, %275 : vector<8x32xf32>
    %277 = vector.broadcast %256 : vector<1x32xf32> to vector<8x32xf32>
    %278 = arith.mulf %276, %277 : vector<8x32xf32>
    %279 = vector.broadcast %258 : vector<1x32xf32> to vector<8x32xf32>
    %280 = arith.addf %278, %279 : vector<8x32xf32>
    %281 = arith.truncf %280 : vector<8x32xf32> to vector<8x32xbf16>
    %c0_106 = arith.constant 0 : index
    %c0_107 = arith.constant 0 : index
    %c0_108 = arith.constant 0 : index
    %282 = vector.load %arg17[%c0_106, %c0_107, %c0_108] : memref<1x32x32xf32, #tpu.memory_space<vmem>>, vector<1x32x32xf32>
    %283 = vector.shape_cast %282 : vector<1x32x32xf32> to vector<32x32xf32>
    %284 = arith.truncf %283 : vector<32x32xf32> to vector<32x32xbf16>
    %cst_109 = arith.constant dense<0.000000e+00> : vector<8x32xf32>
    %285 = tpu.matmul %281, %284, %cst_109 {dimension_numbers = #tpu.dot_dimension_numbers<[1], [0], [0], [1], [0, 0, 1, 1], [], []>} : vector<8x32xbf16>, vector<32x32xbf16>, vector<8x32xf32> -> vector<8x32xf32>
    %c0_110 = arith.constant 0 : index
    %c0_111 = arith.constant 0 : index
    %c0_112 = arith.constant 0 : index
    %286 = vector.load %arg18[%c0_110, %c0_111, %c0_112] : memref<1x1x32xf32, #tpu.memory_space<vmem>>, vector<1x1x32xf32>
    %287 = vector.shape_cast %286 : vector<1x1x32xf32> to vector<1x32xf32>
    %288 = vector.broadcast %287 : vector<1x32xf32> to vector<8x32xf32>
    %289 = arith.addf %285, %288 : vector<8x32xf32>
    %290 = arith.truncf %280 : vector<8x32xf32> to vector<8x32xbf16>
    %c0_113 = arith.constant 0 : index
    %c0_114 = arith.constant 0 : index
    %c0_115 = arith.constant 0 : index
    %291 = vector.load %arg19[%c0_113, %c0_114, %c0_115] : memref<1x32x32xf32, #tpu.memory_space<vmem>>, vector<1x32x32xf32>
    %292 = vector.shape_cast %291 : vector<1x32x32xf32> to vector<32x32xf32>
    %293 = arith.truncf %292 : vector<32x32xf32> to vector<32x32xbf16>
    %cst_116 = arith.constant dense<0.000000e+00> : vector<8x32xf32>
    %294 = tpu.matmul %290, %293, %cst_116 {dimension_numbers = #tpu.dot_dimension_numbers<[1], [0], [0], [1], [0, 0, 1, 1], [], []>} : vector<8x32xbf16>, vector<32x32xbf16>, vector<8x32xf32> -> vector<8x32xf32>
    %c0_117 = arith.constant 0 : index
    %c0_118 = arith.constant 0 : index
    %c0_119 = arith.constant 0 : index
    %295 = vector.load %arg20[%c0_117, %c0_118, %c0_119] : memref<1x1x32xf32, #tpu.memory_space<vmem>>, vector<1x1x32xf32>
    %296 = vector.shape_cast %295 : vector<1x1x32xf32> to vector<1x32xf32>
    %297 = vector.broadcast %296 : vector<1x32xf32> to vector<8x32xf32>
    %298 = arith.addf %294, %297 : vector<8x32xf32>
    %299 = arith.negf %298 : vector<8x32xf32>
    %300 = math.exp %299 : vector<8x32xf32>
    %cst_120 = arith.constant 1.000000e+00 : f32
    %301 = vector.broadcast %cst_120 : f32 to vector<8x32xf32>
    %302 = arith.addf %301, %300 : vector<8x32xf32>
    %303 = arith.divf %301, %302 : vector<8x32xf32>
    %304 = arith.mulf %289, %303 : vector<8x32xf32>
    %cst_121 = arith.constant 0.000000e+00 : f32
    %305 = vector.broadcast %cst_121 : f32 to vector<2x32xf32>
    %306 = tpu.concatenate %305, %304 in 0 : vector<2x32xf32>, vector<8x32xf32> -> vector<10x32xf32>
    %cst_122 = arith.constant 0.000000e+00 : f32
    %307 = vector.broadcast %cst_122 : f32 to vector<8x32xf32>
    %308 = vector.extract_strided_slice %306 {offsets = [0, 0], sizes = [8, 32], strides = [1, 1]} : vector<10x32xf32> to vector<8x32xf32>
    %c0_123 = arith.constant 0 : index
    %c0_124 = arith.constant 0 : index
    %c0_125 = arith.constant 0 : index
    %309 = vector.load %arg21[%c0_123, %c0_124, %c0_125] : memref<1x3x32xf32, #tpu.memory_space<vmem>>, vector<1x1x32xf32>
    %310 = vector.shape_cast %309 : vector<1x1x32xf32> to vector<1x32xf32>
    %311 = vector.broadcast %310 : vector<1x32xf32> to vector<8x32xf32>
    %312 = arith.mulf %308, %311 : vector<8x32xf32>
    %313 = arith.addf %307, %312 : vector<8x32xf32>
    %314 = vector.extract_strided_slice %306 {offsets = [1, 0], sizes = [8, 32], strides = [1, 1]} : vector<10x32xf32> to vector<8x32xf32>
    %c0_126 = arith.constant 0 : index
    %c1_127 = arith.constant 1 : index
    %c0_128 = arith.constant 0 : index
    %315 = vector.load %arg21[%c0_126, %c1_127, %c0_128] : memref<1x3x32xf32, #tpu.memory_space<vmem>>, vector<1x1x32xf32>
    %316 = vector.shape_cast %315 : vector<1x1x32xf32> to vector<1x32xf32>
    %317 = vector.broadcast %316 : vector<1x32xf32> to vector<8x32xf32>
    %318 = arith.mulf %314, %317 : vector<8x32xf32>
    %319 = arith.addf %313, %318 : vector<8x32xf32>
    %320 = vector.extract_strided_slice %306 {offsets = [2, 0], sizes = [8, 32], strides = [1, 1]} : vector<10x32xf32> to vector<8x32xf32>
    %c0_129 = arith.constant 0 : index
    %c2_130 = arith.constant 2 : index
    %c0_131 = arith.constant 0 : index
    %321 = vector.load %arg21[%c0_129, %c2_130, %c0_131] : memref<1x3x32xf32, #tpu.memory_space<vmem>>, vector<1x1x32xf32>
    %322 = vector.shape_cast %321 : vector<1x1x32xf32> to vector<1x32xf32>
    %323 = vector.broadcast %322 : vector<1x32xf32> to vector<8x32xf32>
    %324 = arith.mulf %320, %323 : vector<8x32xf32>
    %325 = arith.addf %319, %324 : vector<8x32xf32>
    %c0_132 = arith.constant 0 : index
    %c0_133 = arith.constant 0 : index
    %c0_134 = arith.constant 0 : index
    %326 = vector.load %arg22[%c0_132, %c0_133, %c0_134] : memref<1x1x32xf32, #tpu.memory_space<vmem>>, vector<1x1x32xf32>
    %327 = vector.shape_cast %326 : vector<1x1x32xf32> to vector<1x32xf32>
    %328 = vector.broadcast %327 : vector<1x32xf32> to vector<8x32xf32>
    %329 = arith.addf %325, %328 : vector<8x32xf32>
    %330 = arith.negf %329 : vector<8x32xf32>
    %331 = math.exp %330 : vector<8x32xf32>
    %cst_135 = arith.constant 1.000000e+00 : f32
    %332 = vector.broadcast %cst_135 : f32 to vector<8x32xf32>
    %333 = arith.addf %332, %331 : vector<8x32xf32>
    %334 = arith.divf %332, %333 : vector<8x32xf32>
    %335 = arith.mulf %329, %334 : vector<8x32xf32>
    %336 = arith.truncf %335 : vector<8x32xf32> to vector<8x32xbf16>
    %c0_136 = arith.constant 0 : index
    %c0_137 = arith.constant 0 : index
    %c0_138 = arith.constant 0 : index
    %337 = vector.load %arg23[%c0_136, %c0_137, %c0_138] : memref<1x32x32xf32, #tpu.memory_space<vmem>>, vector<1x32x32xf32>
    %338 = vector.shape_cast %337 : vector<1x32x32xf32> to vector<32x32xf32>
    %339 = arith.truncf %338 : vector<32x32xf32> to vector<32x32xbf16>
    %cst_139 = arith.constant dense<0.000000e+00> : vector<8x32xf32>
    %340 = tpu.matmul %336, %339, %cst_139 {dimension_numbers = #tpu.dot_dimension_numbers<[1], [0], [0], [1], [0, 0, 1, 1], [], []>} : vector<8x32xbf16>, vector<32x32xbf16>, vector<8x32xf32> -> vector<8x32xf32>
    %c0_140 = arith.constant 0 : index
    %c0_141 = arith.constant 0 : index
    %c0_142 = arith.constant 0 : index
    %341 = vector.load %arg24[%c0_140, %c0_141, %c0_142] : memref<1x1x32xf32, #tpu.memory_space<vmem>>, vector<1x1x32xf32>
    %342 = vector.shape_cast %341 : vector<1x1x32xf32> to vector<1x32xf32>
    %343 = vector.broadcast %342 : vector<1x32xf32> to vector<8x32xf32>
    %344 = arith.addf %340, %343 : vector<8x32xf32>
    %345 = arith.addf %254, %344 : vector<8x32xf32>
    %c0_143 = arith.constant 0 : index
    %c3 = arith.constant 3 : index
    %c0_144 = arith.constant 0 : index
    %346 = vector.load %arg3[%c0_143, %c3, %c0_144] : memref<1x5x32xf32, #tpu.memory_space<vmem>>, vector<1x1x32xf32>
    %347 = vector.shape_cast %346 : vector<1x1x32xf32> to vector<1x32xf32>
    %c0_145 = arith.constant 0 : index
    %c3_146 = arith.constant 3 : index
    %c0_147 = arith.constant 0 : index
    %348 = vector.load %arg4[%c0_145, %c3_146, %c0_147] : memref<1x5x32xf32, #tpu.memory_space<vmem>>, vector<1x1x32xf32>
    %349 = vector.shape_cast %348 : vector<1x1x32xf32> to vector<1x32xf32>
    %cst_148 = arith.constant dense<0.000000e+00> : vector<8xf32>
    %350 = vector.multi_reduction <add>, %345, %cst_148 [1] : vector<8x32xf32> to vector<8xf32>
    %351 = vector.shape_cast %350 : vector<8xf32> to vector<8x1xf32>
    %cst_149 = arith.constant 3.200000e+01 : f32
    %352 = vector.broadcast %cst_149 : f32 to vector<8x1xf32>
    %353 = arith.divf %351, %352 : vector<8x1xf32>
    %354 = vector.broadcast %353 : vector<8x1xf32> to vector<8x32xf32>
    %355 = arith.subf %345, %354 : vector<8x32xf32>
    %356 = arith.mulf %355, %355 : vector<8x32xf32>
    %cst_150 = arith.constant dense<0.000000e+00> : vector<8xf32>
    %357 = vector.multi_reduction <add>, %356, %cst_150 [1] : vector<8x32xf32> to vector<8xf32>
    %358 = vector.shape_cast %357 : vector<8xf32> to vector<8x1xf32>
    %cst_151 = arith.constant 3.200000e+01 : f32
    %359 = vector.broadcast %cst_151 : f32 to vector<8x1xf32>
    %360 = arith.divf %358, %359 : vector<8x1xf32>
    %361 = vector.broadcast %353 : vector<8x1xf32> to vector<8x32xf32>
    %362 = arith.subf %345, %361 : vector<8x32xf32>
    %cst_152 = arith.constant 9.99999974E-6 : f32
    %363 = vector.broadcast %cst_152 : f32 to vector<8x1xf32>
    %364 = arith.addf %360, %363 : vector<8x1xf32>
    %365 = math.rsqrt %364 : vector<8x1xf32>
    %366 = vector.broadcast %365 : vector<8x1xf32> to vector<8x32xf32>
    %367 = arith.mulf %362, %366 : vector<8x32xf32>
    %368 = vector.broadcast %347 : vector<1x32xf32> to vector<8x32xf32>
    %369 = arith.mulf %367, %368 : vector<8x32xf32>
    %370 = vector.broadcast %349 : vector<1x32xf32> to vector<8x32xf32>
    %371 = arith.addf %369, %370 : vector<8x32xf32>
    %372 = arith.truncf %371 : vector<8x32xf32> to vector<8x32xbf16>
    %c0_153 = arith.constant 0 : index
    %c0_154 = arith.constant 0 : index
    %c0_155 = arith.constant 0 : index
    %373 = vector.load %arg25[%c0_153, %c0_154, %c0_155] : memref<1x32x64xf32, #tpu.memory_space<vmem>>, vector<1x32x64xf32>
    %374 = vector.shape_cast %373 : vector<1x32x64xf32> to vector<32x64xf32>
    %375 = arith.truncf %374 : vector<32x64xf32> to vector<32x64xbf16>
    %cst_156 = arith.constant dense<0.000000e+00> : vector<8x64xf32>
    %376 = tpu.matmul %372, %375, %cst_156 {dimension_numbers = #tpu.dot_dimension_numbers<[1], [0], [0], [1], [0, 0, 1, 1], [], []>} : vector<8x32xbf16>, vector<32x64xbf16>, vector<8x64xf32> -> vector<8x64xf32>
    %c0_157 = arith.constant 0 : index
    %c0_158 = arith.constant 0 : index
    %c0_159 = arith.constant 0 : index
    %377 = vector.load %arg26[%c0_157, %c0_158, %c0_159] : memref<1x1x64xf32, #tpu.memory_space<vmem>>, vector<1x1x64xf32>
    %378 = vector.shape_cast %377 : vector<1x1x64xf32> to vector<1x64xf32>
    %379 = vector.broadcast %378 : vector<1x64xf32> to vector<8x64xf32>
    %380 = arith.addf %376, %379 : vector<8x64xf32>
    %381 = arith.negf %380 : vector<8x64xf32>
    %382 = math.exp %381 : vector<8x64xf32>
    %cst_160 = arith.constant 1.000000e+00 : f32
    %383 = vector.broadcast %cst_160 : f32 to vector<8x64xf32>
    %384 = arith.addf %383, %382 : vector<8x64xf32>
    %385 = arith.divf %383, %384 : vector<8x64xf32>
    %386 = arith.mulf %380, %385 : vector<8x64xf32>
    %387 = arith.truncf %386 : vector<8x64xf32> to vector<8x64xbf16>
    %c0_161 = arith.constant 0 : index
    %c0_162 = arith.constant 0 : index
    %c0_163 = arith.constant 0 : index
    %388 = vector.load %arg27[%c0_161, %c0_162, %c0_163] : memref<1x64x32xf32, #tpu.memory_space<vmem>>, vector<1x64x32xf32>
    %389 = vector.shape_cast %388 : vector<1x64x32xf32> to vector<64x32xf32>
    %390 = arith.truncf %389 : vector<64x32xf32> to vector<64x32xbf16>
    %cst_164 = arith.constant dense<0.000000e+00> : vector<8x32xf32>
    %391 = tpu.matmul %387, %390, %cst_164 {dimension_numbers = #tpu.dot_dimension_numbers<[1], [0], [0], [1], [0, 0, 1, 1], [], []>} : vector<8x64xbf16>, vector<64x32xbf16>, vector<8x32xf32> -> vector<8x32xf32>
    %c0_165 = arith.constant 0 : index
    %c0_166 = arith.constant 0 : index
    %c0_167 = arith.constant 0 : index
    %392 = vector.load %arg28[%c0_165, %c0_166, %c0_167] : memref<1x1x32xf32, #tpu.memory_space<vmem>>, vector<1x1x32xf32>
    %393 = vector.shape_cast %392 : vector<1x1x32xf32> to vector<1x32xf32>
    %394 = vector.broadcast %393 : vector<1x32xf32> to vector<8x32xf32>
    %395 = arith.addf %391, %394 : vector<8x32xf32>
    %cst_168 = arith.constant 5.000000e-01 : f32
    %396 = vector.broadcast %cst_168 : f32 to vector<8x32xf32>
    %397 = arith.mulf %396, %395 : vector<8x32xf32>
    %398 = arith.addf %345, %397 : vector<8x32xf32>
    %c0_169 = arith.constant 0 : index
    %c4 = arith.constant 4 : index
    %c0_170 = arith.constant 0 : index
    %399 = vector.load %arg3[%c0_169, %c4, %c0_170] : memref<1x5x32xf32, #tpu.memory_space<vmem>>, vector<1x1x32xf32>
    %400 = vector.shape_cast %399 : vector<1x1x32xf32> to vector<1x32xf32>
    %c0_171 = arith.constant 0 : index
    %c4_172 = arith.constant 4 : index
    %c0_173 = arith.constant 0 : index
    %401 = vector.load %arg4[%c0_171, %c4_172, %c0_173] : memref<1x5x32xf32, #tpu.memory_space<vmem>>, vector<1x1x32xf32>
    %402 = vector.shape_cast %401 : vector<1x1x32xf32> to vector<1x32xf32>
    %cst_174 = arith.constant dense<0.000000e+00> : vector<8xf32>
    %403 = vector.multi_reduction <add>, %398, %cst_174 [1] : vector<8x32xf32> to vector<8xf32>
    %404 = vector.shape_cast %403 : vector<8xf32> to vector<8x1xf32>
    %cst_175 = arith.constant 3.200000e+01 : f32
    %405 = vector.broadcast %cst_175 : f32 to vector<8x1xf32>
    %406 = arith.divf %404, %405 : vector<8x1xf32>
    %407 = vector.broadcast %406 : vector<8x1xf32> to vector<8x32xf32>
    %408 = arith.subf %398, %407 : vector<8x32xf32>
    %409 = arith.mulf %408, %408 : vector<8x32xf32>
    %cst_176 = arith.constant dense<0.000000e+00> : vector<8xf32>
    %410 = vector.multi_reduction <add>, %409, %cst_176 [1] : vector<8x32xf32> to vector<8xf32>
    %411 = vector.shape_cast %410 : vector<8xf32> to vector<8x1xf32>
    %cst_177 = arith.constant 3.200000e+01 : f32
    %412 = vector.broadcast %cst_177 : f32 to vector<8x1xf32>
    %413 = arith.divf %411, %412 : vector<8x1xf32>
    %414 = vector.broadcast %406 : vector<8x1xf32> to vector<8x32xf32>
    %415 = arith.subf %398, %414 : vector<8x32xf32>
    %cst_178 = arith.constant 9.99999974E-6 : f32
    %416 = vector.broadcast %cst_178 : f32 to vector<8x1xf32>
    %417 = arith.addf %413, %416 : vector<8x1xf32>
    %418 = math.rsqrt %417 : vector<8x1xf32>
    %419 = vector.broadcast %418 : vector<8x1xf32> to vector<8x32xf32>
    %420 = arith.mulf %415, %419 : vector<8x32xf32>
    %421 = vector.broadcast %400 : vector<1x32xf32> to vector<8x32xf32>
    %422 = arith.mulf %420, %421 : vector<8x32xf32>
    %423 = vector.broadcast %402 : vector<1x32xf32> to vector<8x32xf32>
    %424 = arith.addf %422, %423 : vector<8x32xf32>
    %425 = vector.shape_cast %424 : vector<8x32xf32> to vector<1x8x32xf32>
    %c0_179 = arith.constant 0 : index
    %c0_180 = arith.constant 0 : index
    %c0_181 = arith.constant 0 : index
    %426 = vector.load %arg30[%c0_179, %c0_180, %c0_181] : memref<1x8x32xf32, #tpu.memory_space<vmem>>, vector<1x8x32xf32>
    tpu.vector_store %arg30[%c0_179, %c0_180, %c0_181], %425 {strides = array<i32>} : memref<1x8x32xf32, #tpu.memory_space<vmem>>, vector<1x8x32xf32>,
    %427 = vector.shape_cast %424 : vector<8x32xf32> to vector<1x8x32xf32>
    %c0_182 = arith.constant 0 : index
    %c0_183 = arith.constant 0 : index
    %c0_184 = arith.constant 0 : index
    %428 = vector.load %arg29[%c0_182, %c0_183, %c0_184] : memref<1x8x32xf32, #tpu.memory_space<vmem>>, vector<1x8x32xf32>
    tpu.vector_store %arg29[%c0_182, %c0_183, %c0_184], %427 {strides = array<i32>} : memref<1x8x32xf32, #tpu.memory_space<vmem>>, vector<1x8x32xf32>,
    return
  }
  func.func @transform_0(%arg0: i32, %arg1: i32) -> (i32, i32, i32) {
    %c0_i32 = arith.constant 0 : i32
    %c0_i32_0 = arith.constant 0 : i32
    %c0_i32_1 = arith.constant 0 : i32
    return %arg0, %c0_i32, %c0_i32_0 : i32, i32, i32
  }
  func.func @transform_1(%arg0: i32, %arg1: i32) -> (i32, i32, i32) {
    %c0_i32 = arith.constant 0 : i32
    %c0_i32_0 = arith.constant 0 : i32
    %c0_i32_1 = arith.constant 0 : i32
    return %arg1, %c0_i32, %c0_i32_0 : i32, i32, i32
  }
  func.func @transform_2(%arg0: i32, %arg1: i32) -> (i32, i32, i32) {
    %c0_i32 = arith.constant 0 : i32
    %c0_i32_0 = arith.constant 0 : i32
    %c0_i32_1 = arith.constant 0 : i32
    return %arg1, %c0_i32, %c0_i32_0 : i32, i32, i32
  }
  func.func @transform_3(%arg0: i32, %arg1: i32) -> (i32, i32, i32) {
    %c0_i32 = arith.constant 0 : i32
    %c0_i32_0 = arith.constant 0 : i32
    %c0_i32_1 = arith.constant 0 : i32
    return %arg1, %c0_i32, %c0_i32_0 : i32, i32, i32
  }
  func.func @transform_4(%arg0: i32, %arg1: i32) -> (i32, i32, i32) {
    %c0_i32 = arith.constant 0 : i32
    %c0_i32_0 = arith.constant 0 : i32
    %c0_i32_1 = arith.constant 0 : i32
    return %arg1, %c0_i32, %c0_i32_0 : i32, i32, i32
  }
  func.func @transform_5(%arg0: i32, %arg1: i32) -> (i32, i32, i32) {
    %c0_i32 = arith.constant 0 : i32
    %c0_i32_0 = arith.constant 0 : i32
    %c0_i32_1 = arith.constant 0 : i32
    return %arg1, %c0_i32, %c0_i32_0 : i32, i32, i32
  }
  func.func @transform_6(%arg0: i32, %arg1: i32) -> (i32, i32, i32) {
    %c0_i32 = arith.constant 0 : i32
    %c0_i32_0 = arith.constant 0 : i32
    %c0_i32_1 = arith.constant 0 : i32
    return %arg1, %c0_i32, %c0_i32_0 : i32, i32, i32
  }
  func.func @transform_7(%arg0: i32, %arg1: i32) -> (i32, i32, i32) {
    %c0_i32 = arith.constant 0 : i32
    %c0_i32_0 = arith.constant 0 : i32
    %c0_i32_1 = arith.constant 0 : i32
    return %arg1, %c0_i32, %c0_i32_0 : i32, i32, i32
  }
  func.func @transform_8(%arg0: i32, %arg1: i32) -> (i32, i32, i32) {
    %c0_i32 = arith.constant 0 : i32
    %c0_i32_0 = arith.constant 0 : i32
    %c0_i32_1 = arith.constant 0 : i32
    return %arg1, %c0_i32, %c0_i32_0 : i32, i32, i32
  }
  func.func @transform_9(%arg0: i32, %arg1: i32) -> (i32, i32, i32) {
    %c0_i32 = arith.constant 0 : i32
    %c0_i32_0 = arith.constant 0 : i32
    %c0_i32_1 = arith.constant 0 : i32
    return %arg1, %c0_i32, %c0_i32_0 : i32, i32, i32
  }
  func.func @transform_10(%arg0: i32, %arg1: i32) -> (i32, i32, i32) {
    %c0_i32 = arith.constant 0 : i32
    %c0_i32_0 = arith.constant 0 : i32
    %c0_i32_1 = arith.constant 0 : i32
    return %arg1, %c0_i32, %c0_i32_0 : i32, i32, i32
  }
  func.func @transform_11(%arg0: i32, %arg1: i32) -> (i32, i32, i32) {
    %c0_i32 = arith.constant 0 : i32
    %c0_i32_0 = arith.constant 0 : i32
    %c0_i32_1 = arith.constant 0 : i32
    return %arg1, %c0_i32, %c0_i32_0 : i32, i32, i32
  }
  func.func @transform_12(%arg0: i32, %arg1: i32) -> (i32, i32, i32) {
    %c0_i32 = arith.constant 0 : i32
    %c0_i32_0 = arith.constant 0 : i32
    %c0_i32_1 = arith.constant 0 : i32
    return %arg1, %c0_i32, %c0_i32_0 : i32, i32, i32
  }
  func.func @transform_13(%arg0: i32, %arg1: i32) -> (i32, i32, i32) {
    %c0_i32 = arith.constant 0 : i32
    %c0_i32_0 = arith.constant 0 : i32
    %c0_i32_1 = arith.constant 0 : i32
    return %arg1, %c0_i32, %c0_i32_0 : i32, i32, i32
  }
  func.func @transform_14(%arg0: i32, %arg1: i32) -> (i32, i32, i32) {
    %c0_i32 = arith.constant 0 : i32
    %c0_i32_0 = arith.constant 0 : i32
    %c0_i32_1 = arith.constant 0 : i32
    return %arg1, %c0_i32, %c0_i32_0 : i32, i32, i32
  }
  func.func @transform_15(%arg0: i32, %arg1: i32) -> (i32, i32, i32) {
    %c0_i32 = arith.constant 0 : i32
    %c0_i32_0 = arith.constant 0 : i32
    %c0_i32_1 = arith.constant 0 : i32
    return %arg1, %c0_i32, %c0_i32_0 : i32, i32, i32
  }
  func.func @transform_16(%arg0: i32, %arg1: i32) -> (i32, i32, i32) {
    %c0_i32 = arith.constant 0 : i32
    %c0_i32_0 = arith.constant 0 : i32
    %c0_i32_1 = arith.constant 0 : i32
    return %arg1, %c0_i32, %c0_i32_0 : i32, i32, i32
  }
  func.func @transform_17(%arg0: i32, %arg1: i32) -> (i32, i32, i32) {
    %c0_i32 = arith.constant 0 : i32
    %c0_i32_0 = arith.constant 0 : i32
    %c0_i32_1 = arith.constant 0 : i32
    return %arg1, %c0_i32, %c0_i32_0 : i32, i32, i32
  }
  func.func @transform_18(%arg0: i32, %arg1: i32) -> (i32, i32, i32) {
    %c0_i32 = arith.constant 0 : i32
    %c0_i32_0 = arith.constant 0 : i32
    %c0_i32_1 = arith.constant 0 : i32
    return %arg1, %c0_i32, %c0_i32_0 : i32, i32, i32
  }
  func.func @transform_19(%arg0: i32, %arg1: i32) -> (i32, i32, i32) {
    %c0_i32 = arith.constant 0 : i32
    %c0_i32_0 = arith.constant 0 : i32
    %c0_i32_1 = arith.constant 0 : i32
    return %arg1, %c0_i32, %c0_i32_0 : i32, i32, i32
  }
  func.func @transform_20(%arg0: i32, %arg1: i32) -> (i32, i32, i32) {
    %c0_i32 = arith.constant 0 : i32
    %c0_i32_0 = arith.constant 0 : i32
    %c0_i32_1 = arith.constant 0 : i32
    return %arg1, %c0_i32, %c0_i32_0 : i32, i32, i32
  }
  func.func @transform_21(%arg0: i32, %arg1: i32) -> (i32, i32, i32) {
    %c0_i32 = arith.constant 0 : i32
    %c0_i32_0 = arith.constant 0 : i32
    %c0_i32_1 = arith.constant 0 : i32
    return %arg1, %c0_i32, %c0_i32_0 : i32, i32, i32
  }
  func.func @transform_22(%arg0: i32, %arg1: i32) -> (i32, i32, i32) {
    %c0_i32 = arith.constant 0 : i32
    %c0_i32_0 = arith.constant 0 : i32
    %c0_i32_1 = arith.constant 0 : i32
    return %arg1, %c0_i32, %c0_i32_0 : i32, i32, i32
  }
  func.func @transform_23(%arg0: i32, %arg1: i32) -> (i32, i32, i32) {
    %c0_i32 = arith.constant 0 : i32
    %c0_i32_0 = arith.constant 0 : i32
    %c0_i32_1 = arith.constant 0 : i32
    return %arg1, %c0_i32, %c0_i32_0 : i32, i32, i32
  }
  func.func @transform_24(%arg0: i32, %arg1: i32) -> (i32, i32, i32) {
    %c0_i32 = arith.constant 0 : i32
    %c0_i32_0 = arith.constant 0 : i32
    %c0_i32_1 = arith.constant 0 : i32
    return %arg1, %c0_i32, %c0_i32_0 : i32, i32, i32
  }
  func.func @transform_25(%arg0: i32, %arg1: i32) -> (i32, i32, i32) {
    %c0_i32 = arith.constant 0 : i32
    %c0_i32_0 = arith.constant 0 : i32
    %c0_i32_1 = arith.constant 0 : i32
    return %arg1, %c0_i32, %c0_i32_0 : i32, i32, i32
  }
  func.func @transform_26(%arg0: i32, %arg1: i32) -> (i32, i32, i32) {
    %c0_i32 = arith.constant 0 : i32
    %c0_i32_0 = arith.constant 0 : i32
    %c0_i32_1 = arith.constant 0 : i32
    return %arg1, %c0_i32, %c0_i32_0 : i32, i32, i32
  }
  func.func @transform_27(%arg0: i32, %arg1: i32) -> (i32, i32, i32) {
    %c0_i32 = arith.constant 0 : i32
    %c0_i32_0 = arith.constant 0 : i32
    %c0_i32_1 = arith.constant 0 : i32
    return %arg0, %c0_i32, %c0_i32_0 : i32, i32, i32
  }
}

</mosaic_0001>

<llo_original>
// kernel: _lambda_.5
$region0: #{_lambda_.5}
  #allocation0 [shape = 'u32[]', space=smem, size = 0x4, offset = 0x4, fixed_abs, tag = 'smem constant byte address 0x4 - core index']
  #allocation1 [shape = 'u32[144,128]{1,0:T(1,128)}', space=vmem, size = 0x12000, scoped, tag = 'internal scratch']
  %s0 = inlined_call_operand.vmem [shape: f32[16,32], index: 0, kind: input, shape index: {}]
  %s1 = inlined_call_operand.vmem [shape: f32[32,128], index: 1, kind: input, shape index: {}]
  %s2 = inlined_call_operand.vmem [shape: f32[1,128], index: 2, kind: input, shape index: {}]
  %s3 = inlined_call_operand.hbm [shape: f32[16,128], index: 3, kind: output, shape index: {}]
  %s4 = sld [smem:[#allocation0]]
  $region22: #{_lambda_.5} parent=0
    _
  %s6 = ssub.s32 1, %s4
  %s7 = scalar_select 0, %s6, %s4
  $region1: #{_lambda_.5} parent=0
    #allocation2 [shape = 'u8[8192]{0}', space=vmem, size = 0x2000, scoped, tag = 'output window, operand 0, single buffered']
    #allocation3 [shape = 's32[1]{0}', space=sflag, size = 0x4, scoped, tag = 'scoped memory for _lambda_.5']
    %8 = vsyncpa [#allocation3], 0
    // Predicated region
    $region2: #{_lambda_.5} parent=1 // pred_check
      _
    $region3: #{_lambda_.5} parent=1 // pred_check_branch
      %10 = sbr.rel (0) target = $region5
    $region4: #{_lambda_.5} parent=1 // pred_region
      _
    $region5: #{_lambda_.5} parent=1 // pred_fallthru
      _
    // Predicated region
    $region6: #{_lambda_.5} parent=1 // pred_check
      _
    $region7: #{_lambda_.5} parent=1 // pred_check_branch
      %12 = sbr.rel (0) target = $region9
    $region8: #{_lambda_.5} parent=1 // pred_region
      _
    $region9: #{_lambda_.5} parent=1 // pred_fallthru
      _
    // Predicated region
    $region10: #{_lambda_.5} parent=1 // pred_check
      _
    $region11: #{_lambda_.5} parent=1 // pred_check_branch
      %14 = sbr.rel (0) target = $region13
    $region12: #{_lambda_.5} parent=1 // pred_region
      _
    $region13: #{_lambda_.5} parent=1 // pred_fallthru
      _
    %v16 = vld [vmem:[%s0] sm:$0xff]
    %v17 = vld [vmem:[%s0 + $0x8] sm:$0xff]
    %v18 = vpack.c.bf16 %v17, %v16
    %v19 = vld [vmem:[%s1] sm:$0xff]
    %v20 = vld [vmem:[%s1 + $0x8] sm:$0xff]
    %v21 = vld [vmem:[%s1 + $0x10] sm:$0xff]
    %v22 = vld [vmem:[%s1 + $0x18] sm:$0xff]
    %v23 = vpack.c.bf16 %v20, %v19
    %v24 = vpack.c.bf16 %v22, %v21
    %v25 = vld [vmem:[%s2] sm:$0x1]
    %v27 = vlaneseq
    %v28 = vshrl.u32 %v27, 7
    %v29 = vsub.s32 0, %v28
    %v30 = vrot.slane %v25, %v29
    %vm32 = vcmask 261120
    %v34 = vsel %vm32, %v18, 0
    %36 = vmatprep.subr.bf16.mxu0 0
    %37 = vmatpush1.bf16.msra.mxu0 0
    %38 = vmatprep.subr.bf16.mxu0 0
    %39 = vmatpush1.bf16.msra.mxu0 0
    %40 = vmatprep.subr.bf16.mxu0 0
    %41 = vmatpush1.bf16.msra.mxu0 0
    %42 = vmatprep.subr.bf16.mxu0 0
    %43 = vmatpush1.bf16.msra.mxu0 0
    %44 = vmatprep.subr.bf16.mxu0 0
    %45 = vmatpush1.bf16.msra.mxu0 0
    %46 = vmatprep.subr.bf16.mxu0 0
    %47 = vmatpush1.bf16.msra.mxu0 0
    %48 = vmatprep.subr.bf16.mxu0 0
    %49 = vmatpush1.bf16.msra.mxu0 %v24
    %50 = vmatprep.subr.bf16.mxu0 0
    %51 = vmatpush1.bf16.msra.mxu0 %v23
    %52 = vmatprep.subr.bf16.mxu0 0
    %53 = vmatpush2.bf16.msra.mxu0 0
    %54 = vmatprep.subr.bf16.mxu0 0
    %55 = vmatpush2.bf16.msra.mxu0 0
    %56 = vmatprep.subr.bf16.mxu0 0
    %57 = vmatpush2.bf16.msra.mxu0 0
    %58 = vmatprep.subr.bf16.mxu0 0
    %59 = vmatpush2.bf16.msra.mxu0 0
    %60 = vmatprep.subr.bf16.mxu0 0
    %61 = vmatpush2.bf16.msra.mxu0 0
    %62 = vmatprep.subr.bf16.mxu0 0
    %63 = vmatpush2.bf16.msra.mxu0 0
    %64 = vmatprep.subr.bf16.mxu0 0
    %65 = vmatpush2.bf16.msra.mxu0 0
    %66 = vmatprep.subr.bf16.mxu0 0
    %67 = vmatpush2.bf16.msra.mxu0 0
    %68 = vmatprep.mubr.bf16.mxu0 0
    %69 = vmatmul.mubr.bf16.gmra.mxu0 %v34
    %v70 = vpop.f32.mrf.mxu0
    %v71 = vadd.f32 %v30, %v70
    %v72 = vpop.f32.mrf.mxu0
    %v73 = vpop.f32.mrf.mxu0
    %v74 = vadd.f32 %v30, %v73
    %v75 = vpop.f32.mrf.mxu0
    %76 = vdwg.mxu0
    %77 = vmax.xlane.f32.xlu0 %v71
    %v78 = vpop.xlane.xlu0 %77
    %79 = vmax.xlane.f32.xlu0 %v74
    %v80 = vpop.xlane.xlu0 %79
    %v81 = vsub.f32 %v71, %v78
    %v82 = vsub.f32 %v74, %v80
    %v83 = vmul.f32 %v81, 1.442695
    %v84 = vpow.pop %v83
    %v85 = vmul.f32 %v82, 1.442695
    %v86 = vpow.pop %v85
    %87 = vadd.xlane.f32.xlu0 %v84
    %v88 = vpop.xlane.xlu0 %87
    %89 = vadd.xlane.f32.xlu0 %v86
    %v90 = vpop.xlane.xlu0 %89
    %v91 = vlog2.pop %v88
    %v92 = vmul.f32 %v91, 0.6931472
    %v93 = vlog2.pop %v90
    %v94 = vmul.f32 %v93, 0.6931472
    %v95 = vsub.f32 %v81, %v92
    %v96 = vsub.f32 %v82, %v94
    %97 = vst [vmem:[#allocation2] sm:$0xff] %v95
    %98 = vst [vmem:[#allocation2 + $0x8] sm:$0xff] %v96
    // Predicated region
    $region14: #{_lambda_.5} parent=1 // pred_check
      _
    $region15: #{_lambda_.5} parent=1 // pred_check_branch
      %100 = sbr.rel (0) target = $region17
    $region16: #{_lambda_.5} parent=1 // pred_region
      %s102 = ssub.s32 256, 256
      %103 = vsyncadd [#allocation3], %s102
      %s104 = sshll.u32 [#allocation2], 4
      %s105 = int_to_ptr.vmem [resolvable:$true] %s104
      %110 = dma.vmem_to_hbm [thread:$0]  %s105, 256, %s3, [#allocation3], 128, 128, 8
    $region17: #{_lambda_.5} parent=1 // pred_fallthru
      _
    // Predicated region
    $region18: #{_lambda_.5} parent=1 // pred_check
      _
    $region19: #{_lambda_.5} parent=1 // pred_check_branch
      %112 = sbr.rel (0) target = $region21
    $region20: #{_lambda_.5} parent=1 // pred_region
      %113 = dma.done [#allocation3], 256
    $region21: #{_lambda_.5} parent=1 // pred_fallthru
      _
    %114 = vsyncpa [#allocation3], 1

// kernel: _lambda_.3
$region0: #{_lambda_.3}
  #allocation0 [shape = 'u32[]', space=smem, size = 0x4, offset = 0x4, fixed_abs, tag = 'smem constant byte address 0x4 - core index']
  #allocation1 [shape = 'u32[144,128]{1,0:T(1,128)}', space=vmem, size = 0x12000, scoped, tag = 'internal scratch']
  %s0 = inlined_call_operand.vmem [shape: f32[2,7,8,9], index: 0, kind: input, shape index: {}]
  %s1 = inlined_call_operand.vmem [shape: f32[2,7,8,9], index: 1, kind: input, shape index: {}]
  %s2 = inlined_call_operand.vmem [shape: f32[9,32], index: 2, kind: input, shape index: {}]
  %s3 = inlined_call_operand.vmem [shape: f32[1,32], index: 3, kind: input, shape index: {}]
  %s4 = inlined_call_operand.vmem [shape: f32[9,32,32], index: 4, kind: input, shape index: {}]
  %s5 = inlined_call_operand.vmem [shape: f32[1,32], index: 5, kind: input, shape index: {}]
  %s6 = inlined_call_operand.vmem [shape: f32[3,32,32], index: 6, kind: input, shape index: {}]
  %s7 = inlined_call_operand.vmem [shape: f32[1,32], index: 7, kind: input, shape index: {}]
  %s8 = inlined_call_operand.vmem [shape: f32[2,8,32], index: 8, kind: output, shape index: {}]
  %s9 = sld [smem:[#allocation0]]
  $region65: #{_lambda_.3} parent=0
    _
  %s11 = ssub.s32 1, %s9
  %s12 = scalar_select 0, %s11, %s9
  loop: start=0, step=1, limit=4
  $region2: #{_lambda_.3} parent=0 // loop_pre_header
    _
  $region3: #{_lambda_.3} parent=0 // loop_header
    %s14 = sphi 0, %s18
    %p15 = scmp.ge.s32.totalorder %s14, 4
    %s24 = sphi 0, %s26
    %s27 = sphi 0, %s24
    %s28 = sphi 0, %s27
    %s44 = sphi 0, %s28
    %s50 = sphi 0, %s52
    %s53 = sphi 0, %s50
    %s54 = sphi 0, %s53
    %s70 = sphi 0, %s54
    %s74 = sphi 0, %s74
    %s76 = sphi 0, %s74
    %s77 = sphi 0, %s76
    %s91 = sphi 0, %s77
    %s95 = sphi 0, %s95
    %s97 = sphi 0, %s95
    %s98 = sphi 0, %s97
    %s112 = sphi 0, %s98
    %s116 = sphi 0, %s116
    %s118 = sphi 0, %s116
    %s119 = sphi 0, %s118
    %s133 = sphi 0, %s119
    %s137 = sphi 0, %s137
    %s139 = sphi 0, %s137
    %s140 = sphi 0, %s139
    %s154 = sphi 0, %s140
    %s158 = sphi 0, %s158
    %s160 = sphi 0, %s158
    %s161 = sphi 0, %s160
    %s175 = sphi 0, %s161
    %s179 = sphi 0, %s179
    %s181 = sphi 0, %s179
    %s182 = sphi 0, %s181
    %s196 = sphi 0, %s182
    %s202 = sphi 0, %s204
    %s205 = sphi 0, %s202
    %s206 = sphi 0, %s205
    %s222 = sphi 0, %s206
  $region4: #{_lambda_.3} parent=0 // loop_header_branch
    %17 = sbr.rel (%p15) target = $region8
  $region5: #{_lambda_.3} parent=0 // loop_body
    %s19 = ssub.s32 %s14, 1
    %s20 = ssub.s32 %s14, 2
    %s21 = sadd.s32 %s14, 1
    %s22 = ssub.s32 %s14, %s21
    %p23 = scmp.eq.s32.totalorder %s22, 0
    %s25 = sadd.s32 %s24, 1
    %s26 = scalar_select %p23, %s24, %s25
    %p29 = pneg %p23
    %p30 = scmp.eq.s32.totalorder %s14, 1
    %p31 = por %p29, %p30
    %p32 = scmp.ne.s32.totalorder %s24, %s27
    %p33 = scmp.eq.s32.totalorder %s14, 0
    %p34 = por %p32, %p33
    %p35 = scmp.ne.s32.totalorder %s24, %s27
    %p36 = scmp.eq.s32.totalorder %s19, 1
    %p37 = por %p35, %p36
    %p38 = scmp.ne.s32.totalorder %s27, %s28
    %p39 = scmp.eq.s32.totalorder %s19, 0
    %p40 = por %p38, %p39
    %p41 = scmp.ne.s32.totalorder %s27, %s28
    %p42 = scmp.eq.s32.totalorder %s20, 1
    %p43 = por %p41, %p42
    %p45 = scmp.ne.s32.totalorder %s28, %s44
    %p46 = scmp.eq.s32.totalorder %s20, 0
    %p47 = por %p45, %p46
    %s48 = ssub.s32 %s14, %s21
    %p49 = scmp.eq.s32.totalorder %s48, 0
    %s51 = sadd.s32 %s50, 1
    %s52 = scalar_select %p49, %s50, %s51
    %p55 = pneg %p49
    %p56 = scmp.eq.s32.totalorder %s14, 1
    %p57 = por %p55, %p56
    %p58 = scmp.ne.s32.totalorder %s50, %s53
    %p59 = scmp.eq.s32.totalorder %s14, 0
    %p60 = por %p58, %p59
    %p61 = scmp.ne.s32.totalorder %s50, %s53
    %p62 = scmp.eq.s32.totalorder %s19, 1
    %p63 = por %p61, %p62
    %p64 = scmp.ne.s32.totalorder %s53, %s54
    %p65 = scmp.eq.s32.totalorder %s19, 0
    %p66 = por %p64, %p65
    %p67 = scmp.ne.s32.totalorder %s53, %s54
    %p68 = scmp.eq.s32.totalorder %s20, 1
    %p69 = por %p67, %p68
    %p71 = scmp.ne.s32.totalorder %s54, %s70
    %p72 = scmp.eq.s32.totalorder %s20, 0
    %p73 = por %p71, %p72
    %s75 = sadd.s32 %s74, 1
    %p78 = scmp.eq.s32.totalorder %s14, 1
    %p79 = scmp.ne.s32.totalorder %s74, %s76
    %p80 = scmp.eq.s32.totalorder %s14, 0
    %p81 = por %p79, %p80
    %p82 = scmp.ne.s32.totalorder %s74, %s76
    %p83 = scmp.eq.s32.totalorder %s19, 1
    %p84 = por %p82, %p83
    %p85 = scmp.ne.s32.totalorder %s76, %s77
    %p86 = scmp.eq.s32.totalorder %s19, 0
    %p87 = por %p85, %p86
    %p88 = scmp.ne.s32.totalorder %s76, %s77
    %p89 = scmp.eq.s32.totalorder %s20, 1
    %p90 = por %p88, %p89
    %p92 = scmp.ne.s32.totalorder %s77, %s91
    %p93 = scmp.eq.s32.totalorder %s20, 0
    %p94 = por %p92, %p93
    %s96 = sadd.s32 %s95, 1
    %p99 = scmp.eq.s32.totalorder %s14, 1
    %p100 = scmp.ne.s32.totalorder %s95, %s97
    %p101 = scmp.eq.s32.totalorder %s14, 0
    %p102 = por %p100, %p101
    %p103 = scmp.ne.s32.totalorder %s95, %s97
    %p104 = scmp.eq.s32.totalorder %s19, 1
    %p105 = por %p103, %p104
    %p106 = scmp.ne.s32.totalorder %s97, %s98
    %p107 = scmp.eq.s32.totalorder %s19, 0
    %p108 = por %p106, %p107
    %p109 = scmp.ne.s32.totalorder %s97, %s98
    %p110 = scmp.eq.s32.totalorder %s20, 1
    %p111 = por %p109, %p110
    %p113 = scmp.ne.s32.totalorder %s98, %s112
    %p114 = scmp.eq.s32.totalorder %s20, 0
    %p115 = por %p113, %p114
    %s117 = sadd.s32 %s116, 1
    %p120 = scmp.eq.s32.totalorder %s14, 1
    %p121 = scmp.ne.s32.totalorder %s116, %s118
    %p122 = scmp.eq.s32.totalorder %s14, 0
    %p123 = por %p121, %p122
    %p124 = scmp.ne.s32.totalorder %s116, %s118
    %p125 = scmp.eq.s32.totalorder %s19, 1
    %p126 = por %p124, %p125
    %p127 = scmp.ne.s32.totalorder %s118, %s119
    %p128 = scmp.eq.s32.totalorder %s19, 0
    %p129 = por %p127, %p128
    %p130 = scmp.ne.s32.totalorder %s118, %s119
    %p131 = scmp.eq.s32.totalorder %s20, 1
    %p132 = por %p130, %p131
    %p134 = scmp.ne.s32.totalorder %s119, %s133
    %p135 = scmp.eq.s32.totalorder %s20, 0
    %p136 = por %p134, %p135
    %s138 = sadd.s32 %s137, 1
    %p141 = scmp.eq.s32.totalorder %s14, 1
    %p142 = scmp.ne.s32.totalorder %s137, %s139
    %p143 = scmp.eq.s32.totalorder %s14, 0
    %p144 = por %p142, %p143
    %p145 = scmp.ne.s32.totalorder %s137, %s139
    %p146 = scmp.eq.s32.totalorder %s19, 1
    %p147 = por %p145, %p146
    %p148 = scmp.ne.s32.totalorder %s139, %s140
    %p149 = scmp.eq.s32.totalorder %s19, 0
    %p150 = por %p148, %p149
    %p151 = scmp.ne.s32.totalorder %s139, %s140
    %p152 = scmp.eq.s32.totalorder %s20, 1
    %p153 = por %p151, %p152
    %p155 = scmp.ne.s32.totalorder %s140, %s154
    %p156 = scmp.eq.s32.totalorder %s20, 0
    %p157 = por %p155, %p156
    %s159 = sadd.s32 %s158, 1
    %p162 = scmp.eq.s32.totalorder %s14, 1
    %p163 = scmp.ne.s32.totalorder %s158, %s160
    %p164 = scmp.eq.s32.totalorder %s14, 0
    %p165 = por %p163, %p164
    %p166 = scmp.ne.s32.totalorder %s158, %s160
    %p167 = scmp.eq.s32.totalorder %s19, 1
    %p168 = por %p166, %p167
    %p169 = scmp.ne.s32.totalorder %s160, %s161
    %p170 = scmp.eq.s32.totalorder %s19, 0
    %p171 = por %p169, %p170
    %p172 = scmp.ne.s32.totalorder %s160, %s161
    %p173 = scmp.eq.s32.totalorder %s20, 1
    %p174 = por %p172, %p173
    %p176 = scmp.ne.s32.totalorder %s161, %s175
    %p177 = scmp.eq.s32.totalorder %s20, 0
    %p178 = por %p176, %p177
    %s180 = sadd.s32 %s179, 1
    %p183 = scmp.eq.s32.totalorder %s14, 1
    %p184 = scmp.ne.s32.totalorder %s179, %s181
    %p185 = scmp.eq.s32.totalorder %s14, 0
    %p186 = por %p184, %p185
    %p187 = scmp.ne.s32.totalorder %s179, %s181
    %p188 = scmp.eq.s32.totalorder %s19, 1
    %p189 = por %p187, %p188
    %p190 = scmp.ne.s32.totalorder %s181, %s182
    %p191 = scmp.eq.s32.totalorder %s19, 0
    %p192 = por %p190, %p191
    %p193 = scmp.ne.s32.totalorder %s181, %s182
    %p194 = scmp.eq.s32.totalorder %s20, 1
    %p195 = por %p193, %p194
    %p197 = scmp.ne.s32.totalorder %s182, %s196
    %p198 = scmp.eq.s32.totalorder %s20, 0
    %p199 = por %p197, %p198
    %s200 = ssub.s32 %s14, %s21
    %p201 = scmp.eq.s32.totalorder %s200, 0
    %s203 = sadd.s32 %s202, 1
    %s204 = scalar_select %p201, %s202, %s203
    %p207 = pneg %p201
    %p208 = scmp.eq.s32.totalorder %s14, 1
    %p209 = por %p207, %p208
    %p210 = scmp.ne.s32.totalorder %s202, %s205
    %p211 = scmp.eq.s32.totalorder %s14, 0
    %p212 = por %p210, %p211
    %p213 = scmp.ne.s32.totalorder %s202, %s205
    %p214 = scmp.eq.s32.totalorder %s19, 1
    %p215 = por %p213, %p214
    %p216 = scmp.ne.s32.totalorder %s205, %s206
    %p217 = scmp.eq.s32.totalorder %s19, 0
    %p218 = por %p216, %p217
    %p219 = scmp.ne.s32.totalorder %s205, %s206
    %p220 = scmp.eq.s32.totalorder %s20, 1
    %p221 = por %p219, %p220
    %p223 = scmp.ne.s32.totalorder %s206, %s222
    %p224 = scmp.eq.s32.totalorder %s20, 0
    %p225 = por %p223, %p224
    %p226 = scmp.le.s32.totalorder 1, %s14
    %p227 = scmp.lt.s32.totalorder %s14, 3
    %p228 = pnand %p226, %p227
    %p229 = pneg %p228
    // Predicated region
    $region9: #{_lambda_.3} parent=5 // pred_check
      _
    $region10: #{_lambda_.3} parent=5 // pred_check_branch
      %231 = sbr.rel (%p228) target = $region12
    $region11: #{_lambda_.3} parent=5 // pred_region
      %s232 = ssub.s32 %s14, 1
      // Predicated region
      $region13: #{_lambda_.3} parent=11 // pred_check
        %p233 = pneg %p87
      $region14: #{_lambda_.3} parent=11 // pred_check_branch
        %235 = sbr.rel (%p233) target = $region16
      $region15: #{_lambda_.3} parent=11 // pred_region
        _
      $region16: #{_lambda_.3} parent=11 // pred_fallthru
        _
      // Predicated region
      $region17: #{_lambda_.3} parent=11 // pred_check
        %p236 = pneg %p108
      $region18: #{_lambda_.3} parent=11 // pred_check_branch
        %238 = sbr.rel (%p236) target = $region20
      $region19: #{_lambda_.3} parent=11 // pred_region
        _
      $region20: #{_lambda_.3} parent=11 // pred_fallthru
        _
      // Predicated region
      $region21: #{_lambda_.3} parent=11 // pred_check
        %p239 = pneg %p129
      $region22: #{_lambda_.3} parent=11 // pred_check_branch
        %241 = sbr.rel (%p239) target = $region24
      $region23: #{_lambda_.3} parent=11 // pred_region
        _
      $region24: #{_lambda_.3} parent=11 // pred_fallthru
        _
      // Predicated region
      $region25: #{_lambda_.3} parent=11 // pred_check
        %p242 = pneg %p150
      $region26: #{_lambda_.3} parent=11 // pred_check_branch
        %244 = sbr.rel (%p242) target = $region28
      $region27: #{_lambda_.3} parent=11 // pred_region
        _
      $region28: #{_lambda_.3} parent=11 // pred_fallthru
        _
      // Predicated region
      $region29: #{_lambda_.3} parent=11 // pred_check
        %p245 = pneg %p171
      $region30: #{_lambda_.3} parent=11 // pred_check_branch
        %247 = sbr.rel (%p245) target = $region32
      $region31: #{_lambda_.3} parent=11 // pred_region
        _
      $region32: #{_lambda_.3} parent=11 // pred_fallthru
        _
      // Predicated region
      $region33: #{_lambda_.3} parent=11 // pred_check
        %p248 = pneg %p192
      $region34: #{_lambda_.3} parent=11 // pred_check_branch
        %250 = sbr.rel (%p248) target = $region36
      $region35: #{_lambda_.3} parent=11 // pred_region
        _
      $region36: #{_lambda_.3} parent=11 // pred_fallthru
        _
    $region12: #{_lambda_.3} parent=5 // pred_fallthru
      _
    %p251 = scmp.lt.s32.totalorder %s14, 2
    // Predicated region
    $region37: #{_lambda_.3} parent=5 // pred_check
      %p252 = pneg %p251
    $region38: #{_lambda_.3} parent=5 // pred_check_branch
      %254 = sbr.rel (%p252) target = $region40
    $region39: #{_lambda_.3} parent=5 // pred_region
      // Predicated region
      $region41: #{_lambda_.3} parent=39 // pred_check
        %p255 = pneg %p34
      $region42: #{_lambda_.3} parent=39 // pred_check_branch
        %257 = sbr.rel (%p255) target = $region44
      $region43: #{_lambda_.3} parent=39 // pred_region
        %p258 = scmp.lt.s32.totalorder %s14, 1
        %s259 = scalar_select %p258, %s14, 1
        %s260 = smul.addr %s259, 7
        %s261 = smul.addr %s260, 8
        %s262 = scalar_lea.vmem %s0, %s261
      $region44: #{_lambda_.3} parent=39 // pred_fallthru
        _
      // Predicated region
      $region45: #{_lambda_.3} parent=39 // pred_check
        %p263 = pneg %p60
      $region46: #{_lambda_.3} parent=39 // pred_check_branch
        %265 = sbr.rel (%p263) target = $region48
      $region47: #{_lambda_.3} parent=39 // pred_region
        %p266 = scmp.lt.s32.totalorder %s14, 1
        %s267 = scalar_select %p266, %s14, 1
        %s268 = smul.addr %s267, 7
        %s269 = smul.addr %s268, 8
        %s270 = scalar_lea.vmem %s1, %s269
      $region48: #{_lambda_.3} parent=39 // pred_fallthru
        _
    $region40: #{_lambda_.3} parent=5 // pred_fallthru
      _
    %p271 = scmp.le.s32.totalorder 1, %s14
    %p272 = scmp.lt.s32.totalorder %s14, 3
    %p273 = pnand %p271, %p272
    %p274 = pneg %p273
    // Predicated region
    $region49: #{_lambda_.3} parent=5 // pred_check
      _
    $region50: #{_lambda_.3} parent=5 // pred_check_branch
      %276 = sbr.rel (%p273) target = $region52
    $region51: #{_lambda_.3} parent=5 // pred_region
      %s277 = ssub.s32 %s14, 1
      %p278 = scmp.lt.s32.totalorder %s19, 1
      %s279 = scalar_select %p278, %s19, 1
      %s280 = smul.addr %s279, 7
      %s281 = smul.addr %s280, 8
      %s282 = scalar_lea.vmem %s0, %s281
      %p283 = pneg %p40
      %p284 = pneg %p37
      %p285 = scmp.lt.s32.totalorder %s19, 1
      %s286 = scalar_select %p285, %s19, 1
      %s287 = smul.addr %s286, 7
      %s288 = smul.addr %s287, 8
      %s289 = scalar_lea.vmem %s1, %s288
      %p290 = pneg %p66
      %p291 = pneg %p63
      %p292 = pneg %p87
      %p293 = pneg %p84
      %p294 = pneg %p108
      %p295 = pneg %p105
      %p296 = pneg %p129
      %p297 = pneg %p126
      %p298 = pneg %p150
      %p299 = pneg %p147
      %p300 = pneg %p171
      %p301 = pneg %p168
      %p302 = pneg %p192
      %p303 = pneg %p189
      %p304 = pneg %p218
      %p305 = pneg %p215
      %p306 = scmp.lt.s32.totalorder %s19, 1
      %s307 = scalar_select %p306, %s19, 1
      %s308 = smul.addr %s307, 8
      %s309 = scalar_lea.vmem %s8, %s308
      %p310 = scmp.lt.s32.totalorder %s19, 1
      %s311 = scalar_select %p310, %s19, 1
      %s312 = smul.addr %s311, 7
      %s313 = smul.addr %s312, 8
      %s314 = scalar_lea.vmem %s0, %s313
      %p315 = scmp.lt.s32.totalorder %s19, 1
      %s316 = scalar_select %p315, %s19, 1
      %s317 = smul.addr %s316, 7
      %s318 = smul.addr %s317, 8
      %s319 = scalar_lea.vmem %s1, %s318
      %p320 = scmp.lt.s32.totalorder %s19, 1
      %s321 = scalar_select %p320, %s19, 1
      %s322 = smul.addr %s321, 8
      %s323 = scalar_lea.vmem %s8, %s322
      %v325 = vld [vmem:[%s314] sm:$0xff]
      %v326 = vld [vmem:[%s314 + $0x8] sm:$0xff]
      %v327 = vld [vmem:[%s314 + $0x10] sm:$0xff]
      %v328 = vld [vmem:[%s314 + $0x18] sm:$0xff]
      %v329 = vld [vmem:[%s314 + $0x20] sm:$0xff]
      %v330 = vld [vmem:[%s314 + $0x28] sm:$0xff]
      %v331 = vld [vmem:[%s314 + $0x30] sm:$0xff]
      %v332 = vld [vmem:[%s319] sm:$0xff]
      %v333 = vld [vmem:[%s319 + $0x8] sm:$0xff]
      %v334 = vld [vmem:[%s319 + $0x10] sm:$0xff]
      %v335 = vld [vmem:[%s319 + $0x18] sm:$0xff]
      %v336 = vld [vmem:[%s319 + $0x20] sm:$0xff]
      %v337 = vld [vmem:[%s319 + $0x28] sm:$0xff]
      %v338 = vld [vmem:[%s319 + $0x30] sm:$0xff]
      %v339 = vld [vmem:[%s2] sm:$0xff]
      %v340 = vld [vmem:[%s2 + $0x8] sm:$0x1]
      %v341 = vpack.c.bf16 %v340, %v339
      %v342 = vld [vmem:[%s3] sm:$0x1]
      %v343 = vld [vmem:[%s5] sm:$0x1]
      %v344 = vld [vmem:[%s7] sm:$0x1]
      %v345 = vpack.c.bf16 %v325, %v325
      %v347 = vlaneseq
      %v348 = vshrl.u32 %v347, 7
      %v349 = vsub.s32 0, %v348
      %v350 = vrot.slane %v342, %v349
      %vm352 = vcmask 72704
      %v354 = vsel %vm352, %v345, 0
      %vm356 = vcmask 1043456
      %vm357 = vcmask 1044480
      %v358 = vsel %vm356, 4294967295, 65535
      %v359 = vsel %vm357, %v358, 0
      %v361 = vand.u32 %v341, %v359
      %363 = vmatprep.subr.bf16.mxu0 0
      %364 = vmatpush1.bf16.msra.mxu0 0
      %365 = vmatprep.subr.bf16.mxu0 0
      %366 = vmatpush1.bf16.msra.mxu0 0
      %367 = vmatprep.subr.bf16.mxu0 0
      %368 = vmatpush1.bf16.msra.mxu0 0
      %369 = vmatprep.subr.bf16.mxu0 0
      %370 = vmatpush1.bf16.msra.mxu0 0
      %371 = vmatprep.subr.bf16.mxu0 0
      %372 = vmatpush1.bf16.msra.mxu0 0
      %373 = vmatprep.subr.bf16.mxu0 0
      %374 = vmatpush1.bf16.msra.mxu0 0
      %375 = vmatprep.subr.bf16.mxu0 0
      %376 = vmatpush1.bf16.msra.mxu0 0
      %377 = vmatprep.subr.bf16.mxu0 0
      %378 = vmatpush1.bf16.msra.mxu0 %v361
      %379 = vmatprep.subr.bf16.mxu0 0
      %380 = vmatpush2.bf16.msra.mxu0 0
      %381 = vmatprep.subr.bf16.mxu0 0
      %382 = vmatpush2.bf16.msra.mxu0 0
      %383 = vmatprep.subr.bf16.mxu0 0
      %384 = vmatpush2.bf16.msra.mxu0 0
      %385 = vmatprep.subr.bf16.mxu0 0
      %386 = vmatpush2.bf16.msra.mxu0 0
      %387 = vmatprep.subr.bf16.mxu0 0
      %388 = vmatpush2.bf16.msra.mxu0 0
      %389 = vmatprep.subr.bf16.mxu0 0
      %390 = vmatpush2.bf16.msra.mxu0 0
      %391 = vmatprep.subr.bf16.mxu0 0
      %392 = vmatpush2.bf16.msra.mxu0 0
      %393 = vmatprep.subr.bf16.mxu0 0
      %394 = vmatpush2.bf16.msra.mxu0 0
      %395 = vmatprep.mubr.bf16.mxu0 0
      %396 = vmatmul.mubr.bf16.gmra.mxu0 %v354
      %v397 = vpop.f32.mrf.mxu0
      %v398 = vadd.f32 %v350, %v397
      %v399 = vpop.f32.mrf.mxu0
      %v400 = vpop.f32.mrf.mxu0
      %v401 = vpop.f32.mrf.mxu0
      %402 = vdwg.mxu0
      %v403 = vmax.f32 %v398, 0.0
      %v404 = vpack.c.bf16 %v332, %v332
      %v406 = vsel %vm352, %v404, 0
      %408 = vmatprep.subr.bf16.mxu0 0
      %409 = vmatpush1.bf16.msra.mxu0 0
      %410 = vmatprep.subr.bf16.mxu0 0
      %411 = vmatpush1.bf16.msra.mxu0 0
      %412 = vmatprep.subr.bf16.mxu0 0
      %413 = vmatpush1.bf16.msra.mxu0 0
      %414 = vmatprep.subr.bf16.mxu0 0
      %415 = vmatpush1.bf16.msra.mxu0 0
      %416 = vmatprep.subr.bf16.mxu0 0
      %417 = vmatpush1.bf16.msra.mxu0 0
      %418 = vmatprep.subr.bf16.mxu0 0
      %419 = vmatpush1.bf16.msra.mxu0 0
      %420 = vmatprep.subr.bf16.mxu0 0
      %421 = vmatpush1.bf16.msra.mxu0 0
      %422 = vmatprep.subr.bf16.mxu0 0
      %423 = vmatpush1.bf16.msra.mxu0 %v361
      %424 = vmatprep.subr.bf16.mxu0 0
      %425 = vmatpush2.bf16.msra.mxu0 0
      %426 = vmatprep.subr.bf16.mxu0 0
      %427 = vmatpush2.bf16.msra.mxu0 0
      %428 = vmatprep.subr.bf16.mxu0 0
      %429 = vmatpush2.bf16.msra.mxu0 0
      %430 = vmatprep.subr.bf16.mxu0 0
      %431 = vmatpush2.bf16.msra.mxu0 0
      %432 = vmatprep.subr.bf16.mxu0 0
      %433 = vmatpush2.bf16.msra.mxu0 0
      %434 = vmatprep.subr.bf16.mxu0 0
      %435 = vmatpush2.bf16.msra.mxu0 0
      %436 = vmatprep.subr.bf16.mxu0 0
      %437 = vmatpush2.bf16.msra.mxu0 0
      %438 = vmatprep.subr.bf16.mxu0 0
      %439 = vmatpush2.bf16.msra.mxu0 0
      %440 = vmatprep.mubr.bf16.mxu0 0
      %441 = vmatmul.mubr.bf16.gmra.mxu0 %v406
      %v442 = vpop.f32.mrf.mxu0
      %v443 = vadd.f32 %v350, %v442
      %v444 = vpop.f32.mrf.mxu0
      %v445 = vpop.f32.mrf.mxu0
      %v446 = vpop.f32.mrf.mxu0
      %447 = vdwg.mxu0
      %v448 = vmax.f32 %v443, 0.0
      %v450 = vrot.slane %v403, 7
      %vm452 = vcmask 1040384
      %v453 = vsel %vm452, 0.0, %v450
      %v455 = vrot.slane %v448, 7
      %v457 = vsel %vm452, 0.0, %v455
      %v458 = vpack.c.bf16 %v326, %v326
      %v460 = vsel %vm352, %v458, 0
      %462 = vmatprep.subr.bf16.mxu0 0
      %463 = vmatpush1.bf16.msra.mxu0 0
      %464 = vmatprep.subr.bf16.mxu0 0
      %465 = vmatpush1.bf16.msra.mxu0 0
      %466 = vmatprep.subr.bf16.mxu0 0
      %467 = vmatpush1.bf16.msra.mxu0 0
      %468 = vmatprep.subr.bf16.mxu0 0
      %469 = vmatpush1.bf16.msra.mxu0 0
      %470 = vmatprep.subr.bf16.mxu0 0
      %471 = vmatpush1.bf16.msra.mxu0 0
      %472 = vmatprep.subr.bf16.mxu0 0
      %473 = vmatpush1.bf16.msra.mxu0 0
      %474 = vmatprep.subr.bf16.mxu0 0
      %475 = vmatpush1.bf16.msra.mxu0 0
      %476 = vmatprep.subr.bf16.mxu0 0
      %477 = vmatpush1.bf16.msra.mxu0 %v361
      %478 = vmatprep.subr.bf16.mxu0 0
      %479 = vmatpush2.bf16.msra.mxu0 0
      %480 = vmatprep.subr.bf16.mxu0 0
      %481 = vmatpush2.bf16.msra.mxu0 0
      %482 = vmatprep.subr.bf16.mxu0 0
      %483 = vmatpush2.bf16.msra.mxu0 0
      %484 = vmatprep.subr.bf16.mxu0 0
      %485 = vmatpush2.bf16.msra.mxu0 0
      %486 = vmatprep.subr.bf16.mxu0 0
      %487 = vmatpush2.bf16.msra.mxu0 0
      %488 = vmatprep.subr.bf16.mxu0 0
      %489 = vmatpush2.bf16.msra.mxu0 0
      %490 = vmatprep.subr.bf16.mxu0 0
      %491 = vmatpush2.bf16.msra.mxu0 0
      %492 = vmatprep.subr.bf16.mxu0 0
      %493 = vmatpush2.bf16.msra.mxu0 0
      %494 = vmatprep.mubr.bf16.mxu0 0
      %495 = vmatmul.mubr.bf16.gmra.mxu0 %v460
      %v496 = vpop.f32.mrf.mxu0
      %v497 = vadd.f32 %v350, %v496
      %v498 = vpop.f32.mrf.mxu0
      %v499 = vpop.f32.mrf.mxu0
      %v500 = vpop.f32.mrf.mxu0
      %501 = vdwg.mxu0
      %v502 = vmax.f32 %v497, 0.0
      %v503 = vpack.c.bf16 %v333, %v333
      %v505 = vsel %vm352, %v503, 0
      %507 = vmatprep.subr.bf16.mxu0 0
      %508 = vmatpush1.bf16.msra.mxu0 0
      %509 = vmatprep.subr.bf16.mxu0 0
      %510 = vmatpush1.bf16.msra.mxu0 0
      %511 = vmatprep.subr.bf16.mxu0 0
      %512 = vmatpush1.bf16.msra.mxu0 0
      %513 = vmatprep.subr.bf16.mxu0 0
      %514 = vmatpush1.bf16.msra.mxu0 0
      %515 = vmatprep.subr.bf16.mxu0 0
      %516 = vmatpush1.bf16.msra.mxu0 0
      %517 = vmatprep.subr.bf16.mxu0 0
      %518 = vmatpush1.bf16.msra.mxu0 0
      %519 = vmatprep.subr.bf16.mxu0 0
      %520 = vmatpush1.bf16.msra.mxu0 0
      %521 = vmatprep.subr.bf16.mxu0 0
      %522 = vmatpush1.bf16.msra.mxu0 %v361
      %523 = vmatprep.subr.bf16.mxu0 0
      %524 = vmatpush2.bf16.msra.mxu0 0
      %525 = vmatprep.subr.bf16.mxu0 0
      %526 = vmatpush2.bf16.msra.mxu0 0
      %527 = vmatprep.subr.bf16.mxu0 0
      %528 = vmatpush2.bf16.msra.mxu0 0
      %529 = vmatprep.subr.bf16.mxu0 0
      %530 = vmatpush2.bf16.msra.mxu0 0
      %531 = vmatprep.subr.bf16.mxu0 0
      %532 = vmatpush2.bf16.msra.mxu0 0
      %533 = vmatprep.subr.bf16.mxu0 0
      %534 = vmatpush2.bf16.msra.mxu0 0
      %535 = vmatprep.subr.bf16.mxu0 0
      %536 = vmatpush2.bf16.msra.mxu0 0
      %537 = vmatprep.subr.bf16.mxu0 0
      %538 = vmatpush2.bf16.msra.mxu0 0
      %539 = vmatprep.mubr.bf16.mxu0 0
      %540 = vmatmul.mubr.bf16.gmra.mxu0 %v505
      %v541 = vpop.f32.mrf.mxu0
      %v542 = vadd.f32 %v350, %v541
      %v543 = vpop.f32.mrf.mxu0
      %v544 = vpop.f32.mrf.mxu0
      %v545 = vpop.f32.mrf.mxu0
      %546 = vdwg.mxu0
      %v547 = vmax.f32 %v542, 0.0
      %v549 = vrot.slane %v502, 7
      %v551 = vsel %vm452, 0.0, %v549
      %v553 = vrot.slane %v547, 7
      %v555 = vsel %vm452, 0.0, %v553
      %v556 = vpack.c.bf16 %v327, %v327
      %v558 = vsel %vm352, %v556, 0
      %560 = vmatprep.subr.bf16.mxu0 0
      %561 = vmatpush1.bf16.msra.mxu0 0
      %562 = vmatprep.subr.bf16.mxu0 0
      %563 = vmatpush1.bf16.msra.mxu0 0
      %564 = vmatprep.subr.bf16.mxu0 0
      %565 = vmatpush1.bf16.msra.mxu0 0
      %566 = vmatprep.subr.bf16.mxu0 0
      %567 = vmatpush1.bf16.msra.mxu0 0
      %568 = vmatprep.subr.bf16.mxu0 0
      %569 = vmatpush1.bf16.msra.mxu0 0
      %570 = vmatprep.subr.bf16.mxu0 0
      %571 = vmatpush1.bf16.msra.mxu0 0
      %572 = vmatprep.subr.bf16.mxu0 0
      %573 = vmatpush1.bf16.msra.mxu0 0
      %574 = vmatprep.subr.bf16.mxu0 0
      %575 = vmatpush1.bf16.msra.mxu0 %v361
      %576 = vmatprep.subr.bf16.mxu0 0
      %577 = vmatpush2.bf16.msra.mxu0 0
      %578 = vmatprep.subr.bf16.mxu0 0
      %579 = vmatpush2.bf16.msra.mxu0 0
      %580 = vmatprep.subr.bf16.mxu0 0
      %581 = vmatpush2.bf16.msra.mxu0 0
      %582 = vmatprep.subr.bf16.mxu0 0
      %583 = vmatpush2.bf16.msra.mxu0 0
      %584 = vmatprep.subr.bf16.mxu0 0
      %585 = vmatpush2.bf16.msra.mxu0 0
      %586 = vmatprep.subr.bf16.mxu0 0
      %587 = vmatpush2.bf16.msra.mxu0 0
      %588 = vmatprep.subr.bf16.mxu0 0
      %589 = vmatpush2.bf16.msra.mxu0 0
      %590 = vmatprep.subr.bf16.mxu0 0
      %591 = vmatpush2.bf16.msra.mxu0 0
      %592 = vmatprep.mubr.bf16.mxu0 0
      %593 = vmatmul.mubr.bf16.gmra.mxu0 %v558
      %v594 = vpop.f32.mrf.mxu0
      %v595 = vadd.f32 %v350, %v594
      %v596 = vpop.f32.mrf.mxu0
      %v597 = vpop.f32.mrf.mxu0
      %v598 = vpop.f32.mrf.mxu0
      %599 = vdwg.mxu0
      %v600 = vmax.f32 %v595, 0.0
      %v601 = vpack.c.bf16 %v334, %v334
      %v603 = vsel %vm352, %v601, 0
      %605 = vmatprep.subr.bf16.mxu0 0
      %606 = vmatpush1.bf16.msra.mxu0 0
      %607 = vmatprep.subr.bf16.mxu0 0
      %608 = vmatpush1.bf16.msra.mxu0 0
      %609 = vmatprep.subr.bf16.mxu0 0
      %610 = vmatpush1.bf16.msra.mxu0 0
      %611 = vmatprep.subr.bf16.mxu0 0
      %612 = vmatpush1.bf16.msra.mxu0 0
      %613 = vmatprep.subr.bf16.mxu0 0
      %614 = vmatpush1.bf16.msra.mxu0 0
      %615 = vmatprep.subr.bf16.mxu0 0
      %616 = vmatpush1.bf16.msra.mxu0 0
      %617 = vmatprep.subr.bf16.mxu0 0
      %618 = vmatpush1.bf16.msra.mxu0 0
      %619 = vmatprep.subr.bf16.mxu0 0
      %620 = vmatpush1.bf16.msra.mxu0 %v361
      %621 = vmatprep.subr.bf16.mxu0 0
      %622 = vmatpush2.bf16.msra.mxu0 0
      %623 = vmatprep.subr.bf16.mxu0 0
      %624 = vmatpush2.bf16.msra.mxu0 0
      %625 = vmatprep.subr.bf16.mxu0 0
      %626 = vmatpush2.bf16.msra.mxu0 0
      %627 = vmatprep.subr.bf16.mxu0 0
      %628 = vmatpush2.bf16.msra.mxu0 0
      %629 = vmatprep.subr.bf16.mxu0 0
      %630 = vmatpush2.bf16.msra.mxu0 0
      %631 = vmatprep.subr.bf16.mxu0 0
      %632 = vmatpush2.bf16.msra.mxu0 0
      %633 = vmatprep.subr.bf16.mxu0 0
      %634 = vmatpush2.bf16.msra.mxu0 0
      %635 = vmatprep.subr.bf16.mxu0 0
      %636 = vmatpush2.bf16.msra.mxu0 0
      %637 = vmatprep.mubr.bf16.mxu0 0
      %638 = vmatmul.mubr.bf16.gmra.mxu0 %v603
      %v639 = vpop.f32.mrf.mxu0
      %v640 = vadd.f32 %v350, %v639
      %v641 = vpop.f32.mrf.mxu0
      %v642 = vpop.f32.mrf.mxu0
      %v643 = vpop.f32.mrf.mxu0
      %644 = vdwg.mxu0
      %v645 = vmax.f32 %v640, 0.0
      %v647 = vrot.slane %v600, 7
      %v649 = vsel %vm452, 0.0, %v647
      %v651 = vrot.slane %v645, 7
      %v653 = vsel %vm452, 0.0, %v651
      %v654 = vpack.c.bf16 %v328, %v328
      %v656 = vsel %vm352, %v654, 0
      %658 = vmatprep.subr.bf16.mxu0 0
      %659 = vmatpush1.bf16.msra.mxu0 0
      %660 = vmatprep.subr.bf16.mxu0 0
      %661 = vmatpush1.bf16.msra.mxu0 0
      %662 = vmatprep.subr.bf16.mxu0 0
      %663 = vmatpush1.bf16.msra.mxu0 0
      %664 = vmatprep.subr.bf16.mxu0 0
      %665 = vmatpush1.bf16.msra.mxu0 0
      %666 = vmatprep.subr.bf16.mxu0 0
      %667 = vmatpush1.bf16.msra.mxu0 0
      %668 = vmatprep.subr.bf16.mxu0 0
      %669 = vmatpush1.bf16.msra.mxu0 0
      %670 = vmatprep.subr.bf16.mxu0 0
      %671 = vmatpush1.bf16.msra.mxu0 0
      %672 = vmatprep.subr.bf16.mxu0 0
      %673 = vmatpush1.bf16.msra.mxu0 %v361
      %674 = vmatprep.subr.bf16.mxu0 0
      %675 = vmatpush2.bf16.msra.mxu0 0
      %676 = vmatprep.subr.bf16.mxu0 0
      %677 = vmatpush2.bf16.msra.mxu0 0
      %678 = vmatprep.subr.bf16.mxu0 0
      %679 = vmatpush2.bf16.msra.mxu0 0
      %680 = vmatprep.subr.bf16.mxu0 0
      %681 = vmatpush2.bf16.msra.mxu0 0
      %682 = vmatprep.subr.bf16.mxu0 0
      %683 = vmatpush2.bf16.msra.mxu0 0
      %684 = vmatprep.subr.bf16.mxu0 0
      %685 = vmatpush2.bf16.msra.mxu0 0
      %686 = vmatprep.subr.bf16.mxu0 0
      %687 = vmatpush2.bf16.msra.mxu0 0
      %688 = vmatprep.subr.bf16.mxu0 0
      %689 = vmatpush2.bf16.msra.mxu0 0
      %690 = vmatprep.mubr.bf16.mxu0 0
      %691 = vmatmul.mubr.bf16.gmra.mxu0 %v656
      %v692 = vpop.f32.mrf.mxu0
      %v693 = vadd.f32 %v350, %v692
      %v694 = vpop.f32.mrf.mxu0
      %v695 = vpop.f32.mrf.mxu0
      %v696 = vpop.f32.mrf.mxu0
      %697 = vdwg.mxu0
      %v698 = vmax.f32 %v693, 0.0
      %v699 = vpack.c.bf16 %v335, %v335
      %v701 = vsel %vm352, %v699, 0
      %703 = vmatprep.subr.bf16.mxu0 0
      %704 = vmatpush1.bf16.msra.mxu0 0
      %705 = vmatprep.subr.bf16.mxu0 0
      %706 = vmatpush1.bf16.msra.mxu0 0
      %707 = vmatprep.subr.bf16.mxu0 0
      %708 = vmatpush1.bf16.msra.mxu0 0
      %709 = vmatprep.subr.bf16.mxu0 0
      %710 = vmatpush1.bf16.msra.mxu0 0
      %711 = vmatprep.subr.bf16.mxu0 0
      %712 = vmatpush1.bf16.msra.mxu0 0
      %713 = vmatprep.subr.bf16.mxu0 0
      %714 = vmatpush1.bf16.msra.mxu0 0
      %715 = vmatprep.subr.bf16.mxu0 0
      %716 = vmatpush1.bf16.msra.mxu0 0
      %717 = vmatprep.subr.bf16.mxu0 0
      %718 = vmatpush1.bf16.msra.mxu0 %v361
      %719 = vmatprep.subr.bf16.mxu0 0
      %720 = vmatpush2.bf16.msra.mxu0 0
      %721 = vmatprep.subr.bf16.mxu0 0
      %722 = vmatpush2.bf16.msra.mxu0 0
      %723 = vmatprep.subr.bf16.mxu0 0
      %724 = vmatpush2.bf16.msra.mxu0 0
      %725 = vmatprep.subr.bf16.mxu0 0
      %726 = vmatpush2.bf16.msra.mxu0 0
      %727 = vmatprep.subr.bf16.mxu0 0
      %728 = vmatpush2.bf16.msra.mxu0 0
      %729 = vmatprep.subr.bf16.mxu0 0
      %730 = vmatpush2.bf16.msra.mxu0 0
      %731 = vmatprep.subr.bf16.mxu0 0
      %732 = vmatpush2.bf16.msra.mxu0 0
      %733 = vmatprep.subr.bf16.mxu0 0
      %734 = vmatpush2.bf16.msra.mxu0 0
      %735 = vmatprep.mubr.bf16.mxu0 0
      %736 = vmatmul.mubr.bf16.gmra.mxu0 %v701
      %v737 = vpop.f32.mrf.mxu0
      %v738 = vadd.f32 %v350, %v737
      %v739 = vpop.f32.mrf.mxu0
      %v740 = vpop.f32.mrf.mxu0
      %v741 = vpop.f32.mrf.mxu0
      %742 = vdwg.mxu0
      %v743 = vmax.f32 %v738, 0.0
      %v745 = vrot.slane %v698, 7
      %v747 = vsel %vm452, 0.0, %v745
      %v749 = vrot.slane %v743, 7
      %v751 = vsel %vm452, 0.0, %v749
      %v752 = vpack.c.bf16 %v329, %v329
      %v754 = vsel %vm352, %v752, 0
      %756 = vmatprep.subr.bf16.mxu0 0
      %757 = vmatpush1.bf16.msra.mxu0 0
      %758 = vmatprep.subr.bf16.mxu0 0
      %759 = vmatpush1.bf16.msra.mxu0 0
      %760 = vmatprep.subr.bf16.mxu0 0
      %761 = vmatpush1.bf16.msra.mxu0 0
      %762 = vmatprep.subr.bf16.mxu0 0
      %763 = vmatpush1.bf16.msra.mxu0 0
      %764 = vmatprep.subr.bf16.mxu0 0
      %765 = vmatpush1.bf16.msra.mxu0 0
      %766 = vmatprep.subr.bf16.mxu0 0
      %767 = vmatpush1.bf16.msra.mxu0 0
      %768 = vmatprep.subr.bf16.mxu0 0
      %769 = vmatpush1.bf16.msra.mxu0 0
      %770 = vmatprep.subr.bf16.mxu0 0
      %771 = vmatpush1.bf16.msra.mxu0 %v361
      %772 = vmatprep.subr.bf16.mxu0 0
      %773 = vmatpush2.bf16.msra.mxu0 0
      %774 = vmatprep.subr.bf16.mxu0 0
      %775 = vmatpush2.bf16.msra.mxu0 0
      %776 = vmatprep.subr.bf16.mxu0 0
      %777 = vmatpush2.bf16.msra.mxu0 0
      %778 = vmatprep.subr.bf16.mxu0 0
      %779 = vmatpush2.bf16.msra.mxu0 0
      %780 = vmatprep.subr.bf16.mxu0 0
      %781 = vmatpush2.bf16.msra.mxu0 0
      %782 = vmatprep.subr.bf16.mxu0 0
      %783 = vmatpush2.bf16.msra.mxu0 0
      %784 = vmatprep.subr.bf16.mxu0 0
      %785 = vmatpush2.bf16.msra.mxu0 0
      %786 = vmatprep.subr.bf16.mxu0 0
      %787 = vmatpush2.bf16.msra.mxu0 0
      %788 = vmatprep.mubr.bf16.mxu0 0
      %789 = vmatmul.mubr.bf16.gmra.mxu0 %v754
      %v790 = vpop.f32.mrf.mxu0
      %v791 = vadd.f32 %v350, %v790
      %v792 = vpop.f32.mrf.mxu0
      %v793 = vpop.f32.mrf.mxu0
      %v794 = vpop.f32.mrf.mxu0
      %795 = vdwg.mxu0
      %v796 = vmax.f32 %v791, 0.0
      %v797 = vpack.c.bf16 %v336, %v336
      %v799 = vsel %vm352, %v797, 0
      %801 = vmatprep.subr.bf16.mxu0 0
      %802 = vmatpush1.bf16.msra.mxu0 0
      %803 = vmatprep.subr.bf16.mxu0 0
      %804 = vmatpush1.bf16.msra.mxu0 0
      %805 = vmatprep.subr.bf16.mxu0 0
      %806 = vmatpush1.bf16.msra.mxu0 0
      %807 = vmatprep.subr.bf16.mxu0 0
      %808 = vmatpush1.bf16.msra.mxu0 0
      %809 = vmatprep.subr.bf16.mxu0 0
      %810 = vmatpush1.bf16.msra.mxu0 0
      %811 = vmatprep.subr.bf16.mxu0 0
      %812 = vmatpush1.bf16.msra.mxu0 0
      %813 = vmatprep.subr.bf16.mxu0 0
      %814 = vmatpush1.bf16.msra.mxu0 0
      %815 = vmatprep.subr.bf16.mxu0 0
      %816 = vmatpush1.bf16.msra.mxu0 %v361
      %817 = vmatprep.subr.bf16.mxu0 0
      %818 = vmatpush2.bf16.msra.mxu0 0
      %819 = vmatprep.subr.bf16.mxu0 0
      %820 = vmatpush2.bf16.msra.mxu0 0
      %821 = vmatprep.subr.bf16.mxu0 0
      %822 = vmatpush2.bf16.msra.mxu0 0
      %823 = vmatprep.subr.bf16.mxu0 0
      %824 = vmatpush2.bf16.msra.mxu0 0
      %825 = vmatprep.subr.bf16.mxu0 0
      %826 = vmatpush2.bf16.msra.mxu0 0
      %827 = vmatprep.subr.bf16.mxu0 0
      %828 = vmatpush2.bf16.msra.mxu0 0
      %829 = vmatprep.subr.bf16.mxu0 0
      %830 = vmatpush2.bf16.msra.mxu0 0
      %831 = vmatprep.subr.bf16.mxu0 0
      %832 = vmatpush2.bf16.msra.mxu0 0
      %833 = vmatprep.mubr.bf16.mxu0 0
      %834 = vmatmul.mubr.bf16.gmra.mxu0 %v799
      %v835 = vpop.f32.mrf.mxu0
      %v836 = vadd.f32 %v350, %v835
      %v837 = vpop.f32.mrf.mxu0
      %v838 = vpop.f32.mrf.mxu0
      %v839 = vpop.f32.mrf.mxu0
      %840 = vdwg.mxu0
      %v841 = vmax.f32 %v836, 0.0
      %v843 = vrot.slane %v796, 7
      %v845 = vsel %vm452, 0.0, %v843
      %v847 = vrot.slane %v841, 7
      %v849 = vsel %vm452, 0.0, %v847
      %v850 = vpack.c.bf16 %v330, %v330
      %v852 = vsel %vm352, %v850, 0
      %854 = vmatprep.subr.bf16.mxu0 0
      %855 = vmatpush1.bf16.msra.mxu0 0
      %856 = vmatprep.subr.bf16.mxu0 0
      %857 = vmatpush1.bf16.msra.mxu0 0
      %858 = vmatprep.subr.bf16.mxu0 0
      %859 = vmatpush1.bf16.msra.mxu0 0
      %860 = vmatprep.subr.bf16.mxu0 0
      %861 = vmatpush1.bf16.msra.mxu0 0
      %862 = vmatprep.subr.bf16.mxu0 0
      %863 = vmatpush1.bf16.msra.mxu0 0
      %864 = vmatprep.subr.bf16.mxu0 0
      %865 = vmatpush1.bf16.msra.mxu0 0
      %866 = vmatprep.subr.bf16.mxu0 0
      %867 = vmatpush1.bf16.msra.mxu0 0
      %868 = vmatprep.subr.bf16.mxu0 0
      %869 = vmatpush1.bf16.msra.mxu0 %v361
      %870 = vmatprep.subr.bf16.mxu0 0
      %871 = vmatpush2.bf16.msra.mxu0 0
      %872 = vmatprep.subr.bf16.mxu0 0
      %873 = vmatpush2.bf16.msra.mxu0 0
      %874 = vmatprep.subr.bf16.mxu0 0
      %875 = vmatpush2.bf16.msra.mxu0 0
      %876 = vmatprep.subr.bf16.mxu0 0
      %877 = vmatpush2.bf16.msra.mxu0 0
      %878 = vmatprep.subr.bf16.mxu0 0
      %879 = vmatpush2.bf16.msra.mxu0 0
      %880 = vmatprep.subr.bf16.mxu0 0
      %881 = vmatpush2.bf16.msra.mxu0 0
      %882 = vmatprep.subr.bf16.mxu0 0
      %883 = vmatpush2.bf16.msra.mxu0 0
      %884 = vmatprep.subr.bf16.mxu0 0
      %885 = vmatpush2.bf16.msra.mxu0 0
      %886 = vmatprep.mubr.bf16.mxu0 0
      %887 = vmatmul.mubr.bf16.gmra.mxu0 %v852
      %v888 = vpop.f32.mrf.mxu0
      %v889 = vadd.f32 %v350, %v888
      %v890 = vpop.f32.mrf.mxu0
      %v891 = vpop.f32.mrf.mxu0
      %v892 = vpop.f32.mrf.mxu0
      %893 = vdwg.mxu0
      %v894 = vmax.f32 %v889, 0.0
      %v895 = vpack.c.bf16 %v337, %v337
      %v897 = vsel %vm352, %v895, 0
      %899 = vmatprep.subr.bf16.mxu0 0
      %900 = vmatpush1.bf16.msra.mxu0 0
      %901 = vmatprep.subr.bf16.mxu0 0
      %902 = vmatpush1.bf16.msra.mxu0 0
      %903 = vmatprep.subr.bf16.mxu0 0
      %904 = vmatpush1.bf16.msra.mxu0 0
      %905 = vmatprep.subr.bf16.mxu0 0
      %906 = vmatpush1.bf16.msra.mxu0 0
      %907 = vmatprep.subr.bf16.mxu0 0
      %908 = vmatpush1.bf16.msra.mxu0 0
      %909 = vmatprep.subr.bf16.mxu0 0
      %910 = vmatpush1.bf16.msra.mxu0 0
      %911 = vmatprep.subr.bf16.mxu0 0
      %912 = vmatpush1.bf16.msra.mxu0 0
      %913 = vmatprep.subr.bf16.mxu0 0
      %914 = vmatpush1.bf16.msra.mxu0 %v361
      %915 = vmatprep.subr.bf16.mxu0 0
      %916 = vmatpush2.bf16.msra.mxu0 0
      %917 = vmatprep.subr.bf16.mxu0 0
      %918 = vmatpush2.bf16.msra.mxu0 0
      %919 = vmatprep.subr.bf16.mxu0 0
      %920 = vmatpush2.bf16.msra.mxu0 0
      %921 = vmatprep.subr.bf16.mxu0 0
      %922 = vmatpush2.bf16.msra.mxu0 0
      %923 = vmatprep.subr.bf16.mxu0 0
      %924 = vmatpush2.bf16.msra.mxu0 0
      %925 = vmatprep.subr.bf16.mxu0 0
      %926 = vmatpush2.bf16.msra.mxu0 0
      %927 = vmatprep.subr.bf16.mxu0 0
      %928 = vmatpush2.bf16.msra.mxu0 0
      %929 = vmatprep.subr.bf16.mxu0 0
      %930 = vmatpush2.bf16.msra.mxu0 0
      %931 = vmatprep.mubr.bf16.mxu0 0
      %932 = vmatmul.mubr.bf16.gmra.mxu0 %v897
      %v933 = vpop.f32.mrf.mxu0
      %v934 = vadd.f32 %v350, %v933
      %v935 = vpop.f32.mrf.mxu0
      %v936 = vpop.f32.mrf.mxu0
      %v937 = vpop.f32.mrf.mxu0
      %938 = vdwg.mxu0
      %v939 = vmax.f32 %v934, 0.0
      %v941 = vrot.slane %v894, 7
      %v943 = vsel %vm452, 0.0, %v941
      %v945 = vrot.slane %v939, 7
      %v947 = vsel %vm452, 0.0, %v945
      %v948 = vpack.c.bf16 %v331, %v331
      %v950 = vsel %vm352, %v948, 0
      %952 = vmatprep.subr.bf16.mxu0 0
      %953 = vmatpush1.bf16.msra.mxu0 0
      %954 = vmatprep.subr.bf16.mxu0 0
      %955 = vmatpush1.bf16.msra.mxu0 0
      %956 = vmatprep.subr.bf16.mxu0 0
      %957 = vmatpush1.bf16.msra.mxu0 0
      %958 = vmatprep.subr.bf16.mxu0 0
      %959 = vmatpush1.bf16.msra.mxu0 0
      %960 = vmatprep.subr.bf16.mxu0 0
      %961 = vmatpush1.bf16.msra.mxu0 0
      %962 = vmatprep.subr.bf16.mxu0 0
      %963 = vmatpush1.bf16.msra.mxu0 0
      %964 = vmatprep.subr.bf16.mxu0 0
      %965 = vmatpush1.bf16.msra.mxu0 0
      %966 = vmatprep.subr.bf16.mxu0 0
      %967 = vmatpush1.bf16.msra.mxu0 %v361
      %968 = vmatprep.subr.bf16.mxu0 0
      %969 = vmatpush2.bf16.msra.mxu0 0
      %970 = vmatprep.subr.bf16.mxu0 0
      %971 = vmatpush2.bf16.msra.mxu0 0
      %972 = vmatprep.subr.bf16.mxu0 0
      %973 = vmatpush2.bf16.msra.mxu0 0
      %974 = vmatprep.subr.bf16.mxu0 0
      %975 = vmatpush2.bf16.msra.mxu0 0
      %976 = vmatprep.subr.bf16.mxu0 0
      %977 = vmatpush2.bf16.msra.mxu0 0
      %978 = vmatprep.subr.bf16.mxu0 0
      %979 = vmatpush2.bf16.msra.mxu0 0
      %980 = vmatprep.subr.bf16.mxu0 0
      %981 = vmatpush2.bf16.msra.mxu0 0
      %982 = vmatprep.subr.bf16.mxu0 0
      %983 = vmatpush2.bf16.msra.mxu0 0
      %984 = vmatprep.mubr.bf16.mxu0 0
      %985 = vmatmul.mubr.bf16.gmra.mxu0 %v950
      %v986 = vpop.f32.mrf.mxu0
      %v987 = vadd.f32 %v350, %v986
      %v988 = vpop.f32.mrf.mxu0
      %v989 = vpop.f32.mrf.mxu0
      %v990 = vpop.f32.mrf.mxu0
      %991 = vdwg.mxu0
      %v992 = vmax.f32 %v987, 0.0
      %v993 = vpack.c.bf16 %v338, %v338
      %v995 = vsel %vm352, %v993, 0
      %997 = vmatprep.subr.bf16.mxu0 0
      %998 = vmatpush1.bf16.msra.mxu0 0
      %999 = vmatprep.subr.bf16.mxu0 0
      %1000 = vmatpush1.bf16.msra.mxu0 0
      %1001 = vmatprep.subr.bf16.mxu0 0
      %1002 = vmatpush1.bf16.msra.mxu0 0
      %1003 = vmatprep.subr.bf16.mxu0 0
      %1004 = vmatpush1.bf16.msra.mxu0 0
      %1005 = vmatprep.subr.bf16.mxu0 0
      %1006 = vmatpush1.bf16.msra.mxu0 0
      %1007 = vmatprep.subr.bf16.mxu0 0
      %1008 = vmatpush1.bf16.msra.mxu0 0
      %1009 = vmatprep.subr.bf16.mxu0 0
      %1010 = vmatpush1.bf16.msra.mxu0 0
      %1011 = vmatprep.subr.bf16.mxu0 0
      %1012 = vmatpush1.bf16.msra.mxu0 %v361
      %1013 = vmatprep.subr.bf16.mxu0 0
      %1014 = vmatpush2.bf16.msra.mxu0 0
      %1015 = vmatprep.subr.bf16.mxu0 0
      %1016 = vmatpush2.bf16.msra.mxu0 0
      %1017 = vmatprep.subr.bf16.mxu0 0
      %1018 = vmatpush2.bf16.msra.mxu0 0
      %1019 = vmatprep.subr.bf16.mxu0 0
      %1020 = vmatpush2.bf16.msra.mxu0 0
      %1021 = vmatprep.subr.bf16.mxu0 0
      %1022 = vmatpush2.bf16.msra.mxu0 0
      %1023 = vmatprep.subr.bf16.mxu0 0
      %1024 = vmatpush2.bf16.msra.mxu0 0
      %1025 = vmatprep.subr.bf16.mxu0 0
      %1026 = vmatpush2.bf16.msra.mxu0 0
      %1027 = vmatprep.subr.bf16.mxu0 0
      %1028 = vmatpush2.bf16.msra.mxu0 0
      %1029 = vmatprep.mubr.bf16.mxu0 0
      %1030 = vmatmul.mubr.bf16.gmra.mxu0 %v995
      %v1031 = vpop.f32.mrf.mxu0
      %v1032 = vadd.f32 %v350, %v1031
      %v1033 = vpop.f32.mrf.mxu0
      %v1034 = vpop.f32.mrf.mxu0
      %v1035 = vpop.f32.mrf.mxu0
      %1036 = vdwg.mxu0
      %v1037 = vmax.f32 %v1032, 0.0
      %v1039 = vrot.slane %v992, 7
      %v1041 = vsel %vm452, 0.0, %v1039
      %v1043 = vrot.slane %v1037, 7
      %v1045 = vsel %vm452, 0.0, %v1043
      %v1047 = vlaneseq
      %v1048 = vshrl.u32 %v1047, 7
      %v1049 = vsub.s32 0, %v1048
      %v1050 = vrot.slane %v344, %v1049
      %v1052 = vadd.f32 %v1050, 0.0
      %v1053 = vpack.c.bf16 %v453, %v453
      %v1054 = vld [vmem:[%s4] sm:$0xff]
      %v1055 = vld [vmem:[%s4 + $0x8] sm:$0xff]
      %v1056 = vld [vmem:[%s4 + $0x10] sm:$0xff]
      %v1057 = vld [vmem:[%s4 + $0x18] sm:$0xff]
      %v1058 = vpack.c.bf16 %v1055, %v1054
      %v1059 = vpack.c.bf16 %v1057, %v1056
      %v1060 = vpack.c.bf16 %v551, %v551
      %s1061 = scalar_lea.vmem %s4, 32
      %v1062 = vld [vmem:[%s1061] sm:$0xff]
      %v1063 = vld [vmem:[%s1061 + $0x8] sm:$0xff]
      %v1064 = vld [vmem:[%s1061 + $0x10] sm:$0xff]
      %v1065 = vld [vmem:[%s1061 + $0x18] sm:$0xff]
      %v1066 = vpack.c.bf16 %v1063, %v1062
      %v1067 = vpack.c.bf16 %v1065, %v1064
      %vm1068 = vcmask 261120
      %v1070 = vsel %vm1068, %v1060, 0
      %1072 = vmatprep.subr.bf16.mxu0 0
      %1073 = vmatpush1.bf16.msra.mxu0 0
      %1074 = vmatprep.subr.bf16.mxu0 0
      %1075 = vmatpush1.bf16.msra.mxu0 0
      %1076 = vmatprep.subr.bf16.mxu0 0
      %1077 = vmatpush1.bf16.msra.mxu0 0
      %1078 = vmatprep.subr.bf16.mxu0 0
      %1079 = vmatpush1.bf16.msra.mxu0 0
      %1080 = vmatprep.subr.bf16.mxu0 0
      %1081 = vmatpush1.bf16.msra.mxu0 0
      %1082 = vmatprep.subr.bf16.mxu0 0
      %1083 = vmatpush1.bf16.msra.mxu0 0
      %1084 = vmatprep.subr.bf16.mxu0 0
      %1085 = vmatpush1.bf16.msra.mxu0 %v1067
      %1086 = vmatprep.subr.bf16.mxu0 0
      %1087 = vmatpush1.bf16.msra.mxu0 %v1066
      %1088 = vmatprep.subr.bf16.mxu0 0
      %1089 = vmatpush2.bf16.msra.mxu0 0
      %1090 = vmatprep.subr.bf16.mxu0 0
      %1091 = vmatpush2.bf16.msra.mxu0 0
      %1092 = vmatprep.subr.bf16.mxu0 0
      %1093 = vmatpush2.bf16.msra.mxu0 0
      %1094 = vmatprep.subr.bf16.mxu0 0
      %1095 = vmatpush2.bf16.msra.mxu0 0
      %1096 = vmatprep.subr.bf16.mxu0 0
      %1097 = vmatpush2.bf16.msra.mxu0 0
      %1098 = vmatprep.subr.bf16.mxu0 0
      %1099 = vmatpush2.bf16.msra.mxu0 0
      %1100 = vmatprep.subr.bf16.mxu0 0
      %1101 = vmatpush2.bf16.msra.mxu0 0
      %1102 = vmatprep.subr.bf16.mxu0 0
      %1103 = vmatpush2.bf16.msra.mxu0 0
      %1104 = vmatprep.mubr.bf16.mxu0 0
      %1105 = vmatmul.mubr.bf16.gmra.mxu0 %v1070
      %v1106 = vpop.f32.mrf.mxu0
      %v1107 = vadd.f32 0.0, %v1106
      %v1108 = vpop.f32.mrf.mxu0
      %v1109 = vpop.f32.mrf.mxu0
      %v1110 = vpop.f32.mrf.mxu0
      %1111 = vdwg.mxu0
      %v1113 = vsel %vm1068, %v1053, 0
      %1115 = vmatprep.subr.bf16.mxu0 0
      %1116 = vmatpush1.bf16.msra.mxu0 0
      %1117 = vmatprep.subr.bf16.mxu0 0
      %1118 = vmatpush1.bf16.msra.mxu0 0
      %1119 = vmatprep.subr.bf16.mxu0 0
      %1120 = vmatpush1.bf16.msra.mxu0 0
      %1121 = vmatprep.subr.bf16.mxu0 0
      %1122 = vmatpush1.bf16.msra.mxu0 0
      %1123 = vmatprep.subr.bf16.mxu0 0
      %1124 = vmatpush1.bf16.msra.mxu0 0
      %1125 = vmatprep.subr.bf16.mxu0 0
      %1126 = vmatpush1.bf16.msra.mxu0 0
      %1127 = vmatprep.subr.bf16.mxu0 0
      %1128 = vmatpush1.bf16.msra.mxu0 %v1059
      %1129 = vmatprep.subr.bf16.mxu0 0
      %1130 = vmatpush1.bf16.msra.mxu0 %v1058
      %1131 = vmatprep.subr.bf16.mxu0 0
      %1132 = vmatpush2.bf16.msra.mxu0 0
      %1133 = vmatprep.subr.bf16.mxu0 0
      %1134 = vmatpush2.bf16.msra.mxu0 0
      %1135 = vmatprep.subr.bf16.mxu0 0
      %1136 = vmatpush2.bf16.msra.mxu0 0
      %1137 = vmatprep.subr.bf16.mxu0 0
      %1138 = vmatpush2.bf16.msra.mxu0 0
      %1139 = vmatprep.subr.bf16.mxu0 0
      %1140 = vmatpush2.bf16.msra.mxu0 0
      %1141 = vmatprep.subr.bf16.mxu0 0
      %1142 = vmatpush2.bf16.msra.mxu0 0
      %1143 = vmatprep.subr.bf16.mxu0 0
      %1144 = vmatpush2.bf16.msra.mxu0 0
      %1145 = vmatprep.subr.bf16.mxu0 0
      %1146 = vmatpush2.bf16.msra.mxu0 0
      %1147 = vmatprep.mubr.bf16.mxu0 0
      %1148 = vmatmul.mubr.bf16.gmra.mxu0 %v1113
      %v1149 = vpop.f32.mrf.mxu0
      %v1150 = vadd.f32 %v1107, %v1149
      %v1151 = vpop.f32.mrf.mxu0
      %v1152 = vpop.f32.mrf.mxu0
      %v1153 = vpop.f32.mrf.mxu0
      %1154 = vdwg.mxu0
      %v1155 = vpack.c.bf16 %v649, %v649
      %s1156 = scalar_lea.vmem %s4, 64
      %v1157 = vld [vmem:[%s1156] sm:$0xff]
      %v1158 = vld [vmem:[%s1156 + $0x8] sm:$0xff]
      %v1159 = vld [vmem:[%s1156 + $0x10] sm:$0xff]
      %v1160 = vld [vmem:[%s1156 + $0x18] sm:$0xff]
      %v1161 = vpack.c.bf16 %v1158, %v1157
      %v1162 = vpack.c.bf16 %v1160, %v1159
      %v1164 = vsel %vm1068, %v1155, 0
      %1166 = vmatprep.subr.bf16.mxu0 0
      %1167 = vmatpush1.bf16.msra.mxu0 0
      %1168 = vmatprep.subr.bf16.mxu0 0
      %1169 = vmatpush1.bf16.msra.mxu0 0
      %1170 = vmatprep.subr.bf16.mxu0 0
      %1171 = vmatpush1.bf16.msra.mxu0 0
      %1172 = vmatprep.subr.bf16.mxu0 0
      %1173 = vmatpush1.bf16.msra.mxu0 0
      %1174 = vmatprep.subr.bf16.mxu0 0
      %1175 = vmatpush1.bf16.msra.mxu0 0
      %1176 = vmatprep.subr.bf16.mxu0 0
      %1177 = vmatpush1.bf16.msra.mxu0 0
      %1178 = vmatprep.subr.bf16.mxu0 0
      %1179 = vmatpush1.bf16.msra.mxu0 %v1162
      %1180 = vmatprep.subr.bf16.mxu0 0
      %1181 = vmatpush1.bf16.msra.mxu0 %v1161
      %1182 = vmatprep.subr.bf16.mxu0 0
      %1183 = vmatpush2.bf16.msra.mxu0 0
      %1184 = vmatprep.subr.bf16.mxu0 0
      %1185 = vmatpush2.bf16.msra.mxu0 0
      %1186 = vmatprep.subr.bf16.mxu0 0
      %1187 = vmatpush2.bf16.msra.mxu0 0
      %1188 = vmatprep.subr.bf16.mxu0 0
      %1189 = vmatpush2.bf16.msra.mxu0 0
      %1190 = vmatprep.subr.bf16.mxu0 0
      %1191 = vmatpush2.bf16.msra.mxu0 0
      %1192 = vmatprep.subr.bf16.mxu0 0
      %1193 = vmatpush2.bf16.msra.mxu0 0
      %1194 = vmatprep.subr.bf16.mxu0 0
      %1195 = vmatpush2.bf16.msra.mxu0 0
      %1196 = vmatprep.subr.bf16.mxu0 0
      %1197 = vmatpush2.bf16.msra.mxu0 0
      %1198 = vmatprep.mubr.bf16.mxu0 0
      %1199 = vmatmul.mubr.bf16.gmra.mxu0 %v1164
      %v1200 = vpop.f32.mrf.mxu0
      %v1201 = vadd.f32 0.0, %v1200
      %v1202 = vpop.f32.mrf.mxu0
      %v1203 = vpop.f32.mrf.mxu0
      %v1204 = vpop.f32.mrf.mxu0
      %1205 = vdwg.mxu0
      %v1206 = vadd.f32 %v1150, %v1201
      %v1207 = vpack.c.bf16 %v457, %v457
      %s1208 = scalar_lea.vmem %s4, 96
      %v1209 = vld [vmem:[%s1208] sm:$0xff]
      %v1210 = vld [vmem:[%s1208 + $0x8] sm:$0xff]
      %v1211 = vld [vmem:[%s1208 + $0x10] sm:$0xff]
      %v1212 = vld [vmem:[%s1208 + $0x18] sm:$0xff]
      %v1213 = vpack.c.bf16 %v1210, %v1209
      %v1214 = vpack.c.bf16 %v1212, %v1211
      %v1216 = vsel %vm1068, %v1207, 0
      %1218 = vmatprep.subr.bf16.mxu0 0
      %1219 = vmatpush1.bf16.msra.mxu0 0
      %1220 = vmatprep.subr.bf16.mxu0 0
      %1221 = vmatpush1.bf16.msra.mxu0 0
      %1222 = vmatprep.subr.bf16.mxu0 0
      %1223 = vmatpush1.bf16.msra.mxu0 0
      %1224 = vmatprep.subr.bf16.mxu0 0
      %1225 = vmatpush1.bf16.msra.mxu0 0
      %1226 = vmatprep.subr.bf16.mxu0 0
      %1227 = vmatpush1.bf16.msra.mxu0 0
      %1228 = vmatprep.subr.bf16.mxu0 0
      %1229 = vmatpush1.bf16.msra.mxu0 0
      %1230 = vmatprep.subr.bf16.mxu0 0
      %1231 = vmatpush1.bf16.msra.mxu0 %v1214
      %1232 = vmatprep.subr.bf16.mxu0 0
      %1233 = vmatpush1.bf16.msra.mxu0 %v1213
      %1234 = vmatprep.subr.bf16.mxu0 0
      %1235 = vmatpush2.bf16.msra.mxu0 0
      %1236 = vmatprep.subr.bf16.mxu0 0
      %1237 = vmatpush2.bf16.msra.mxu0 0
      %1238 = vmatprep.subr.bf16.mxu0 0
      %1239 = vmatpush2.bf16.msra.mxu0 0
      %1240 = vmatprep.subr.bf16.mxu0 0
      %1241 = vmatpush2.bf16.msra.mxu0 0
      %1242 = vmatprep.subr.bf16.mxu0 0
      %1243 = vmatpush2.bf16.msra.mxu0 0
      %1244 = vmatprep.subr.bf16.mxu0 0
      %1245 = vmatpush2.bf16.msra.mxu0 0
      %1246 = vmatprep.subr.bf16.mxu0 0
      %1247 = vmatpush2.bf16.msra.mxu0 0
      %1248 = vmatprep.subr.bf16.mxu0 0
      %1249 = vmatpush2.bf16.msra.mxu0 0
      %1250 = vmatprep.mubr.bf16.mxu0 0
      %1251 = vmatmul.mubr.bf16.gmra.mxu0 %v1216
      %v1252 = vpop.f32.mrf.mxu0
      %v1253 = vadd.f32 0.0, %v1252
      %v1254 = vpop.f32.mrf.mxu0
      %v1255 = vpop.f32.mrf.mxu0
      %v1256 = vpop.f32.mrf.mxu0
      %1257 = vdwg.mxu0
      %v1258 = vadd.f32 %v1206, %v1253
      %v1259 = vpack.c.bf16 %v555, %v555
      %s1260 = scalar_lea.vmem %s4, 128
      %v1261 = vld [vmem:[%s1260] sm:$0xff]
      %v1262 = vld [vmem:[%s1260 + $0x8] sm:$0xff]
      %v1263 = vld [vmem:[%s1260 + $0x10] sm:$0xff]
      %v1264 = vld [vmem:[%s1260 + $0x18] sm:$0xff]
      %v1265 = vpack.c.bf16 %v1262, %v1261
      %v1266 = vpack.c.bf16 %v1264, %v1263
      %v1268 = vsel %vm1068, %v1259, 0
      %1270 = vmatprep.subr.bf16.mxu0 0
      %1271 = vmatpush1.bf16.msra.mxu0 0
      %1272 = vmatprep.subr.bf16.mxu0 0
      %1273 = vmatpush1.bf16.msra.mxu0 0
      %1274 = vmatprep.subr.bf16.mxu0 0
      %1275 = vmatpush1.bf16.msra.mxu0 0
      %1276 = vmatprep.subr.bf16.mxu0 0
      %1277 = vmatpush1.bf16.msra.mxu0 0
      %1278 = vmatprep.subr.bf16.mxu0 0
      %1279 = vmatpush1.bf16.msra.mxu0 0
      %1280 = vmatprep.subr.bf16.mxu0 0
      %1281 = vmatpush1.bf16.msra.mxu0 0
      %1282 = vmatprep.subr.bf16.mxu0 0
      %1283 = vmatpush1.bf16.msra.mxu0 %v1266
      %1284 = vmatprep.subr.bf16.mxu0 0
      %1285 = vmatpush1.bf16.msra.mxu0 %v1265
      %1286 = vmatprep.subr.bf16.mxu0 0
      %1287 = vmatpush2.bf16.msra.mxu0 0
      %1288 = vmatprep.subr.bf16.mxu0 0
      %1289 = vmatpush2.bf16.msra.mxu0 0
      %1290 = vmatprep.subr.bf16.mxu0 0
      %1291 = vmatpush2.bf16.msra.mxu0 0
      %1292 = vmatprep.subr.bf16.mxu0 0
      %1293 = vmatpush2.bf16.msra.mxu0 0
      %1294 = vmatprep.subr.bf16.mxu0 0
      %1295 = vmatpush2.bf16.msra.mxu0 0
      %1296 = vmatprep.subr.bf16.mxu0 0
      %1297 = vmatpush2.bf16.msra.mxu0 0
      %1298 = vmatprep.subr.bf16.mxu0 0
      %1299 = vmatpush2.bf16.msra.mxu0 0
      %1300 = vmatprep.subr.bf16.mxu0 0
      %1301 = vmatpush2.bf16.msra.mxu0 0
      %1302 = vmatprep.mubr.bf16.mxu0 0
      %1303 = vmatmul.mubr.bf16.gmra.mxu0 %v1268
      %v1304 = vpop.f32.mrf.mxu0
      %v1305 = vadd.f32 0.0, %v1304
      %v1306 = vpop.f32.mrf.mxu0
      %v1307 = vpop.f32.mrf.mxu0
      %v1308 = vpop.f32.mrf.mxu0
      %1309 = vdwg.mxu0
      %v1310 = vadd.f32 %v1258, %v1305
      %v1311 = vpack.c.bf16 %v653, %v653
      %s1312 = scalar_lea.vmem %s4, 160
      %v1313 = vld [vmem:[%s1312] sm:$0xff]
      %v1314 = vld [vmem:[%s1312 + $0x8] sm:$0xff]
      %v1315 = vld [vmem:[%s1312 + $0x10] sm:$0xff]
      %v1316 = vld [vmem:[%s1312 + $0x18] sm:$0xff]
      %v1317 = vpack.c.bf16 %v1314, %v1313
      %v1318 = vpack.c.bf16 %v1316, %v1315
      %v1320 = vsel %vm1068, %v1311, 0
      %1322 = vmatprep.subr.bf16.mxu0 0
      %1323 = vmatpush1.bf16.msra.mxu0 0
      %1324 = vmatprep.subr.bf16.mxu0 0
      %1325 = vmatpush1.bf16.msra.mxu0 0
      %1326 = vmatprep.subr.bf16.mxu0 0
      %1327 = vmatpush1.bf16.msra.mxu0 0
      %1328 = vmatprep.subr.bf16.mxu0 0
      %1329 = vmatpush1.bf16.msra.mxu0 0
      %1330 = vmatprep.subr.bf16.mxu0 0
      %1331 = vmatpush1.bf16.msra.mxu0 0
      %1332 = vmatprep.subr.bf16.mxu0 0
      %1333 = vmatpush1.bf16.msra.mxu0 0
      %1334 = vmatprep.subr.bf16.mxu0 0
      %1335 = vmatpush1.bf16.msra.mxu0 %v1318
      %1336 = vmatprep.subr.bf16.mxu0 0
      %1337 = vmatpush1.bf16.msra.mxu0 %v1317
      %1338 = vmatprep.subr.bf16.mxu0 0
      %1339 = vmatpush2.bf16.msra.mxu0 0
      %1340 = vmatprep.subr.bf16.mxu0 0
      %1341 = vmatpush2.bf16.msra.mxu0 0
      %1342 = vmatprep.subr.bf16.mxu0 0
      %1343 = vmatpush2.bf16.msra.mxu0 0
      %1344 = vmatprep.subr.bf16.mxu0 0
      %1345 = vmatpush2.bf16.msra.mxu0 0
      %1346 = vmatprep.subr.bf16.mxu0 0
      %1347 = vmatpush2.bf16.msra.mxu0 0
      %1348 = vmatprep.subr.bf16.mxu0 0
      %1349 = vmatpush2.bf16.msra.mxu0 0
      %1350 = vmatprep.subr.bf16.mxu0 0
      %1351 = vmatpush2.bf16.msra.mxu0 0
      %1352 = vmatprep.subr.bf16.mxu0 0
      %1353 = vmatpush2.bf16.msra.mxu0 0
      %1354 = vmatprep.mubr.bf16.mxu0 0
      %1355 = vmatmul.mubr.bf16.gmra.mxu0 %v1320
      %v1356 = vpop.f32.mrf.mxu0
      %v1357 = vadd.f32 0.0, %v1356
      %v1358 = vpop.f32.mrf.mxu0
      %v1359 = vpop.f32.mrf.mxu0
      %v1360 = vpop.f32.mrf.mxu0
      %1361 = vdwg.mxu0
      %v1362 = vadd.f32 %v1310, %v1357
      %v1363 = vpack.c.bf16 %v450, %v453
      %s1364 = scalar_lea.vmem %s4, 192
      %v1365 = vld [vmem:[%s1364] sm:$0xff]
      %v1366 = vld [vmem:[%s1364 + $0x8] sm:$0xff]
      %v1367 = vld [vmem:[%s1364 + $0x10] sm:$0xff]
      %v1368 = vld [vmem:[%s1364 + $0x18] sm:$0xff]
      %v1369 = vpack.c.bf16 %v1366, %v1365
      %v1370 = vpack.c.bf16 %v1368, %v1367
      %v1372 = vshrl.u32 %v1363, 16
      %v1374 = vshll.u32 %v1363, 16
      %v1376 = vrot.slane %v1374, 1
      %v1377 = vor.u32 %v1372, %v1376
      %v1379 = vsel %vm1068, %v1377, 0
      %1381 = vmatprep.subr.bf16.mxu0 0
      %1382 = vmatpush1.bf16.msra.mxu0 0
      %1383 = vmatprep.subr.bf16.mxu0 0
      %1384 = vmatpush1.bf16.msra.mxu0 0
      %1385 = vmatprep.subr.bf16.mxu0 0
      %1386 = vmatpush1.bf16.msra.mxu0 0
      %1387 = vmatprep.subr.bf16.mxu0 0
      %1388 = vmatpush1.bf16.msra.mxu0 0
      %1389 = vmatprep.subr.bf16.mxu0 0
      %1390 = vmatpush1.bf16.msra.mxu0 0
      %1391 = vmatprep.subr.bf16.mxu0 0
      %1392 = vmatpush1.bf16.msra.mxu0 0
      %1393 = vmatprep.subr.bf16.mxu0 0
      %1394 = vmatpush1.bf16.msra.mxu0 %v1370
      %1395 = vmatprep.subr.bf16.mxu0 0
      %1396 = vmatpush1.bf16.msra.mxu0 %v1369
      %1397 = vmatprep.subr.bf16.mxu0 0
      %1398 = vmatpush2.bf16.msra.mxu0 0
      %1399 = vmatprep.subr.bf16.mxu0 0
      %1400 = vmatpush2.bf16.msra.mxu0 0
      %1401 = vmatprep.subr.bf16.mxu0 0
      %1402 = vmatpush2.bf16.msra.mxu0 0
      %1403 = vmatprep.subr.bf16.mxu0 0
      %1404 = vmatpush2.bf16.msra.mxu0 0
      %1405 = vmatprep.subr.bf16.mxu0 0
      %1406 = vmatpush2.bf16.msra.mxu0 0
      %1407 = vmatprep.subr.bf16.mxu0 0
      %1408 = vmatpush2.bf16.msra.mxu0 0
      %1409 = vmatprep.subr.bf16.mxu0 0
      %1410 = vmatpush2.bf16.msra.mxu0 0
      %1411 = vmatprep.subr.bf16.mxu0 0
      %1412 = vmatpush2.bf16.msra.mxu0 0
      %1413 = vmatprep.mubr.bf16.mxu0 0
      %1414 = vmatmul.mubr.bf16.gmra.mxu0 %v1379
      %v1415 = vpop.f32.mrf.mxu0
      %v1416 = vadd.f32 0.0, %v1415
      %v1417 = vpop.f32.mrf.mxu0
      %v1418 = vpop.f32.mrf.mxu0
      %v1419 = vpop.f32.mrf.mxu0
      %1420 = vdwg.mxu0
      %v1421 = vadd.f32 %v1362, %v1416
      %v1422 = vpack.c.bf16 %v549, %v551
      %s1423 = scalar_lea.vmem %s4, 224
      %v1424 = vld [vmem:[%s1423] sm:$0xff]
      %v1425 = vld [vmem:[%s1423 + $0x8] sm:$0xff]
      %v1426 = vld [vmem:[%s1423 + $0x10] sm:$0xff]
      %v1427 = vld [vmem:[%s1423 + $0x18] sm:$0xff]
      %v1428 = vpack.c.bf16 %v1425, %v1424
      %v1429 = vpack.c.bf16 %v1427, %v1426
      %v1431 = vshrl.u32 %v1422, 16
      %v1433 = vshll.u32 %v1422, 16
      %v1435 = vrot.slane %v1433, 1
      %v1436 = vor.u32 %v1431, %v1435
      %v1438 = vsel %vm1068, %v1436, 0
      %1440 = vmatprep.subr.bf16.mxu0 0
      %1441 = vmatpush1.bf16.msra.mxu0 0
      %1442 = vmatprep.subr.bf16.mxu0 0
      %1443 = vmatpush1.bf16.msra.mxu0 0
      %1444 = vmatprep.subr.bf16.mxu0 0
      %1445 = vmatpush1.bf16.msra.mxu0 0
      %1446 = vmatprep.subr.bf16.mxu0 0
      %1447 = vmatpush1.bf16.msra.mxu0 0
      %1448 = vmatprep.subr.bf16.mxu0 0
      %1449 = vmatpush1.bf16.msra.mxu0 0
      %1450 = vmatprep.subr.bf16.mxu0 0
      %1451 = vmatpush1.bf16.msra.mxu0 0
      %1452 = vmatprep.subr.bf16.mxu0 0
      %1453 = vmatpush1.bf16.msra.mxu0 %v1429
      %1454 = vmatprep.subr.bf16.mxu0 0
      %1455 = vmatpush1.bf16.msra.mxu0 %v1428
      %1456 = vmatprep.subr.bf16.mxu0 0
      %1457 = vmatpush2.bf16.msra.mxu0 0
      %1458 = vmatprep.subr.bf16.mxu0 0
      %1459 = vmatpush2.bf16.msra.mxu0 0
      %1460 = vmatprep.subr.bf16.mxu0 0
      %1461 = vmatpush2.bf16.msra.mxu0 0
      %1462 = vmatprep.subr.bf16.mxu0 0
      %1463 = vmatpush2.bf16.msra.mxu0 0
      %1464 = vmatprep.subr.bf16.mxu0 0
      %1465 = vmatpush2.bf16.msra.mxu0 0
      %1466 = vmatprep.subr.bf16.mxu0 0
      %1467 = vmatpush2.bf16.msra.mxu0 0
      %1468 = vmatprep.subr.bf16.mxu0 0
      %1469 = vmatpush2.bf16.msra.mxu0 0
      %1470 = vmatprep.subr.bf16.mxu0 0
      %1471 = vmatpush2.bf16.msra.mxu0 0
      %1472 = vmatprep.mubr.bf16.mxu0 0
      %1473 = vmatmul.mubr.bf16.gmra.mxu0 %v1438
      %v1474 = vpop.f32.mrf.mxu0
      %v1475 = vadd.f32 0.0, %v1474
      %v1476 = vpop.f32.mrf.mxu0
      %v1477 = vpop.f32.mrf.mxu0
      %v1478 = vpop.f32.mrf.mxu0
      %1479 = vdwg.mxu0
      %v1480 = vadd.f32 %v1421, %v1475
      %v1481 = vpack.c.bf16 %v647, %v649
      %s1482 = scalar_lea.vmem %s4, 256
      %v1483 = vld [vmem:[%s1482] sm:$0xff]
      %v1484 = vld [vmem:[%s1482 + $0x8] sm:$0xff]
      %v1485 = vld [vmem:[%s1482 + $0x10] sm:$0xff]
      %v1486 = vld [vmem:[%s1482 + $0x18] sm:$0xff]
      %v1487 = vpack.c.bf16 %v1484, %v1483
      %v1488 = vpack.c.bf16 %v1486, %v1485
      %v1490 = vshrl.u32 %v1481, 16
      %v1492 = vshll.u32 %v1481, 16
      %v1494 = vrot.slane %v1492, 1
      %v1495 = vor.u32 %v1490, %v1494
      %v1497 = vsel %vm1068, %v1495, 0
      %1499 = vmatprep.subr.bf16.mxu0 0
      %1500 = vmatpush1.bf16.msra.mxu0 0
      %1501 = vmatprep.subr.bf16.mxu0 0
      %1502 = vmatpush1.bf16.msra.mxu0 0
      %1503 = vmatprep.subr.bf16.mxu0 0
      %1504 = vmatpush1.bf16.msra.mxu0 0
      %1505 = vmatprep.subr.bf16.mxu0 0
      %1506 = vmatpush1.bf16.msra.mxu0 0
      %1507 = vmatprep.subr.bf16.mxu0 0
      %1508 = vmatpush1.bf16.msra.mxu0 0
      %1509 = vmatprep.subr.bf16.mxu0 0
      %1510 = vmatpush1.bf16.msra.mxu0 0
      %1511 = vmatprep.subr.bf16.mxu0 0
      %1512 = vmatpush1.bf16.msra.mxu0 %v1488
      %1513 = vmatprep.subr.bf16.mxu0 0
      %1514 = vmatpush1.bf16.msra.mxu0 %v1487
      %1515 = vmatprep.subr.bf16.mxu0 0
      %1516 = vmatpush2.bf16.msra.mxu0 0
      %1517 = vmatprep.subr.bf16.mxu0 0
      %1518 = vmatpush2.bf16.msra.mxu0 0
      %1519 = vmatprep.subr.bf16.mxu0 0
      %1520 = vmatpush2.bf16.msra.mxu0 0
      %1521 = vmatprep.subr.bf16.mxu0 0
      %1522 = vmatpush2.bf16.msra.mxu0 0
      %1523 = vmatprep.subr.bf16.mxu0 0
      %1524 = vmatpush2.bf16.msra.mxu0 0
      %1525 = vmatprep.subr.bf16.mxu0 0
      %1526 = vmatpush2.bf16.msra.mxu0 0
      %1527 = vmatprep.subr.bf16.mxu0 0
      %1528 = vmatpush2.bf16.msra.mxu0 0
      %1529 = vmatprep.subr.bf16.mxu0 0
      %1530 = vmatpush2.bf16.msra.mxu0 0
      %1531 = vmatprep.mubr.bf16.mxu0 0
      %1532 = vmatmul.mubr.bf16.gmra.mxu0 %v1497
      %v1533 = vpop.f32.mrf.mxu0
      %v1534 = vadd.f32 0.0, %v1533
      %v1535 = vpop.f32.mrf.mxu0
      %v1536 = vpop.f32.mrf.mxu0
      %v1537 = vpop.f32.mrf.mxu0
      %1538 = vdwg.mxu0
      %v1539 = vadd.f32 %v1480, %v1534
      %v1541 = vlaneseq
      %v1542 = vshrl.u32 %v1541, 7
      %v1543 = vsub.s32 0, %v1542
      %v1544 = vrot.slane %v343, %v1543
      %v1546 = vadd.f32 %v1539, %v1544
      %v1547 = vmax.f32 %v1546, 0.0
      %v1548 = vpack.c.bf16 %v1547, %v1547
      %v1549 = vld [vmem:[%s6] sm:$0xff]
      %v1550 = vld [vmem:[%s6 + $0x8] sm:$0xff]
      %v1551 = vld [vmem:[%s6 + $0x10] sm:$0xff]
      %v1552 = vld [vmem:[%s6 + $0x18] sm:$0xff]
      %v1553 = vpack.c.bf16 %v1550, %v1549
      %v1554 = vpack.c.bf16 %v1552, %v1551
      %v1556 = vsel %vm1068, %v1548, 0
      %1558 = vmatprep.subr.bf16.mxu0 0
      %1559 = vmatpush1.bf16.msra.mxu0 0
      %1560 = vmatprep.subr.bf16.mxu0 0
      %1561 = vmatpush1.bf16.msra.mxu0 0
      %1562 = vmatprep.subr.bf16.mxu0 0
      %1563 = vmatpush1.bf16.msra.mxu0 0
      %1564 = vmatprep.subr.bf16.mxu0 0
      %1565 = vmatpush1.bf16.msra.mxu0 0
      %1566 = vmatprep.subr.bf16.mxu0 0
      %1567 = vmatpush1.bf16.msra.mxu0 0
      %1568 = vmatprep.subr.bf16.mxu0 0
      %1569 = vmatpush1.bf16.msra.mxu0 0
      %1570 = vmatprep.subr.bf16.mxu0 0
      %1571 = vmatpush1.bf16.msra.mxu0 %v1554
      %1572 = vmatprep.subr.bf16.mxu0 0
      %1573 = vmatpush1.bf16.msra.mxu0 %v1553
      %1574 = vmatprep.subr.bf16.mxu0 0
      %1575 = vmatpush2.bf16.msra.mxu0 0
      %1576 = vmatprep.subr.bf16.mxu0 0
      %1577 = vmatpush2.bf16.msra.mxu0 0
      %1578 = vmatprep.subr.bf16.mxu0 0
      %1579 = vmatpush2.bf16.msra.mxu0 0
      %1580 = vmatprep.subr.bf16.mxu0 0
      %1581 = vmatpush2.bf16.msra.mxu0 0
      %1582 = vmatprep.subr.bf16.mxu0 0
      %1583 = vmatpush2.bf16.msra.mxu0 0
      %1584 = vmatprep.subr.bf16.mxu0 0
      %1585 = vmatpush2.bf16.msra.mxu0 0
      %1586 = vmatprep.subr.bf16.mxu0 0
      %1587 = vmatpush2.bf16.msra.mxu0 0
      %1588 = vmatprep.subr.bf16.mxu0 0
      %1589 = vmatpush2.bf16.msra.mxu0 0
      %1590 = vmatprep.mubr.bf16.mxu0 0
      %1591 = vmatmul.mubr.bf16.gmra.mxu0 %v1556
      %v1592 = vpop.f32.mrf.mxu0
      %v1593 = vadd.f32 0.0, %v1592
      %v1594 = vpop.f32.mrf.mxu0
      %v1595 = vpop.f32.mrf.mxu0
      %v1596 = vpop.f32.mrf.mxu0
      %1597 = vdwg.mxu0
      %v1598 = vadd.f32 %v1052, %v1593
      %v1599 = vpack.c.bf16 %v747, %v747
      %v1601 = vsel %vm1068, %v1599, 0
      %1603 = vmatprep.subr.bf16.mxu0 0
      %1604 = vmatpush1.bf16.msra.mxu0 0
      %1605 = vmatprep.subr.bf16.mxu0 0
      %1606 = vmatpush1.bf16.msra.mxu0 0
      %1607 = vmatprep.subr.bf16.mxu0 0
      %1608 = vmatpush1.bf16.msra.mxu0 0
      %1609 = vmatprep.subr.bf16.mxu0 0
      %1610 = vmatpush1.bf16.msra.mxu0 0
      %1611 = vmatprep.subr.bf16.mxu0 0
      %1612 = vmatpush1.bf16.msra.mxu0 0
      %1613 = vmatprep.subr.bf16.mxu0 0
      %1614 = vmatpush1.bf16.msra.mxu0 0
      %1615 = vmatprep.subr.bf16.mxu0 0
      %1616 = vmatpush1.bf16.msra.mxu0 %v1067
      %1617 = vmatprep.subr.bf16.mxu0 0
      %1618 = vmatpush1.bf16.msra.mxu0 %v1066
      %1619 = vmatprep.subr.bf16.mxu0 0
      %1620 = vmatpush2.bf16.msra.mxu0 0
      %1621 = vmatprep.subr.bf16.mxu0 0
      %1622 = vmatpush2.bf16.msra.mxu0 0
      %1623 = vmatprep.subr.bf16.mxu0 0
      %1624 = vmatpush2.bf16.msra.mxu0 0
      %1625 = vmatprep.subr.bf16.mxu0 0
      %1626 = vmatpush2.bf16.msra.mxu0 0
      %1627 = vmatprep.subr.bf16.mxu0 0
      %1628 = vmatpush2.bf16.msra.mxu0 0
      %1629 = vmatprep.subr.bf16.mxu0 0
      %1630 = vmatpush2.bf16.msra.mxu0 0
      %1631 = vmatprep.subr.bf16.mxu0 0
      %1632 = vmatpush2.bf16.msra.mxu0 0
      %1633 = vmatprep.subr.bf16.mxu0 0
      %1634 = vmatpush2.bf16.msra.mxu0 0
      %1635 = vmatprep.mubr.bf16.mxu0 0
      %1636 = vmatmul.mubr.bf16.gmra.mxu0 %v1601
      %v1637 = vpop.f32.mrf.mxu0
      %v1638 = vadd.f32 0.0, %v1637
      %v1639 = vpop.f32.mrf.mxu0
      %v1640 = vpop.f32.mrf.mxu0
      %v1641 = vpop.f32.mrf.mxu0
      %1642 = vdwg.mxu0
      %1643 = vmatprep.subr.bf16.mxu0 0
      %1644 = vmatpush1.bf16.msra.mxu0 0
      %1645 = vmatprep.subr.bf16.mxu0 0
      %1646 = vmatpush1.bf16.msra.mxu0 0
      %1647 = vmatprep.subr.bf16.mxu0 0
      %1648 = vmatpush1.bf16.msra.mxu0 0
      %1649 = vmatprep.subr.bf16.mxu0 0
      %1650 = vmatpush1.bf16.msra.mxu0 0
      %1651 = vmatprep.subr.bf16.mxu0 0
      %1652 = vmatpush1.bf16.msra.mxu0 0
      %1653 = vmatprep.subr.bf16.mxu0 0
      %1654 = vmatpush1.bf16.msra.mxu0 0
      %1655 = vmatprep.subr.bf16.mxu0 0
      %1656 = vmatpush1.bf16.msra.mxu0 %v1059
      %1657 = vmatprep.subr.bf16.mxu0 0
      %1658 = vmatpush1.bf16.msra.mxu0 %v1058
      %1659 = vmatprep.subr.bf16.mxu0 0
      %1660 = vmatpush2.bf16.msra.mxu0 0
      %1661 = vmatprep.subr.bf16.mxu0 0
      %1662 = vmatpush2.bf16.msra.mxu0 0
      %1663 = vmatprep.subr.bf16.mxu0 0
      %1664 = vmatpush2.bf16.msra.mxu0 0
      %1665 = vmatprep.subr.bf16.mxu0 0
      %1666 = vmatpush2.bf16.msra.mxu0 0
      %1667 = vmatprep.subr.bf16.mxu0 0
      %1668 = vmatpush2.bf16.msra.mxu0 0
      %1669 = vmatprep.subr.bf16.mxu0 0
      %1670 = vmatpush2.bf16.msra.mxu0 0
      %1671 = vmatprep.subr.bf16.mxu0 0
      %1672 = vmatpush2.bf16.msra.mxu0 0
      %1673 = vmatprep.subr.bf16.mxu0 0
      %1674 = vmatpush2.bf16.msra.mxu0 0
      %1675 = vmatprep.mubr.bf16.mxu0 0
      %1676 = vmatmul.mubr.bf16.gmra.mxu0 %v1164
      %v1677 = vpop.f32.mrf.mxu0
      %v1678 = vadd.f32 %v1638, %v1677
      %v1679 = vpop.f32.mrf.mxu0
      %v1680 = vpop.f32.mrf.mxu0
      %v1681 = vpop.f32.mrf.mxu0
      %1682 = vdwg.mxu0
      %v1683 = vpack.c.bf16 %v845, %v845
      %v1685 = vsel %vm1068, %v1683, 0
      %1687 = vmatprep.subr.bf16.mxu0 0
      %1688 = vmatpush1.bf16.msra.mxu0 0
      %1689 = vmatprep.subr.bf16.mxu0 0
      %1690 = vmatpush1.bf16.msra.mxu0 0
      %1691 = vmatprep.subr.bf16.mxu0 0
      %1692 = vmatpush1.bf16.msra.mxu0 0
      %1693 = vmatprep.subr.bf16.mxu0 0
      %1694 = vmatpush1.bf16.msra.mxu0 0
      %1695 = vmatprep.subr.bf16.mxu0 0
      %1696 = vmatpush1.bf16.msra.mxu0 0
      %1697 = vmatprep.subr.bf16.mxu0 0
      %1698 = vmatpush1.bf16.msra.mxu0 0
      %1699 = vmatprep.subr.bf16.mxu0 0
      %1700 = vmatpush1.bf16.msra.mxu0 %v1162
      %1701 = vmatprep.subr.bf16.mxu0 0
      %1702 = vmatpush1.bf16.msra.mxu0 %v1161
      %1703 = vmatprep.subr.bf16.mxu0 0
      %1704 = vmatpush2.bf16.msra.mxu0 0
      %1705 = vmatprep.subr.bf16.mxu0 0
      %1706 = vmatpush2.bf16.msra.mxu0 0
      %1707 = vmatprep.subr.bf16.mxu0 0
      %1708 = vmatpush2.bf16.msra.mxu0 0
      %1709 = vmatprep.subr.bf16.mxu0 0
      %1710 = vmatpush2.bf16.msra.mxu0 0
      %1711 = vmatprep.subr.bf16.mxu0 0
      %1712 = vmatpush2.bf16.msra.mxu0 0
      %1713 = vmatprep.subr.bf16.mxu0 0
      %1714 = vmatpush2.bf16.msra.mxu0 0
      %1715 = vmatprep.subr.bf16.mxu0 0
      %1716 = vmatpush2.bf16.msra.mxu0 0
      %1717 = vmatprep.subr.bf16.mxu0 0
      %1718 = vmatpush2.bf16.msra.mxu0 0
      %1719 = vmatprep.mubr.bf16.mxu0 0
      %1720 = vmatmul.mubr.bf16.gmra.mxu0 %v1685
      %v1721 = vpop.f32.mrf.mxu0
      %v1722 = vadd.f32 0.0, %v1721
      %v1723 = vpop.f32.mrf.mxu0
      %v1724 = vpop.f32.mrf.mxu0
      %v1725 = vpop.f32.mrf.mxu0
      %1726 = vdwg.mxu0
      %v1727 = vadd.f32 %v1678, %v1722
      %1728 = vmatprep.subr.bf16.mxu0 0
      %1729 = vmatpush1.bf16.msra.mxu0 0
      %1730 = vmatprep.subr.bf16.mxu0 0
      %1731 = vmatpush1.bf16.msra.mxu0 0
      %1732 = vmatprep.subr.bf16.mxu0 0
      %1733 = vmatpush1.bf16.msra.mxu0 0
      %1734 = vmatprep.subr.bf16.mxu0 0
      %1735 = vmatpush1.bf16.msra.mxu0 0
      %1736 = vmatprep.subr.bf16.mxu0 0
      %1737 = vmatpush1.bf16.msra.mxu0 0
      %1738 = vmatprep.subr.bf16.mxu0 0
      %1739 = vmatpush1.bf16.msra.mxu0 0
      %1740 = vmatprep.subr.bf16.mxu0 0
      %1741 = vmatpush1.bf16.msra.mxu0 %v1214
      %1742 = vmatprep.subr.bf16.mxu0 0
      %1743 = vmatpush1.bf16.msra.mxu0 %v1213
      %1744 = vmatprep.subr.bf16.mxu0 0
      %1745 = vmatpush2.bf16.msra.mxu0 0
      %1746 = vmatprep.subr.bf16.mxu0 0
      %1747 = vmatpush2.bf16.msra.mxu0 0
      %1748 = vmatprep.subr.bf16.mxu0 0
      %1749 = vmatpush2.bf16.msra.mxu0 0
      %1750 = vmatprep.subr.bf16.mxu0 0
      %1751 = vmatpush2.bf16.msra.mxu0 0
      %1752 = vmatprep.subr.bf16.mxu0 0
      %1753 = vmatpush2.bf16.msra.mxu0 0
      %1754 = vmatprep.subr.bf16.mxu0 0
      %1755 = vmatpush2.bf16.msra.mxu0 0
      %1756 = vmatprep.subr.bf16.mxu0 0
      %1757 = vmatpush2.bf16.msra.mxu0 0
      %1758 = vmatprep.subr.bf16.mxu0 0
      %1759 = vmatpush2.bf16.msra.mxu0 0
      %1760 = vmatprep.mubr.bf16.mxu0 0
      %1761 = vmatmul.mubr.bf16.gmra.mxu0 %v1320
      %v1762 = vpop.f32.mrf.mxu0
      %v1763 = vadd.f32 0.0, %v1762
      %v1764 = vpop.f32.mrf.mxu0
      %v1765 = vpop.f32.mrf.mxu0
      %v1766 = vpop.f32.mrf.mxu0
      %1767 = vdwg.mxu0
      %v1768 = vadd.f32 %v1727, %v1763
      %v1769 = vpack.c.bf16 %v751, %v751
      %v1771 = vsel %vm1068, %v1769, 0
      %1773 = vmatprep.subr.bf16.mxu0 0
      %1774 = vmatpush1.bf16.msra.mxu0 0
      %1775 = vmatprep.subr.bf16.mxu0 0
      %1776 = vmatpush1.bf16.msra.mxu0 0
      %1777 = vmatprep.subr.bf16.mxu0 0
      %1778 = vmatpush1.bf16.msra.mxu0 0
      %1779 = vmatprep.subr.bf16.mxu0 0
      %1780 = vmatpush1.bf16.msra.mxu0 0
      %1781 = vmatprep.subr.bf16.mxu0 0
      %1782 = vmatpush1.bf16.msra.mxu0 0
      %1783 = vmatprep.subr.bf16.mxu0 0
      %1784 = vmatpush1.bf16.msra.mxu0 0
      %1785 = vmatprep.subr.bf16.mxu0 0
      %1786 = vmatpush1.bf16.msra.mxu0 %v1266
      %1787 = vmatprep.subr.bf16.mxu0 0
      %1788 = vmatpush1.bf16.msra.mxu0 %v1265
      %1789 = vmatprep.subr.bf16.mxu0 0
      %1790 = vmatpush2.bf16.msra.mxu0 0
      %1791 = vmatprep.subr.bf16.mxu0 0
      %1792 = vmatpush2.bf16.msra.mxu0 0
      %1793 = vmatprep.subr.bf16.mxu0 0
      %1794 = vmatpush2.bf16.msra.mxu0 0
      %1795 = vmatprep.subr.bf16.mxu0 0
      %1796 = vmatpush2.bf16.msra.mxu0 0
      %1797 = vmatprep.subr.bf16.mxu0 0
      %1798 = vmatpush2.bf16.msra.mxu0 0
      %1799 = vmatprep.subr.bf16.mxu0 0
      %1800 = vmatpush2.bf16.msra.mxu0 0
      %1801 = vmatprep.subr.bf16.mxu0 0
      %1802 = vmatpush2.bf16.msra.mxu0 0
      %1803 = vmatprep.subr.bf16.mxu0 0
      %1804 = vmatpush2.bf16.msra.mxu0 0
      %1805 = vmatprep.mubr.bf16.mxu0 0
      %1806 = vmatmul.mubr.bf16.gmra.mxu0 %v1771
      %v1807 = vpop.f32.mrf.mxu0
      %v1808 = vadd.f32 0.0, %v1807
      %v1809 = vpop.f32.mrf.mxu0
      %v1810 = vpop.f32.mrf.mxu0
      %v1811 = vpop.f32.mrf.mxu0
      %1812 = vdwg.mxu0
      %v1813 = vadd.f32 %v1768, %v1808
      %v1814 = vpack.c.bf16 %v849, %v849
      %v1816 = vsel %vm1068, %v1814, 0
      %1818 = vmatprep.subr.bf16.mxu0 0
      %1819 = vmatpush1.bf16.msra.mxu0 0
      %1820 = vmatprep.subr.bf16.mxu0 0
      %1821 = vmatpush1.bf16.msra.mxu0 0
      %1822 = vmatprep.subr.bf16.mxu0 0
      %1823 = vmatpush1.bf16.msra.mxu0 0
      %1824 = vmatprep.subr.bf16.mxu0 0
      %1825 = vmatpush1.bf16.msra.mxu0 0
      %1826 = vmatprep.subr.bf16.mxu0 0
      %1827 = vmatpush1.bf16.msra.mxu0 0
      %1828 = vmatprep.subr.bf16.mxu0 0
      %1829 = vmatpush1.bf16.msra.mxu0 0
      %1830 = vmatprep.subr.bf16.mxu0 0
      %1831 = vmatpush1.bf16.msra.mxu0 %v1318
      %1832 = vmatprep.subr.bf16.mxu0 0
      %1833 = vmatpush1.bf16.msra.mxu0 %v1317
      %1834 = vmatprep.subr.bf16.mxu0 0
      %1835 = vmatpush2.bf16.msra.mxu0 0
      %1836 = vmatprep.subr.bf16.mxu0 0
      %1837 = vmatpush2.bf16.msra.mxu0 0
      %1838 = vmatprep.subr.bf16.mxu0 0
      %1839 = vmatpush2.bf16.msra.mxu0 0
      %1840 = vmatprep.subr.bf16.mxu0 0
      %1841 = vmatpush2.bf16.msra.mxu0 0
      %1842 = vmatprep.subr.bf16.mxu0 0
      %1843 = vmatpush2.bf16.msra.mxu0 0
      %1844 = vmatprep.subr.bf16.mxu0 0
      %1845 = vmatpush2.bf16.msra.mxu0 0
      %1846 = vmatprep.subr.bf16.mxu0 0
      %1847 = vmatpush2.bf16.msra.mxu0 0
      %1848 = vmatprep.subr.bf16.mxu0 0
      %1849 = vmatpush2.bf16.msra.mxu0 0
      %1850 = vmatprep.mubr.bf16.mxu0 0
      %1851 = vmatmul.mubr.bf16.gmra.mxu0 %v1816
      %v1852 = vpop.f32.mrf.mxu0
      %v1853 = vadd.f32 0.0, %v1852
      %v1854 = vpop.f32.mrf.mxu0
      %v1855 = vpop.f32.mrf.mxu0
      %v1856 = vpop.f32.mrf.mxu0
      %1857 = vdwg.mxu0
      %v1858 = vadd.f32 %v1813, %v1853
      %1859 = vmatprep.subr.bf16.mxu0 0
      %1860 = vmatpush1.bf16.msra.mxu0 0
      %1861 = vmatprep.subr.bf16.mxu0 0
      %1862 = vmatpush1.bf16.msra.mxu0 0
      %1863 = vmatprep.subr.bf16.mxu0 0
      %1864 = vmatpush1.bf16.msra.mxu0 0
      %1865 = vmatprep.subr.bf16.mxu0 0
      %1866 = vmatpush1.bf16.msra.mxu0 0
      %1867 = vmatprep.subr.bf16.mxu0 0
      %1868 = vmatpush1.bf16.msra.mxu0 0
      %1869 = vmatprep.subr.bf16.mxu0 0
      %1870 = vmatpush1.bf16.msra.mxu0 0
      %1871 = vmatprep.subr.bf16.mxu0 0
      %1872 = vmatpush1.bf16.msra.mxu0 %v1370
      %1873 = vmatprep.subr.bf16.mxu0 0
      %1874 = vmatpush1.bf16.msra.mxu0 %v1369
      %1875 = vmatprep.subr.bf16.mxu0 0
      %1876 = vmatpush2.bf16.msra.mxu0 0
      %1877 = vmatprep.subr.bf16.mxu0 0
      %1878 = vmatpush2.bf16.msra.mxu0 0
      %1879 = vmatprep.subr.bf16.mxu0 0
      %1880 = vmatpush2.bf16.msra.mxu0 0
      %1881 = vmatprep.subr.bf16.mxu0 0
      %1882 = vmatpush2.bf16.msra.mxu0 0
      %1883 = vmatprep.subr.bf16.mxu0 0
      %1884 = vmatpush2.bf16.msra.mxu0 0
      %1885 = vmatprep.subr.bf16.mxu0 0
      %1886 = vmatpush2.bf16.msra.mxu0 0
      %1887 = vmatprep.subr.bf16.mxu0 0
      %1888 = vmatpush2.bf16.msra.mxu0 0
      %1889 = vmatprep.subr.bf16.mxu0 0
      %1890 = vmatpush2.bf16.msra.mxu0 0
      %1891 = vmatprep.mubr.bf16.mxu0 0
      %1892 = vmatmul.mubr.bf16.gmra.mxu0 %v1497
      %v1893 = vpop.f32.mrf.mxu0
      %v1894 = vadd.f32 0.0, %v1893
      %v1895 = vpop.f32.mrf.mxu0
      %v1896 = vpop.f32.mrf.mxu0
      %v1897 = vpop.f32.mrf.mxu0
      %1898 = vdwg.mxu0
      %v1899 = vadd.f32 %v1858, %v1894
      %v1900 = vpack.c.bf16 %v745, %v747
      %v1902 = vshrl.u32 %v1900, 16
      %v1904 = vshll.u32 %v1900, 16
      %v1906 = vrot.slane %v1904, 1
      %v1907 = vor.u32 %v1902, %v1906
      %v1909 = vsel %vm1068, %v1907, 0
      %1911 = vmatprep.subr.bf16.mxu0 0
      %1912 = vmatpush1.bf16.msra.mxu0 0
      %1913 = vmatprep.subr.bf16.mxu0 0
      %1914 = vmatpush1.bf16.msra.mxu0 0
      %1915 = vmatprep.subr.bf16.mxu0 0
      %1916 = vmatpush1.bf16.msra.mxu0 0
      %1917 = vmatprep.subr.bf16.mxu0 0
      %1918 = vmatpush1.bf16.msra.mxu0 0
      %1919 = vmatprep.subr.bf16.mxu0 0
      %1920 = vmatpush1.bf16.msra.mxu0 0
      %1921 = vmatprep.subr.bf16.mxu0 0
      %1922 = vmatpush1.bf16.msra.mxu0 0
      %1923 = vmatprep.subr.bf16.mxu0 0
      %1924 = vmatpush1.bf16.msra.mxu0 %v1429
      %1925 = vmatprep.subr.bf16.mxu0 0
      %1926 = vmatpush1.bf16.msra.mxu0 %v1428
      %1927 = vmatprep.subr.bf16.mxu0 0
      %1928 = vmatpush2.bf16.msra.mxu0 0
      %1929 = vmatprep.subr.bf16.mxu0 0
      %1930 = vmatpush2.bf16.msra.mxu0 0
      %1931 = vmatprep.subr.bf16.mxu0 0
      %1932 = vmatpush2.bf16.msra.mxu0 0
      %1933 = vmatprep.subr.bf16.mxu0 0
      %1934 = vmatpush2.bf16.msra.mxu0 0
      %1935 = vmatprep.subr.bf16.mxu0 0
      %1936 = vmatpush2.bf16.msra.mxu0 0
      %1937 = vmatprep.subr.bf16.mxu0 0
      %1938 = vmatpush2.bf16.msra.mxu0 0
      %1939 = vmatprep.subr.bf16.mxu0 0
      %1940 = vmatpush2.bf16.msra.mxu0 0
      %1941 = vmatprep.subr.bf16.mxu0 0
      %1942 = vmatpush2.bf16.msra.mxu0 0
      %1943 = vmatprep.mubr.bf16.mxu0 0
      %1944 = vmatmul.mubr.bf16.gmra.mxu0 %v1909
      %v1945 = vpop.f32.mrf.mxu0
      %v1946 = vadd.f32 0.0, %v1945
      %v1947 = vpop.f32.mrf.mxu0
      %v1948 = vpop.f32.mrf.mxu0
      %v1949 = vpop.f32.mrf.mxu0
      %1950 = vdwg.mxu0
      %v1951 = vadd.f32 %v1899, %v1946
      %v1952 = vpack.c.bf16 %v843, %v845
      %v1954 = vshrl.u32 %v1952, 16
      %v1956 = vshll.u32 %v1952, 16
      %v1958 = vrot.slane %v1956, 1
      %v1959 = vor.u32 %v1954, %v1958
      %v1961 = vsel %vm1068, %v1959, 0
      %1963 = vmatprep.subr.bf16.mxu0 0
      %1964 = vmatpush1.bf16.msra.mxu0 0
      %1965 = vmatprep.subr.bf16.mxu0 0
      %1966 = vmatpush1.bf16.msra.mxu0 0
      %1967 = vmatprep.subr.bf16.mxu0 0
      %1968 = vmatpush1.bf16.msra.mxu0 0
      %1969 = vmatprep.subr.bf16.mxu0 0
      %1970 = vmatpush1.bf16.msra.mxu0 0
      %1971 = vmatprep.subr.bf16.mxu0 0
      %1972 = vmatpush1.bf16.msra.mxu0 0
      %1973 = vmatprep.subr.bf16.mxu0 0
      %1974 = vmatpush1.bf16.msra.mxu0 0
      %1975 = vmatprep.subr.bf16.mxu0 0
      %1976 = vmatpush1.bf16.msra.mxu0 %v1488
      %1977 = vmatprep.subr.bf16.mxu0 0
      %1978 = vmatpush1.bf16.msra.mxu0 %v1487
      %1979 = vmatprep.subr.bf16.mxu0 0
      %1980 = vmatpush2.bf16.msra.mxu0 0
      %1981 = vmatprep.subr.bf16.mxu0 0
      %1982 = vmatpush2.bf16.msra.mxu0 0
      %1983 = vmatprep.subr.bf16.mxu0 0
      %1984 = vmatpush2.bf16.msra.mxu0 0
      %1985 = vmatprep.subr.bf16.mxu0 0
      %1986 = vmatpush2.bf16.msra.mxu0 0
      %1987 = vmatprep.subr.bf16.mxu0 0
      %1988 = vmatpush2.bf16.msra.mxu0 0
      %1989 = vmatprep.subr.bf16.mxu0 0
      %1990 = vmatpush2.bf16.msra.mxu0 0
      %1991 = vmatprep.subr.bf16.mxu0 0
      %1992 = vmatpush2.bf16.msra.mxu0 0
      %1993 = vmatprep.subr.bf16.mxu0 0
      %1994 = vmatpush2.bf16.msra.mxu0 0
      %1995 = vmatprep.mubr.bf16.mxu0 0
      %1996 = vmatmul.mubr.bf16.gmra.mxu0 %v1961
      %v1997 = vpop.f32.mrf.mxu0
      %v1998 = vadd.f32 0.0, %v1997
      %v1999 = vpop.f32.mrf.mxu0
      %v2000 = vpop.f32.mrf.mxu0
      %v2001 = vpop.f32.mrf.mxu0
      %2002 = vdwg.mxu0
      %v2003 = vadd.f32 %v1951, %v1998
      %v2004 = vadd.f32 %v2003, %v1544
      %v2005 = vmax.f32 %v2004, 0.0
      %v2006 = vpack.c.bf16 %v2005, %v2005
      %s2007 = scalar_lea.vmem %s6, 32
      %v2008 = vld [vmem:[%s2007] sm:$0xff]
      %v2009 = vld [vmem:[%s2007 + $0x8] sm:$0xff]
      %v2010 = vld [vmem:[%s2007 + $0x10] sm:$0xff]
      %v2011 = vld [vmem:[%s2007 + $0x18] sm:$0xff]
      %v2012 = vpack.c.bf16 %v2009, %v2008
      %v2013 = vpack.c.bf16 %v2011, %v2010
      %v2015 = vsel %vm1068, %v2006, 0
      %2017 = vmatprep.subr.bf16.mxu0 0
      %2018 = vmatpush1.bf16.msra.mxu0 0
      %2019 = vmatprep.subr.bf16.mxu0 0
      %2020 = vmatpush1.bf16.msra.mxu0 0
      %2021 = vmatprep.subr.bf16.mxu0 0
      %2022 = vmatpush1.bf16.msra.mxu0 0
      %2023 = vmatprep.subr.bf16.mxu0 0
      %2024 = vmatpush1.bf16.msra.mxu0 0
      %2025 = vmatprep.subr.bf16.mxu0 0
      %2026 = vmatpush1.bf16.msra.mxu0 0
      %2027 = vmatprep.subr.bf16.mxu0 0
      %2028 = vmatpush1.bf16.msra.mxu0 0
      %2029 = vmatprep.subr.bf16.mxu0 0
      %2030 = vmatpush1.bf16.msra.mxu0 %v2013
      %2031 = vmatprep.subr.bf16.mxu0 0
      %2032 = vmatpush1.bf16.msra.mxu0 %v2012
      %2033 = vmatprep.subr.bf16.mxu0 0
      %2034 = vmatpush2.bf16.msra.mxu0 0
      %2035 = vmatprep.subr.bf16.mxu0 0
      %2036 = vmatpush2.bf16.msra.mxu0 0
      %2037 = vmatprep.subr.bf16.mxu0 0
      %2038 = vmatpush2.bf16.msra.mxu0 0
      %2039 = vmatprep.subr.bf16.mxu0 0
      %2040 = vmatpush2.bf16.msra.mxu0 0
      %2041 = vmatprep.subr.bf16.mxu0 0
      %2042 = vmatpush2.bf16.msra.mxu0 0
      %2043 = vmatprep.subr.bf16.mxu0 0
      %2044 = vmatpush2.bf16.msra.mxu0 0
      %2045 = vmatprep.subr.bf16.mxu0 0
      %2046 = vmatpush2.bf16.msra.mxu0 0
      %2047 = vmatprep.subr.bf16.mxu0 0
      %2048 = vmatpush2.bf16.msra.mxu0 0
      %2049 = vmatprep.mubr.bf16.mxu0 0
      %2050 = vmatmul.mubr.bf16.gmra.mxu0 %v2015
      %v2051 = vpop.f32.mrf.mxu0
      %v2052 = vadd.f32 0.0, %v2051
      %v2053 = vpop.f32.mrf.mxu0
      %v2054 = vpop.f32.mrf.mxu0
      %v2055 = vpop.f32.mrf.mxu0
      %2056 = vdwg.mxu0
      %v2057 = vadd.f32 %v1598, %v2052
      %v2058 = vpack.c.bf16 %v943, %v943
      %v2060 = vsel %vm1068, %v2058, 0
      %2062 = vmatprep.subr.bf16.mxu0 0
      %2063 = vmatpush1.bf16.msra.mxu0 0
      %2064 = vmatprep.subr.bf16.mxu0 0
      %2065 = vmatpush1.bf16.msra.mxu0 0
      %2066 = vmatprep.subr.bf16.mxu0 0
      %2067 = vmatpush1.bf16.msra.mxu0 0
      %2068 = vmatprep.subr.bf16.mxu0 0
      %2069 = vmatpush1.bf16.msra.mxu0 0
      %2070 = vmatprep.subr.bf16.mxu0 0
      %2071 = vmatpush1.bf16.msra.mxu0 0
      %2072 = vmatprep.subr.bf16.mxu0 0
      %2073 = vmatpush1.bf16.msra.mxu0 0
      %2074 = vmatprep.subr.bf16.mxu0 0
      %2075 = vmatpush1.bf16.msra.mxu0 %v1067
      %2076 = vmatprep.subr.bf16.mxu0 0
      %2077 = vmatpush1.bf16.msra.mxu0 %v1066
      %2078 = vmatprep.subr.bf16.mxu0 0
      %2079 = vmatpush2.bf16.msra.mxu0 0
      %2080 = vmatprep.subr.bf16.mxu0 0
      %2081 = vmatpush2.bf16.msra.mxu0 0
      %2082 = vmatprep.subr.bf16.mxu0 0
      %2083 = vmatpush2.bf16.msra.mxu0 0
      %2084 = vmatprep.subr.bf16.mxu0 0
      %2085 = vmatpush2.bf16.msra.mxu0 0
      %2086 = vmatprep.subr.bf16.mxu0 0
      %2087 = vmatpush2.bf16.msra.mxu0 0
      %2088 = vmatprep.subr.bf16.mxu0 0
      %2089 = vmatpush2.bf16.msra.mxu0 0
      %2090 = vmatprep.subr.bf16.mxu0 0
      %2091 = vmatpush2.bf16.msra.mxu0 0
      %2092 = vmatprep.subr.bf16.mxu0 0
      %2093 = vmatpush2.bf16.msra.mxu0 0
      %2094 = vmatprep.mubr.bf16.mxu0 0
      %2095 = vmatmul.mubr.bf16.gmra.mxu0 %v2060
      %v2096 = vpop.f32.mrf.mxu0
      %v2097 = vadd.f32 0.0, %v2096
      %v2098 = vpop.f32.mrf.mxu0
      %v2099 = vpop.f32.mrf.mxu0
      %v2100 = vpop.f32.mrf.mxu0
      %2101 = vdwg.mxu0
      %2102 = vmatprep.subr.bf16.mxu0 0
      %2103 = vmatpush1.bf16.msra.mxu0 0
      %2104 = vmatprep.subr.bf16.mxu0 0
      %2105 = vmatpush1.bf16.msra.mxu0 0
      %2106 = vmatprep.subr.bf16.mxu0 0
      %2107 = vmatpush1.bf16.msra.mxu0 0
      %2108 = vmatprep.subr.bf16.mxu0 0
      %2109 = vmatpush1.bf16.msra.mxu0 0
      %2110 = vmatprep.subr.bf16.mxu0 0
      %2111 = vmatpush1.bf16.msra.mxu0 0
      %2112 = vmatprep.subr.bf16.mxu0 0
      %2113 = vmatpush1.bf16.msra.mxu0 0
      %2114 = vmatprep.subr.bf16.mxu0 0
      %2115 = vmatpush1.bf16.msra.mxu0 %v1059
      %2116 = vmatprep.subr.bf16.mxu0 0
      %2117 = vmatpush1.bf16.msra.mxu0 %v1058
      %2118 = vmatprep.subr.bf16.mxu0 0
      %2119 = vmatpush2.bf16.msra.mxu0 0
      %2120 = vmatprep.subr.bf16.mxu0 0
      %2121 = vmatpush2.bf16.msra.mxu0 0
      %2122 = vmatprep.subr.bf16.mxu0 0
      %2123 = vmatpush2.bf16.msra.mxu0 0
      %2124 = vmatprep.subr.bf16.mxu0 0
      %2125 = vmatpush2.bf16.msra.mxu0 0
      %2126 = vmatprep.subr.bf16.mxu0 0
      %2127 = vmatpush2.bf16.msra.mxu0 0
      %2128 = vmatprep.subr.bf16.mxu0 0
      %2129 = vmatpush2.bf16.msra.mxu0 0
      %2130 = vmatprep.subr.bf16.mxu0 0
      %2131 = vmatpush2.bf16.msra.mxu0 0
      %2132 = vmatprep.subr.bf16.mxu0 0
      %2133 = vmatpush2.bf16.msra.mxu0 0
      %2134 = vmatprep.mubr.bf16.mxu0 0
      %2135 = vmatmul.mubr.bf16.gmra.mxu0 %v1685
      %v2136 = vpop.f32.mrf.mxu0
      %v2137 = vadd.f32 %v2097, %v2136
      %v2138 = vpop.f32.mrf.mxu0
      %v2139 = vpop.f32.mrf.mxu0
      %v2140 = vpop.f32.mrf.mxu0
      %2141 = vdwg.mxu0
      %v2142 = vpack.c.bf16 %v1041, %v1041
      %v2144 = vsel %vm1068, %v2142, 0
      %2146 = vmatprep.subr.bf16.mxu0 0
      %2147 = vmatpush1.bf16.msra.mxu0 0
      %2148 = vmatprep.subr.bf16.mxu0 0
      %2149 = vmatpush1.bf16.msra.mxu0 0
      %2150 = vmatprep.subr.bf16.mxu0 0
      %2151 = vmatpush1.bf16.msra.mxu0 0
      %2152 = vmatprep.subr.bf16.mxu0 0
      %2153 = vmatpush1.bf16.msra.mxu0 0
      %2154 = vmatprep.subr.bf16.mxu0 0
      %2155 = vmatpush1.bf16.msra.mxu0 0
      %2156 = vmatprep.subr.bf16.mxu0 0
      %2157 = vmatpush1.bf16.msra.mxu0 0
      %2158 = vmatprep.subr.bf16.mxu0 0
      %2159 = vmatpush1.bf16.msra.mxu0 %v1162
      %2160 = vmatprep.subr.bf16.mxu0 0
      %2161 = vmatpush1.bf16.msra.mxu0 %v1161
      %2162 = vmatprep.subr.bf16.mxu0 0
      %2163 = vmatpush2.bf16.msra.mxu0 0
      %2164 = vmatprep.subr.bf16.mxu0 0
      %2165 = vmatpush2.bf16.msra.mxu0 0
      %2166 = vmatprep.subr.bf16.mxu0 0
      %2167 = vmatpush2.bf16.msra.mxu0 0
      %2168 = vmatprep.subr.bf16.mxu0 0
      %2169 = vmatpush2.bf16.msra.mxu0 0
      %2170 = vmatprep.subr.bf16.mxu0 0
      %2171 = vmatpush2.bf16.msra.mxu0 0
      %2172 = vmatprep.subr.bf16.mxu0 0
      %2173 = vmatpush2.bf16.msra.mxu0 0
      %2174 = vmatprep.subr.bf16.mxu0 0
      %2175 = vmatpush2.bf16.msra.mxu0 0
      %2176 = vmatprep.subr.bf16.mxu0 0
      %2177 = vmatpush2.bf16.msra.mxu0 0
      %2178 = vmatprep.mubr.bf16.mxu0 0
      %2179 = vmatmul.mubr.bf16.gmra.mxu0 %v2144
      %v2180 = vpop.f32.mrf.mxu0
      %v2181 = vadd.f32 0.0, %v2180
      %v2182 = vpop.f32.mrf.mxu0
      %v2183 = vpop.f32.mrf.mxu0
      %v2184 = vpop.f32.mrf.mxu0
      %2185 = vdwg.mxu0
      %v2186 = vadd.f32 %v2137, %v2181
      %2187 = vmatprep.subr.bf16.mxu0 0
      %2188 = vmatpush1.bf16.msra.mxu0 0
      %2189 = vmatprep.subr.bf16.mxu0 0
      %2190 = vmatpush1.bf16.msra.mxu0 0
      %2191 = vmatprep.subr.bf16.mxu0 0
      %2192 = vmatpush1.bf16.msra.mxu0 0
      %2193 = vmatprep.subr.bf16.mxu0 0
      %2194 = vmatpush1.bf16.msra.mxu0 0
      %2195 = vmatprep.subr.bf16.mxu0 0
      %2196 = vmatpush1.bf16.msra.mxu0 0
      %2197 = vmatprep.subr.bf16.mxu0 0
      %2198 = vmatpush1.bf16.msra.mxu0 0
      %2199 = vmatprep.subr.bf16.mxu0 0
      %2200 = vmatpush1.bf16.msra.mxu0 %v1214
      %2201 = vmatprep.subr.bf16.mxu0 0
      %2202 = vmatpush1.bf16.msra.mxu0 %v1213
      %2203 = vmatprep.subr.bf16.mxu0 0
      %2204 = vmatpush2.bf16.msra.mxu0 0
      %2205 = vmatprep.subr.bf16.mxu0 0
      %2206 = vmatpush2.bf16.msra.mxu0 0
      %2207 = vmatprep.subr.bf16.mxu0 0
      %2208 = vmatpush2.bf16.msra.mxu0 0
      %2209 = vmatprep.subr.bf16.mxu0 0
      %2210 = vmatpush2.bf16.msra.mxu0 0
      %2211 = vmatprep.subr.bf16.mxu0 0
      %2212 = vmatpush2.bf16.msra.mxu0 0
      %2213 = vmatprep.subr.bf16.mxu0 0
      %2214 = vmatpush2.bf16.msra.mxu0 0
      %2215 = vmatprep.subr.bf16.mxu0 0
      %2216 = vmatpush2.bf16.msra.mxu0 0
      %2217 = vmatprep.subr.bf16.mxu0 0
      %2218 = vmatpush2.bf16.msra.mxu0 0
      %2219 = vmatprep.mubr.bf16.mxu0 0
      %2220 = vmatmul.mubr.bf16.gmra.mxu0 %v1816
      %v2221 = vpop.f32.mrf.mxu0
      %v2222 = vadd.f32 0.0, %v2221
      %v2223 = vpop.f32.mrf.mxu0
      %v2224 = vpop.f32.mrf.mxu0
      %v2225 = vpop.f32.mrf.mxu0
      %2226 = vdwg.mxu0
      %v2227 = vadd.f32 %v2186, %v2222
      %v2228 = vpack.c.bf16 %v947, %v947
      %v2230 = vsel %vm1068, %v2228, 0
      %2232 = vmatprep.subr.bf16.mxu0 0
      %2233 = vmatpush1.bf16.msra.mxu0 0
      %2234 = vmatprep.subr.bf16.mxu0 0
      %2235 = vmatpush1.bf16.msra.mxu0 0
      %2236 = vmatprep.subr.bf16.mxu0 0
      %2237 = vmatpush1.bf16.msra.mxu0 0
      %2238 = vmatprep.subr.bf16.mxu0 0
      %2239 = vmatpush1.bf16.msra.mxu0 0
      %2240 = vmatprep.subr.bf16.mxu0 0
      %2241 = vmatpush1.bf16.msra.mxu0 0
      %2242 = vmatprep.subr.bf16.mxu0 0
      %2243 = vmatpush1.bf16.msra.mxu0 0
      %2244 = vmatprep.subr.bf16.mxu0 0
      %2245 = vmatpush1.bf16.msra.mxu0 %v1266
      %2246 = vmatprep.subr.bf16.mxu0 0
      %2247 = vmatpush1.bf16.msra.mxu0 %v1265
      %2248 = vmatprep.subr.bf16.mxu0 0
      %2249 = vmatpush2.bf16.msra.mxu0 0
      %2250 = vmatprep.subr.bf16.mxu0 0
      %2251 = vmatpush2.bf16.msra.mxu0 0
      %2252 = vmatprep.subr.bf16.mxu0 0
      %2253 = vmatpush2.bf16.msra.mxu0 0
      %2254 = vmatprep.subr.bf16.mxu0 0
      %2255 = vmatpush2.bf16.msra.mxu0 0
      %2256 = vmatprep.subr.bf16.mxu0 0
      %2257 = vmatpush2.bf16.msra.mxu0 0
      %2258 = vmatprep.subr.bf16.mxu0 0
      %2259 = vmatpush2.bf16.msra.mxu0 0
      %2260 = vmatprep.subr.bf16.mxu0 0
      %2261 = vmatpush2.bf16.msra.mxu0 0
      %2262 = vmatprep.subr.bf16.mxu0 0
      %2263 = vmatpush2.bf16.msra.mxu0 0
      %2264 = vmatprep.mubr.bf16.mxu0 0
      %2265 = vmatmul.mubr.bf16.gmra.mxu0 %v2230
      %v2266 = vpop.f32.mrf.mxu0
      %v2267 = vadd.f32 0.0, %v2266
      %v2268 = vpop.f32.mrf.mxu0
      %v2269 = vpop.f32.mrf.mxu0
      %v2270 = vpop.f32.mrf.mxu0
      %2271 = vdwg.mxu0
      %v2272 = vadd.f32 %v2227, %v2267
      %v2273 = vpack.c.bf16 %v1045, %v1045
      %v2275 = vsel %vm1068, %v2273, 0
      %2277 = vmatprep.subr.bf16.mxu0 0
      %2278 = vmatpush1.bf16.msra.mxu0 0
      %2279 = vmatprep.subr.bf16.mxu0 0
      %2280 = vmatpush1.bf16.msra.mxu0 0
      %2281 = vmatprep.subr.bf16.mxu0 0
      %2282 = vmatpush1.bf16.msra.mxu0 0
      %2283 = vmatprep.subr.bf16.mxu0 0
      %2284 = vmatpush1.bf16.msra.mxu0 0
      %2285 = vmatprep.subr.bf16.mxu0 0
      %2286 = vmatpush1.bf16.msra.mxu0 0
      %2287 = vmatprep.subr.bf16.mxu0 0
      %2288 = vmatpush1.bf16.msra.mxu0 0
      %2289 = vmatprep.subr.bf16.mxu0 0
      %2290 = vmatpush1.bf16.msra.mxu0 %v1318
      %2291 = vmatprep.subr.bf16.mxu0 0
      %2292 = vmatpush1.bf16.msra.mxu0 %v1317
      %2293 = vmatprep.subr.bf16.mxu0 0
      %2294 = vmatpush2.bf16.msra.mxu0 0
      %2295 = vmatprep.subr.bf16.mxu0 0
      %2296 = vmatpush2.bf16.msra.mxu0 0
      %2297 = vmatprep.subr.bf16.mxu0 0
      %2298 = vmatpush2.bf16.msra.mxu0 0
      %2299 = vmatprep.subr.bf16.mxu0 0
      %2300 = vmatpush2.bf16.msra.mxu0 0
      %2301 = vmatprep.subr.bf16.mxu0 0
      %2302 = vmatpush2.bf16.msra.mxu0 0
      %2303 = vmatprep.subr.bf16.mxu0 0
      %2304 = vmatpush2.bf16.msra.mxu0 0
      %2305 = vmatprep.subr.bf16.mxu0 0
      %2306 = vmatpush2.bf16.msra.mxu0 0
      %2307 = vmatprep.subr.bf16.mxu0 0
      %2308 = vmatpush2.bf16.msra.mxu0 0
      %2309 = vmatprep.mubr.bf16.mxu0 0
      %2310 = vmatmul.mubr.bf16.gmra.mxu0 %v2275
      %v2311 = vpop.f32.mrf.mxu0
      %v2312 = vadd.f32 0.0, %v2311
      %v2313 = vpop.f32.mrf.mxu0
      %v2314 = vpop.f32.mrf.mxu0
      %v2315 = vpop.f32.mrf.mxu0
      %2316 = vdwg.mxu0
      %v2317 = vadd.f32 %v2272, %v2312
      %2318 = vmatprep.subr.bf16.mxu0 0
      %2319 = vmatpush1.bf16.msra.mxu0 0
      %2320 = vmatprep.subr.bf16.mxu0 0
      %2321 = vmatpush1.bf16.msra.mxu0 0
      %2322 = vmatprep.subr.bf16.mxu0 0
      %2323 = vmatpush1.bf16.msra.mxu0 0
      %2324 = vmatprep.subr.bf16.mxu0 0
      %2325 = vmatpush1.bf16.msra.mxu0 0
      %2326 = vmatprep.subr.bf16.mxu0 0
      %2327 = vmatpush1.bf16.msra.mxu0 0
      %2328 = vmatprep.subr.bf16.mxu0 0
      %2329 = vmatpush1.bf16.msra.mxu0 0
      %2330 = vmatprep.subr.bf16.mxu0 0
      %2331 = vmatpush1.bf16.msra.mxu0 %v1370
      %2332 = vmatprep.subr.bf16.mxu0 0
      %2333 = vmatpush1.bf16.msra.mxu0 %v1369
      %2334 = vmatprep.subr.bf16.mxu0 0
      %2335 = vmatpush2.bf16.msra.mxu0 0
      %2336 = vmatprep.subr.bf16.mxu0 0
      %2337 = vmatpush2.bf16.msra.mxu0 0
      %2338 = vmatprep.subr.bf16.mxu0 0
      %2339 = vmatpush2.bf16.msra.mxu0 0
      %2340 = vmatprep.subr.bf16.mxu0 0
      %2341 = vmatpush2.bf16.msra.mxu0 0
      %2342 = vmatprep.subr.bf16.mxu0 0
      %2343 = vmatpush2.bf16.msra.mxu0 0
      %2344 = vmatprep.subr.bf16.mxu0 0
      %2345 = vmatpush2.bf16.msra.mxu0 0
      %2346 = vmatprep.subr.bf16.mxu0 0
      %2347 = vmatpush2.bf16.msra.mxu0 0
      %2348 = vmatprep.subr.bf16.mxu0 0
      %2349 = vmatpush2.bf16.msra.mxu0 0
      %2350 = vmatprep.mubr.bf16.mxu0 0
      %2351 = vmatmul.mubr.bf16.gmra.mxu0 %v1961
      %v2352 = vpop.f32.mrf.mxu0
      %v2353 = vadd.f32 0.0, %v2352
      %v2354 = vpop.f32.mrf.mxu0
      %v2355 = vpop.f32.mrf.mxu0
      %v2356 = vpop.f32.mrf.mxu0
      %2357 = vdwg.mxu0
      %v2358 = vadd.f32 %v2317, %v2353
      %v2359 = vpack.c.bf16 %v941, %v943
      %v2361 = vshrl.u32 %v2359, 16
      %v2363 = vshll.u32 %v2359, 16
      %v2365 = vrot.slane %v2363, 1
      %v2366 = vor.u32 %v2361, %v2365
      %v2368 = vsel %vm1068, %v2366, 0
      %2370 = vmatprep.subr.bf16.mxu0 0
      %2371 = vmatpush1.bf16.msra.mxu0 0
      %2372 = vmatprep.subr.bf16.mxu0 0
      %2373 = vmatpush1.bf16.msra.mxu0 0
      %2374 = vmatprep.subr.bf16.mxu0 0
      %2375 = vmatpush1.bf16.msra.mxu0 0
      %2376 = vmatprep.subr.bf16.mxu0 0
      %2377 = vmatpush1.bf16.msra.mxu0 0
      %2378 = vmatprep.subr.bf16.mxu0 0
      %2379 = vmatpush1.bf16.msra.mxu0 0
      %2380 = vmatprep.subr.bf16.mxu0 0
      %2381 = vmatpush1.bf16.msra.mxu0 0
      %2382 = vmatprep.subr.bf16.mxu0 0
      %2383 = vmatpush1.bf16.msra.mxu0 %v1429
      %2384 = vmatprep.subr.bf16.mxu0 0
      %2385 = vmatpush1.bf16.msra.mxu0 %v1428
      %2386 = vmatprep.subr.bf16.mxu0 0
      %2387 = vmatpush2.bf16.msra.mxu0 0
      %2388 = vmatprep.subr.bf16.mxu0 0
      %2389 = vmatpush2.bf16.msra.mxu0 0
      %2390 = vmatprep.subr.bf16.mxu0 0
      %2391 = vmatpush2.bf16.msra.mxu0 0
      %2392 = vmatprep.subr.bf16.mxu0 0
      %2393 = vmatpush2.bf16.msra.mxu0 0
      %2394 = vmatprep.subr.bf16.mxu0 0
      %2395 = vmatpush2.bf16.msra.mxu0 0
      %2396 = vmatprep.subr.bf16.mxu0 0
      %2397 = vmatpush2.bf16.msra.mxu0 0
      %2398 = vmatprep.subr.bf16.mxu0 0
      %2399 = vmatpush2.bf16.msra.mxu0 0
      %2400 = vmatprep.subr.bf16.mxu0 0
      %2401 = vmatpush2.bf16.msra.mxu0 0
      %2402 = vmatprep.mubr.bf16.mxu0 0
      %2403 = vmatmul.mubr.bf16.gmra.mxu0 %v2368
      %v2404 = vpop.f32.mrf.mxu0
      %v2405 = vadd.f32 0.0, %v2404
      %v2406 = vpop.f32.mrf.mxu0
      %v2407 = vpop.f32.mrf.mxu0
      %v2408 = vpop.f32.mrf.mxu0
      %2409 = vdwg.mxu0
      %v2410 = vadd.f32 %v2358, %v2405
      %v2411 = vpack.c.bf16 %v1039, %v1041
      %v2413 = vshrl.u32 %v2411, 16
      %v2415 = vshll.u32 %v2411, 16
      %v2417 = vrot.slane %v2415, 1
      %v2418 = vor.u32 %v2413, %v2417
      %v2420 = vsel %vm1068, %v2418, 0
      %2422 = vmatprep.subr.bf16.mxu0 0
      %2423 = vmatpush1.bf16.msra.mxu0 0
      %2424 = vmatprep.subr.bf16.mxu0 0
      %2425 = vmatpush1.bf16.msra.mxu0 0
      %2426 = vmatprep.subr.bf16.mxu0 0
      %2427 = vmatpush1.bf16.msra.mxu0 0
      %2428 = vmatprep.subr.bf16.mxu0 0
      %2429 = vmatpush1.bf16.msra.mxu0 0
      %2430 = vmatprep.subr.bf16.mxu0 0
      %2431 = vmatpush1.bf16.msra.mxu0 0
      %2432 = vmatprep.subr.bf16.mxu0 0
      %2433 = vmatpush1.bf16.msra.mxu0 0
      %2434 = vmatprep.subr.bf16.mxu0 0
      %2435 = vmatpush1.bf16.msra.mxu0 %v1488
      %2436 = vmatprep.subr.bf16.mxu0 0
      %2437 = vmatpush1.bf16.msra.mxu0 %v1487
      %2438 = vmatprep.subr.bf16.mxu0 0
      %2439 = vmatpush2.bf16.msra.mxu0 0
      %2440 = vmatprep.subr.bf16.mxu0 0
      %2441 = vmatpush2.bf16.msra.mxu0 0
      %2442 = vmatprep.subr.bf16.mxu0 0
      %2443 = vmatpush2.bf16.msra.mxu0 0
      %2444 = vmatprep.subr.bf16.mxu0 0
      %2445 = vmatpush2.bf16.msra.mxu0 0
      %2446 = vmatprep.subr.bf16.mxu0 0
      %2447 = vmatpush2.bf16.msra.mxu0 0
      %2448 = vmatprep.subr.bf16.mxu0 0
      %2449 = vmatpush2.bf16.msra.mxu0 0
      %2450 = vmatprep.subr.bf16.mxu0 0
      %2451 = vmatpush2.bf16.msra.mxu0 0
      %2452 = vmatprep.subr.bf16.mxu0 0
      %2453 = vmatpush2.bf16.msra.mxu0 0
      %2454 = vmatprep.mubr.bf16.mxu0 0
      %2455 = vmatmul.mubr.bf16.gmra.mxu0 %v2420
      %v2456 = vpop.f32.mrf.mxu0
      %v2457 = vadd.f32 0.0, %v2456
      %v2458 = vpop.f32.mrf.mxu0
      %v2459 = vpop.f32.mrf.mxu0
      %v2460 = vpop.f32.mrf.mxu0
      %2461 = vdwg.mxu0
      %v2462 = vadd.f32 %v2410, %v2457
      %v2463 = vadd.f32 %v2462, %v1544
      %v2464 = vmax.f32 %v2463, 0.0
      %v2465 = vpack.c.bf16 %v2464, %v2464
      %s2466 = scalar_lea.vmem %s6, 64
      %v2467 = vld [vmem:[%s2466] sm:$0xff]
      %v2468 = vld [vmem:[%s2466 + $0x8] sm:$0xff]
      %v2469 = vld [vmem:[%s2466 + $0x10] sm:$0xff]
      %v2470 = vld [vmem:[%s2466 + $0x18] sm:$0xff]
      %v2471 = vpack.c.bf16 %v2468, %v2467
      %v2472 = vpack.c.bf16 %v2470, %v2469
      %v2474 = vsel %vm1068, %v2465, 0
      %2476 = vmatprep.subr.bf16.mxu0 0
      %2477 = vmatpush1.bf16.msra.mxu0 0
      %2478 = vmatprep.subr.bf16.mxu0 0
      %2479 = vmatpush1.bf16.msra.mxu0 0
      %2480 = vmatprep.subr.bf16.mxu0 0
      %2481 = vmatpush1.bf16.msra.mxu0 0
      %2482 = vmatprep.subr.bf16.mxu0 0
      %2483 = vmatpush1.bf16.msra.mxu0 0
      %2484 = vmatprep.subr.bf16.mxu0 0
      %2485 = vmatpush1.bf16.msra.mxu0 0
      %2486 = vmatprep.subr.bf16.mxu0 0
      %2487 = vmatpush1.bf16.msra.mxu0 0
      %2488 = vmatprep.subr.bf16.mxu0 0
      %2489 = vmatpush1.bf16.msra.mxu0 %v2472
      %2490 = vmatprep.subr.bf16.mxu0 0
      %2491 = vmatpush1.bf16.msra.mxu0 %v2471
      %2492 = vmatprep.subr.bf16.mxu0 0
      %2493 = vmatpush2.bf16.msra.mxu0 0
      %2494 = vmatprep.subr.bf16.mxu0 0
      %2495 = vmatpush2.bf16.msra.mxu0 0
      %2496 = vmatprep.subr.bf16.mxu0 0
      %2497 = vmatpush2.bf16.msra.mxu0 0
      %2498 = vmatprep.subr.bf16.mxu0 0
      %2499 = vmatpush2.bf16.msra.mxu0 0
      %2500 = vmatprep.subr.bf16.mxu0 0
      %2501 = vmatpush2.bf16.msra.mxu0 0
      %2502 = vmatprep.subr.bf16.mxu0 0
      %2503 = vmatpush2.bf16.msra.mxu0 0
      %2504 = vmatprep.subr.bf16.mxu0 0
      %2505 = vmatpush2.bf16.msra.mxu0 0
      %2506 = vmatprep.subr.bf16.mxu0 0
      %2507 = vmatpush2.bf16.msra.mxu0 0
      %2508 = vmatprep.mubr.bf16.mxu0 0
      %2509 = vmatmul.mubr.bf16.gmra.mxu0 %v2474
      %v2510 = vpop.f32.mrf.mxu0
      %v2511 = vadd.f32 0.0, %v2510
      %v2512 = vpop.f32.mrf.mxu0
      %v2513 = vpop.f32.mrf.mxu0
      %v2514 = vpop.f32.mrf.mxu0
      %2515 = vdwg.mxu0
      %v2516 = vadd.f32 %v2057, %v2511
      %2517 = vst.msk [vmem:[%s323] sm:$0xff] %vm1068, %v2516
      %p2518 = scmp.lt.s32.totalorder %s19, 1
      %s2519 = scalar_select %p2518, %s19, 1
      %s2520 = smul.addr %s2519, 8
      %s2521 = scalar_lea.vmem %s8, %s2520
      // Predicated region
      $region53: #{_lambda_.3} parent=51 // pred_check
        %p2522 = pneg %p215
      $region54: #{_lambda_.3} parent=51 // pred_check_branch
        %2524 = sbr.rel (%p2522) target = $region56
      $region55: #{_lambda_.3} parent=51 // pred_region
        _
      $region56: #{_lambda_.3} parent=51 // pred_fallthru
        _
    $region52: #{_lambda_.3} parent=5 // pred_fallthru
      _
    %p2525 = scmp.le.s32.totalorder 2, %s14
    // Predicated region
    $region57: #{_lambda_.3} parent=5 // pred_check
      %p2526 = pneg %p2525
    $region58: #{_lambda_.3} parent=5 // pred_check_branch
      %2528 = sbr.rel (%p2526) target = $region60
    $region59: #{_lambda_.3} parent=5 // pred_region
      %s2529 = ssub.s32 %s14, 2
      // Predicated region
      $region61: #{_lambda_.3} parent=59 // pred_check
        %p2530 = pneg %p221
      $region62: #{_lambda_.3} parent=59 // pred_check_branch
        %2532 = sbr.rel (%p2530) target = $region64
      $region63: #{_lambda_.3} parent=59 // pred_region
        %p2533 = scmp.lt.s32.totalorder %s20, 1
        %s2534 = scalar_select %p2533, %s20, 1
        %s2535 = smul.addr %s2534, 8
        %s2536 = scalar_lea.vmem %s8, %s2535
      $region64: #{_lambda_.3} parent=59 // pred_fallthru
        _
    $region60: #{_lambda_.3} parent=5 // pred_fallthru
      _
  $region6: #{_lambda_.3} parent=0 // loop_footer
    %s18 = sadd.s32 1, %s14
  $region7: #{_lambda_.3} parent=0 // loop_footer_branch
    %13 = sbr.rel target = $region3
  $region8: #{_lambda_.3} parent=0 // loop_exit
    _

// kernel: _lambda_.4
$region0: #{_lambda_.4}
  #allocation0 [shape = 'u32[]', space=smem, size = 0x4, offset = 0x4, fixed_abs, tag = 'smem constant byte address 0x4 - core index']
  #allocation1 [shape = 'u32[144,128]{1,0:T(1,128)}', space=vmem, size = 0x12000, scoped, tag = 'internal scratch']
  #allocation2 [shape = 'f32[1,8,32]{2,1,0:T(8,128)}', space=vmem, size = 0x1000, scoped, tag = 'scratch operand']
  %s0 = inlined_call_operand.vmem [shape: f32[2,8,32], index: 0, kind: input, shape index: {}]
  %s1 = inlined_call_operand.vmem [shape: f32[2,5,32], index: 1, kind: input, shape index: {}]
  %s2 = inlined_call_operand.vmem [shape: f32[2,5,32], index: 2, kind: input, shape index: {}]
  %s3 = inlined_call_operand.vmem [shape: f32[2,32,64], index: 3, kind: input, shape index: {}]
  %s4 = inlined_call_operand.vmem [shape: f32[2,1,64], index: 4, kind: input, shape index: {}]
  %s5 = inlined_call_operand.vmem [shape: f32[2,64,32], index: 5, kind: input, shape index: {}]
  %s6 = inlined_call_operand.vmem [shape: f32[2,1,32], index: 6, kind: input, shape index: {}]
  %s7 = inlined_call_operand.vmem [shape: f32[2,32,32], index: 7, kind: input, shape index: {}]
  %s8 = inlined_call_operand.vmem [shape: f32[2,1,32], index: 8, kind: input, shape index: {}]
  %s9 = inlined_call_operand.vmem [shape: f32[2,32,32], index: 9, kind: input, shape index: {}]
  %s10 = inlined_call_operand.vmem [shape: f32[2,1,32], index: 10, kind: input, shape index: {}]
  %s11 = inlined_call_operand.vmem [shape: f32[2,32,32], index: 11, kind: input, shape index: {}]
  %s12 = inlined_call_operand.vmem [shape: f32[2,1,32], index: 12, kind: input, shape index: {}]
  %s13 = inlined_call_operand.vmem [shape: f32[2,32,32], index: 13, kind: input, shape index: {}]
  %s14 = inlined_call_operand.vmem [shape: f32[2,1,32], index: 14, kind: input, shape index: {}]
  %s15 = inlined_call_operand.vmem [shape: f32[2,32,32], index: 15, kind: input, shape index: {}]
  %s16 = inlined_call_operand.vmem [shape: f32[2,1,32], index: 16, kind: input, shape index: {}]
  %s17 = inlined_call_operand.vmem [shape: f32[2,32,32], index: 17, kind: input, shape index: {}]
  %s18 = inlined_call_operand.vmem [shape: f32[2,1,32], index: 18, kind: input, shape index: {}]
  %s19 = inlined_call_operand.vmem [shape: f32[2,3,32], index: 19, kind: input, shape index: {}]
  %s20 = inlined_call_operand.vmem [shape: f32[2,1,32], index: 20, kind: input, shape index: {}]
  %s21 = inlined_call_operand.vmem [shape: f32[2,32,32], index: 21, kind: input, shape index: {}]
  %s22 = inlined_call_operand.vmem [shape: f32[2,1,32], index: 22, kind: input, shape index: {}]
  %s23 = inlined_call_operand.vmem [shape: f32[2,32,64], index: 23, kind: input, shape index: {}]
  %s24 = inlined_call_operand.vmem [shape: f32[2,1,64], index: 24, kind: input, shape index: {}]
  %s25 = inlined_call_operand.vmem [shape: f32[2,64,32], index: 25, kind: input, shape index: {}]
  %s26 = inlined_call_operand.vmem [shape: f32[2,1,32], index: 26, kind: input, shape index: {}]
  %s27 = inlined_call_operand.vmem [shape: f32[2,8,32], index: 27, kind: output, shape index: {}]
  %s28 = sld [smem:[#allocation0]]
  $region145: #{_lambda_.4} parent=0
    _
  %s30 = ssub.s32 1, %s28
  %s31 = scalar_select 0, %s30, %s28
  loop: start=0, step=1, limit=6
  $region2: #{_lambda_.4} parent=0 // loop_pre_header
    _
  $region3: #{_lambda_.4} parent=0 // loop_header
    %s33 = sphi 0, %s37
    %p34 = scmp.ge.s32.totalorder %s33, 6
    %s40 = sphi 0, %s52
    %s41 = sphi 0, %s48
    %s42 = sphi 0, %s40
    %s43 = sphi 0, %s41
    %s44 = sphi 0, %s42
    %s45 = sphi 0, %s43
    %s55 = sphi 0, %s57
    %s58 = sphi 0, %s55
    %s59 = sphi 0, %s58
    %s75 = sphi 0, %s59
    %s81 = sphi 0, %s83
    %s84 = sphi 0, %s81
    %s85 = sphi 0, %s84
    %s101 = sphi 0, %s85
    %s107 = sphi 0, %s109
    %s110 = sphi 0, %s107
    %s111 = sphi 0, %s110
    %s127 = sphi 0, %s111
    %s133 = sphi 0, %s135
    %s136 = sphi 0, %s133
    %s137 = sphi 0, %s136
    %s153 = sphi 0, %s137
    %s159 = sphi 0, %s161
    %s162 = sphi 0, %s159
    %s163 = sphi 0, %s162
    %s179 = sphi 0, %s163
    %s185 = sphi 0, %s187
    %s188 = sphi 0, %s185
    %s189 = sphi 0, %s188
    %s205 = sphi 0, %s189
    %s211 = sphi 0, %s213
    %s214 = sphi 0, %s211
    %s215 = sphi 0, %s214
    %s231 = sphi 0, %s215
    %s237 = sphi 0, %s239
    %s240 = sphi 0, %s237
    %s241 = sphi 0, %s240
    %s257 = sphi 0, %s241
    %s263 = sphi 0, %s265
    %s266 = sphi 0, %s263
    %s267 = sphi 0, %s266
    %s283 = sphi 0, %s267
    %s289 = sphi 0, %s291
    %s292 = sphi 0, %s289
    %s293 = sphi 0, %s292
    %s309 = sphi 0, %s293
    %s315 = sphi 0, %s317
    %s318 = sphi 0, %s315
    %s319 = sphi 0, %s318
    %s335 = sphi 0, %s319
    %s341 = sphi 0, %s343
    %s344 = sphi 0, %s341
    %s345 = sphi 0, %s344
    %s361 = sphi 0, %s345
    %s367 = sphi 0, %s369
    %s370 = sphi 0, %s367
    %s371 = sphi 0, %s370
    %s387 = sphi 0, %s371
    %s393 = sphi 0, %s395
    %s396 = sphi 0, %s393
    %s397 = sphi 0, %s396
    %s413 = sphi 0, %s397
    %s419 = sphi 0, %s421
    %s422 = sphi 0, %s419
    %s423 = sphi 0, %s422
    %s439 = sphi 0, %s423
    %s445 = sphi 0, %s447
    %s448 = sphi 0, %s445
    %s449 = sphi 0, %s448
    %s465 = sphi 0, %s449
    %s471 = sphi 0, %s473
    %s474 = sphi 0, %s471
    %s475 = sphi 0, %s474
    %s491 = sphi 0, %s475
    %s497 = sphi 0, %s499
    %s500 = sphi 0, %s497
    %s501 = sphi 0, %s500
    %s517 = sphi 0, %s501
    %s523 = sphi 0, %s525
    %s526 = sphi 0, %s523
    %s527 = sphi 0, %s526
    %s543 = sphi 0, %s527
    %s549 = sphi 0, %s551
    %s552 = sphi 0, %s549
    %s553 = sphi 0, %s552
    %s569 = sphi 0, %s553
    %s575 = sphi 0, %s577
    %s578 = sphi 0, %s575
    %s579 = sphi 0, %s578
    %s595 = sphi 0, %s579
    %s601 = sphi 0, %s603
    %s604 = sphi 0, %s601
    %s605 = sphi 0, %s604
    %s621 = sphi 0, %s605
    %s627 = sphi 0, %s629
    %s630 = sphi 0, %s627
    %s631 = sphi 0, %s630
    %s647 = sphi 0, %s631
    %s653 = sphi 0, %s655
    %s656 = sphi 0, %s653
    %s657 = sphi 0, %s656
    %s673 = sphi 0, %s657
    %s679 = sphi 0, %s681
    %s682 = sphi 0, %s679
    %s683 = sphi 0, %s682
    %s699 = sphi 0, %s683
    %s705 = sphi 0, %s707
    %s708 = sphi 0, %s705
    %s709 = sphi 0, %s708
    %s725 = sphi 0, %s709
    %s731 = sphi 0, %s733
    %s734 = sphi 0, %s731
    %s735 = sphi 0, %s734
    %s751 = sphi 0, %s735
    %s757 = sphi 0, %s759
    %s760 = sphi 0, %s757
    %s761 = sphi 0, %s760
    %s777 = sphi 0, %s761
  $region4: #{_lambda_.4} parent=0 // loop_header_branch
    %36 = sbr.rel (%p34) target = $region8
  $region5: #{_lambda_.4} parent=0 // loop_body
    %s38 = ssub.s32 %s33, 1
    %s39 = ssub.s32 %s33, 2
    %s46 = sadd.s32 1, %s41
    %p47 = scmp.ge.s32.totalorder %s46, 2
    %s48 = scalar_select %p47, 0, %s46
    %s49 = sadd.s32 1, %s40
    %s50 = scalar_select %p47, %s49, %s40
    %p51 = scmp.ge.s32.totalorder %s50, 2
    %s52 = scalar_select %p51, 0, %s50
    %s53 = ssub.s32 %s40, %s52
    %p54 = scmp.eq.s32.totalorder %s53, 0
    %s56 = sadd.s32 %s55, 1
    %s57 = scalar_select %p54, %s55, %s56
    %p60 = pneg %p54
    %p61 = scmp.eq.s32.totalorder %s33, 3
    %p62 = por %p60, %p61
    %p63 = scmp.ne.s32.totalorder %s55, %s58
    %p64 = scmp.eq.s32.totalorder %s33, 0
    %p65 = por %p63, %p64
    %p66 = scmp.ne.s32.totalorder %s55, %s58
    %p67 = scmp.eq.s32.totalorder %s38, 3
    %p68 = por %p66, %p67
    %p69 = scmp.ne.s32.totalorder %s58, %s59
    %p70 = scmp.eq.s32.totalorder %s38, 0
    %p71 = por %p69, %p70
    %p72 = scmp.ne.s32.totalorder %s58, %s59
    %p73 = scmp.eq.s32.totalorder %s39, 3
    %p74 = por %p72, %p73
    %p76 = scmp.ne.s32.totalorder %s59, %s75
    %p77 = scmp.eq.s32.totalorder %s39, 0
    %p78 = por %p76, %p77
    %s79 = ssub.s32 %s41, %s48
    %p80 = scmp.eq.s32.totalorder %s79, 0
    %s82 = sadd.s32 %s81, 1
    %s83 = scalar_select %p80, %s81, %s82
    %p86 = pneg %p80
    %p87 = scmp.eq.s32.totalorder %s33, 3
    %p88 = por %p86, %p87
    %p89 = scmp.ne.s32.totalorder %s81, %s84
    %p90 = scmp.eq.s32.totalorder %s33, 0
    %p91 = por %p89, %p90
    %p92 = scmp.ne.s32.totalorder %s81, %s84
    %p93 = scmp.eq.s32.totalorder %s38, 3
    %p94 = por %p92, %p93
    %p95 = scmp.ne.s32.totalorder %s84, %s85
    %p96 = scmp.eq.s32.totalorder %s38, 0
    %p97 = por %p95, %p96
    %p98 = scmp.ne.s32.totalorder %s84, %s85
    %p99 = scmp.eq.s32.totalorder %s39, 3
    %p100 = por %p98, %p99
    %p102 = scmp.ne.s32.totalorder %s85, %s101
    %p103 = scmp.eq.s32.totalorder %s39, 0
    %p104 = por %p102, %p103
    %s105 = ssub.s32 %s41, %s48
    %p106 = scmp.eq.s32.totalorder %s105, 0
    %s108 = sadd.s32 %s107, 1
    %s109 = scalar_select %p106, %s107, %s108
    %p112 = pneg %p106
    %p113 = scmp.eq.s32.totalorder %s33, 3
    %p114 = por %p112, %p113
    %p115 = scmp.ne.s32.totalorder %s107, %s110
    %p116 = scmp.eq.s32.totalorder %s33, 0
    %p117 = por %p115, %p116
    %p118 = scmp.ne.s32.totalorder %s107, %s110
    %p119 = scmp.eq.s32.totalorder %s38, 3
    %p120 = por %p118, %p119
    %p121 = scmp.ne.s32.totalorder %s110, %s111
    %p122 = scmp.eq.s32.totalorder %s38, 0
    %p123 = por %p121, %p122
    %p124 = scmp.ne.s32.totalorder %s110, %s111
    %p125 = scmp.eq.s32.totalorder %s39, 3
    %p126 = por %p124, %p125
    %p128 = scmp.ne.s32.totalorder %s111, %s127
    %p129 = scmp.eq.s32.totalorder %s39, 0
    %p130 = por %p128, %p129
    %s131 = ssub.s32 %s41, %s48
    %p132 = scmp.eq.s32.totalorder %s131, 0
    %s134 = sadd.s32 %s133, 1
    %s135 = scalar_select %p132, %s133, %s134
    %p138 = pneg %p132
    %p139 = scmp.eq.s32.totalorder %s33, 3
    %p140 = por %p138, %p139
    %p141 = scmp.ne.s32.totalorder %s133, %s136
    %p142 = scmp.eq.s32.totalorder %s33, 0
    %p143 = por %p141, %p142
    %p144 = scmp.ne.s32.totalorder %s133, %s136
    %p145 = scmp.eq.s32.totalorder %s38, 3
    %p146 = por %p144, %p145
    %p147 = scmp.ne.s32.totalorder %s136, %s137
    %p148 = scmp.eq.s32.totalorder %s38, 0
    %p149 = por %p147, %p148
    %p150 = scmp.ne.s32.totalorder %s136, %s137
    %p151 = scmp.eq.s32.totalorder %s39, 3
    %p152 = por %p150, %p151
    %p154 = scmp.ne.s32.totalorder %s137, %s153
    %p155 = scmp.eq.s32.totalorder %s39, 0
    %p156 = por %p154, %p155
    %s157 = ssub.s32 %s41, %s48
    %p158 = scmp.eq.s32.totalorder %s157, 0
    %s160 = sadd.s32 %s159, 1
    %s161 = scalar_select %p158, %s159, %s160
    %p164 = pneg %p158
    %p165 = scmp.eq.s32.totalorder %s33, 3
    %p166 = por %p164, %p165
    %p167 = scmp.ne.s32.totalorder %s159, %s162
    %p168 = scmp.eq.s32.totalorder %s33, 0
    %p169 = por %p167, %p168
    %p170 = scmp.ne.s32.totalorder %s159, %s162
    %p171 = scmp.eq.s32.totalorder %s38, 3
    %p172 = por %p170, %p171
    %p173 = scmp.ne.s32.totalorder %s162, %s163
    %p174 = scmp.eq.s32.totalorder %s38, 0
    %p175 = por %p173, %p174
    %p176 = scmp.ne.s32.totalorder %s162, %s163
    %p177 = scmp.eq.s32.totalorder %s39, 3
    %p178 = por %p176, %p177
    %p180 = scmp.ne.s32.totalorder %s163, %s179
    %p181 = scmp.eq.s32.totalorder %s39, 0
    %p182 = por %p180, %p181
    %s183 = ssub.s32 %s41, %s48
    %p184 = scmp.eq.s32.totalorder %s183, 0
    %s186 = sadd.s32 %s185, 1
    %s187 = scalar_select %p184, %s185, %s186
    %p190 = pneg %p184
    %p191 = scmp.eq.s32.totalorder %s33, 3
    %p192 = por %p190, %p191
    %p193 = scmp.ne.s32.totalorder %s185, %s188
    %p194 = scmp.eq.s32.totalorder %s33, 0
    %p195 = por %p193, %p194
    %p196 = scmp.ne.s32.totalorder %s185, %s188
    %p197 = scmp.eq.s32.totalorder %s38, 3
    %p198 = por %p196, %p197
    %p199 = scmp.ne.s32.totalorder %s188, %s189
    %p200 = scmp.eq.s32.totalorder %s38, 0
    %p201 = por %p199, %p200
    %p202 = scmp.ne.s32.totalorder %s188, %s189
    %p203 = scmp.eq.s32.totalorder %s39, 3
    %p204 = por %p202, %p203
    %p206 = scmp.ne.s32.totalorder %s189, %s205
    %p207 = scmp.eq.s32.totalorder %s39, 0
    %p208 = por %p206, %p207
    %s209 = ssub.s32 %s41, %s48
    %p210 = scmp.eq.s32.totalorder %s209, 0
    %s212 = sadd.s32 %s211, 1
    %s213 = scalar_select %p210, %s211, %s212
    %p216 = pneg %p210
    %p217 = scmp.eq.s32.totalorder %s33, 3
    %p218 = por %p216, %p217
    %p219 = scmp.ne.s32.totalorder %s211, %s214
    %p220 = scmp.eq.s32.totalorder %s33, 0
    %p221 = por %p219, %p220
    %p222 = scmp.ne.s32.totalorder %s211, %s214
    %p223 = scmp.eq.s32.totalorder %s38, 3
    %p224 = por %p222, %p223
    %p225 = scmp.ne.s32.totalorder %s214, %s215
    %p226 = scmp.eq.s32.totalorder %s38, 0
    %p227 = por %p225, %p226
    %p228 = scmp.ne.s32.totalorder %s214, %s215
    %p229 = scmp.eq.s32.totalorder %s39, 3
    %p230 = por %p228, %p229
    %p232 = scmp.ne.s32.totalorder %s215, %s231
    %p233 = scmp.eq.s32.totalorder %s39, 0
    %p234 = por %p232, %p233
    %s235 = ssub.s32 %s41, %s48
    %p236 = scmp.eq.s32.totalorder %s235, 0
    %s238 = sadd.s32 %s237, 1
    %s239 = scalar_select %p236, %s237, %s238
    %p242 = pneg %p236
    %p243 = scmp.eq.s32.totalorder %s33, 3
    %p244 = por %p242, %p243
    %p245 = scmp.ne.s32.totalorder %s237, %s240
    %p246 = scmp.eq.s32.totalorder %s33, 0
    %p247 = por %p245, %p246
    %p248 = scmp.ne.s32.totalorder %s237, %s240
    %p249 = scmp.eq.s32.totalorder %s38, 3
    %p250 = por %p248, %p249
    %p251 = scmp.ne.s32.totalorder %s240, %s241
    %p252 = scmp.eq.s32.totalorder %s38, 0
    %p253 = por %p251, %p252
    %p254 = scmp.ne.s32.totalorder %s240, %s241
    %p255 = scmp.eq.s32.totalorder %s39, 3
    %p256 = por %p254, %p255
    %p258 = scmp.ne.s32.totalorder %s241, %s257
    %p259 = scmp.eq.s32.totalorder %s39, 0
    %p260 = por %p258, %p259
    %s261 = ssub.s32 %s41, %s48
    %p262 = scmp.eq.s32.totalorder %s261, 0
    %s264 = sadd.s32 %s263, 1
    %s265 = scalar_select %p262, %s263, %s264
    %p268 = pneg %p262
    %p269 = scmp.eq.s32.totalorder %s33, 3
    %p270 = por %p268, %p269
    %p271 = scmp.ne.s32.totalorder %s263, %s266
    %p272 = scmp.eq.s32.totalorder %s33, 0
    %p273 = por %p271, %p272
    %p274 = scmp.ne.s32.totalorder %s263, %s266
    %p275 = scmp.eq.s32.totalorder %s38, 3
    %p276 = por %p274, %p275
    %p277 = scmp.ne.s32.totalorder %s266, %s267
    %p278 = scmp.eq.s32.totalorder %s38, 0
    %p279 = por %p277, %p278
    %p280 = scmp.ne.s32.totalorder %s266, %s267
    %p281 = scmp.eq.s32.totalorder %s39, 3
    %p282 = por %p280, %p281
    %p284 = scmp.ne.s32.totalorder %s267, %s283
    %p285 = scmp.eq.s32.totalorder %s39, 0
    %p286 = por %p284, %p285
    %s287 = ssub.s32 %s41, %s48
    %p288 = scmp.eq.s32.totalorder %s287, 0
    %s290 = sadd.s32 %s289, 1
    %s291 = scalar_select %p288, %s289, %s290
    %p294 = pneg %p288
    %p295 = scmp.eq.s32.totalorder %s33, 3
    %p296 = por %p294, %p295
    %p297 = scmp.ne.s32.totalorder %s289, %s292
    %p298 = scmp.eq.s32.totalorder %s33, 0
    %p299 = por %p297, %p298
    %p300 = scmp.ne.s32.totalorder %s289, %s292
    %p301 = scmp.eq.s32.totalorder %s38, 3
    %p302 = por %p300, %p301
    %p303 = scmp.ne.s32.totalorder %s292, %s293
    %p304 = scmp.eq.s32.totalorder %s38, 0
    %p305 = por %p303, %p304
    %p306 = scmp.ne.s32.totalorder %s292, %s293
    %p307 = scmp.eq.s32.totalorder %s39, 3
    %p308 = por %p306, %p307
    %p310 = scmp.ne.s32.totalorder %s293, %s309
    %p311 = scmp.eq.s32.totalorder %s39, 0
    %p312 = por %p310, %p311
    %s313 = ssub.s32 %s41, %s48
    %p314 = scmp.eq.s32.totalorder %s313, 0
    %s316 = sadd.s32 %s315, 1
    %s317 = scalar_select %p314, %s315, %s316
    %p320 = pneg %p314
    %p321 = scmp.eq.s32.totalorder %s33, 3
    %p322 = por %p320, %p321
    %p323 = scmp.ne.s32.totalorder %s315, %s318
    %p324 = scmp.eq.s32.totalorder %s33, 0
    %p325 = por %p323, %p324
    %p326 = scmp.ne.s32.totalorder %s315, %s318
    %p327 = scmp.eq.s32.totalorder %s38, 3
    %p328 = por %p326, %p327
    %p329 = scmp.ne.s32.totalorder %s318, %s319
    %p330 = scmp.eq.s32.totalorder %s38, 0
    %p331 = por %p329, %p330
    %p332 = scmp.ne.s32.totalorder %s318, %s319
    %p333 = scmp.eq.s32.totalorder %s39, 3
    %p334 = por %p332, %p333
    %p336 = scmp.ne.s32.totalorder %s319, %s335
    %p337 = scmp.eq.s32.totalorder %s39, 0
    %p338 = por %p336, %p337
    %s339 = ssub.s32 %s41, %s48
    %p340 = scmp.eq.s32.totalorder %s339, 0
    %s342 = sadd.s32 %s341, 1
    %s343 = scalar_select %p340, %s341, %s342
    %p346 = pneg %p340
    %p347 = scmp.eq.s32.totalorder %s33, 3
    %p348 = por %p346, %p347
    %p349 = scmp.ne.s32.totalorder %s341, %s344
    %p350 = scmp.eq.s32.totalorder %s33, 0
    %p351 = por %p349, %p350
    %p352 = scmp.ne.s32.totalorder %s341, %s344
    %p353 = scmp.eq.s32.totalorder %s38, 3
    %p354 = por %p352, %p353
    %p355 = scmp.ne.s32.totalorder %s344, %s345
    %p356 = scmp.eq.s32.totalorder %s38, 0
    %p357 = por %p355, %p356
    %p358 = scmp.ne.s32.totalorder %s344, %s345
    %p359 = scmp.eq.s32.totalorder %s39, 3
    %p360 = por %p358, %p359
    %p362 = scmp.ne.s32.totalorder %s345, %s361
    %p363 = scmp.eq.s32.totalorder %s39, 0
    %p364 = por %p362, %p363
    %s365 = ssub.s32 %s41, %s48
    %p366 = scmp.eq.s32.totalorder %s365, 0
    %s368 = sadd.s32 %s367, 1
    %s369 = scalar_select %p366, %s367, %s368
    %p372 = pneg %p366
    %p373 = scmp.eq.s32.totalorder %s33, 3
    %p374 = por %p372, %p373
    %p375 = scmp.ne.s32.totalorder %s367, %s370
    %p376 = scmp.eq.s32.totalorder %s33, 0
    %p377 = por %p375, %p376
    %p378 = scmp.ne.s32.totalorder %s367, %s370
    %p379 = scmp.eq.s32.totalorder %s38, 3
    %p380 = por %p378, %p379
    %p381 = scmp.ne.s32.totalorder %s370, %s371
    %p382 = scmp.eq.s32.totalorder %s38, 0
    %p383 = por %p381, %p382
    %p384 = scmp.ne.s32.totalorder %s370, %s371
    %p385 = scmp.eq.s32.totalorder %s39, 3
    %p386 = por %p384, %p385
    %p388 = scmp.ne.s32.totalorder %s371, %s387
    %p389 = scmp.eq.s32.totalorder %s39, 0
    %p390 = por %p388, %p389
    %s391 = ssub.s32 %s41, %s48
    %p392 = scmp.eq.s32.totalorder %s391, 0
    %s394 = sadd.s32 %s393, 1
    %s395 = scalar_select %p392, %s393, %s394
    %p398 = pneg %p392
    %p399 = scmp.eq.s32.totalorder %s33, 3
    %p400 = por %p398, %p399
    %p401 = scmp.ne.s32.totalorder %s393, %s396
    %p402 = scmp.eq.s32.totalorder %s33, 0
    %p403 = por %p401, %p402
    %p404 = scmp.ne.s32.totalorder %s393, %s396
    %p405 = scmp.eq.s32.totalorder %s38, 3
    %p406 = por %p404, %p405
    %p407 = scmp.ne.s32.totalorder %s396, %s397
    %p408 = scmp.eq.s32.totalorder %s38, 0
    %p409 = por %p407, %p408
    %p410 = scmp.ne.s32.totalorder %s396, %s397
    %p411 = scmp.eq.s32.totalorder %s39, 3
    %p412 = por %p410, %p411
    %p414 = scmp.ne.s32.totalorder %s397, %s413
    %p415 = scmp.eq.s32.totalorder %s39, 0
    %p416 = por %p414, %p415
    %s417 = ssub.s32 %s41, %s48
    %p418 = scmp.eq.s32.totalorder %s417, 0
    %s420 = sadd.s32 %s419, 1
    %s421 = scalar_select %p418, %s419, %s420
    %p424 = pneg %p418
    %p425 = scmp.eq.s32.totalorder %s33, 3
    %p426 = por %p424, %p425
    %p427 = scmp.ne.s32.totalorder %s419, %s422
    %p428 = scmp.eq.s32.totalorder %s33, 0
    %p429 = por %p427, %p428
    %p430 = scmp.ne.s32.totalorder %s419, %s422
    %p431 = scmp.eq.s32.totalorder %s38, 3
    %p432 = por %p430, %p431
    %p433 = scmp.ne.s32.totalorder %s422, %s423
    %p434 = scmp.eq.s32.totalorder %s38, 0
    %p435 = por %p433, %p434
    %p436 = scmp.ne.s32.totalorder %s422, %s423
    %p437 = scmp.eq.s32.totalorder %s39, 3
    %p438 = por %p436, %p437
    %p440 = scmp.ne.s32.totalorder %s423, %s439
    %p441 = scmp.eq.s32.totalorder %s39, 0
    %p442 = por %p440, %p441
    %s443 = ssub.s32 %s41, %s48
    %p444 = scmp.eq.s32.totalorder %s443, 0
    %s446 = sadd.s32 %s445, 1
    %s447 = scalar_select %p444, %s445, %s446
    %p450 = pneg %p444
    %p451 = scmp.eq.s32.totalorder %s33, 3
    %p452 = por %p450, %p451
    %p453 = scmp.ne.s32.totalorder %s445, %s448
    %p454 = scmp.eq.s32.totalorder %s33, 0
    %p455 = por %p453, %p454
    %p456 = scmp.ne.s32.totalorder %s445, %s448
    %p457 = scmp.eq.s32.totalorder %s38, 3
    %p458 = por %p456, %p457
    %p459 = scmp.ne.s32.totalorder %s448, %s449
    %p460 = scmp.eq.s32.totalorder %s38, 0
    %p461 = por %p459, %p460
    %p462 = scmp.ne.s32.totalorder %s448, %s449
    %p463 = scmp.eq.s32.totalorder %s39, 3
    %p464 = por %p462, %p463
    %p466 = scmp.ne.s32.totalorder %s449, %s465
    %p467 = scmp.eq.s32.totalorder %s39, 0
    %p468 = por %p466, %p467
    %s469 = ssub.s32 %s41, %s48
    %p470 = scmp.eq.s32.totalorder %s469, 0
    %s472 = sadd.s32 %s471, 1
    %s473 = scalar_select %p470, %s471, %s472
    %p476 = pneg %p470
    %p477 = scmp.eq.s32.totalorder %s33, 3
    %p478 = por %p476, %p477
    %p479 = scmp.ne.s32.totalorder %s471, %s474
    %p480 = scmp.eq.s32.totalorder %s33, 0
    %p481 = por %p479, %p480
    %p482 = scmp.ne.s32.totalorder %s471, %s474
    %p483 = scmp.eq.s32.totalorder %s38, 3
    %p484 = por %p482, %p483
    %p485 = scmp.ne.s32.totalorder %s474, %s475
    %p486 = scmp.eq.s32.totalorder %s38, 0
    %p487 = por %p485, %p486
    %p488 = scmp.ne.s32.totalorder %s474, %s475
    %p489 = scmp.eq.s32.totalorder %s39, 3
    %p490 = por %p488, %p489
    %p492 = scmp.ne.s32.totalorder %s475, %s491
    %p493 = scmp.eq.s32.totalorder %s39, 0
    %p494 = por %p492, %p493
    %s495 = ssub.s32 %s41, %s48
    %p496 = scmp.eq.s32.totalorder %s495, 0
    %s498 = sadd.s32 %s497, 1
    %s499 = scalar_select %p496, %s497, %s498
    %p502 = pneg %p496
    %p503 = scmp.eq.s32.totalorder %s33, 3
    %p504 = por %p502, %p503
    %p505 = scmp.ne.s32.totalorder %s497, %s500
    %p506 = scmp.eq.s32.totalorder %s33, 0
    %p507 = por %p505, %p506
    %p508 = scmp.ne.s32.totalorder %s497, %s500
    %p509 = scmp.eq.s32.totalorder %s38, 3
    %p510 = por %p508, %p509
    %p511 = scmp.ne.s32.totalorder %s500, %s501
    %p512 = scmp.eq.s32.totalorder %s38, 0
    %p513 = por %p511, %p512
    %p514 = scmp.ne.s32.totalorder %s500, %s501
    %p515 = scmp.eq.s32.totalorder %s39, 3
    %p516 = por %p514, %p515
    %p518 = scmp.ne.s32.totalorder %s501, %s517
    %p519 = scmp.eq.s32.totalorder %s39, 0
    %p520 = por %p518, %p519
    %s521 = ssub.s32 %s41, %s48
    %p522 = scmp.eq.s32.totalorder %s521, 0
    %s524 = sadd.s32 %s523, 1
    %s525 = scalar_select %p522, %s523, %s524
    %p528 = pneg %p522
    %p529 = scmp.eq.s32.totalorder %s33, 3
    %p530 = por %p528, %p529
    %p531 = scmp.ne.s32.totalorder %s523, %s526
    %p532 = scmp.eq.s32.totalorder %s33, 0
    %p533 = por %p531, %p532
    %p534 = scmp.ne.s32.totalorder %s523, %s526
    %p535 = scmp.eq.s32.totalorder %s38, 3
    %p536 = por %p534, %p535
    %p537 = scmp.ne.s32.totalorder %s526, %s527
    %p538 = scmp.eq.s32.totalorder %s38, 0
    %p539 = por %p537, %p538
    %p540 = scmp.ne.s32.totalorder %s526, %s527
    %p541 = scmp.eq.s32.totalorder %s39, 3
    %p542 = por %p540, %p541
    %p544 = scmp.ne.s32.totalorder %s527, %s543
    %p545 = scmp.eq.s32.totalorder %s39, 0
    %p546 = por %p544, %p545
    %s547 = ssub.s32 %s41, %s48
    %p548 = scmp.eq.s32.totalorder %s547, 0
    %s550 = sadd.s32 %s549, 1
    %s551 = scalar_select %p548, %s549, %s550
    %p554 = pneg %p548
    %p555 = scmp.eq.s32.totalorder %s33, 3
    %p556 = por %p554, %p555
    %p557 = scmp.ne.s32.totalorder %s549, %s552
    %p558 = scmp.eq.s32.totalorder %s33, 0
    %p559 = por %p557, %p558
    %p560 = scmp.ne.s32.totalorder %s549, %s552
    %p561 = scmp.eq.s32.totalorder %s38, 3
    %p562 = por %p560, %p561
    %p563 = scmp.ne.s32.totalorder %s552, %s553
    %p564 = scmp.eq.s32.totalorder %s38, 0
    %p565 = por %p563, %p564
    %p566 = scmp.ne.s32.totalorder %s552, %s553
    %p567 = scmp.eq.s32.totalorder %s39, 3
    %p568 = por %p566, %p567
    %p570 = scmp.ne.s32.totalorder %s553, %s569
    %p571 = scmp.eq.s32.totalorder %s39, 0
    %p572 = por %p570, %p571
    %s573 = ssub.s32 %s41, %s48
    %p574 = scmp.eq.s32.totalorder %s573, 0
    %s576 = sadd.s32 %s575, 1
    %s577 = scalar_select %p574, %s575, %s576
    %p580 = pneg %p574
    %p581 = scmp.eq.s32.totalorder %s33, 3
    %p582 = por %p580, %p581
    %p583 = scmp.ne.s32.totalorder %s575, %s578
    %p584 = scmp.eq.s32.totalorder %s33, 0
    %p585 = por %p583, %p584
    %p586 = scmp.ne.s32.totalorder %s575, %s578
    %p587 = scmp.eq.s32.totalorder %s38, 3
    %p588 = por %p586, %p587
    %p589 = scmp.ne.s32.totalorder %s578, %s579
    %p590 = scmp.eq.s32.totalorder %s38, 0
    %p591 = por %p589, %p590
    %p592 = scmp.ne.s32.totalorder %s578, %s579
    %p593 = scmp.eq.s32.totalorder %s39, 3
    %p594 = por %p592, %p593
    %p596 = scmp.ne.s32.totalorder %s579, %s595
    %p597 = scmp.eq.s32.totalorder %s39, 0
    %p598 = por %p596, %p597
    %s599 = ssub.s32 %s41, %s48
    %p600 = scmp.eq.s32.totalorder %s599, 0
    %s602 = sadd.s32 %s601, 1
    %s603 = scalar_select %p600, %s601, %s602
    %p606 = pneg %p600
    %p607 = scmp.eq.s32.totalorder %s33, 3
    %p608 = por %p606, %p607
    %p609 = scmp.ne.s32.totalorder %s601, %s604
    %p610 = scmp.eq.s32.totalorder %s33, 0
    %p611 = por %p609, %p610
    %p612 = scmp.ne.s32.totalorder %s601, %s604
    %p613 = scmp.eq.s32.totalorder %s38, 3
    %p614 = por %p612, %p613
    %p615 = scmp.ne.s32.totalorder %s604, %s605
    %p616 = scmp.eq.s32.totalorder %s38, 0
    %p617 = por %p615, %p616
    %p618 = scmp.ne.s32.totalorder %s604, %s605
    %p619 = scmp.eq.s32.totalorder %s39, 3
    %p620 = por %p618, %p619
    %p622 = scmp.ne.s32.totalorder %s605, %s621
    %p623 = scmp.eq.s32.totalorder %s39, 0
    %p624 = por %p622, %p623
    %s625 = ssub.s32 %s41, %s48
    %p626 = scmp.eq.s32.totalorder %s625, 0
    %s628 = sadd.s32 %s627, 1
    %s629 = scalar_select %p626, %s627, %s628
    %p632 = pneg %p626
    %p633 = scmp.eq.s32.totalorder %s33, 3
    %p634 = por %p632, %p633
    %p635 = scmp.ne.s32.totalorder %s627, %s630
    %p636 = scmp.eq.s32.totalorder %s33, 0
    %p637 = por %p635, %p636
    %p638 = scmp.ne.s32.totalorder %s627, %s630
    %p639 = scmp.eq.s32.totalorder %s38, 3
    %p640 = por %p638, %p639
    %p641 = scmp.ne.s32.totalorder %s630, %s631
    %p642 = scmp.eq.s32.totalorder %s38, 0
    %p643 = por %p641, %p642
    %p644 = scmp.ne.s32.totalorder %s630, %s631
    %p645 = scmp.eq.s32.totalorder %s39, 3
    %p646 = por %p644, %p645
    %p648 = scmp.ne.s32.totalorder %s631, %s647
    %p649 = scmp.eq.s32.totalorder %s39, 0
    %p650 = por %p648, %p649
    %s651 = ssub.s32 %s41, %s48
    %p652 = scmp.eq.s32.totalorder %s651, 0
    %s654 = sadd.s32 %s653, 1
    %s655 = scalar_select %p652, %s653, %s654
    %p658 = pneg %p652
    %p659 = scmp.eq.s32.totalorder %s33, 3
    %p660 = por %p658, %p659
    %p661 = scmp.ne.s32.totalorder %s653, %s656
    %p662 = scmp.eq.s32.totalorder %s33, 0
    %p663 = por %p661, %p662
    %p664 = scmp.ne.s32.totalorder %s653, %s656
    %p665 = scmp.eq.s32.totalorder %s38, 3
    %p666 = por %p664, %p665
    %p667 = scmp.ne.s32.totalorder %s656, %s657
    %p668 = scmp.eq.s32.totalorder %s38, 0
    %p669 = por %p667, %p668
    %p670 = scmp.ne.s32.totalorder %s656, %s657
    %p671 = scmp.eq.s32.totalorder %s39, 3
    %p672 = por %p670, %p671
    %p674 = scmp.ne.s32.totalorder %s657, %s673
    %p675 = scmp.eq.s32.totalorder %s39, 0
    %p676 = por %p674, %p675
    %s677 = ssub.s32 %s41, %s48
    %p678 = scmp.eq.s32.totalorder %s677, 0
    %s680 = sadd.s32 %s679, 1
    %s681 = scalar_select %p678, %s679, %s680
    %p684 = pneg %p678
    %p685 = scmp.eq.s32.totalorder %s33, 3
    %p686 = por %p684, %p685
    %p687 = scmp.ne.s32.totalorder %s679, %s682
    %p688 = scmp.eq.s32.totalorder %s33, 0
    %p689 = por %p687, %p688
    %p690 = scmp.ne.s32.totalorder %s679, %s682
    %p691 = scmp.eq.s32.totalorder %s38, 3
    %p692 = por %p690, %p691
    %p693 = scmp.ne.s32.totalorder %s682, %s683
    %p694 = scmp.eq.s32.totalorder %s38, 0
    %p695 = por %p693, %p694
    %p696 = scmp.ne.s32.totalorder %s682, %s683
    %p697 = scmp.eq.s32.totalorder %s39, 3
    %p698 = por %p696, %p697
    %p700 = scmp.ne.s32.totalorder %s683, %s699
    %p701 = scmp.eq.s32.totalorder %s39, 0
    %p702 = por %p700, %p701
    %s703 = ssub.s32 %s41, %s48
    %p704 = scmp.eq.s32.totalorder %s703, 0
    %s706 = sadd.s32 %s705, 1
    %s707 = scalar_select %p704, %s705, %s706
    %p710 = pneg %p704
    %p711 = scmp.eq.s32.totalorder %s33, 3
    %p712 = por %p710, %p711
    %p713 = scmp.ne.s32.totalorder %s705, %s708
    %p714 = scmp.eq.s32.totalorder %s33, 0
    %p715 = por %p713, %p714
    %p716 = scmp.ne.s32.totalorder %s705, %s708
    %p717 = scmp.eq.s32.totalorder %s38, 3
    %p718 = por %p716, %p717
    %p719 = scmp.ne.s32.totalorder %s708, %s709
    %p720 = scmp.eq.s32.totalorder %s38, 0
    %p721 = por %p719, %p720
    %p722 = scmp.ne.s32.totalorder %s708, %s709
    %p723 = scmp.eq.s32.totalorder %s39, 3
    %p724 = por %p722, %p723
    %p726 = scmp.ne.s32.totalorder %s709, %s725
    %p727 = scmp.eq.s32.totalorder %s39, 0
    %p728 = por %p726, %p727
    %s729 = ssub.s32 %s41, %s48
    %p730 = scmp.eq.s32.totalorder %s729, 0
    %s732 = sadd.s32 %s731, 1
    %s733 = scalar_select %p730, %s731, %s732
    %p736 = pneg %p730
    %p737 = scmp.eq.s32.totalorder %s33, 3
    %p738 = por %p736, %p737
    %p739 = scmp.ne.s32.totalorder %s731, %s734
    %p740 = scmp.eq.s32.totalorder %s33, 0
    %p741 = por %p739, %p740
    %p742 = scmp.ne.s32.totalorder %s731, %s734
    %p743 = scmp.eq.s32.totalorder %s38, 3
    %p744 = por %p742, %p743
    %p745 = scmp.ne.s32.totalorder %s734, %s735
    %p746 = scmp.eq.s32.totalorder %s38, 0
    %p747 = por %p745, %p746
    %p748 = scmp.ne.s32.totalorder %s734, %s735
    %p749 = scmp.eq.s32.totalorder %s39, 3
    %p750 = por %p748, %p749
    %p752 = scmp.ne.s32.totalorder %s735, %s751
    %p753 = scmp.eq.s32.totalorder %s39, 0
    %p754 = por %p752, %p753
    %s755 = ssub.s32 %s40, %s52
    %p756 = scmp.eq.s32.totalorder %s755, 0
    %s758 = sadd.s32 %s757, 1
    %s759 = scalar_select %p756, %s757, %s758
    %p762 = pneg %p756
    %p763 = scmp.eq.s32.totalorder %s33, 3
    %p764 = por %p762, %p763
    %p765 = scmp.ne.s32.totalorder %s757, %s760
    %p766 = scmp.eq.s32.totalorder %s33, 0
    %p767 = por %p765, %p766
    %p768 = scmp.ne.s32.totalorder %s757, %s760
    %p769 = scmp.eq.s32.totalorder %s38, 3
    %p770 = por %p768, %p769
    %p771 = scmp.ne.s32.totalorder %s760, %s761
    %p772 = scmp.eq.s32.totalorder %s38, 0
    %p773 = por %p771, %p772
    %p774 = scmp.ne.s32.totalorder %s760, %s761
    %p775 = scmp.eq.s32.totalorder %s39, 3
    %p776 = por %p774, %p775
    %p778 = scmp.ne.s32.totalorder %s761, %s777
    %p779 = scmp.eq.s32.totalorder %s39, 0
    %p780 = por %p778, %p779
    %p781 = scmp.le.s32.totalorder 1, %s33
    %p782 = scmp.lt.s32.totalorder %s33, 5
    %p783 = pnand %p781, %p782
    %p784 = pneg %p783
    // Predicated region
    $region9: #{_lambda_.4} parent=5 // pred_check
      _
    $region10: #{_lambda_.4} parent=5 // pred_check_branch
      %786 = sbr.rel (%p783) target = $region12
    $region11: #{_lambda_.4} parent=5 // pred_region
      %s787 = ssub.s32 %s33, 1
    $region12: #{_lambda_.4} parent=5 // pred_fallthru
      _
    %p788 = scmp.lt.s32.totalorder %s33, 4
    // Predicated region
    $region13: #{_lambda_.4} parent=5 // pred_check
      %p789 = pneg %p788
    $region14: #{_lambda_.4} parent=5 // pred_check_branch
      %791 = sbr.rel (%p789) target = $region16
    $region15: #{_lambda_.4} parent=5 // pred_region
      // Predicated region
      $region17: #{_lambda_.4} parent=15 // pred_check
        %p792 = pneg %p65
      $region18: #{_lambda_.4} parent=15 // pred_check_branch
        %794 = sbr.rel (%p792) target = $region20
      $region19: #{_lambda_.4} parent=15 // pred_region
        %p795 = scmp.lt.s32.totalorder %s40, 1
        %s796 = scalar_select %p795, %s40, 1
        %s797 = smul.addr %s796, 8
        %s798 = scalar_lea.vmem %s0, %s797
      $region20: #{_lambda_.4} parent=15 // pred_fallthru
        _
      // Predicated region
      $region21: #{_lambda_.4} parent=15 // pred_check
        %p799 = pneg %p91
      $region22: #{_lambda_.4} parent=15 // pred_check_branch
        %801 = sbr.rel (%p799) target = $region24
      $region23: #{_lambda_.4} parent=15 // pred_region
        %p802 = scmp.lt.s32.totalorder %s41, 1
        %s803 = scalar_select %p802, %s41, 1
        %s804 = smul.addr %s803, 8
        %s805 = scalar_lea.vmem %s1, %s804
      $region24: #{_lambda_.4} parent=15 // pred_fallthru
        _
      // Predicated region
      $region25: #{_lambda_.4} parent=15 // pred_check
        %p806 = pneg %p117
      $region26: #{_lambda_.4} parent=15 // pred_check_branch
        %808 = sbr.rel (%p806) target = $region28
      $region27: #{_lambda_.4} parent=15 // pred_region
        %p809 = scmp.lt.s32.totalorder %s41, 1
        %s810 = scalar_select %p809, %s41, 1
        %s811 = smul.addr %s810, 8
        %s812 = scalar_lea.vmem %s2, %s811
      $region28: #{_lambda_.4} parent=15 // pred_fallthru
        _
      // Predicated region
      $region29: #{_lambda_.4} parent=15 // pred_check
        %p813 = pneg %p143
      $region30: #{_lambda_.4} parent=15 // pred_check_branch
        %815 = sbr.rel (%p813) target = $region32
      $region31: #{_lambda_.4} parent=15 // pred_region
        %p816 = scmp.lt.s32.totalorder %s41, 1
        %s817 = scalar_select %p816, %s41, 1
        %s818 = smul.addr %s817, 4
        %s819 = smul.addr %s818, 8
        %s820 = scalar_lea.vmem %s3, %s819
      $region32: #{_lambda_.4} parent=15 // pred_fallthru
        _
      // Predicated region
      $region33: #{_lambda_.4} parent=15 // pred_check
        %p821 = pneg %p169
      $region34: #{_lambda_.4} parent=15 // pred_check_branch
        %823 = sbr.rel (%p821) target = $region36
      $region35: #{_lambda_.4} parent=15 // pred_region
        %p824 = scmp.lt.s32.totalorder %s41, 1
        %s825 = scalar_select %p824, %s41, 1
        %s826 = scalar_lea.vmem %s4, %s825
      $region36: #{_lambda_.4} parent=15 // pred_fallthru
        _
      // Predicated region
      $region37: #{_lambda_.4} parent=15 // pred_check
        %p827 = pneg %p195
      $region38: #{_lambda_.4} parent=15 // pred_check_branch
        %829 = sbr.rel (%p827) target = $region40
      $region39: #{_lambda_.4} parent=15 // pred_region
        %p830 = scmp.lt.s32.totalorder %s41, 1
        %s831 = scalar_select %p830, %s41, 1
        %s832 = smul.addr %s831, 8
        %s833 = smul.addr %s832, 8
        %s834 = scalar_lea.vmem %s5, %s833
      $region40: #{_lambda_.4} parent=15 // pred_fallthru
        _
      // Predicated region
      $region41: #{_lambda_.4} parent=15 // pred_check
        %p835 = pneg %p221
      $region42: #{_lambda_.4} parent=15 // pred_check_branch
        %837 = sbr.rel (%p835) target = $region44
      $region43: #{_lambda_.4} parent=15 // pred_region
        %p838 = scmp.lt.s32.totalorder %s41, 1
        %s839 = scalar_select %p838, %s41, 1
        %s840 = scalar_lea.vmem %s6, %s839
      $region44: #{_lambda_.4} parent=15 // pred_fallthru
        _
      // Predicated region
      $region45: #{_lambda_.4} parent=15 // pred_check
        %p841 = pneg %p247
      $region46: #{_lambda_.4} parent=15 // pred_check_branch
        %843 = sbr.rel (%p841) target = $region48
      $region47: #{_lambda_.4} parent=15 // pred_region
        %p844 = scmp.lt.s32.totalorder %s41, 1
        %s845 = scalar_select %p844, %s41, 1
        %s846 = smul.addr %s845, 4
        %s847 = smul.addr %s846, 8
        %s848 = scalar_lea.vmem %s7, %s847
      $region48: #{_lambda_.4} parent=15 // pred_fallthru
        _
      // Predicated region
      $region49: #{_lambda_.4} parent=15 // pred_check
        %p849 = pneg %p273
      $region50: #{_lambda_.4} parent=15 // pred_check_branch
        %851 = sbr.rel (%p849) target = $region52
      $region51: #{_lambda_.4} parent=15 // pred_region
        %p852 = scmp.lt.s32.totalorder %s41, 1
        %s853 = scalar_select %p852, %s41, 1
        %s854 = scalar_lea.vmem %s8, %s853
      $region52: #{_lambda_.4} parent=15 // pred_fallthru
        _
      // Predicated region
      $region53: #{_lambda_.4} parent=15 // pred_check
        %p855 = pneg %p299
      $region54: #{_lambda_.4} parent=15 // pred_check_branch
        %857 = sbr.rel (%p855) target = $region56
      $region55: #{_lambda_.4} parent=15 // pred_region
        %p858 = scmp.lt.s32.totalorder %s41, 1
        %s859 = scalar_select %p858, %s41, 1
        %s860 = smul.addr %s859, 4
        %s861 = smul.addr %s860, 8
        %s862 = scalar_lea.vmem %s9, %s861
      $region56: #{_lambda_.4} parent=15 // pred_fallthru
        _
      // Predicated region
      $region57: #{_lambda_.4} parent=15 // pred_check
        %p863 = pneg %p325
      $region58: #{_lambda_.4} parent=15 // pred_check_branch
        %865 = sbr.rel (%p863) target = $region60
      $region59: #{_lambda_.4} parent=15 // pred_region
        %p866 = scmp.lt.s32.totalorder %s41, 1
        %s867 = scalar_select %p866, %s41, 1
        %s868 = scalar_lea.vmem %s10, %s867
      $region60: #{_lambda_.4} parent=15 // pred_fallthru
        _
      // Predicated region
      $region61: #{_lambda_.4} parent=15 // pred_check
        %p869 = pneg %p351
      $region62: #{_lambda_.4} parent=15 // pred_check_branch
        %871 = sbr.rel (%p869) target = $region64
      $region63: #{_lambda_.4} parent=15 // pred_region
        %p872 = scmp.lt.s32.totalorder %s41, 1
        %s873 = scalar_select %p872, %s41, 1
        %s874 = smul.addr %s873, 4
        %s875 = smul.addr %s874, 8
        %s876 = scalar_lea.vmem %s11, %s875
      $region64: #{_lambda_.4} parent=15 // pred_fallthru
        _
      // Predicated region
      $region65: #{_lambda_.4} parent=15 // pred_check
        %p877 = pneg %p377
      $region66: #{_lambda_.4} parent=15 // pred_check_branch
        %879 = sbr.rel (%p877) target = $region68
      $region67: #{_lambda_.4} parent=15 // pred_region
        %p880 = scmp.lt.s32.totalorder %s41, 1
        %s881 = scalar_select %p880, %s41, 1
        %s882 = scalar_lea.vmem %s12, %s881
      $region68: #{_lambda_.4} parent=15 // pred_fallthru
        _
      // Predicated region
      $region69: #{_lambda_.4} parent=15 // pred_check
        %p883 = pneg %p403
      $region70: #{_lambda_.4} parent=15 // pred_check_branch
        %885 = sbr.rel (%p883) target = $region72
      $region71: #{_lambda_.4} parent=15 // pred_region
        %p886 = scmp.lt.s32.totalorder %s41, 1
        %s887 = scalar_select %p886, %s41, 1
        %s888 = smul.addr %s887, 4
        %s889 = smul.addr %s888, 8
        %s890 = scalar_lea.vmem %s13, %s889
      $region72: #{_lambda_.4} parent=15 // pred_fallthru
        _
      // Predicated region
      $region73: #{_lambda_.4} parent=15 // pred_check
        %p891 = pneg %p429
      $region74: #{_lambda_.4} parent=15 // pred_check_branch
        %893 = sbr.rel (%p891) target = $region76
      $region75: #{_lambda_.4} parent=15 // pred_region
        %p894 = scmp.lt.s32.totalorder %s41, 1
        %s895 = scalar_select %p894, %s41, 1
        %s896 = scalar_lea.vmem %s14, %s895
      $region76: #{_lambda_.4} parent=15 // pred_fallthru
        _
      // Predicated region
      $region77: #{_lambda_.4} parent=15 // pred_check
        %p897 = pneg %p455
      $region78: #{_lambda_.4} parent=15 // pred_check_branch
        %899 = sbr.rel (%p897) target = $region80
      $region79: #{_lambda_.4} parent=15 // pred_region
        %p900 = scmp.lt.s32.totalorder %s41, 1
        %s901 = scalar_select %p900, %s41, 1
        %s902 = smul.addr %s901, 4
        %s903 = smul.addr %s902, 8
        %s904 = scalar_lea.vmem %s15, %s903
      $region80: #{_lambda_.4} parent=15 // pred_fallthru
        _
      // Predicated region
      $region81: #{_lambda_.4} parent=15 // pred_check
        %p905 = pneg %p481
      $region82: #{_lambda_.4} parent=15 // pred_check_branch
        %907 = sbr.rel (%p905) target = $region84
      $region83: #{_lambda_.4} parent=15 // pred_region
        %p908 = scmp.lt.s32.totalorder %s41, 1
        %s909 = scalar_select %p908, %s41, 1
        %s910 = scalar_lea.vmem %s16, %s909
      $region84: #{_lambda_.4} parent=15 // pred_fallthru
        _
      // Predicated region
      $region85: #{_lambda_.4} parent=15 // pred_check
        %p911 = pneg %p507
      $region86: #{_lambda_.4} parent=15 // pred_check_branch
        %913 = sbr.rel (%p911) target = $region88
      $region87: #{_lambda_.4} parent=15 // pred_region
        %p914 = scmp.lt.s32.totalorder %s41, 1
        %s915 = scalar_select %p914, %s41, 1
        %s916 = smul.addr %s915, 4
        %s917 = smul.addr %s916, 8
        %s918 = scalar_lea.vmem %s17, %s917
      $region88: #{_lambda_.4} parent=15 // pred_fallthru
        _
      // Predicated region
      $region89: #{_lambda_.4} parent=15 // pred_check
        %p919 = pneg %p533
      $region90: #{_lambda_.4} parent=15 // pred_check_branch
        %921 = sbr.rel (%p919) target = $region92
      $region91: #{_lambda_.4} parent=15 // pred_region
        %p922 = scmp.lt.s32.totalorder %s41, 1
        %s923 = scalar_select %p922, %s41, 1
        %s924 = scalar_lea.vmem %s18, %s923
      $region92: #{_lambda_.4} parent=15 // pred_fallthru
        _
      // Predicated region
      $region93: #{_lambda_.4} parent=15 // pred_check
        %p925 = pneg %p559
      $region94: #{_lambda_.4} parent=15 // pred_check_branch
        %927 = sbr.rel (%p925) target = $region96
      $region95: #{_lambda_.4} parent=15 // pred_region
        %p928 = scmp.lt.s32.totalorder %s41, 1
        %s929 = scalar_select %p928, %s41, 1
        %s930 = smul.addr %s929, 4
        %s931 = scalar_lea.vmem %s19, %s930
      $region96: #{_lambda_.4} parent=15 // pred_fallthru
        _
      // Predicated region
      $region97: #{_lambda_.4} parent=15 // pred_check
        %p932 = pneg %p585
      $region98: #{_lambda_.4} parent=15 // pred_check_branch
        %934 = sbr.rel (%p932) target = $region100
      $region99: #{_lambda_.4} parent=15 // pred_region
        %p935 = scmp.lt.s32.totalorder %s41, 1
        %s936 = scalar_select %p935, %s41, 1
        %s937 = scalar_lea.vmem %s20, %s936
      $region100: #{_lambda_.4} parent=15 // pred_fallthru
        _
      // Predicated region
      $region101: #{_lambda_.4} parent=15 // pred_check
        %p938 = pneg %p611
      $region102: #{_lambda_.4} parent=15 // pred_check_branch
        %940 = sbr.rel (%p938) target = $region104
      $region103: #{_lambda_.4} parent=15 // pred_region
        %p941 = scmp.lt.s32.totalorder %s41, 1
        %s942 = scalar_select %p941, %s41, 1
        %s943 = smul.addr %s942, 4
        %s944 = smul.addr %s943, 8
        %s945 = scalar_lea.vmem %s21, %s944
      $region104: #{_lambda_.4} parent=15 // pred_fallthru
        _
      // Predicated region
      $region105: #{_lambda_.4} parent=15 // pred_check
        %p946 = pneg %p637
      $region106: #{_lambda_.4} parent=15 // pred_check_branch
        %948 = sbr.rel (%p946) target = $region108
      $region107: #{_lambda_.4} parent=15 // pred_region
        %p949 = scmp.lt.s32.totalorder %s41, 1
        %s950 = scalar_select %p949, %s41, 1
        %s951 = scalar_lea.vmem %s22, %s950
      $region108: #{_lambda_.4} parent=15 // pred_fallthru
        _
      // Predicated region
      $region109: #{_lambda_.4} parent=15 // pred_check
        %p952 = pneg %p663
      $region110: #{_lambda_.4} parent=15 // pred_check_branch
        %954 = sbr.rel (%p952) target = $region112
      $region111: #{_lambda_.4} parent=15 // pred_region
        %p955 = scmp.lt.s32.totalorder %s41, 1
        %s956 = scalar_select %p955, %s41, 1
        %s957 = smul.addr %s956, 4
        %s958 = smul.addr %s957, 8
        %s959 = scalar_lea.vmem %s23, %s958
      $region112: #{_lambda_.4} parent=15 // pred_fallthru
        _
      // Predicated region
      $region113: #{_lambda_.4} parent=15 // pred_check
        %p960 = pneg %p689
      $region114: #{_lambda_.4} parent=15 // pred_check_branch
        %962 = sbr.rel (%p960) target = $region116
      $region115: #{_lambda_.4} parent=15 // pred_region
        %p963 = scmp.lt.s32.totalorder %s41, 1
        %s964 = scalar_select %p963, %s41, 1
        %s965 = scalar_lea.vmem %s24, %s964
      $region116: #{_lambda_.4} parent=15 // pred_fallthru
        _
      // Predicated region
      $region117: #{_lambda_.4} parent=15 // pred_check
        %p966 = pneg %p715
      $region118: #{_lambda_.4} parent=15 // pred_check_branch
        %968 = sbr.rel (%p966) target = $region120
      $region119: #{_lambda_.4} parent=15 // pred_region
        %p969 = scmp.lt.s32.totalorder %s41, 1
        %s970 = scalar_select %p969, %s41, 1
        %s971 = smul.addr %s970, 8
        %s972 = smul.addr %s971, 8
        %s973 = scalar_lea.vmem %s25, %s972
      $region120: #{_lambda_.4} parent=15 // pred_fallthru
        _
      // Predicated region
      $region121: #{_lambda_.4} parent=15 // pred_check
        %p974 = pneg %p741
      $region122: #{_lambda_.4} parent=15 // pred_check_branch
        %976 = sbr.rel (%p974) target = $region124
      $region123: #{_lambda_.4} parent=15 // pred_region
        %p977 = scmp.lt.s32.totalorder %s41, 1
        %s978 = scalar_select %p977, %s41, 1
        %s979 = scalar_lea.vmem %s26, %s978
      $region124: #{_lambda_.4} parent=15 // pred_fallthru
        _
    $region16: #{_lambda_.4} parent=5 // pred_fallthru
      _
    %p980 = scmp.le.s32.totalorder 1, %s33
    %p981 = scmp.lt.s32.totalorder %s33, 5
    %p982 = pnand %p980, %p981
    %p983 = pneg %p982
    // Predicated region
    $region125: #{_lambda_.4} parent=5 // pred_check
      _
    $region126: #{_lambda_.4} parent=5 // pred_check_branch
      %985 = sbr.rel (%p982) target = $region128
    $region127: #{_lambda_.4} parent=5 // pred_region
      %s986 = ssub.s32 %s33, 1
      %p987 = scmp.lt.s32.totalorder %s42, 1
      %s988 = scalar_select %p987, %s42, 1
      %s989 = smul.addr %s988, 8
      %s990 = scalar_lea.vmem %s0, %s989
      %p991 = pneg %p71
      %p992 = pneg %p68
      %p993 = scmp.lt.s32.totalorder %s43, 1
      %s994 = scalar_select %p993, %s43, 1
      %s995 = smul.addr %s994, 8
      %s996 = scalar_lea.vmem %s1, %s995
      %p997 = pneg %p97
      %p998 = pneg %p94
      %p999 = scmp.lt.s32.totalorder %s43, 1
      %s1000 = scalar_select %p999, %s43, 1
      %s1001 = smul.addr %s1000, 8
      %s1002 = scalar_lea.vmem %s2, %s1001
      %p1003 = pneg %p123
      %p1004 = pneg %p120
      %p1005 = scmp.lt.s32.totalorder %s43, 1
      %s1006 = scalar_select %p1005, %s43, 1
      %s1007 = smul.addr %s1006, 4
      %s1008 = smul.addr %s1007, 8
      %s1009 = scalar_lea.vmem %s3, %s1008
      %p1010 = pneg %p149
      %p1011 = pneg %p146
      %p1012 = scmp.lt.s32.totalorder %s43, 1
      %s1013 = scalar_select %p1012, %s43, 1
      %s1014 = scalar_lea.vmem %s4, %s1013
      %p1015 = pneg %p175
      %p1016 = pneg %p172
      %p1017 = scmp.lt.s32.totalorder %s43, 1
      %s1018 = scalar_select %p1017, %s43, 1
      %s1019 = smul.addr %s1018, 8
      %s1020 = smul.addr %s1019, 8
      %s1021 = scalar_lea.vmem %s5, %s1020
      %p1022 = pneg %p201
      %p1023 = pneg %p198
      %p1024 = scmp.lt.s32.totalorder %s43, 1
      %s1025 = scalar_select %p1024, %s43, 1
      %s1026 = scalar_lea.vmem %s6, %s1025
      %p1027 = pneg %p227
      %p1028 = pneg %p224
      %p1029 = scmp.lt.s32.totalorder %s43, 1
      %s1030 = scalar_select %p1029, %s43, 1
      %s1031 = smul.addr %s1030, 4
      %s1032 = smul.addr %s1031, 8
      %s1033 = scalar_lea.vmem %s7, %s1032
      %p1034 = pneg %p253
      %p1035 = pneg %p250
      %p1036 = scmp.lt.s32.totalorder %s43, 1
      %s1037 = scalar_select %p1036, %s43, 1
      %s1038 = scalar_lea.vmem %s8, %s1037
      %p1039 = pneg %p279
      %p1040 = pneg %p276
      %p1041 = scmp.lt.s32.totalorder %s43, 1
      %s1042 = scalar_select %p1041, %s43, 1
      %s1043 = smul.addr %s1042, 4
      %s1044 = smul.addr %s1043, 8
      %s1045 = scalar_lea.vmem %s9, %s1044
      %p1046 = pneg %p305
      %p1047 = pneg %p302
      %p1048 = scmp.lt.s32.totalorder %s43, 1
      %s1049 = scalar_select %p1048, %s43, 1
      %s1050 = scalar_lea.vmem %s10, %s1049
      %p1051 = pneg %p331
      %p1052 = pneg %p328
      %p1053 = scmp.lt.s32.totalorder %s43, 1
      %s1054 = scalar_select %p1053, %s43, 1
      %s1055 = smul.addr %s1054, 4
      %s1056 = smul.addr %s1055, 8
      %s1057 = scalar_lea.vmem %s11, %s1056
      %p1058 = pneg %p357
      %p1059 = pneg %p354
      %p1060 = scmp.lt.s32.totalorder %s43, 1
      %s1061 = scalar_select %p1060, %s43, 1
      %s1062 = scalar_lea.vmem %s12, %s1061
      %p1063 = pneg %p383
      %p1064 = pneg %p380
      %p1065 = scmp.lt.s32.totalorder %s43, 1
      %s1066 = scalar_select %p1065, %s43, 1
      %s1067 = smul.addr %s1066, 4
      %s1068 = smul.addr %s1067, 8
      %s1069 = scalar_lea.vmem %s13, %s1068
      %p1070 = pneg %p409
      %p1071 = pneg %p406
      %p1072 = scmp.lt.s32.totalorder %s43, 1
      %s1073 = scalar_select %p1072, %s43, 1
      %s1074 = scalar_lea.vmem %s14, %s1073
      %p1075 = pneg %p435
      %p1076 = pneg %p432
      %p1077 = scmp.lt.s32.totalorder %s43, 1
      %s1078 = scalar_select %p1077, %s43, 1
      %s1079 = smul.addr %s1078, 4
      %s1080 = smul.addr %s1079, 8
      %s1081 = scalar_lea.vmem %s15, %s1080
      %p1082 = pneg %p461
      %p1083 = pneg %p458
      %p1084 = scmp.lt.s32.totalorder %s43, 1
      %s1085 = scalar_select %p1084, %s43, 1
      %s1086 = scalar_lea.vmem %s16, %s1085
      %p1087 = pneg %p487
      %p1088 = pneg %p484
      %p1089 = scmp.lt.s32.totalorder %s43, 1
      %s1090 = scalar_select %p1089, %s43, 1
      %s1091 = smul.addr %s1090, 4
      %s1092 = smul.addr %s1091, 8
      %s1093 = scalar_lea.vmem %s17, %s1092
      %p1094 = pneg %p513
      %p1095 = pneg %p510
      %p1096 = scmp.lt.s32.totalorder %s43, 1
      %s1097 = scalar_select %p1096, %s43, 1
      %s1098 = scalar_lea.vmem %s18, %s1097
      %p1099 = pneg %p539
      %p1100 = pneg %p536
      %p1101 = scmp.lt.s32.totalorder %s43, 1
      %s1102 = scalar_select %p1101, %s43, 1
      %s1103 = smul.addr %s1102, 4
      %s1104 = scalar_lea.vmem %s19, %s1103
      %p1105 = pneg %p565
      %p1106 = pneg %p562
      %p1107 = scmp.lt.s32.totalorder %s43, 1
      %s1108 = scalar_select %p1107, %s43, 1
      %s1109 = scalar_lea.vmem %s20, %s1108
      %p1110 = pneg %p591
      %p1111 = pneg %p588
      %p1112 = scmp.lt.s32.totalorder %s43, 1
      %s1113 = scalar_select %p1112, %s43, 1
      %s1114 = smul.addr %s1113, 4
      %s1115 = smul.addr %s1114, 8
      %s1116 = scalar_lea.vmem %s21, %s1115
      %p1117 = pneg %p617
      %p1118 = pneg %p614
      %p1119 = scmp.lt.s32.totalorder %s43, 1
      %s1120 = scalar_select %p1119, %s43, 1
      %s1121 = scalar_lea.vmem %s22, %s1120
      %p1122 = pneg %p643
      %p1123 = pneg %p640
      %p1124 = scmp.lt.s32.totalorder %s43, 1
      %s1125 = scalar_select %p1124, %s43, 1
      %s1126 = smul.addr %s1125, 4
      %s1127 = smul.addr %s1126, 8
      %s1128 = scalar_lea.vmem %s23, %s1127
      %p1129 = pneg %p669
      %p1130 = pneg %p666
      %p1131 = scmp.lt.s32.totalorder %s43, 1
      %s1132 = scalar_select %p1131, %s43, 1
      %s1133 = scalar_lea.vmem %s24, %s1132
      %p1134 = pneg %p695
      %p1135 = pneg %p692
      %p1136 = scmp.lt.s32.totalorder %s43, 1
      %s1137 = scalar_select %p1136, %s43, 1
      %s1138 = smul.addr %s1137, 8
      %s1139 = smul.addr %s1138, 8
      %s1140 = scalar_lea.vmem %s25, %s1139
      %p1141 = pneg %p721
      %p1142 = pneg %p718
      %p1143 = scmp.lt.s32.totalorder %s43, 1
      %s1144 = scalar_select %p1143, %s43, 1
      %s1145 = scalar_lea.vmem %s26, %s1144
      %p1146 = pneg %p747
      %p1147 = pneg %p744
      %p1148 = pneg %p773
      %p1149 = pneg %p770
      %p1150 = scmp.lt.s32.totalorder %s42, 1
      %s1151 = scalar_select %p1150, %s42, 1
      %s1152 = smul.addr %s1151, 8
      %s1153 = scalar_lea.vmem %s27, %s1152
      %p1154 = scmp.lt.s32.totalorder %s42, 1
      %s1155 = scalar_select %p1154, %s42, 1
      %s1156 = smul.addr %s1155, 8
      %s1157 = scalar_lea.vmem %s0, %s1156
      %p1158 = scmp.lt.s32.totalorder %s43, 1
      %s1159 = scalar_select %p1158, %s43, 1
      %s1160 = smul.addr %s1159, 8
      %s1161 = scalar_lea.vmem %s1, %s1160
      %p1162 = scmp.lt.s32.totalorder %s43, 1
      %s1163 = scalar_select %p1162, %s43, 1
      %s1164 = smul.addr %s1163, 8
      %s1165 = scalar_lea.vmem %s2, %s1164
      %p1166 = scmp.lt.s32.totalorder %s43, 1
      %s1167 = scalar_select %p1166, %s43, 1
      %s1168 = smul.addr %s1167, 4
      %s1169 = smul.addr %s1168, 8
      %s1170 = scalar_lea.vmem %s3, %s1169
      %p1171 = scmp.lt.s32.totalorder %s43, 1
      %s1172 = scalar_select %p1171, %s43, 1
      %s1173 = scalar_lea.vmem %s4, %s1172
      %p1174 = scmp.lt.s32.totalorder %s43, 1
      %s1175 = scalar_select %p1174, %s43, 1
      %s1176 = smul.addr %s1175, 8
      %s1177 = smul.addr %s1176, 8
      %s1178 = scalar_lea.vmem %s5, %s1177
      %p1179 = scmp.lt.s32.totalorder %s43, 1
      %s1180 = scalar_select %p1179, %s43, 1
      %s1181 = scalar_lea.vmem %s6, %s1180
      %p1182 = scmp.lt.s32.totalorder %s43, 1
      %s1183 = scalar_select %p1182, %s43, 1
      %s1184 = smul.addr %s1183, 4
      %s1185 = smul.addr %s1184, 8
      %s1186 = scalar_lea.vmem %s7, %s1185
      %p1187 = scmp.lt.s32.totalorder %s43, 1
      %s1188 = scalar_select %p1187, %s43, 1
      %s1189 = scalar_lea.vmem %s8, %s1188
      %p1190 = scmp.lt.s32.totalorder %s43, 1
      %s1191 = scalar_select %p1190, %s43, 1
      %s1192 = smul.addr %s1191, 4
      %s1193 = smul.addr %s1192, 8
      %s1194 = scalar_lea.vmem %s9, %s1193
      %p1195 = scmp.lt.s32.totalorder %s43, 1
      %s1196 = scalar_select %p1195, %s43, 1
      %s1197 = scalar_lea.vmem %s10, %s1196
      %p1198 = scmp.lt.s32.totalorder %s43, 1
      %s1199 = scalar_select %p1198, %s43, 1
      %s1200 = smul.addr %s1199, 4
      %s1201 = smul.addr %s1200, 8
      %s1202 = scalar_lea.vmem %s11, %s1201
      %p1203 = scmp.lt.s32.totalorder %s43, 1
      %s1204 = scalar_select %p1203, %s43, 1
      %s1205 = scalar_lea.vmem %s12, %s1204
      %p1206 = scmp.lt.s32.totalorder %s43, 1
      %s1207 = scalar_select %p1206, %s43, 1
      %s1208 = smul.addr %s1207, 4
      %s1209 = smul.addr %s1208, 8
      %s1210 = scalar_lea.vmem %s13, %s1209
      %p1211 = scmp.lt.s32.totalorder %s43, 1
      %s1212 = scalar_select %p1211, %s43, 1
      %s1213 = scalar_lea.vmem %s14, %s1212
      %p1214 = scmp.lt.s32.totalorder %s43, 1
      %s1215 = scalar_select %p1214, %s43, 1
      %s1216 = smul.addr %s1215, 4
      %s1217 = smul.addr %s1216, 8
      %s1218 = scalar_lea.vmem %s15, %s1217
      %p1219 = scmp.lt.s32.totalorder %s43, 1
      %s1220 = scalar_select %p1219, %s43, 1
      %s1221 = scalar_lea.vmem %s16, %s1220
      %p1222 = scmp.lt.s32.totalorder %s43, 1
      %s1223 = scalar_select %p1222, %s43, 1
      %s1224 = smul.addr %s1223, 4
      %s1225 = smul.addr %s1224, 8
      %s1226 = scalar_lea.vmem %s17, %s1225
      %p1227 = scmp.lt.s32.totalorder %s43, 1
      %s1228 = scalar_select %p1227, %s43, 1
      %s1229 = scalar_lea.vmem %s18, %s1228
      %p1230 = scmp.lt.s32.totalorder %s43, 1
      %s1231 = scalar_select %p1230, %s43, 1
      %s1232 = smul.addr %s1231, 4
      %s1233 = scalar_lea.vmem %s19, %s1232
      %p1234 = scmp.lt.s32.totalorder %s43, 1
      %s1235 = scalar_select %p1234, %s43, 1
      %s1236 = scalar_lea.vmem %s20, %s1235
      %p1237 = scmp.lt.s32.totalorder %s43, 1
      %s1238 = scalar_select %p1237, %s43, 1
      %s1239 = smul.addr %s1238, 4
      %s1240 = smul.addr %s1239, 8
      %s1241 = scalar_lea.vmem %s21, %s1240
      %p1242 = scmp.lt.s32.totalorder %s43, 1
      %s1243 = scalar_select %p1242, %s43, 1
      %s1244 = scalar_lea.vmem %s22, %s1243
      %p1245 = scmp.lt.s32.totalorder %s43, 1
      %s1246 = scalar_select %p1245, %s43, 1
      %s1247 = smul.addr %s1246, 4
      %s1248 = smul.addr %s1247, 8
      %s1249 = scalar_lea.vmem %s23, %s1248
      %p1250 = scmp.lt.s32.totalorder %s43, 1
      %s1251 = scalar_select %p1250, %s43, 1
      %s1252 = scalar_lea.vmem %s24, %s1251
      %p1253 = scmp.lt.s32.totalorder %s43, 1
      %s1254 = scalar_select %p1253, %s43, 1
      %s1255 = smul.addr %s1254, 8
      %s1256 = smul.addr %s1255, 8
      %s1257 = scalar_lea.vmem %s25, %s1256
      %p1258 = scmp.lt.s32.totalorder %s43, 1
      %s1259 = scalar_select %p1258, %s43, 1
      %s1260 = scalar_lea.vmem %s26, %s1259
      %p1261 = scmp.lt.s32.totalorder %s42, 1
      %s1262 = scalar_select %p1261, %s42, 1
      %s1263 = smul.addr %s1262, 8
      %s1264 = scalar_lea.vmem %s27, %s1263
      %p1266 = scmp.eq.s32.totalorder %s43, 0
      // Predicated region
      $region129: #{_lambda_.4} parent=127 // pred_check
        %p1267 = pneg %p1266
      $region130: #{_lambda_.4} parent=127 // pred_check_branch
        %1269 = sbr.rel (%p1267) target = $region132
      $region131: #{_lambda_.4} parent=127 // pred_region
        %v1270 = vld [vmem:[%s1157] sm:$0xff]
        %vm1271 = vcmask 261120
        %1272 = vst.msk [vmem:[#allocation2] sm:$0xff] %vm1271, %v1270
      $region132: #{_lambda_.4} parent=127 // pred_fallthru
        _
      %v1273 = vld [vmem:[#allocation2] sm:$0xff]
      %v1274 = vld [vmem:[%s1161] sm:$0x1]
      %v1275 = vld [vmem:[%s1165] sm:$0x1]
      %vm1276 = vcmask 261120
      %v1277 = vsel %vm1276, %v1273, 0.0
      %1278 = vadd.xlane.f32.xlu0 %v1277
      %v1279 = vpop.xlane.xlu0 %1278
      %v1280 = vrcp.pop 32.0
      %v1281 = vmul.f32 %v1279, %v1280
      %v1282 = vsub.f32 %v1273, %v1281
      %v1283 = vmul.f32 %v1282, %v1282
      %v1284 = vsel %vm1276, %v1283, 0.0
      %1285 = vadd.xlane.f32.xlu0 %v1284
      %v1286 = vpop.xlane.xlu0 %1285
      %v1287 = vmul.f32 %v1286, %v1280
      %v1288 = vadd.f32 %v1287, 1e-05
      %v1289 = vrsqrt.pop %v1288
      %v1290 = vmul.f32 %v1282, %v1289
      %v1291 = vlaneseq
      %v1292 = vshrl.u32 %v1291, 7
      %v1293 = vsub.s32 0, %v1292
      %v1294 = vrot.slane %v1274, %v1293
      %v1295 = vmul.f32 %v1290, %v1294
      %v1296 = vlaneseq
      %v1297 = vshrl.u32 %v1296, 7
      %v1298 = vsub.s32 0, %v1297
      %v1299 = vrot.slane %v1275, %v1298
      %v1300 = vadd.f32 %v1295, %v1299
      %v1301 = vpack.c.bf16 %v1300, %v1300
      %v1302 = vld [vmem:[%s1170] sm:$0xff]
      %v1303 = vld [vmem:[%s1170 + $0x8] sm:$0xff]
      %v1304 = vld [vmem:[%s1170 + $0x10] sm:$0xff]
      %v1305 = vld [vmem:[%s1170 + $0x18] sm:$0xff]
      %v1306 = vpack.c.bf16 %v1303, %v1302
      %v1307 = vpack.c.bf16 %v1305, %v1304
      %v1308 = vld [vmem:[%s1173] sm:$0x1]
      %v1310 = vlaneseq
      %v1311 = vshrl.u32 %v1310, 7
      %v1312 = vsub.s32 0, %v1311
      %v1313 = vrot.slane %v1308, %v1312
      %v1316 = vsel %vm1276, %v1301, 0
      %1318 = vmatprep.subr.bf16.mxu0 0
      %1319 = vmatpush1.bf16.msra.mxu0 0
      %1320 = vmatprep.subr.bf16.mxu0 0
      %1321 = vmatpush1.bf16.msra.mxu0 0
      %1322 = vmatprep.subr.bf16.mxu0 0
      %1323 = vmatpush1.bf16.msra.mxu0 0
      %1324 = vmatprep.subr.bf16.mxu0 0
      %1325 = vmatpush1.bf16.msra.mxu0 0
      %1326 = vmatprep.subr.bf16.mxu0 0
      %1327 = vmatpush1.bf16.msra.mxu0 0
      %1328 = vmatprep.subr.bf16.mxu0 0
      %1329 = vmatpush1.bf16.msra.mxu0 0
      %1330 = vmatprep.subr.bf16.mxu0 0
      %1331 = vmatpush1.bf16.msra.mxu0 %v1307
      %1332 = vmatprep.subr.bf16.mxu0 0
      %1333 = vmatpush1.bf16.msra.mxu0 %v1306
      %1334 = vmatprep.subr.bf16.mxu0 0
      %1335 = vmatpush2.bf16.msra.mxu0 0
      %1336 = vmatprep.subr.bf16.mxu0 0
      %1337 = vmatpush2.bf16.msra.mxu0 0
      %1338 = vmatprep.subr.bf16.mxu0 0
      %1339 = vmatpush2.bf16.msra.mxu0 0
      %1340 = vmatprep.subr.bf16.mxu0 0
      %1341 = vmatpush2.bf16.msra.mxu0 0
      %1342 = vmatprep.subr.bf16.mxu0 0
      %1343 = vmatpush2.bf16.msra.mxu0 0
      %1344 = vmatprep.subr.bf16.mxu0 0
      %1345 = vmatpush2.bf16.msra.mxu0 0
      %1346 = vmatprep.subr.bf16.mxu0 0
      %1347 = vmatpush2.bf16.msra.mxu0 0
      %1348 = vmatprep.subr.bf16.mxu0 0
      %1349 = vmatpush2.bf16.msra.mxu0 0
      %1350 = vmatprep.mubr.bf16.mxu0 0
      %1351 = vmatmul.mubr.bf16.gmra.mxu0 %v1316
      %v1352 = vpop.f32.mrf.mxu0
      %v1353 = vadd.f32 %v1313, %v1352
      %v1354 = vpop.f32.mrf.mxu0
      %v1355 = vpop.f32.mrf.mxu0
      %v1356 = vpop.f32.mrf.mxu0
      %1357 = vdwg.mxu0
      %v1358 = vxor.u32 %v1353, 2147483648
      %v1359 = vmul.f32 %v1358, 1.442695
      %v1360 = vpow.pop %v1359
      %v1361 = vadd.f32 %v1360, 1.0
      %v1362 = vrcp.pop %v1361
      %v1363 = vmul.f32 1.0, %v1362
      %v1364 = vmul.f32 %v1353, %v1363
      %v1365 = vpack.c.bf16 %v1364, %v1364
      %v1366 = vld [vmem:[%s1178] sm:$0xff]
      %v1367 = vld [vmem:[%s1178 + $0x8] sm:$0xff]
      %v1368 = vld [vmem:[%s1178 + $0x10] sm:$0xff]
      %v1369 = vld [vmem:[%s1178 + $0x18] sm:$0xff]
      %v1370 = vld [vmem:[%s1178 + $0x20] sm:$0xff]
      %v1371 = vld [vmem:[%s1178 + $0x28] sm:$0xff]
      %v1372 = vld [vmem:[%s1178 + $0x30] sm:$0xff]
      %v1373 = vld [vmem:[%s1178 + $0x38] sm:$0xff]
      %v1374 = vpack.c.bf16 %v1367, %v1366
      %v1375 = vpack.c.bf16 %v1369, %v1368
      %v1376 = vpack.c.bf16 %v1371, %v1370
      %v1377 = vpack.c.bf16 %v1373, %v1372
      %v1378 = vld [vmem:[%s1181] sm:$0x1]
      %v1380 = vlaneseq
      %v1381 = vshrl.u32 %v1380, 7
      %v1382 = vsub.s32 0, %v1381
      %v1383 = vrot.slane %v1378, %v1382
      %vm1385 = vcmask 523264
      %v1387 = vsel %vm1385, %v1365, 0
      %1389 = vmatprep.subr.bf16.mxu0 0
      %1390 = vmatpush1.bf16.msra.mxu0 0
      %1391 = vmatprep.subr.bf16.mxu0 0
      %1392 = vmatpush1.bf16.msra.mxu0 0
      %1393 = vmatprep.subr.bf16.mxu0 0
      %1394 = vmatpush1.bf16.msra.mxu0 0
      %1395 = vmatprep.subr.bf16.mxu0 0
      %1396 = vmatpush1.bf16.msra.mxu0 0
      %1397 = vmatprep.subr.bf16.mxu0 0
      %1398 = vmatpush1.bf16.msra.mxu0 %v1377
      %1399 = vmatprep.subr.bf16.mxu0 0
      %1400 = vmatpush1.bf16.msra.mxu0 %v1376
      %1401 = vmatprep.subr.bf16.mxu0 0
      %1402 = vmatpush1.bf16.msra.mxu0 %v1375
      %1403 = vmatprep.subr.bf16.mxu0 0
      %1404 = vmatpush1.bf16.msra.mxu0 %v1374
      %1405 = vmatprep.subr.bf16.mxu0 0
      %1406 = vmatpush2.bf16.msra.mxu0 0
      %1407 = vmatprep.subr.bf16.mxu0 0
      %1408 = vmatpush2.bf16.msra.mxu0 0
      %1409 = vmatprep.subr.bf16.mxu0 0
      %1410 = vmatpush2.bf16.msra.mxu0 0
      %1411 = vmatprep.subr.bf16.mxu0 0
      %1412 = vmatpush2.bf16.msra.mxu0 0
      %1413 = vmatprep.subr.bf16.mxu0 0
      %1414 = vmatpush2.bf16.msra.mxu0 0
      %1415 = vmatprep.subr.bf16.mxu0 0
      %1416 = vmatpush2.bf16.msra.mxu0 0
      %1417 = vmatprep.subr.bf16.mxu0 0
      %1418 = vmatpush2.bf16.msra.mxu0 0
      %1419 = vmatprep.subr.bf16.mxu0 0
      %1420 = vmatpush2.bf16.msra.mxu0 0
      %1421 = vmatprep.mubr.bf16.mxu0 0
      %1422 = vmatmul.mubr.bf16.gmra.mxu0 %v1387
      %v1423 = vpop.f32.mrf.mxu0
      %v1424 = vadd.f32 %v1383, %v1423
      %v1425 = vpop.f32.mrf.mxu0
      %v1426 = vpop.f32.mrf.mxu0
      %v1427 = vpop.f32.mrf.mxu0
      %1428 = vdwg.mxu0
      %v1429 = vmul.f32 %v1424, 0.5
      %v1430 = vadd.f32 %v1273, %v1429
      %v1431 = vld [vmem:[%s1161 + $0x1] sm:$0x1]
      %v1432 = vld [vmem:[%s1165 + $0x1] sm:$0x1]
      %v1433 = vsel %vm1276, %v1430, 0.0
      %1434 = vadd.xlane.f32.xlu0 %v1433
      %v1435 = vpop.xlane.xlu0 %1434
      %v1436 = vmul.f32 %v1435, %v1280
      %v1437 = vsub.f32 %v1430, %v1436
      %v1438 = vmul.f32 %v1437, %v1437
      %v1439 = vsel %vm1276, %v1438, 0.0
      %1440 = vadd.xlane.f32.xlu0 %v1439
      %v1441 = vpop.xlane.xlu0 %1440
      %v1442 = vmul.f32 %v1441, %v1280
      %v1443 = vadd.f32 %v1442, 1e-05
      %v1444 = vrsqrt.pop %v1443
      %v1445 = vmul.f32 %v1437, %v1444
      %v1446 = vlaneseq
      %v1447 = vshrl.u32 %v1446, 7
      %v1448 = vsub.s32 0, %v1447
      %v1449 = vrot.slane %v1431, %v1448
      %v1450 = vmul.f32 %v1445, %v1449
      %v1451 = vlaneseq
      %v1452 = vshrl.u32 %v1451, 7
      %v1453 = vsub.s32 0, %v1452
      %v1454 = vrot.slane %v1432, %v1453
      %v1455 = vadd.f32 %v1450, %v1454
      %v1456 = vpack.c.bf16 %v1455, %v1455
      %v1457 = vld [vmem:[%s1186] sm:$0xff]
      %v1458 = vld [vmem:[%s1186 + $0x8] sm:$0xff]
      %v1459 = vld [vmem:[%s1186 + $0x10] sm:$0xff]
      %v1460 = vld [vmem:[%s1186 + $0x18] sm:$0xff]
      %v1461 = vpack.c.bf16 %v1458, %v1457
      %v1462 = vpack.c.bf16 %v1460, %v1459
      %v1463 = vld [vmem:[%s1189] sm:$0x1]
      %v1465 = vlaneseq
      %v1466 = vshrl.u32 %v1465, 7
      %v1467 = vsub.s32 0, %v1466
      %v1468 = vrot.slane %v1463, %v1467
      %v1471 = vsel %vm1276, %v1456, 0
      %1473 = vmatprep.subr.bf16.mxu0 0
      %1474 = vmatpush1.bf16.msra.mxu0 0
      %1475 = vmatprep.subr.bf16.mxu0 0
      %1476 = vmatpush1.bf16.msra.mxu0 0
      %1477 = vmatprep.subr.bf16.mxu0 0
      %1478 = vmatpush1.bf16.msra.mxu0 0
      %1479 = vmatprep.subr.bf16.mxu0 0
      %1480 = vmatpush1.bf16.msra.mxu0 0
      %1481 = vmatprep.subr.bf16.mxu0 0
      %1482 = vmatpush1.bf16.msra.mxu0 0
      %1483 = vmatprep.subr.bf16.mxu0 0
      %1484 = vmatpush1.bf16.msra.mxu0 0
      %1485 = vmatprep.subr.bf16.mxu0 0
      %1486 = vmatpush1.bf16.msra.mxu0 %v1462
      %1487 = vmatprep.subr.bf16.mxu0 0
      %1488 = vmatpush1.bf16.msra.mxu0 %v1461
      %1489 = vmatprep.subr.bf16.mxu0 0
      %1490 = vmatpush2.bf16.msra.mxu0 0
      %1491 = vmatprep.subr.bf16.mxu0 0
      %1492 = vmatpush2.bf16.msra.mxu0 0
      %1493 = vmatprep.subr.bf16.mxu0 0
      %1494 = vmatpush2.bf16.msra.mxu0 0
      %1495 = vmatprep.subr.bf16.mxu0 0
      %1496 = vmatpush2.bf16.msra.mxu0 0
      %1497 = vmatprep.subr.bf16.mxu0 0
      %1498 = vmatpush2.bf16.msra.mxu0 0
      %1499 = vmatprep.subr.bf16.mxu0 0
      %1500 = vmatpush2.bf16.msra.mxu0 0
      %1501 = vmatprep.subr.bf16.mxu0 0
      %1502 = vmatpush2.bf16.msra.mxu0 0
      %1503 = vmatprep.subr.bf16.mxu0 0
      %1504 = vmatpush2.bf16.msra.mxu0 0
      %1505 = vmatprep.mubr.bf16.mxu0 0
      %1506 = vmatmul.mubr.bf16.gmra.mxu0 %v1471
      %v1507 = vpop.f32.mrf.mxu0
      %v1508 = vadd.f32 %v1468, %v1507
      %v1509 = vpop.f32.mrf.mxu0
      %v1510 = vpop.f32.mrf.mxu0
      %v1511 = vpop.f32.mrf.mxu0
      %1512 = vdwg.mxu0
      %v1513 = vld [vmem:[%s1194] sm:$0xff]
      %v1514 = vld [vmem:[%s1194 + $0x8] sm:$0xff]
      %v1515 = vld [vmem:[%s1194 + $0x10] sm:$0xff]
      %v1516 = vld [vmem:[%s1194 + $0x18] sm:$0xff]
      %v1517 = vpack.c.bf16 %v1514, %v1513
      %v1518 = vpack.c.bf16 %v1516, %v1515
      %v1519 = vld [vmem:[%s1197] sm:$0x1]
      %v1521 = vlaneseq
      %v1522 = vshrl.u32 %v1521, 7
      %v1523 = vsub.s32 0, %v1522
      %v1524 = vrot.slane %v1519, %v1523
      %1526 = vmatprep.subr.bf16.mxu0 0
      %1527 = vmatpush1.bf16.msra.mxu0 0
      %1528 = vmatprep.subr.bf16.mxu0 0
      %1529 = vmatpush1.bf16.msra.mxu0 0
      %1530 = vmatprep.subr.bf16.mxu0 0
      %1531 = vmatpush1.bf16.msra.mxu0 0
      %1532 = vmatprep.subr.bf16.mxu0 0
      %1533 = vmatpush1.bf16.msra.mxu0 0
      %1534 = vmatprep.subr.bf16.mxu0 0
      %1535 = vmatpush1.bf16.msra.mxu0 0
      %1536 = vmatprep.subr.bf16.mxu0 0
      %1537 = vmatpush1.bf16.msra.mxu0 0
      %1538 = vmatprep.subr.bf16.mxu0 0
      %1539 = vmatpush1.bf16.msra.mxu0 %v1518
      %1540 = vmatprep.subr.bf16.mxu0 0
      %1541 = vmatpush1.bf16.msra.mxu0 %v1517
      %1542 = vmatprep.subr.bf16.mxu0 0
      %1543 = vmatpush2.bf16.msra.mxu0 0
      %1544 = vmatprep.subr.bf16.mxu0 0
      %1545 = vmatpush2.bf16.msra.mxu0 0
      %1546 = vmatprep.subr.bf16.mxu0 0
      %1547 = vmatpush2.bf16.msra.mxu0 0
      %1548 = vmatprep.subr.bf16.mxu0 0
      %1549 = vmatpush2.bf16.msra.mxu0 0
      %1550 = vmatprep.subr.bf16.mxu0 0
      %1551 = vmatpush2.bf16.msra.mxu0 0
      %1552 = vmatprep.subr.bf16.mxu0 0
      %1553 = vmatpush2.bf16.msra.mxu0 0
      %1554 = vmatprep.subr.bf16.mxu0 0
      %1555 = vmatpush2.bf16.msra.mxu0 0
      %1556 = vmatprep.subr.bf16.mxu0 0
      %1557 = vmatpush2.bf16.msra.mxu0 0
      %1558 = vmatprep.mubr.bf16.mxu0 0
      %1559 = vmatmul.mubr.bf16.gmra.mxu0 %v1471
      %v1560 = vpop.f32.mrf.mxu0
      %v1561 = vadd.f32 %v1524, %v1560
      %v1562 = vpop.f32.mrf.mxu0
      %v1563 = vpop.f32.mrf.mxu0
      %v1564 = vpop.f32.mrf.mxu0
      %1565 = vdwg.mxu0
      %v1566 = vld [vmem:[%s1202] sm:$0xff]
      %v1567 = vld [vmem:[%s1202 + $0x8] sm:$0xff]
      %v1568 = vld [vmem:[%s1202 + $0x10] sm:$0xff]
      %v1569 = vld [vmem:[%s1202 + $0x18] sm:$0xff]
      %v1570 = vpack.c.bf16 %v1567, %v1566
      %v1571 = vpack.c.bf16 %v1569, %v1568
      %v1572 = vld [vmem:[%s1205] sm:$0x1]
      %v1574 = vlaneseq
      %v1575 = vshrl.u32 %v1574, 7
      %v1576 = vsub.s32 0, %v1575
      %v1577 = vrot.slane %v1572, %v1576
      %1579 = vmatprep.subr.bf16.mxu0 0
      %1580 = vmatpush1.bf16.msra.mxu0 0
      %1581 = vmatprep.subr.bf16.mxu0 0
      %1582 = vmatpush1.bf16.msra.mxu0 0
      %1583 = vmatprep.subr.bf16.mxu0 0
      %1584 = vmatpush1.bf16.msra.mxu0 0
      %1585 = vmatprep.subr.bf16.mxu0 0
      %1586 = vmatpush1.bf16.msra.mxu0 0
      %1587 = vmatprep.subr.bf16.mxu0 0
      %1588 = vmatpush1.bf16.msra.mxu0 0
      %1589 = vmatprep.subr.bf16.mxu0 0
      %1590 = vmatpush1.bf16.msra.mxu0 0
      %1591 = vmatprep.subr.bf16.mxu0 0
      %1592 = vmatpush1.bf16.msra.mxu0 %v1571
      %1593 = vmatprep.subr.bf16.mxu0 0
      %1594 = vmatpush1.bf16.msra.mxu0 %v1570
      %1595 = vmatprep.subr.bf16.mxu0 0
      %1596 = vmatpush2.bf16.msra.mxu0 0
      %1597 = vmatprep.subr.bf16.mxu0 0
      %1598 = vmatpush2.bf16.msra.mxu0 0
      %1599 = vmatprep.subr.bf16.mxu0 0
      %1600 = vmatpush2.bf16.msra.mxu0 0
      %1601 = vmatprep.subr.bf16.mxu0 0
      %1602 = vmatpush2.bf16.msra.mxu0 0
      %1603 = vmatprep.subr.bf16.mxu0 0
      %1604 = vmatpush2.bf16.msra.mxu0 0
      %1605 = vmatprep.subr.bf16.mxu0 0
      %1606 = vmatpush2.bf16.msra.mxu0 0
      %1607 = vmatprep.subr.bf16.mxu0 0
      %1608 = vmatpush2.bf16.msra.mxu0 0
      %1609 = vmatprep.subr.bf16.mxu0 0
      %1610 = vmatpush2.bf16.msra.mxu0 0
      %1611 = vmatprep.mubr.bf16.mxu0 0
      %1612 = vmatmul.mubr.bf16.gmra.mxu0 %v1471
      %v1613 = vpop.f32.mrf.mxu0
      %v1614 = vadd.f32 %v1577, %v1613
      %v1615 = vpop.f32.mrf.mxu0
      %v1616 = vpop.f32.mrf.mxu0
      %v1617 = vpop.f32.mrf.mxu0
      %1618 = vdwg.mxu0
      %v1619 = vlaneseq
      %v1620 = vshrl.u32 %v1619, 7
      %v1621 = vlaneseq
      %v1622 = vand.u32 %v1621, 127
      %vm1623 = vcmp.le.s32.totalorder %v1622, %v1620
      %v1624 = vsub.s32 %v1620, 4
      %vm1625 = vcmp.ge.s32.totalorder %v1622, %v1624
      %vm1626 = vmand %vm1623, %vm1625
      %v1627 = vpack.c.bf16 %v1561, %v1561
      %vm1628 = vcmp.ge.s32.totalorder %v1622, 0
      %vm1629 = vcmp.lt.s32.totalorder %v1622, 8
      %vm1630 = vmand %vm1628, %vm1629
      %v1631 = vsel %vm1630, 1, 0
      %v1632 = vcvt.s32.f32 %v1631
      %v1633 = vmul.f32 %v1508, %v1632
      %v1634 = vpack.c.bf16 %v1633, %v1633
      %v1636 = vsel %vm1276, %v1634, 0
      %v1639 = vsel %vm1276, %v1627, 0
      %1641 = vmatprep.subr.bf16.mxu0 0
      %1642 = vmatpush1.bf16.xpose.msra.mxu0 0
      %1643 = vmatprep.subr.bf16.mxu0 0
      %1644 = vmatpush1.bf16.xpose.msra.mxu0 0
      %1645 = vmatprep.subr.bf16.mxu0 0
      %1646 = vmatpush1.bf16.xpose.msra.mxu0 0
      %1647 = vmatprep.subr.bf16.mxu0 0
      %1648 = vmatpush1.bf16.xpose.msra.mxu0 0
      %1649 = vmatprep.subr.bf16.mxu0 0
      %1650 = vmatpush1.bf16.xpose.msra.mxu0 0
      %1651 = vmatprep.subr.bf16.mxu0 0
      %1652 = vmatpush1.bf16.xpose.msra.mxu0 0
      %1653 = vmatprep.subr.bf16.mxu0 0
      %1654 = vmatpush1.bf16.xpose.msra.mxu0 0
      %1655 = vmatprep.subr.bf16.mxu0 0
      %1656 = vmatpush1.bf16.xpose.msra.mxu0 %v1639
      %1657 = vmatprep.subr.bf16.mxu0 0
      %1658 = vmatpush2.bf16.xpose.msra.mxu0 0
      %1659 = vmatprep.subr.bf16.mxu0 0
      %1660 = vmatpush2.bf16.xpose.msra.mxu0 0
      %1661 = vmatprep.subr.bf16.mxu0 0
      %1662 = vmatpush2.bf16.xpose.msra.mxu0 0
      %1663 = vmatprep.subr.bf16.mxu0 0
      %1664 = vmatpush2.bf16.xpose.msra.mxu0 0
      %1665 = vmatprep.subr.bf16.mxu0 0
      %1666 = vmatpush2.bf16.xpose.msra.mxu0 0
      %1667 = vmatprep.subr.bf16.mxu0 0
      %1668 = vmatpush2.bf16.xpose.msra.mxu0 0
      %1669 = vmatprep.subr.bf16.mxu0 0
      %1670 = vmatpush2.bf16.xpose.msra.mxu0 0
      %1671 = vmatprep.subr.bf16.mxu0 0
      %1672 = vmatpush2.bf16.xpose.msra.mxu0 0
      %1673 = vmatprep.mubr.bf16.mxu0 0
      %1674 = vmatmul.mubr.bf16.gmra.mxu0 %v1636
      %v1675 = vpop.f32.mrf.mxu0
      %v1676 = vadd.f32 0.0, %v1675
      %v1677 = vpop.f32.mrf.mxu0
      %v1678 = vpop.f32.mrf.mxu0
      %v1679 = vpop.f32.mrf.mxu0
      %1680 = vdwg.mxu0
      %v1681 = vmul.f32 %v1676, 0.35355338
      %v1682 = vsel %vm1626, %v1681, -1e+30
      %vm1683 = vcmask 64512
      %v1684 = vsel %vm1683, %v1682, -inf
      %1685 = vmax.xlane.f32.xlu0 %v1684
      %v1686 = vpop.xlane.xlu0 %1685
      %v1687 = vsub.f32 %v1682, %v1686
      %v1688 = vmul.f32 %v1687, 1.442695
      %v1689 = vpow.pop %v1688
      %v1690 = vsel %vm1683, %v1689, 0.0
      %1691 = vadd.xlane.f32.xlu0 %v1690
      %v1692 = vpop.xlane.xlu0 %1691
      %v1693 = vrcp.pop %v1692
      %v1694 = vmul.f32 %v1689, %v1693
      %v1695 = vmul.f32 %v1614, %v1632
      %v1696 = vpack.c.bf16 %v1695, %v1695
      %v1697 = vpack.c.bf16 %v1694, %v1694
      %vm1698 = vcmp.ge.s32.totalorder %v1622, 8
      %vm1699 = vcmp.lt.s32.totalorder %v1622, 16
      %vm1700 = vmand %vm1698, %vm1699
      %v1701 = vsel %vm1700, 1, 0
      %v1702 = vcvt.s32.f32 %v1701
      %v1703 = vmul.f32 %v1508, %v1702
      %v1704 = vpack.c.bf16 %v1703, %v1703
      %v1706 = vsel %vm1276, %v1704, 0
      %1708 = vmatprep.subr.bf16.mxu0 0
      %1709 = vmatpush1.bf16.xpose.msra.mxu0 0
      %1710 = vmatprep.subr.bf16.mxu0 0
      %1711 = vmatpush1.bf16.xpose.msra.mxu0 0
      %1712 = vmatprep.subr.bf16.mxu0 0
      %1713 = vmatpush1.bf16.xpose.msra.mxu0 0
      %1714 = vmatprep.subr.bf16.mxu0 0
      %1715 = vmatpush1.bf16.xpose.msra.mxu0 0
      %1716 = vmatprep.subr.bf16.mxu0 0
      %1717 = vmatpush1.bf16.xpose.msra.mxu0 0
      %1718 = vmatprep.subr.bf16.mxu0 0
      %1719 = vmatpush1.bf16.xpose.msra.mxu0 0
      %1720 = vmatprep.subr.bf16.mxu0 0
      %1721 = vmatpush1.bf16.xpose.msra.mxu0 0
      %1722 = vmatprep.subr.bf16.mxu0 0
      %1723 = vmatpush1.bf16.xpose.msra.mxu0 %v1639
      %1724 = vmatprep.subr.bf16.mxu0 0
      %1725 = vmatpush2.bf16.xpose.msra.mxu0 0
      %1726 = vmatprep.subr.bf16.mxu0 0
      %1727 = vmatpush2.bf16.xpose.msra.mxu0 0
      %1728 = vmatprep.subr.bf16.mxu0 0
      %1729 = vmatpush2.bf16.xpose.msra.mxu0 0
      %1730 = vmatprep.subr.bf16.mxu0 0
      %1731 = vmatpush2.bf16.xpose.msra.mxu0 0
      %1732 = vmatprep.subr.bf16.mxu0 0
      %1733 = vmatpush2.bf16.xpose.msra.mxu0 0
      %1734 = vmatprep.subr.bf16.mxu0 0
      %1735 = vmatpush2.bf16.xpose.msra.mxu0 0
      %1736 = vmatprep.subr.bf16.mxu0 0
      %1737 = vmatpush2.bf16.xpose.msra.mxu0 0
      %1738 = vmatprep.subr.bf16.mxu0 0
      %1739 = vmatpush2.bf16.xpose.msra.mxu0 0
      %1740 = vmatprep.mubr.bf16.mxu0 0
      %1741 = vmatmul.mubr.bf16.gmra.mxu0 %v1706
      %v1742 = vpop.f32.mrf.mxu0
      %v1743 = vadd.f32 0.0, %v1742
      %v1744 = vpop.f32.mrf.mxu0
      %v1745 = vpop.f32.mrf.mxu0
      %v1746 = vpop.f32.mrf.mxu0
      %1747 = vdwg.mxu0
      %v1748 = vmul.f32 %v1743, 0.35355338
      %v1749 = vsel %vm1626, %v1748, -1e+30
      %v1750 = vsel %vm1683, %v1749, -inf
      %1751 = vmax.xlane.f32.xlu0 %v1750
      %v1752 = vpop.xlane.xlu0 %1751
      %v1753 = vsub.f32 %v1749, %v1752
      %v1754 = vmul.f32 %v1753, 1.442695
      %v1755 = vpow.pop %v1754
      %v1756 = vsel %vm1683, %v1755, 0.0
      %1757 = vadd.xlane.f32.xlu0 %v1756
      %v1758 = vpop.xlane.xlu0 %1757
      %v1759 = vrcp.pop %v1758
      %v1760 = vmul.f32 %v1755, %v1759
      %v1761 = vmul.f32 %v1614, %v1702
      %v1762 = vpack.c.bf16 %v1761, %v1761
      %v1763 = vpack.c.bf16 %v1760, %v1760
      %v1765 = vsel %vm1683, %v1763, 0
      %vm1767 = vcmask 1043456
      %v1769 = vsel %vm1767, %v1762, 0
      %1771 = vmatprep.subr.bf16.mxu0 0
      %1772 = vmatpush1.bf16.msra.mxu0 0
      %1773 = vmatprep.subr.bf16.mxu0 0
      %1774 = vmatpush1.bf16.msra.mxu0 0
      %1775 = vmatprep.subr.bf16.mxu0 0
      %1776 = vmatpush1.bf16.msra.mxu0 0
      %1777 = vmatprep.subr.bf16.mxu0 0
      %1778 = vmatpush1.bf16.msra.mxu0 0
      %1779 = vmatprep.subr.bf16.mxu0 0
      %1780 = vmatpush1.bf16.msra.mxu0 0
      %1781 = vmatprep.subr.bf16.mxu0 0
      %1782 = vmatpush1.bf16.msra.mxu0 0
      %1783 = vmatprep.subr.bf16.mxu0 0
      %1784 = vmatpush1.bf16.msra.mxu0 0
      %1785 = vmatprep.subr.bf16.mxu0 0
      %1786 = vmatpush1.bf16.msra.mxu0 %v1769
      %1787 = vmatprep.subr.bf16.mxu0 0
      %1788 = vmatpush2.bf16.msra.mxu0 0
      %1789 = vmatprep.subr.bf16.mxu0 0
      %1790 = vmatpush2.bf16.msra.mxu0 0
      %1791 = vmatprep.subr.bf16.mxu0 0
      %1792 = vmatpush2.bf16.msra.mxu0 0
      %1793 = vmatprep.subr.bf16.mxu0 0
      %1794 = vmatpush2.bf16.msra.mxu0 0
      %1795 = vmatprep.subr.bf16.mxu0 0
      %1796 = vmatpush2.bf16.msra.mxu0 0
      %1797 = vmatprep.subr.bf16.mxu0 0
      %1798 = vmatpush2.bf16.msra.mxu0 0
      %1799 = vmatprep.subr.bf16.mxu0 0
      %1800 = vmatpush2.bf16.msra.mxu0 0
      %1801 = vmatprep.subr.bf16.mxu0 0
      %1802 = vmatpush2.bf16.msra.mxu0 0
      %1803 = vmatprep.mubr.bf16.mxu0 0
      %1804 = vmatmul.mubr.bf16.gmra.mxu0 %v1765
      %v1805 = vpop.f32.mrf.mxu0
      %v1806 = vadd.f32 0.0, %v1805
      %v1807 = vpop.f32.mrf.mxu0
      %v1808 = vpop.f32.mrf.mxu0
      %v1809 = vpop.f32.mrf.mxu0
      %1810 = vdwg.mxu0
      %v1812 = vsel %vm1683, %v1697, 0
      %v1815 = vsel %vm1767, %v1696, 0
      %1817 = vmatprep.subr.bf16.mxu0 0
      %1818 = vmatpush1.bf16.msra.mxu0 0
      %1819 = vmatprep.subr.bf16.mxu0 0
      %1820 = vmatpush1.bf16.msra.mxu0 0
      %1821 = vmatprep.subr.bf16.mxu0 0
      %1822 = vmatpush1.bf16.msra.mxu0 0
      %1823 = vmatprep.subr.bf16.mxu0 0
      %1824 = vmatpush1.bf16.msra.mxu0 0
      %1825 = vmatprep.subr.bf16.mxu0 0
      %1826 = vmatpush1.bf16.msra.mxu0 0
      %1827 = vmatprep.subr.bf16.mxu0 0
      %1828 = vmatpush1.bf16.msra.mxu0 0
      %1829 = vmatprep.subr.bf16.mxu0 0
      %1830 = vmatpush1.bf16.msra.mxu0 0
      %1831 = vmatprep.subr.bf16.mxu0 0
      %1832 = vmatpush1.bf16.msra.mxu0 %v1815
      %1833 = vmatprep.subr.bf16.mxu0 0
      %1834 = vmatpush2.bf16.msra.mxu0 0
      %1835 = vmatprep.subr.bf16.mxu0 0
      %1836 = vmatpush2.bf16.msra.mxu0 0
      %1837 = vmatprep.subr.bf16.mxu0 0
      %1838 = vmatpush2.bf16.msra.mxu0 0
      %1839 = vmatprep.subr.bf16.mxu0 0
      %1840 = vmatpush2.bf16.msra.mxu0 0
      %1841 = vmatprep.subr.bf16.mxu0 0
      %1842 = vmatpush2.bf16.msra.mxu0 0
      %1843 = vmatprep.subr.bf16.mxu0 0
      %1844 = vmatpush2.bf16.msra.mxu0 0
      %1845 = vmatprep.subr.bf16.mxu0 0
      %1846 = vmatpush2.bf16.msra.mxu0 0
      %1847 = vmatprep.subr.bf16.mxu0 0
      %1848 = vmatpush2.bf16.msra.mxu0 0
      %1849 = vmatprep.mubr.bf16.mxu0 0
      %1850 = vmatmul.mubr.bf16.gmra.mxu0 %v1812
      %v1851 = vpop.f32.mrf.mxu0
      %v1852 = vadd.f32 %v1806, %v1851
      %v1853 = vpop.f32.mrf.mxu0
      %v1854 = vpop.f32.mrf.mxu0
      %v1855 = vpop.f32.mrf.mxu0
      %1856 = vdwg.mxu0
      %vm1857 = vcmp.ge.s32.totalorder %v1622, 16
      %vm1858 = vcmp.lt.s32.totalorder %v1622, 24
      %vm1859 = vmand %vm1857, %vm1858
      %v1860 = vsel %vm1859, 1, 0
      %v1861 = vcvt.s32.f32 %v1860
      %v1862 = vmul.f32 %v1508, %v1861
      %v1863 = vpack.c.bf16 %v1862, %v1862
      %v1865 = vsel %vm1276, %v1863, 0
      %1867 = vmatprep.subr.bf16.mxu0 0
      %1868 = vmatpush1.bf16.xpose.msra.mxu0 0
      %1869 = vmatprep.subr.bf16.mxu0 0
      %1870 = vmatpush1.bf16.xpose.msra.mxu0 0
      %1871 = vmatprep.subr.bf16.mxu0 0
      %1872 = vmatpush1.bf16.xpose.msra.mxu0 0
      %1873 = vmatprep.subr.bf16.mxu0 0
      %1874 = vmatpush1.bf16.xpose.msra.mxu0 0
      %1875 = vmatprep.subr.bf16.mxu0 0
      %1876 = vmatpush1.bf16.xpose.msra.mxu0 0
      %1877 = vmatprep.subr.bf16.mxu0 0
      %1878 = vmatpush1.bf16.xpose.msra.mxu0 0
      %1879 = vmatprep.subr.bf16.mxu0 0
      %1880 = vmatpush1.bf16.xpose.msra.mxu0 0
      %1881 = vmatprep.subr.bf16.mxu0 0
      %1882 = vmatpush1.bf16.xpose.msra.mxu0 %v1639
      %1883 = vmatprep.subr.bf16.mxu0 0
      %1884 = vmatpush2.bf16.xpose.msra.mxu0 0
      %1885 = vmatprep.subr.bf16.mxu0 0
      %1886 = vmatpush2.bf16.xpose.msra.mxu0 0
      %1887 = vmatprep.subr.bf16.mxu0 0
      %1888 = vmatpush2.bf16.xpose.msra.mxu0 0
      %1889 = vmatprep.subr.bf16.mxu0 0
      %1890 = vmatpush2.bf16.xpose.msra.mxu0 0
      %1891 = vmatprep.subr.bf16.mxu0 0
      %1892 = vmatpush2.bf16.xpose.msra.mxu0 0
      %1893 = vmatprep.subr.bf16.mxu0 0
      %1894 = vmatpush2.bf16.xpose.msra.mxu0 0
      %1895 = vmatprep.subr.bf16.mxu0 0
      %1896 = vmatpush2.bf16.xpose.msra.mxu0 0
      %1897 = vmatprep.subr.bf16.mxu0 0
      %1898 = vmatpush2.bf16.xpose.msra.mxu0 0
      %1899 = vmatprep.mubr.bf16.mxu0 0
      %1900 = vmatmul.mubr.bf16.gmra.mxu0 %v1865
      %v1901 = vpop.f32.mrf.mxu0
      %v1902 = vadd.f32 0.0, %v1901
      %v1903 = vpop.f32.mrf.mxu0
      %v1904 = vpop.f32.mrf.mxu0
      %v1905 = vpop.f32.mrf.mxu0
      %1906 = vdwg.mxu0
      %v1907 = vmul.f32 %v1902, 0.35355338
      %v1908 = vsel %vm1626, %v1907, -1e+30
      %v1909 = vsel %vm1683, %v1908, -inf
      %1910 = vmax.xlane.f32.xlu0 %v1909
      %v1911 = vpop.xlane.xlu0 %1910
      %v1912 = vsub.f32 %v1908, %v1911
      %v1913 = vmul.f32 %v1912, 1.442695
      %v1914 = vpow.pop %v1913
      %v1915 = vsel %vm1683, %v1914, 0.0
      %1916 = vadd.xlane.f32.xlu0 %v1915
      %v1917 = vpop.xlane.xlu0 %1916
      %v1918 = vrcp.pop %v1917
      %v1919 = vmul.f32 %v1914, %v1918
      %v1920 = vmul.f32 %v1614, %v1861
      %v1921 = vpack.c.bf16 %v1920, %v1920
      %v1922 = vpack.c.bf16 %v1919, %v1919
      %v1924 = vsel %vm1683, %v1922, 0
      %v1927 = vsel %vm1767, %v1921, 0
      %1929 = vmatprep.subr.bf16.mxu0 0
      %1930 = vmatpush1.bf16.msra.mxu0 0
      %1931 = vmatprep.subr.bf16.mxu0 0
      %1932 = vmatpush1.bf16.msra.mxu0 0
      %1933 = vmatprep.subr.bf16.mxu0 0
      %1934 = vmatpush1.bf16.msra.mxu0 0
      %1935 = vmatprep.subr.bf16.mxu0 0
      %1936 = vmatpush1.bf16.msra.mxu0 0
      %1937 = vmatprep.subr.bf16.mxu0 0
      %1938 = vmatpush1.bf16.msra.mxu0 0
      %1939 = vmatprep.subr.bf16.mxu0 0
      %1940 = vmatpush1.bf16.msra.mxu0 0
      %1941 = vmatprep.subr.bf16.mxu0 0
      %1942 = vmatpush1.bf16.msra.mxu0 0
      %1943 = vmatprep.subr.bf16.mxu0 0
      %1944 = vmatpush1.bf16.msra.mxu0 %v1927
      %1945 = vmatprep.subr.bf16.mxu0 0
      %1946 = vmatpush2.bf16.msra.mxu0 0
      %1947 = vmatprep.subr.bf16.mxu0 0
      %1948 = vmatpush2.bf16.msra.mxu0 0
      %1949 = vmatprep.subr.bf16.mxu0 0
      %1950 = vmatpush2.bf16.msra.mxu0 0
      %1951 = vmatprep.subr.bf16.mxu0 0
      %1952 = vmatpush2.bf16.msra.mxu0 0
      %1953 = vmatprep.subr.bf16.mxu0 0
      %1954 = vmatpush2.bf16.msra.mxu0 0
      %1955 = vmatprep.subr.bf16.mxu0 0
      %1956 = vmatpush2.bf16.msra.mxu0 0
      %1957 = vmatprep.subr.bf16.mxu0 0
      %1958 = vmatpush2.bf16.msra.mxu0 0
      %1959 = vmatprep.subr.bf16.mxu0 0
      %1960 = vmatpush2.bf16.msra.mxu0 0
      %1961 = vmatprep.mubr.bf16.mxu0 0
      %1962 = vmatmul.mubr.bf16.gmra.mxu0 %v1924
      %v1963 = vpop.f32.mrf.mxu0
      %v1964 = vadd.f32 0.0, %v1963
      %v1965 = vpop.f32.mrf.mxu0
      %v1966 = vpop.f32.mrf.mxu0
      %v1967 = vpop.f32.mrf.mxu0
      %1968 = vdwg.mxu0
      %v1969 = vadd.f32 %v1852, %v1964
      %vm1970 = vcmp.ge.s32.totalorder %v1622, 24
      %vm1971 = vcmp.lt.s32.totalorder %v1622, 32
      %vm1972 = vmand %vm1970, %vm1971
      %v1973 = vsel %vm1972, 1, 0
      %v1974 = vcvt.s32.f32 %v1973
      %v1975 = vmul.f32 %v1508, %v1974
      %v1976 = vpack.c.bf16 %v1975, %v1975
      %v1978 = vsel %vm1276, %v1976, 0
      %1980 = vmatprep.subr.bf16.mxu0 0
      %1981 = vmatpush1.bf16.xpose.msra.mxu0 0
      %1982 = vmatprep.subr.bf16.mxu0 0
      %1983 = vmatpush1.bf16.xpose.msra.mxu0 0
      %1984 = vmatprep.subr.bf16.mxu0 0
      %1985 = vmatpush1.bf16.xpose.msra.mxu0 0
      %1986 = vmatprep.subr.bf16.mxu0 0
      %1987 = vmatpush1.bf16.xpose.msra.mxu0 0
      %1988 = vmatprep.subr.bf16.mxu0 0
      %1989 = vmatpush1.bf16.xpose.msra.mxu0 0
      %1990 = vmatprep.subr.bf16.mxu0 0
      %1991 = vmatpush1.bf16.xpose.msra.mxu0 0
      %1992 = vmatprep.subr.bf16.mxu0 0
      %1993 = vmatpush1.bf16.xpose.msra.mxu0 0
      %1994 = vmatprep.subr.bf16.mxu0 0
      %1995 = vmatpush1.bf16.xpose.msra.mxu0 %v1639
      %1996 = vmatprep.subr.bf16.mxu0 0
      %1997 = vmatpush2.bf16.xpose.msra.mxu0 0
      %1998 = vmatprep.subr.bf16.mxu0 0
      %1999 = vmatpush2.bf16.xpose.msra.mxu0 0
      %2000 = vmatprep.subr.bf16.mxu0 0
      %2001 = vmatpush2.bf16.xpose.msra.mxu0 0
      %2002 = vmatprep.subr.bf16.mxu0 0
      %2003 = vmatpush2.bf16.xpose.msra.mxu0 0
      %2004 = vmatprep.subr.bf16.mxu0 0
      %2005 = vmatpush2.bf16.xpose.msra.mxu0 0
      %2006 = vmatprep.subr.bf16.mxu0 0
      %2007 = vmatpush2.bf16.xpose.msra.mxu0 0
      %2008 = vmatprep.subr.bf16.mxu0 0
      %2009 = vmatpush2.bf16.xpose.msra.mxu0 0
      %2010 = vmatprep.subr.bf16.mxu0 0
      %2011 = vmatpush2.bf16.xpose.msra.mxu0 0
      %2012 = vmatprep.mubr.bf16.mxu0 0
      %2013 = vmatmul.mubr.bf16.gmra.mxu0 %v1978
      %v2014 = vpop.f32.mrf.mxu0
      %v2015 = vadd.f32 0.0, %v2014
      %v2016 = vpop.f32.mrf.mxu0
      %v2017 = vpop.f32.mrf.mxu0
      %v2018 = vpop.f32.mrf.mxu0
      %2019 = vdwg.mxu0
      %v2020 = vmul.f32 %v2015, 0.35355338
      %v2021 = vsel %vm1626, %v2020, -1e+30
      %v2022 = vsel %vm1683, %v2021, -inf
      %2023 = vmax.xlane.f32.xlu0 %v2022
      %v2024 = vpop.xlane.xlu0 %2023
      %v2025 = vsub.f32 %v2021, %v2024
      %v2026 = vmul.f32 %v2025, 1.442695
      %v2027 = vpow.pop %v2026
      %v2028 = vsel %vm1683, %v2027, 0.0
      %2029 = vadd.xlane.f32.xlu0 %v2028
      %v2030 = vpop.xlane.xlu0 %2029
      %v2031 = vrcp.pop %v2030
      %v2032 = vmul.f32 %v2027, %v2031
      %v2033 = vmul.f32 %v1614, %v1974
      %v2034 = vpack.c.bf16 %v2033, %v2033
      %v2035 = vpack.c.bf16 %v2032, %v2032
      %v2037 = vsel %vm1683, %v2035, 0
      %v2040 = vsel %vm1767, %v2034, 0
      %2042 = vmatprep.subr.bf16.mxu0 0
      %2043 = vmatpush1.bf16.msra.mxu0 0
      %2044 = vmatprep.subr.bf16.mxu0 0
      %2045 = vmatpush1.bf16.msra.mxu0 0
      %2046 = vmatprep.subr.bf16.mxu0 0
      %2047 = vmatpush1.bf16.msra.mxu0 0
      %2048 = vmatprep.subr.bf16.mxu0 0
      %2049 = vmatpush1.bf16.msra.mxu0 0
      %2050 = vmatprep.subr.bf16.mxu0 0
      %2051 = vmatpush1.bf16.msra.mxu0 0
      %2052 = vmatprep.subr.bf16.mxu0 0
      %2053 = vmatpush1.bf16.msra.mxu0 0
      %2054 = vmatprep.subr.bf16.mxu0 0
      %2055 = vmatpush1.bf16.msra.mxu0 0
      %2056 = vmatprep.subr.bf16.mxu0 0
      %2057 = vmatpush1.bf16.msra.mxu0 %v2040
      %2058 = vmatprep.subr.bf16.mxu0 0
      %2059 = vmatpush2.bf16.msra.mxu0 0
      %2060 = vmatprep.subr.bf16.mxu0 0
      %2061 = vmatpush2.bf16.msra.mxu0 0
      %2062 = vmatprep.subr.bf16.mxu0 0
      %2063 = vmatpush2.bf16.msra.mxu0 0
      %2064 = vmatprep.subr.bf16.mxu0 0
      %2065 = vmatpush2.bf16.msra.mxu0 0
      %2066 = vmatprep.subr.bf16.mxu0 0
      %2067 = vmatpush2.bf16.msra.mxu0 0
      %2068 = vmatprep.subr.bf16.mxu0 0
      %2069 = vmatpush2.bf16.msra.mxu0 0
      %2070 = vmatprep.subr.bf16.mxu0 0
      %2071 = vmatpush2.bf16.msra.mxu0 0
      %2072 = vmatprep.subr.bf16.mxu0 0
      %2073 = vmatpush2.bf16.msra.mxu0 0
      %2074 = vmatprep.mubr.bf16.mxu0 0
      %2075 = vmatmul.mubr.bf16.gmra.mxu0 %v2037
      %v2076 = vpop.f32.mrf.mxu0
      %v2077 = vadd.f32 0.0, %v2076
      %v2078 = vpop.f32.mrf.mxu0
      %v2079 = vpop.f32.mrf.mxu0
      %v2080 = vpop.f32.mrf.mxu0
      %2081 = vdwg.mxu0
      %v2082 = vadd.f32 %v1969, %v2077
      %v2083 = vpack.c.bf16 %v2082, %v2082
      %v2084 = vld [vmem:[%s1210] sm:$0xff]
      %v2085 = vld [vmem:[%s1210 + $0x8] sm:$0xff]
      %v2086 = vld [vmem:[%s1210 + $0x10] sm:$0xff]
      %v2087 = vld [vmem:[%s1210 + $0x18] sm:$0xff]
      %v2088 = vpack.c.bf16 %v2085, %v2084
      %v2089 = vpack.c.bf16 %v2087, %v2086
      %v2090 = vld [vmem:[%s1213] sm:$0x1]
      %v2092 = vlaneseq
      %v2093 = vshrl.u32 %v2092, 7
      %v2094 = vsub.s32 0, %v2093
      %v2095 = vrot.slane %v2090, %v2094
      %v2098 = vsel %vm1276, %v2083, 0
      %2100 = vmatprep.subr.bf16.mxu0 0
      %2101 = vmatpush1.bf16.msra.mxu0 0
      %2102 = vmatprep.subr.bf16.mxu0 0
      %2103 = vmatpush1.bf16.msra.mxu0 0
      %2104 = vmatprep.subr.bf16.mxu0 0
      %2105 = vmatpush1.bf16.msra.mxu0 0
      %2106 = vmatprep.subr.bf16.mxu0 0
      %2107 = vmatpush1.bf16.msra.mxu0 0
      %2108 = vmatprep.subr.bf16.mxu0 0
      %2109 = vmatpush1.bf16.msra.mxu0 0
      %2110 = vmatprep.subr.bf16.mxu0 0
      %2111 = vmatpush1.bf16.msra.mxu0 0
      %2112 = vmatprep.subr.bf16.mxu0 0
      %2113 = vmatpush1.bf16.msra.mxu0 %v2089
      %2114 = vmatprep.subr.bf16.mxu0 0
      %2115 = vmatpush1.bf16.msra.mxu0 %v2088
      %2116 = vmatprep.subr.bf16.mxu0 0
      %2117 = vmatpush2.bf16.msra.mxu0 0
      %2118 = vmatprep.subr.bf16.mxu0 0
      %2119 = vmatpush2.bf16.msra.mxu0 0
      %2120 = vmatprep.subr.bf16.mxu0 0
      %2121 = vmatpush2.bf16.msra.mxu0 0
      %2122 = vmatprep.subr.bf16.mxu0 0
      %2123 = vmatpush2.bf16.msra.mxu0 0
      %2124 = vmatprep.subr.bf16.mxu0 0
      %2125 = vmatpush2.bf16.msra.mxu0 0
      %2126 = vmatprep.subr.bf16.mxu0 0
      %2127 = vmatpush2.bf16.msra.mxu0 0
      %2128 = vmatprep.subr.bf16.mxu0 0
      %2129 = vmatpush2.bf16.msra.mxu0 0
      %2130 = vmatprep.subr.bf16.mxu0 0
      %2131 = vmatpush2.bf16.msra.mxu0 0
      %2132 = vmatprep.mubr.bf16.mxu0 0
      %2133 = vmatmul.mubr.bf16.gmra.mxu0 %v2098
      %v2134 = vpop.f32.mrf.mxu0
      %v2135 = vadd.f32 %v2095, %v2134
      %v2136 = vpop.f32.mrf.mxu0
      %v2137 = vpop.f32.mrf.mxu0
      %v2138 = vpop.f32.mrf.mxu0
      %2139 = vdwg.mxu0
      %v2140 = vadd.f32 %v1430, %v2135
      %v2141 = vld [vmem:[%s1161 + $0x2] sm:$0x1]
      %v2142 = vld [vmem:[%s1165 + $0x2] sm:$0x1]
      %v2143 = vsel %vm1276, %v2140, 0.0
      %2144 = vadd.xlane.f32.xlu0 %v2143
      %v2145 = vpop.xlane.xlu0 %2144
      %v2146 = vmul.f32 %v2145, %v1280
      %v2147 = vsub.f32 %v2140, %v2146
      %v2148 = vmul.f32 %v2147, %v2147
      %v2149 = vsel %vm1276, %v2148, 0.0
      %2150 = vadd.xlane.f32.xlu0 %v2149
      %v2151 = vpop.xlane.xlu0 %2150
      %v2152 = vmul.f32 %v2151, %v1280
      %v2153 = vadd.f32 %v2152, 1e-05
      %v2154 = vrsqrt.pop %v2153
      %v2155 = vmul.f32 %v2147, %v2154
      %v2156 = vlaneseq
      %v2157 = vshrl.u32 %v2156, 7
      %v2158 = vsub.s32 0, %v2157
      %v2159 = vrot.slane %v2141, %v2158
      %v2160 = vmul.f32 %v2155, %v2159
      %v2161 = vlaneseq
      %v2162 = vshrl.u32 %v2161, 7
      %v2163 = vsub.s32 0, %v2162
      %v2164 = vrot.slane %v2142, %v2163
      %v2165 = vadd.f32 %v2160, %v2164
      %v2166 = vpack.c.bf16 %v2165, %v2165
      %v2167 = vld [vmem:[%s1218] sm:$0xff]
      %v2168 = vld [vmem:[%s1218 + $0x8] sm:$0xff]
      %v2169 = vld [vmem:[%s1218 + $0x10] sm:$0xff]
      %v2170 = vld [vmem:[%s1218 + $0x18] sm:$0xff]
      %v2171 = vpack.c.bf16 %v2168, %v2167
      %v2172 = vpack.c.bf16 %v2170, %v2169
      %v2173 = vld [vmem:[%s1221] sm:$0x1]
      %v2175 = vlaneseq
      %v2176 = vshrl.u32 %v2175, 7
      %v2177 = vsub.s32 0, %v2176
      %v2178 = vrot.slane %v2173, %v2177
      %v2181 = vsel %vm1276, %v2166, 0
      %2183 = vmatprep.subr.bf16.mxu0 0
      %2184 = vmatpush1.bf16.msra.mxu0 0
      %2185 = vmatprep.subr.bf16.mxu0 0
      %2186 = vmatpush1.bf16.msra.mxu0 0
      %2187 = vmatprep.subr.bf16.mxu0 0
      %2188 = vmatpush1.bf16.msra.mxu0 0
      %2189 = vmatprep.subr.bf16.mxu0 0
      %2190 = vmatpush1.bf16.msra.mxu0 0
      %2191 = vmatprep.subr.bf16.mxu0 0
      %2192 = vmatpush1.bf16.msra.mxu0 0
      %2193 = vmatprep.subr.bf16.mxu0 0
      %2194 = vmatpush1.bf16.msra.mxu0 0
      %2195 = vmatprep.subr.bf16.mxu0 0
      %2196 = vmatpush1.bf16.msra.mxu0 %v2172
      %2197 = vmatprep.subr.bf16.mxu0 0
      %2198 = vmatpush1.bf16.msra.mxu0 %v2171
      %2199 = vmatprep.subr.bf16.mxu0 0
      %2200 = vmatpush2.bf16.msra.mxu0 0
      %2201 = vmatprep.subr.bf16.mxu0 0
      %2202 = vmatpush2.bf16.msra.mxu0 0
      %2203 = vmatprep.subr.bf16.mxu0 0
      %2204 = vmatpush2.bf16.msra.mxu0 0
      %2205 = vmatprep.subr.bf16.mxu0 0
      %2206 = vmatpush2.bf16.msra.mxu0 0
      %2207 = vmatprep.subr.bf16.mxu0 0
      %2208 = vmatpush2.bf16.msra.mxu0 0
      %2209 = vmatprep.subr.bf16.mxu0 0
      %2210 = vmatpush2.bf16.msra.mxu0 0
      %2211 = vmatprep.subr.bf16.mxu0 0
      %2212 = vmatpush2.bf16.msra.mxu0 0
      %2213 = vmatprep.subr.bf16.mxu0 0
      %2214 = vmatpush2.bf16.msra.mxu0 0
      %2215 = vmatprep.mubr.bf16.mxu0 0
      %2216 = vmatmul.mubr.bf16.gmra.mxu0 %v2181
      %v2217 = vpop.f32.mrf.mxu0
      %v2218 = vadd.f32 %v2178, %v2217
      %v2219 = vpop.f32.mrf.mxu0
      %v2220 = vpop.f32.mrf.mxu0
      %v2221 = vpop.f32.mrf.mxu0
      %2222 = vdwg.mxu0
      %v2223 = vld [vmem:[%s1226] sm:$0xff]
      %v2224 = vld [vmem:[%s1226 + $0x8] sm:$0xff]
      %v2225 = vld [vmem:[%s1226 + $0x10] sm:$0xff]
      %v2226 = vld [vmem:[%s1226 + $0x18] sm:$0xff]
      %v2227 = vpack.c.bf16 %v2224, %v2223
      %v2228 = vpack.c.bf16 %v2226, %v2225
      %v2229 = vld [vmem:[%s1229] sm:$0x1]
      %v2231 = vlaneseq
      %v2232 = vshrl.u32 %v2231, 7
      %v2233 = vsub.s32 0, %v2232
      %v2234 = vrot.slane %v2229, %v2233
      %2236 = vmatprep.subr.bf16.mxu0 0
      %2237 = vmatpush1.bf16.msra.mxu0 0
      %2238 = vmatprep.subr.bf16.mxu0 0
      %2239 = vmatpush1.bf16.msra.mxu0 0
      %2240 = vmatprep.subr.bf16.mxu0 0
      %2241 = vmatpush1.bf16.msra.mxu0 0
      %2242 = vmatprep.subr.bf16.mxu0 0
      %2243 = vmatpush1.bf16.msra.mxu0 0
      %2244 = vmatprep.subr.bf16.mxu0 0
      %2245 = vmatpush1.bf16.msra.mxu0 0
      %2246 = vmatprep.subr.bf16.mxu0 0
      %2247 = vmatpush1.bf16.msra.mxu0 0
      %2248 = vmatprep.subr.bf16.mxu0 0
      %2249 = vmatpush1.bf16.msra.mxu0 %v2228
      %2250 = vmatprep.subr.bf16.mxu0 0
      %2251 = vmatpush1.bf16.msra.mxu0 %v2227
      %2252 = vmatprep.subr.bf16.mxu0 0
      %2253 = vmatpush2.bf16.msra.mxu0 0
      %2254 = vmatprep.subr.bf16.mxu0 0
      %2255 = vmatpush2.bf16.msra.mxu0 0
      %2256 = vmatprep.subr.bf16.mxu0 0
      %2257 = vmatpush2.bf16.msra.mxu0 0
      %2258 = vmatprep.subr.bf16.mxu0 0
      %2259 = vmatpush2.bf16.msra.mxu0 0
      %2260 = vmatprep.subr.bf16.mxu0 0
      %2261 = vmatpush2.bf16.msra.mxu0 0
      %2262 = vmatprep.subr.bf16.mxu0 0
      %2263 = vmatpush2.bf16.msra.mxu0 0
      %2264 = vmatprep.subr.bf16.mxu0 0
      %2265 = vmatpush2.bf16.msra.mxu0 0
      %2266 = vmatprep.subr.bf16.mxu0 0
      %2267 = vmatpush2.bf16.msra.mxu0 0
      %2268 = vmatprep.mubr.bf16.mxu0 0
      %2269 = vmatmul.mubr.bf16.gmra.mxu0 %v2181
      %v2270 = vpop.f32.mrf.mxu0
      %v2271 = vadd.f32 %v2234, %v2270
      %v2272 = vpop.f32.mrf.mxu0
      %v2273 = vpop.f32.mrf.mxu0
      %v2274 = vpop.f32.mrf.mxu0
      %2275 = vdwg.mxu0
      %v2276 = vxor.u32 %v2271, 2147483648
      %v2277 = vmul.f32 %v2276, 1.442695
      %v2278 = vpow.pop %v2277
      %v2279 = vadd.f32 %v2278, 1.0
      %v2280 = vrcp.pop %v2279
      %v2281 = vmul.f32 1.0, %v2280
      %v2282 = vmul.f32 %v2218, %v2281
      %v2284 = vrot.slane %v2282, 6
      %vm2286 = vcmask 1041408
      %v2287 = vsel %vm2286, 0.0, %v2284
      %v2288 = vld [vmem:[%s1233] sm:$0x1]
      %v2289 = vlaneseq
      %v2290 = vshrl.u32 %v2289, 7
      %v2291 = vsub.s32 0, %v2290
      %v2292 = vrot.slane %v2288, %v2291
      %v2293 = vmul.f32 %v2287, %v2292
      %v2294 = vadd.f32 %v2293, 0.0
      %v2295 = vld [vmem:[%s1233 + $0x1] sm:$0x1]
      %v2296 = vlaneseq
      %v2297 = vshrl.u32 %v2296, 7
      %v2298 = vsub.s32 0, %v2297
      %v2299 = vrot.slane %v2295, %v2298
      %v2300 = vmul.f32 %v2287, %v2299
      %v2301 = vmul.f32 %v2284, %v2299
      %vm2304 = vcmask 1046528
      %v2305 = vrot.slane %v2300, 1
      %v2306 = vrot.slane %v2301, 1
      %v2307 = vsel %vm2304, %v2305, %v2306
      %v2309 = vadd.f32 %v2294, %v2307
      %v2310 = vld [vmem:[%s1233 + $0x2] sm:$0x1]
      %v2311 = vlaneseq
      %v2312 = vshrl.u32 %v2311, 7
      %v2313 = vsub.s32 0, %v2312
      %v2314 = vrot.slane %v2310, %v2313
      %v2315 = vmul.f32 %v2287, %v2314
      %v2316 = vmul.f32 %v2284, %v2314
      %vm2319 = vcmask 1045504
      %v2320 = vrot.slane %v2315, 2
      %v2321 = vrot.slane %v2316, 2
      %v2322 = vsel %vm2319, %v2320, %v2321
      %v2324 = vadd.f32 %v2309, %v2322
      %v2325 = vld [vmem:[%s1236] sm:$0x1]
      %v2327 = vlaneseq
      %v2328 = vshrl.u32 %v2327, 7
      %v2329 = vsub.s32 0, %v2328
      %v2330 = vrot.slane %v2325, %v2329
      %v2332 = vadd.f32 %v2324, %v2330
      %v2333 = vxor.u32 %v2332, 2147483648
      %v2334 = vmul.f32 %v2333, 1.442695
      %v2335 = vpow.pop %v2334
      %v2336 = vadd.f32 %v2335, 1.0
      %v2337 = vrcp.pop %v2336
      %v2338 = vmul.f32 1.0, %v2337
      %v2339 = vmul.f32 %v2332, %v2338
      %v2340 = vpack.c.bf16 %v2339, %v2339
      %v2341 = vld [vmem:[%s1241] sm:$0xff]
      %v2342 = vld [vmem:[%s1241 + $0x8] sm:$0xff]
      %v2343 = vld [vmem:[%s1241 + $0x10] sm:$0xff]
      %v2344 = vld [vmem:[%s1241 + $0x18] sm:$0xff]
      %v2345 = vpack.c.bf16 %v2342, %v2341
      %v2346 = vpack.c.bf16 %v2344, %v2343
      %v2347 = vld [vmem:[%s1244] sm:$0x1]
      %v2349 = vlaneseq
      %v2350 = vshrl.u32 %v2349, 7
      %v2351 = vsub.s32 0, %v2350
      %v2352 = vrot.slane %v2347, %v2351
      %v2355 = vsel %vm1276, %v2340, 0
      %2357 = vmatprep.subr.bf16.mxu0 0
      %2358 = vmatpush1.bf16.msra.mxu0 0
      %2359 = vmatprep.subr.bf16.mxu0 0
      %2360 = vmatpush1.bf16.msra.mxu0 0
      %2361 = vmatprep.subr.bf16.mxu0 0
      %2362 = vmatpush1.bf16.msra.mxu0 0
      %2363 = vmatprep.subr.bf16.mxu0 0
      %2364 = vmatpush1.bf16.msra.mxu0 0
      %2365 = vmatprep.subr.bf16.mxu0 0
      %2366 = vmatpush1.bf16.msra.mxu0 0
      %2367 = vmatprep.subr.bf16.mxu0 0
      %2368 = vmatpush1.bf16.msra.mxu0 0
      %2369 = vmatprep.subr.bf16.mxu0 0
      %2370 = vmatpush1.bf16.msra.mxu0 %v2346
      %2371 = vmatprep.subr.bf16.mxu0 0
      %2372 = vmatpush1.bf16.msra.mxu0 %v2345
      %2373 = vmatprep.subr.bf16.mxu0 0
      %2374 = vmatpush2.bf16.msra.mxu0 0
      %2375 = vmatprep.subr.bf16.mxu0 0
      %2376 = vmatpush2.bf16.msra.mxu0 0
      %2377 = vmatprep.subr.bf16.mxu0 0
      %2378 = vmatpush2.bf16.msra.mxu0 0
      %2379 = vmatprep.subr.bf16.mxu0 0
      %2380 = vmatpush2.bf16.msra.mxu0 0
      %2381 = vmatprep.subr.bf16.mxu0 0
      %2382 = vmatpush2.bf16.msra.mxu0 0
      %2383 = vmatprep.subr.bf16.mxu0 0
      %2384 = vmatpush2.bf16.msra.mxu0 0
      %2385 = vmatprep.subr.bf16.mxu0 0
      %2386 = vmatpush2.bf16.msra.mxu0 0
      %2387 = vmatprep.subr.bf16.mxu0 0
      %2388 = vmatpush2.bf16.msra.mxu0 0
      %2389 = vmatprep.mubr.bf16.mxu0 0
      %2390 = vmatmul.mubr.bf16.gmra.mxu0 %v2355
      %v2391 = vpop.f32.mrf.mxu0
      %v2392 = vadd.f32 %v2352, %v2391
      %v2393 = vpop.f32.mrf.mxu0
      %v2394 = vpop.f32.mrf.mxu0
      %v2395 = vpop.f32.mrf.mxu0
      %2396 = vdwg.mxu0
      %v2397 = vadd.f32 %v2140, %v2392
      %v2398 = vld [vmem:[%s1161 + $0x3] sm:$0x1]
      %v2399 = vld [vmem:[%s1165 + $0x3] sm:$0x1]
      %v2400 = vsel %vm1276, %v2397, 0.0
      %2401 = vadd.xlane.f32.xlu0 %v2400
      %v2402 = vpop.xlane.xlu0 %2401
      %v2403 = vmul.f32 %v2402, %v1280
      %v2404 = vsub.f32 %v2397, %v2403
      %v2405 = vmul.f32 %v2404, %v2404
      %v2406 = vsel %vm1276, %v2405, 0.0
      %2407 = vadd.xlane.f32.xlu0 %v2406
      %v2408 = vpop.xlane.xlu0 %2407
      %v2409 = vmul.f32 %v2408, %v1280
      %v2410 = vadd.f32 %v2409, 1e-05
      %v2411 = vrsqrt.pop %v2410
      %v2412 = vmul.f32 %v2404, %v2411
      %v2413 = vlaneseq
      %v2414 = vshrl.u32 %v2413, 7
      %v2415 = vsub.s32 0, %v2414
      %v2416 = vrot.slane %v2398, %v2415
      %v2417 = vmul.f32 %v2412, %v2416
      %v2418 = vlaneseq
      %v2419 = vshrl.u32 %v2418, 7
      %v2420 = vsub.s32 0, %v2419
      %v2421 = vrot.slane %v2399, %v2420
      %v2422 = vadd.f32 %v2417, %v2421
      %v2423 = vpack.c.bf16 %v2422, %v2422
      %v2424 = vld [vmem:[%s1249] sm:$0xff]
      %v2425 = vld [vmem:[%s1249 + $0x8] sm:$0xff]
      %v2426 = vld [vmem:[%s1249 + $0x10] sm:$0xff]
      %v2427 = vld [vmem:[%s1249 + $0x18] sm:$0xff]
      %v2428 = vpack.c.bf16 %v2425, %v2424
      %v2429 = vpack.c.bf16 %v2427, %v2426
      %v2430 = vld [vmem:[%s1252] sm:$0x1]
      %v2432 = vlaneseq
      %v2433 = vshrl.u32 %v2432, 7
      %v2434 = vsub.s32 0, %v2433
      %v2435 = vrot.slane %v2430, %v2434
      %v2438 = vsel %vm1276, %v2423, 0
      %2440 = vmatprep.subr.bf16.mxu0 0
      %2441 = vmatpush1.bf16.msra.mxu0 0
      %2442 = vmatprep.subr.bf16.mxu0 0
      %2443 = vmatpush1.bf16.msra.mxu0 0
      %2444 = vmatprep.subr.bf16.mxu0 0
      %2445 = vmatpush1.bf16.msra.mxu0 0
      %2446 = vmatprep.subr.bf16.mxu0 0
      %2447 = vmatpush1.bf16.msra.mxu0 0
      %2448 = vmatprep.subr.bf16.mxu0 0
      %2449 = vmatpush1.bf16.msra.mxu0 0
      %2450 = vmatprep.subr.bf16.mxu0 0
      %2451 = vmatpush1.bf16.msra.mxu0 0
      %2452 = vmatprep.subr.bf16.mxu0 0
      %2453 = vmatpush1.bf16.msra.mxu0 %v2429
      %2454 = vmatprep.subr.bf16.mxu0 0
      %2455 = vmatpush1.bf16.msra.mxu0 %v2428
      %2456 = vmatprep.subr.bf16.mxu0 0
      %2457 = vmatpush2.bf16.msra.mxu0 0
      %2458 = vmatprep.subr.bf16.mxu0 0
      %2459 = vmatpush2.bf16.msra.mxu0 0
      %2460 = vmatprep.subr.bf16.mxu0 0
      %2461 = vmatpush2.bf16.msra.mxu0 0
      %2462 = vmatprep.subr.bf16.mxu0 0
      %2463 = vmatpush2.bf16.msra.mxu0 0
      %2464 = vmatprep.subr.bf16.mxu0 0
      %2465 = vmatpush2.bf16.msra.mxu0 0
      %2466 = vmatprep.subr.bf16.mxu0 0
      %2467 = vmatpush2.bf16.msra.mxu0 0
      %2468 = vmatprep.subr.bf16.mxu0 0
      %2469 = vmatpush2.bf16.msra.mxu0 0
      %2470 = vmatprep.subr.bf16.mxu0 0
      %2471 = vmatpush2.bf16.msra.mxu0 0
      %2472 = vmatprep.mubr.bf16.mxu0 0
      %2473 = vmatmul.mubr.bf16.gmra.mxu0 %v2438
      %v2474 = vpop.f32.mrf.mxu0
      %v2475 = vadd.f32 %v2435, %v2474
      %v2476 = vpop.f32.mrf.mxu0
      %v2477 = vpop.f32.mrf.mxu0
      %v2478 = vpop.f32.mrf.mxu0
      %2479 = vdwg.mxu0
      %v2480 = vxor.u32 %v2475, 2147483648
      %v2481 = vmul.f32 %v2480, 1.442695
      %v2482 = vpow.pop %v2481
      %v2483 = vadd.f32 %v2482, 1.0
      %v2484 = vrcp.pop %v2483
      %v2485 = vmul.f32 1.0, %v2484
      %v2486 = vmul.f32 %v2475, %v2485
      %v2487 = vpack.c.bf16 %v2486, %v2486
      %v2488 = vld [vmem:[%s1257] sm:$0xff]
      %v2489 = vld [vmem:[%s1257 + $0x8] sm:$0xff]
      %v2490 = vld [vmem:[%s1257 + $0x10] sm:$0xff]
      %v2491 = vld [vmem:[%s1257 + $0x18] sm:$0xff]
      %v2492 = vld [vmem:[%s1257 + $0x20] sm:$0xff]
      %v2493 = vld [vmem:[%s1257 + $0x28] sm:$0xff]
      %v2494 = vld [vmem:[%s1257 + $0x30] sm:$0xff]
      %v2495 = vld [vmem:[%s1257 + $0x38] sm:$0xff]
      %v2496 = vpack.c.bf16 %v2489, %v2488
      %v2497 = vpack.c.bf16 %v2491, %v2490
      %v2498 = vpack.c.bf16 %v2493, %v2492
      %v2499 = vpack.c.bf16 %v2495, %v2494
      %v2500 = vld [vmem:[%s1260] sm:$0x1]
      %v2502 = vlaneseq
      %v2503 = vshrl.u32 %v2502, 7
      %v2504 = vsub.s32 0, %v2503
      %v2505 = vrot.slane %v2500, %v2504
      %v2508 = vsel %vm1385, %v2487, 0
      %2510 = vmatprep.subr.bf16.mxu0 0
      %2511 = vmatpush1.bf16.msra.mxu0 0
      %2512 = vmatprep.subr.bf16.mxu0 0
      %2513 = vmatpush1.bf16.msra.mxu0 0
      %2514 = vmatprep.subr.bf16.mxu0 0
      %2515 = vmatpush1.bf16.msra.mxu0 0
      %2516 = vmatprep.subr.bf16.mxu0 0
      %2517 = vmatpush1.bf16.msra.mxu0 0
      %2518 = vmatprep.subr.bf16.mxu0 0
      %2519 = vmatpush1.bf16.msra.mxu0 %v2499
      %2520 = vmatprep.subr.bf16.mxu0 0
      %2521 = vmatpush1.bf16.msra.mxu0 %v2498
      %2522 = vmatprep.subr.bf16.mxu0 0
      %2523 = vmatpush1.bf16.msra.mxu0 %v2497
      %2524 = vmatprep.subr.bf16.mxu0 0
      %2525 = vmatpush1.bf16.msra.mxu0 %v2496
      %2526 = vmatprep.subr.bf16.mxu0 0
      %2527 = vmatpush2.bf16.msra.mxu0 0
      %2528 = vmatprep.subr.bf16.mxu0 0
      %2529 = vmatpush2.bf16.msra.mxu0 0
      %2530 = vmatprep.subr.bf16.mxu0 0
      %2531 = vmatpush2.bf16.msra.mxu0 0
      %2532 = vmatprep.subr.bf16.mxu0 0
      %2533 = vmatpush2.bf16.msra.mxu0 0
      %2534 = vmatprep.subr.bf16.mxu0 0
      %2535 = vmatpush2.bf16.msra.mxu0 0
      %2536 = vmatprep.subr.bf16.mxu0 0
      %2537 = vmatpush2.bf16.msra.mxu0 0
      %2538 = vmatprep.subr.bf16.mxu0 0
      %2539 = vmatpush2.bf16.msra.mxu0 0
      %2540 = vmatprep.subr.bf16.mxu0 0
      %2541 = vmatpush2.bf16.msra.mxu0 0
      %2542 = vmatprep.mubr.bf16.mxu0 0
      %2543 = vmatmul.mubr.bf16.gmra.mxu0 %v2508
      %v2544 = vpop.f32.mrf.mxu0
      %v2545 = vadd.f32 %v2505, %v2544
      %v2546 = vpop.f32.mrf.mxu0
      %v2547 = vpop.f32.mrf.mxu0
      %v2548 = vpop.f32.mrf.mxu0
      %2549 = vdwg.mxu0
      %v2550 = vmul.f32 %v2545, 0.5
      %v2551 = vadd.f32 %v2397, %v2550
      %v2552 = vld [vmem:[%s1161 + $0x4] sm:$0x1]
      %v2553 = vld [vmem:[%s1165 + $0x4] sm:$0x1]
      %v2554 = vsel %vm1276, %v2551, 0.0
      %2555 = vadd.xlane.f32.xlu0 %v2554
      %v2556 = vpop.xlane.xlu0 %2555
      %v2557 = vmul.f32 %v2556, %v1280
      %v2558 = vsub.f32 %v2551, %v2557
      %v2559 = vmul.f32 %v2558, %v2558
      %v2560 = vsel %vm1276, %v2559, 0.0
      %2561 = vadd.xlane.f32.xlu0 %v2560
      %v2562 = vpop.xlane.xlu0 %2561
      %v2563 = vmul.f32 %v2562, %v1280
      %v2564 = vadd.f32 %v2563, 1e-05
      %v2565 = vrsqrt.pop %v2564
      %v2566 = vmul.f32 %v2558, %v2565
      %v2567 = vlaneseq
      %v2568 = vshrl.u32 %v2567, 7
      %v2569 = vsub.s32 0, %v2568
      %v2570 = vrot.slane %v2552, %v2569
      %v2571 = vmul.f32 %v2566, %v2570
      %v2572 = vlaneseq
      %v2573 = vshrl.u32 %v2572, 7
      %v2574 = vsub.s32 0, %v2573
      %v2575 = vrot.slane %v2553, %v2574
      %v2576 = vadd.f32 %v2571, %v2575
      %2577 = vst.msk [vmem:[#allocation2] sm:$0xff] %vm1276, %v2576
      %2578 = vst.msk [vmem:[%s1264] sm:$0xff] %vm1276, %v2576
      %p2579 = scmp.lt.s32.totalorder %s42, 1
      %s2580 = scalar_select %p2579, %s42, 1
      %s2581 = smul.addr %s2580, 8
      %s2582 = scalar_lea.vmem %s27, %s2581
      // Predicated region
      $region133: #{_lambda_.4} parent=127 // pred_check
        %p2583 = pneg %p770
      $region134: #{_lambda_.4} parent=127 // pred_check_branch
        %2585 = sbr.rel (%p2583) target = $region136
      $region135: #{_lambda_.4} parent=127 // pred_region
        _
      $region136: #{_lambda_.4} parent=127 // pred_fallthru
        _
    $region128: #{_lambda_.4} parent=5 // pred_fallthru
      _
    %p2586 = scmp.le.s32.totalorder 2, %s33
    // Predicated region
    $region137: #{_lambda_.4} parent=5 // pred_check
      %p2587 = pneg %p2586
    $region138: #{_lambda_.4} parent=5 // pred_check_branch
      %2589 = sbr.rel (%p2587) target = $region140
    $region139: #{_lambda_.4} parent=5 // pred_region
      %s2590 = ssub.s32 %s33, 2
      // Predicated region
      $region141: #{_lambda_.4} parent=139 // pred_check
        %p2591 = pneg %p776
      $region142: #{_lambda_.4} parent=139 // pred_check_branch
        %2593 = sbr.rel (%p2591) target = $region144
      $region143: #{_lambda_.4} parent=139 // pred_region
        %p2594 = scmp.lt.s32.totalorder %s44, 1
        %s2595 = scalar_select %p2594, %s44, 1
        %s2596 = smul.addr %s2595, 8
        %s2597 = scalar_lea.vmem %s27, %s2596
      $region144: #{_lambda_.4} parent=139 // pred_fallthru
        _
    $region140: #{_lambda_.4} parent=5 // pred_fallthru
      _
  $region6: #{_lambda_.4} parent=0 // loop_footer
    %s37 = sadd.s32 1, %s33
  $region7: #{_lambda_.4} parent=0 // loop_footer_branch
    %32 = sbr.rel target = $region3
  $region8: #{_lambda_.4} parent=0 // loop_exit
    _

</llo_original>
